<compile_context>
chip_gen: v7x
topology: tpu7x:2x2x1
jax: 0.10.0
libtpu: 0.0.40
codegen_flags: <defaults>
</compile_context>

<pallas_src>
import functools
import math

import jax
import jax.numpy as jnp
from jax.experimental import pallas as pl
from jax.experimental.pallas import tpu as pltpu


# ---------------------------------------------------------------------------
# numerics helpers (usable inside Pallas kernels)
# ---------------------------------------------------------------------------
def _erf(x):
    # Abramowitz & Stegun 7.1.26 rational approximation (|err| < 1.5e-7,
    # i.e. indistinguishable from exact erf at float32 precision).
    a1, a2, a3, a4, a5 = (0.254829592, -0.284496736, 1.421413741,
                          -1.453152027, 1.061405429)
    p = 0.3275911
    sign = jnp.sign(x)
    ax = jnp.abs(x)
    t = 1.0 / (1.0 + p * ax)
    poly = ((((a5 * t + a4) * t + a3) * t + a2) * t + a1) * t
    return sign * (1.0 - poly * jnp.exp(-ax * ax))


def _gelu_exact(x):
    # torch nn.GELU() default: 0.5*x*(1+erf(x/sqrt(2))).
    # TODO(synk): on v6e/v7x this polynomial could run in bf16 (bf16 VPU/EUP)
    # to halve vreg pressure; kept in f32 so the same kernel is exact on v5e.
    return 0.5 * x * (1.0 + _erf(x * (1.0 / math.sqrt(2.0))))


def _layernorm(x, gamma, beta, eps):
    # Matches the torch LayerNormalization module (unbiased std, std + eps).
    # Two-pass (centered) variance + exact reciprocal per the correctness
    # review (avoids E[x^2]-E[x]^2 cancellation and approx-recip drift).
    d = x.shape[-1]
    mean = jnp.sum(x, axis=-1, keepdims=True) * (1.0 / d)
    cent = x - mean
    var = jnp.sum(cent * cent, axis=-1, keepdims=True) * (1.0 / (d - 1))
    inv = 1.0 / (jnp.sqrt(var) + eps)
    return cent * inv * gamma + beta


# ---------------------------------------------------------------------------
# kernel 1: fused QKV projection + head split (hoisted: once per token)
# ---------------------------------------------------------------------------
def qkv_head_proj_kernel(x_ref, wqkv_ref, bqkv_ref, q_ref, k_ref, v_ref, *,
                         num_heads):
    f32, bf16 = jnp.float32, jnp.bfloat16
    D = x_ref.shape[2]
    dk = D // num_heads

    qkv = jnp.dot(x_ref[0], wqkv_ref[...], preferred_element_type=f32)
    qkv = (qkv + bqkv_ref[...]).astype(bf16)                      # (T, 3D)

    # Head split happens here, ONCE per token, so the attention kernel never
    # touches sub-128-lane slices or masked scatter stores per query tile.
    for h in range(num_heads):
        q_ref[0, h] = qkv[:, h * dk:(h + 1) * dk]
        k_ref[0, h] = qkv[:, D + h * dk:D + (h + 1) * dk]
        v_ref[0, h] = qkv[:, 2 * D + h * dk:2 * D + (h + 1) * dk]


# ---------------------------------------------------------------------------
# kernel 2: attention + out-proj + LN1 + FFN + LN2, one (batch, query-tile)
# ---------------------------------------------------------------------------
def encoder_block_kernel(x_ref, q_ref, k_ref, v_ref,
                         wout_ref, bout_ref, g1_ref, be1_ref,
                         w1_ref, b1_ref, w2_ref, b2_ref, g2_ref, be2_ref,
                         o_ref, *, eps):
    f32, bf16 = jnp.float32, jnp.bfloat16
    dk = q_ref.shape[3]
    scale = 1.0 / math.sqrt(dk)

    x_tile = x_ref[0]        # (T, D) f32   residual / LN path stays f32
    qh = q_ref[0]            # (H, T, dk)   bf16 (precomputed, head-major)
    kh = k_ref[0]            # (H, S, dk)   bf16
    vh = v_ref[0]            # (H, S, dk)   bf16

    # --- batched multi-head attention (leading-batch einsums, f32 accum) -----
    # TODO(synk): for long sequences add an 'arbitrary' KV grid axis and go
    # flash-style (online softmax) so the (H, T, S) score tile stays bounded.
    s = jnp.einsum("hqd,hkd->hqk", qh, kh, preferred_element_type=f32) * scale
    s = s - jnp.max(s, axis=-1, keepdims=True)                     # stable
    p = jnp.exp(s)
    p = p * pl.reciprocal(jnp.sum(p, axis=-1, keepdims=True), approx=True)

    ah = jnp.einsum("hqk,hkd->hqd", p.astype(bf16), vh,
                    preferred_element_type=f32)                    # (H, T, dk)

    # --- output projection folded into the head contraction ------------------
    # wout_ref is (H, dk, D): per-head slices of the out-proj weight. Per-head
    # partials are summed in f32 -> no (T, D) scratch, no 32-lane scatter.
    attn = jnp.einsum("hqd,hdo->hqo", ah.astype(bf16), wout_ref[...],
                      preferred_element_type=f32)
    attn = jnp.sum(attn, axis=0) + bout_ref[...]                   # (T, D)

    # --- residual + norm1 (dropout == identity, inference) -------------------
    y = _layernorm(x_tile + attn, g1_ref[...], be1_ref[...], eps)

    # --- feed-forward ---------------------------------------------------------
    # TODO(synk): for production d_ff, add an 'arbitrary' d_ff reduction axis so
    # w1/w2 stream through VMEM in slabs instead of being fully resident (v7x).
    h1 = jnp.dot(y.astype(bf16), w1_ref[...],
                 preferred_element_type=f32) + b1_ref[...]         # (T, dff)
    h1 = _gelu_exact(h1)
    ffn = jnp.dot(h1.astype(bf16), w2_ref[...],
                  preferred_element_type=f32) + b2_ref[...]        # (T, D)

    # --- residual + norm2 -----------------------------------------------------
    out = _layernorm(y + ffn, g2_ref[...], be2_ref[...], eps)
    o_ref[0] = out.astype(o_ref.dtype)


# ---------------------------------------------------------------------------
# wrapper helpers
# ---------------------------------------------------------------------------
def _param_spec(shape, buffered):
    n = len(shape)
    idx = lambda b, i, _n=n: (0,) * _n
    if buffered:
        # Grid-invariant block: one VMEM buffer is enough (halves weight VMEM
        # vs. default double-buffering; matters on v7x's 64 MiB VMEM).
        return pl.BlockSpec(shape, idx, pipeline_mode=pl.Buffered(1))
    return pl.BlockSpec(shape, idx)


def _vmem_limit(est_bytes):
    try:
        phys = int(pltpu.get_tpu_info().vmem_capacity_bytes)
    except Exception:                 # older jax / interpret mode
        phys = 64 << 20               # assume the smallest (v7x-sized) VMEM
    cap = (phys * 3) // 4             # leave compiler-scratch headroom
    return int(max(min(int(est_bytes), cap), 32 << 20))


def _encoder_layer_pallas(x, params, *, num_heads, eps, tile_s, tile_kv,
                          buffered_weights):
    B, S, D = x.shape
    d_ff = params["w1"].shape[1]
    assert D % num_heads == 0
    H = num_heads
    dk = D // H
    tile_s = min(tile_s, S)
    tile_kv = min(tile_kv, S)
    assert S % tile_s == 0 and S % tile_kv == 0

    f32, bf16 = jnp.float32, jnp.bfloat16
    wbuf = 1 if buffered_weights else 2
    dkp = -(-dk // 128) * 128                 # lane-padded head dim in VMEM

    # weights live in HBM as bf16 (half the DMA bytes); biases / LN params f32
    wqkv = params["wqkv"].astype(bf16)                        # (D, 3D)
    bqkv = params["bqkv"].astype(f32)
    wout_h = params["wout"].astype(bf16).reshape(H, dk, D)    # folded out-proj
    w1 = params["w1"].astype(bf16)
    w2 = params["w2"].astype(bf16)
    x_bf16 = x.astype(bf16)                   # single cast for the QKV operand

    # ---- kernel 1: QKV projection + head split (once per token) -------------
    est_qkv = (2 * (tile_kv * D * 2 + 3 * H * tile_kv * dkp * 2)
               + wbuf * (2 * D * 3 * D + 4 * 3 * D)
               + tile_kv * 3 * D * (4 + 2)
               + (4 << 20))
    head_spec = pl.BlockSpec((1, H, tile_kv, dk), lambda b, i: (b, 0, i, 0))
    q_hm, k_hm, v_hm = pl.pallas_call(
        functools.partial(qkv_head_proj_kernel, num_heads=H),
        out_shape=tuple(jax.ShapeDtypeStruct((B, H, S, dk), bf16)
                        for _ in range(3)),
        grid_spec=pltpu.PrefetchScalarGridSpec(
            num_scalar_prefetch=0,
            grid=(B, S // tile_kv),
            in_specs=[
                pl.BlockSpec((1, tile_kv, D), lambda b, i: (b, i, 0)),
                _param_spec((D, 3 * D), buffered_weights),
                _param_spec((1, 3 * D), buffered_weights),
            ],
            out_specs=(head_spec, head_spec, head_spec),
        ),
        compiler_params=pltpu.CompilerParams(
            dimension_semantics=("parallel", "parallel"),
            vmem_limit_bytes=_vmem_limit(est_qkv)),
    )(x_bf16, wqkv, bqkv)

    # ---- kernel 2: attention + out-proj + LN1 + FFN + LN2 -------------------
    est_main = (
        2 * (tile_s * D * 4                   # x tile (f32), double buffered
             + H * tile_s * dkp * 2           # q tile (bf16)
             + 2 * H * S * dkp * 2            # k and v (bf16, full sequence)
             + tile_s * D * 4)                # output tile (f32)
        + wbuf * (2 * (H * dk * D + D * d_ff + d_ff * D)      # bf16 weights
                  + 4 * (7 * D + d_ff))                       # f32 biases / LN
        + 4 * (2 * H * tile_s * S             # scores + probs (f32)
               + H * tile_s * dkp             # per-head attention output
               + H * tile_s * D               # out-proj partial sums
               + 2 * tile_s * d_ff            # FFN hidden (pre/post GELU)
               + 4 * tile_s * D)              # attn / y / ffn / out temps
        + 2 * H * tile_s * S                  # bf16 copy of the probabilities
        + (8 << 20))                          # slack for compiler temporaries

    rep = lambda shape: _param_spec(shape, buffered_weights)
    in_specs = [
        pl.BlockSpec((1, tile_s, D), lambda b, i: (b, i, 0)),         # x (f32)
        pl.BlockSpec((1, H, tile_s, dk), lambda b, i: (b, 0, i, 0)),  # q
        pl.BlockSpec((1, H, S, dk), lambda b, i: (b, 0, 0, 0)),       # k
        pl.BlockSpec((1, H, S, dk), lambda b, i: (b, 0, 0, 0)),       # v
        rep((H, dk, D)), rep((1, D)),                                 # out proj
        rep((1, D)), rep((1, D)),                                     # norm1
        rep((D, d_ff)), rep((1, d_ff)),                               # ffn lin1
        rep((d_ff, D)), rep((1, D)),                                  # ffn lin2
        rep((1, D)), rep((1, D)),                                     # norm2
    ]
    return pl.pallas_call(
        functools.partial(encoder_block_kernel, eps=eps),
        out_shape=jax.ShapeDtypeStruct((B, S, D), x.dtype),
        grid_spec=pltpu.PrefetchScalarGridSpec(
            num_scalar_prefetch=0,
            grid=(B, S // tile_s),
            in_specs=in_specs,
            out_specs=pl.BlockSpec((1, tile_s, D), lambda b, i: (b, i, 0)),
        ),
        compiler_params=pltpu.CompilerParams(
            dimension_semantics=("parallel", "parallel"),
            vmem_limit_bytes=_vmem_limit(est_main)),
    )(x, q_hm, k_hm, v_hm, wout_h, params["bout"],
      params["g1"], params["be1"], w1, params["b1"],
      w2, params["b2"], params["g2"], params["be2"])


def encoder_layer(x, params, *, num_heads, eps=1e-5, tile_s=256, tile_kv=256):
    kwargs = dict(num_heads=num_heads, eps=eps, tile_s=tile_s, tile_kv=tile_kv)
    try:
        out = _encoder_layer_pallas(x, params, buffered_weights=True, **kwargs)
        return jax.block_until_ready(out)
    except Exception:
        # pipeline_mode=pl.Buffered(1) unsupported on this jax/Mosaic version:
        # fall back to default double-buffered weight blocks (same numerics).
        out = _encoder_layer_pallas(x, params, buffered_weights=False, **kwargs)
        return jax.block_until_ready(out)


# ---------------------------------------------------------------------------
# deterministic parameter init (xavier_uniform weights, zero biases,
# ones/zeros for layernorm) — weights created directly as (in, out), f32
# ---------------------------------------------------------------------------
def init_params(key, d_model, d_ff):
    def xavier(k, fan_in, fan_out):
        bound = math.sqrt(6.0 / (fan_in + fan_out))
        return jax.random.uniform(k, (fan_in, fan_out), jnp.float32,
                                  minval=-bound, maxval=bound)

    k1, k2, k3, k4 = jax.random.split(key, 4)
    return {
        "wqkv": xavier(k1, d_model, 3 * d_model),
        "bqkv": jnp.zeros((1, 3 * d_model), jnp.float32),
        "wout": xavier(k2, d_model, d_model),
        "bout": jnp.zeros((1, d_model), jnp.float32),
        "g1": jnp.ones((1, d_model), jnp.float32),
        "be1": jnp.zeros((1, d_model), jnp.float32),
        "w1": xavier(k3, d_model, d_ff),
        "b1": jnp.zeros((1, d_ff), jnp.float32),
        "w2": xavier(k4, d_ff, d_model),
        "b2": jnp.zeros((1, d_model), jnp.float32),
        "g2": jnp.ones((1, d_model), jnp.float32),
        "be2": jnp.zeros((1, d_model), jnp.float32),
    }


# ---------------------------------------------------------------------------
# pure-JAX reference mirroring the kernel precision (bf16 matmul inputs,
# f32 accumulation, exact softmax/LN divisions, exact erf) for sanity check
# ---------------------------------------------------------------------------
def encoder_layer_ref(x, p, *, num_heads, eps=1e-5):
    bf16, f32 = jnp.bfloat16, jnp.float32
    B, S, D = x.shape
    dk = D // num_heads

    def mm(a, w):
        return jnp.dot(a.astype(bf16), w.astype(bf16),
                       preferred_element_type=f32)

    qkv = mm(x, p["wqkv"]) + p["bqkv"]
    q, k, v = qkv[..., :D], qkv[..., D:2 * D], qkv[..., 2 * D:]

    def split(t):
        return t.reshape(B, S, num_heads, dk).transpose(0, 2, 1, 3).astype(bf16)

    qh, kh, vh = split(q), split(k), split(v)
    s = jnp.einsum("bhqd,bhkd->bhqk", qh, kh,
                   preferred_element_type=f32) / math.sqrt(dk)
    w_attn = jax.nn.softmax(s, axis=-1)
    a = jnp.einsum("bhqk,bhkd->bhqd", w_attn.astype(bf16), vh,
                   preferred_element_type=f32)
    a = a.transpose(0, 2, 1, 3).reshape(B, S, D)
    a = mm(a, p["wout"]) + p["bout"]

    def ln(t, g, b):
        m = t.mean(-1, keepdims=True)
        sd = jnp.sqrt(jnp.sum((t - m) ** 2, -1, keepdims=True) / (D - 1))
        return g * (t - m) / (sd + eps) + b

    y = ln(x + a, p["g1"], p["be1"])
    h = mm(y, p["w1"]) + p["b1"]
    h = jax.nn.gelu(h, approximate=False)          # exact erf GELU
    f = mm(h, p["w2"]) + p["b2"]
    return ln(y + f, p["g2"], p["be2"])


if __name__ == "__main__":
    # small but lane-dense shapes: d_model multiple of 128, two query tiles
    B, S, D, H, DFF = 2, 512, 128, 4, 256
    key = jax.random.PRNGKey(0)
    kx, kp = jax.random.split(key)
    x = jax.random.normal(kx, (B, S, D), jnp.float32)
    params = init_params(kp, D, DFF)

    out = encoder_layer(x, params, num_heads=H, tile_s=256, tile_kv=256)
    out = jax.block_until_ready(out)

    ref = encoder_layer_ref(x, params, num_heads=H)
    assert out.shape == (B, S, D)
    err = float(jnp.max(jnp.abs(out - ref)))
    assert jnp.allclose(out, ref, rtol=2e-2, atol=2e-2), f"max abs err {err}"

    print("KERNEL_OK")
</pallas_src>

<mosaic_0001>
module attributes {stable_mosaic.version = 11 : i64} {
  func.func @qkv_head_proj_kernel(%arg0: i32, %arg1: i32, %arg2: memref<1x256x128xbf16, #tpu.memory_space<vmem>>, %arg3: memref<128x384xbf16, #tpu.memory_space<vmem>>, %arg4: memref<1x384xf32, #tpu.memory_space<vmem>>, %arg5: memref<1x4x256x32xbf16, #tpu.memory_space<vmem>>, %arg6: memref<1x4x256x32xbf16, #tpu.memory_space<vmem>>, %arg7: memref<1x4x256x32xbf16, #tpu.memory_space<vmem>>) attributes {dimension_semantics = [#tpu.dimension_semantics<parallel>, #tpu.dimension_semantics<parallel>], iteration_bounds = array<i64: 2, 2>, scalar_prefetch = 0 : i64, scratch_operands = 0 : i64, tpu.core_type = #tpu.core_type<tc>, window_params = [{transform_indices = @transform_0, window_bounds = array<i64: 1, 256, 128>}, {pipeline_mode = #tpu.pipeline_mode<synchronous>, transform_indices = @transform_1, window_bounds = array<i64: 128, 384>}, {pipeline_mode = #tpu.pipeline_mode<synchronous>, transform_indices = @transform_2, window_bounds = array<i64: 1, 384>}, {transform_indices = @transform_3, window_bounds = array<i64: 1, 4, 256, 32>}, {transform_indices = @transform_4, window_bounds = array<i64: 1, 4, 256, 32>}, {transform_indices = @transform_5, window_bounds = array<i64: 1, 4, 256, 32>}]} {
    %c0 = arith.constant 0 : index
    %c0_0 = arith.constant 0 : index
    %c0_1 = arith.constant 0 : index
    %0 = vector.load %arg2[%c0, %c0_0, %c0_1] : memref<1x256x128xbf16, #tpu.memory_space<vmem>>, vector<1x256x128xbf16>
    %1 = vector.shape_cast %0 : vector<1x256x128xbf16> to vector<256x128xbf16>
    %c0_2 = arith.constant 0 : index
    %c0_3 = arith.constant 0 : index
    %2 = vector.load %arg3[%c0_2, %c0_3] : memref<128x384xbf16, #tpu.memory_space<vmem>>, vector<128x384xbf16>
    %cst = arith.constant dense<0.000000e+00> : vector<256x384xf32>
    %3 = tpu.matmul %1, %2, %cst {dimension_numbers = #tpu.dot_dimension_numbers<[1], [0], [0], [1], [0, 0, 1, 1], [], []>} : vector<256x128xbf16>, vector<128x384xbf16>, vector<256x384xf32> -> vector<256x384xf32>
    %c0_4 = arith.constant 0 : index
    %c0_5 = arith.constant 0 : index
    %4 = vector.load %arg4[%c0_4, %c0_5] : memref<1x384xf32, #tpu.memory_space<vmem>>, vector<1x384xf32>
    %5 = vector.broadcast %4 : vector<1x384xf32> to vector<256x384xf32>
    %6 = arith.addf %3, %5 : vector<256x384xf32>
    %7 = arith.truncf %6 : vector<256x384xf32> to vector<256x384xbf16>
    %8 = vector.extract_strided_slice %7 {offsets = [0, 0], sizes = [256, 32], strides = [1, 1]} : vector<256x384xbf16> to vector<256x32xbf16>
    %c0_6 = arith.constant 0 : index
    %c0_7 = arith.constant 0 : index
    %c0_8 = arith.constant 0 : index
    %c0_9 = arith.constant 0 : index
    %9 = vector.load %arg5[%c0_6, %c0_7, %c0_8, %c0_9] : memref<1x4x256x32xbf16, #tpu.memory_space<vmem>>, vector<1x1x256x32xbf16>
    %10 = vector.shape_cast %9 : vector<1x1x256x32xbf16> to vector<256x32xbf16>
    %11 = vector.shape_cast %8 : vector<256x32xbf16> to vector<1x1x256x32xbf16>
    tpu.vector_store %arg5[%c0_6, %c0_7, %c0_8, %c0_9], %11 {strides = array<i32>} : memref<1x4x256x32xbf16, #tpu.memory_space<vmem>>, vector<1x1x256x32xbf16>,
    %12 = vector.extract_strided_slice %7 {offsets = [0, 128], sizes = [256, 32], strides = [1, 1]} : vector<256x384xbf16> to vector<256x32xbf16>
    %c0_10 = arith.constant 0 : index
    %c0_11 = arith.constant 0 : index
    %c0_12 = arith.constant 0 : index
    %c0_13 = arith.constant 0 : index
    %13 = vector.load %arg6[%c0_10, %c0_11, %c0_12, %c0_13] : memref<1x4x256x32xbf16, #tpu.memory_space<vmem>>, vector<1x1x256x32xbf16>
    %14 = vector.shape_cast %13 : vector<1x1x256x32xbf16> to vector<256x32xbf16>
    %15 = vector.shape_cast %12 : vector<256x32xbf16> to vector<1x1x256x32xbf16>
    tpu.vector_store %arg6[%c0_10, %c0_11, %c0_12, %c0_13], %15 {strides = array<i32>} : memref<1x4x256x32xbf16, #tpu.memory_space<vmem>>, vector<1x1x256x32xbf16>,
    %16 = vector.extract_strided_slice %7 {offsets = [0, 256], sizes = [256, 32], strides = [1, 1]} : vector<256x384xbf16> to vector<256x32xbf16>
    %c0_14 = arith.constant 0 : index
    %c0_15 = arith.constant 0 : index
    %c0_16 = arith.constant 0 : index
    %c0_17 = arith.constant 0 : index
    %17 = vector.load %arg7[%c0_14, %c0_15, %c0_16, %c0_17] : memref<1x4x256x32xbf16, #tpu.memory_space<vmem>>, vector<1x1x256x32xbf16>
    %18 = vector.shape_cast %17 : vector<1x1x256x32xbf16> to vector<256x32xbf16>
    %19 = vector.shape_cast %16 : vector<256x32xbf16> to vector<1x1x256x32xbf16>
    tpu.vector_store %arg7[%c0_14, %c0_15, %c0_16, %c0_17], %19 {strides = array<i32>} : memref<1x4x256x32xbf16, #tpu.memory_space<vmem>>, vector<1x1x256x32xbf16>,
    %20 = vector.extract_strided_slice %7 {offsets = [0, 32], sizes = [256, 32], strides = [1, 1]} : vector<256x384xbf16> to vector<256x32xbf16>
    %c0_18 = arith.constant 0 : index
    %c1 = arith.constant 1 : index
    %c0_19 = arith.constant 0 : index
    %c0_20 = arith.constant 0 : index
    %21 = vector.load %arg5[%c0_18, %c1, %c0_19, %c0_20] : memref<1x4x256x32xbf16, #tpu.memory_space<vmem>>, vector<1x1x256x32xbf16>
    %22 = vector.shape_cast %21 : vector<1x1x256x32xbf16> to vector<256x32xbf16>
    %23 = vector.shape_cast %20 : vector<256x32xbf16> to vector<1x1x256x32xbf16>
    tpu.vector_store %arg5[%c0_18, %c1, %c0_19, %c0_20], %23 {strides = array<i32>} : memref<1x4x256x32xbf16, #tpu.memory_space<vmem>>, vector<1x1x256x32xbf16>,
    %24 = vector.extract_strided_slice %7 {offsets = [0, 160], sizes = [256, 32], strides = [1, 1]} : vector<256x384xbf16> to vector<256x32xbf16>
    %c0_21 = arith.constant 0 : index
    %c1_22 = arith.constant 1 : index
    %c0_23 = arith.constant 0 : index
    %c0_24 = arith.constant 0 : index
    %25 = vector.load %arg6[%c0_21, %c1_22, %c0_23, %c0_24] : memref<1x4x256x32xbf16, #tpu.memory_space<vmem>>, vector<1x1x256x32xbf16>
    %26 = vector.shape_cast %25 : vector<1x1x256x32xbf16> to vector<256x32xbf16>
    %27 = vector.shape_cast %24 : vector<256x32xbf16> to vector<1x1x256x32xbf16>
    tpu.vector_store %arg6[%c0_21, %c1_22, %c0_23, %c0_24], %27 {strides = array<i32>} : memref<1x4x256x32xbf16, #tpu.memory_space<vmem>>, vector<1x1x256x32xbf16>,
    %28 = vector.extract_strided_slice %7 {offsets = [0, 288], sizes = [256, 32], strides = [1, 1]} : vector<256x384xbf16> to vector<256x32xbf16>
    %c0_25 = arith.constant 0 : index
    %c1_26 = arith.constant 1 : index
    %c0_27 = arith.constant 0 : index
    %c0_28 = arith.constant 0 : index
    %29 = vector.load %arg7[%c0_25, %c1_26, %c0_27, %c0_28] : memref<1x4x256x32xbf16, #tpu.memory_space<vmem>>, vector<1x1x256x32xbf16>
    %30 = vector.shape_cast %29 : vector<1x1x256x32xbf16> to vector<256x32xbf16>
    %31 = vector.shape_cast %28 : vector<256x32xbf16> to vector<1x1x256x32xbf16>
    tpu.vector_store %arg7[%c0_25, %c1_26, %c0_27, %c0_28], %31 {strides = array<i32>} : memref<1x4x256x32xbf16, #tpu.memory_space<vmem>>, vector<1x1x256x32xbf16>,
    %32 = vector.extract_strided_slice %7 {offsets = [0, 64], sizes = [256, 32], strides = [1, 1]} : vector<256x384xbf16> to vector<256x32xbf16>
    %c0_29 = arith.constant 0 : index
    %c2 = arith.constant 2 : index
    %c0_30 = arith.constant 0 : index
    %c0_31 = arith.constant 0 : index
    %33 = vector.load %arg5[%c0_29, %c2, %c0_30, %c0_31] : memref<1x4x256x32xbf16, #tpu.memory_space<vmem>>, vector<1x1x256x32xbf16>
    %34 = vector.shape_cast %33 : vector<1x1x256x32xbf16> to vector<256x32xbf16>
    %35 = vector.shape_cast %32 : vector<256x32xbf16> to vector<1x1x256x32xbf16>
    tpu.vector_store %arg5[%c0_29, %c2, %c0_30, %c0_31], %35 {strides = array<i32>} : memref<1x4x256x32xbf16, #tpu.memory_space<vmem>>, vector<1x1x256x32xbf16>,
    %36 = vector.extract_strided_slice %7 {offsets = [0, 192], sizes = [256, 32], strides = [1, 1]} : vector<256x384xbf16> to vector<256x32xbf16>
    %c0_32 = arith.constant 0 : index
    %c2_33 = arith.constant 2 : index
    %c0_34 = arith.constant 0 : index
    %c0_35 = arith.constant 0 : index
    %37 = vector.load %arg6[%c0_32, %c2_33, %c0_34, %c0_35] : memref<1x4x256x32xbf16, #tpu.memory_space<vmem>>, vector<1x1x256x32xbf16>
    %38 = vector.shape_cast %37 : vector<1x1x256x32xbf16> to vector<256x32xbf16>
    %39 = vector.shape_cast %36 : vector<256x32xbf16> to vector<1x1x256x32xbf16>
    tpu.vector_store %arg6[%c0_32, %c2_33, %c0_34, %c0_35], %39 {strides = array<i32>} : memref<1x4x256x32xbf16, #tpu.memory_space<vmem>>, vector<1x1x256x32xbf16>,
    %40 = vector.extract_strided_slice %7 {offsets = [0, 320], sizes = [256, 32], strides = [1, 1]} : vector<256x384xbf16> to vector<256x32xbf16>
    %c0_36 = arith.constant 0 : index
    %c2_37 = arith.constant 2 : index
    %c0_38 = arith.constant 0 : index
    %c0_39 = arith.constant 0 : index
    %41 = vector.load %arg7[%c0_36, %c2_37, %c0_38, %c0_39] : memref<1x4x256x32xbf16, #tpu.memory_space<vmem>>, vector<1x1x256x32xbf16>
    %42 = vector.shape_cast %41 : vector<1x1x256x32xbf16> to vector<256x32xbf16>
    %43 = vector.shape_cast %40 : vector<256x32xbf16> to vector<1x1x256x32xbf16>
    tpu.vector_store %arg7[%c0_36, %c2_37, %c0_38, %c0_39], %43 {strides = array<i32>} : memref<1x4x256x32xbf16, #tpu.memory_space<vmem>>, vector<1x1x256x32xbf16>,
    %44 = vector.extract_strided_slice %7 {offsets = [0, 96], sizes = [256, 32], strides = [1, 1]} : vector<256x384xbf16> to vector<256x32xbf16>
    %c0_40 = arith.constant 0 : index
    %c3 = arith.constant 3 : index
    %c0_41 = arith.constant 0 : index
    %c0_42 = arith.constant 0 : index
    %45 = vector.load %arg5[%c0_40, %c3, %c0_41, %c0_42] : memref<1x4x256x32xbf16, #tpu.memory_space<vmem>>, vector<1x1x256x32xbf16>
    %46 = vector.shape_cast %45 : vector<1x1x256x32xbf16> to vector<256x32xbf16>
    %47 = vector.shape_cast %44 : vector<256x32xbf16> to vector<1x1x256x32xbf16>
    tpu.vector_store %arg5[%c0_40, %c3, %c0_41, %c0_42], %47 {strides = array<i32>} : memref<1x4x256x32xbf16, #tpu.memory_space<vmem>>, vector<1x1x256x32xbf16>,
    %48 = vector.extract_strided_slice %7 {offsets = [0, 224], sizes = [256, 32], strides = [1, 1]} : vector<256x384xbf16> to vector<256x32xbf16>
    %c0_43 = arith.constant 0 : index
    %c3_44 = arith.constant 3 : index
    %c0_45 = arith.constant 0 : index
    %c0_46 = arith.constant 0 : index
    %49 = vector.load %arg6[%c0_43, %c3_44, %c0_45, %c0_46] : memref<1x4x256x32xbf16, #tpu.memory_space<vmem>>, vector<1x1x256x32xbf16>
    %50 = vector.shape_cast %49 : vector<1x1x256x32xbf16> to vector<256x32xbf16>
    %51 = vector.shape_cast %48 : vector<256x32xbf16> to vector<1x1x256x32xbf16>
    tpu.vector_store %arg6[%c0_43, %c3_44, %c0_45, %c0_46], %51 {strides = array<i32>} : memref<1x4x256x32xbf16, #tpu.memory_space<vmem>>, vector<1x1x256x32xbf16>,
    %52 = vector.extract_strided_slice %7 {offsets = [0, 352], sizes = [256, 32], strides = [1, 1]} : vector<256x384xbf16> to vector<256x32xbf16>
    %c0_47 = arith.constant 0 : index
    %c3_48 = arith.constant 3 : index
    %c0_49 = arith.constant 0 : index
    %c0_50 = arith.constant 0 : index
    %53 = vector.load %arg7[%c0_47, %c3_48, %c0_49, %c0_50] : memref<1x4x256x32xbf16, #tpu.memory_space<vmem>>, vector<1x1x256x32xbf16>
    %54 = vector.shape_cast %53 : vector<1x1x256x32xbf16> to vector<256x32xbf16>
    %55 = vector.shape_cast %52 : vector<256x32xbf16> to vector<1x1x256x32xbf16>
    tpu.vector_store %arg7[%c0_47, %c3_48, %c0_49, %c0_50], %55 {strides = array<i32>} : memref<1x4x256x32xbf16, #tpu.memory_space<vmem>>, vector<1x1x256x32xbf16>,
    return
  }
  func.func @transform_0(%arg0: i32, %arg1: i32) -> (i32, i32, i32) {
    %c0_i32 = arith.constant 0 : i32
    %c0_i32_0 = arith.constant 0 : i32
    return %arg0, %arg1, %c0_i32 : i32, i32, i32
  }
  func.func @transform_1(%arg0: i32, %arg1: i32) -> (i32, i32) {
    %c0_i32 = arith.constant 0 : i32
    %c0_i32_0 = arith.constant 0 : i32
    %c0_i32_1 = arith.constant 0 : i32
    return %c0_i32, %c0_i32_0 : i32, i32
  }
  func.func @transform_2(%arg0: i32, %arg1: i32) -> (i32, i32) {
    %c0_i32 = arith.constant 0 : i32
    %c0_i32_0 = arith.constant 0 : i32
    %c0_i32_1 = arith.constant 0 : i32
    return %c0_i32, %c0_i32_0 : i32, i32
  }
  func.func @transform_3(%arg0: i32, %arg1: i32) -> (i32, i32, i32, i32) {
    %c0_i32 = arith.constant 0 : i32
    %c0_i32_0 = arith.constant 0 : i32
    %c0_i32_1 = arith.constant 0 : i32
    return %arg0, %c0_i32, %arg1, %c0_i32_0 : i32, i32, i32, i32
  }
  func.func @transform_4(%arg0: i32, %arg1: i32) -> (i32, i32, i32, i32) {
    %c0_i32 = arith.constant 0 : i32
    %c0_i32_0 = arith.constant 0 : i32
    %c0_i32_1 = arith.constant 0 : i32
    return %arg0, %c0_i32, %arg1, %c0_i32_0 : i32, i32, i32, i32
  }
  func.func @transform_5(%arg0: i32, %arg1: i32) -> (i32, i32, i32, i32) {
    %c0_i32 = arith.constant 0 : i32
    %c0_i32_0 = arith.constant 0 : i32
    %c0_i32_1 = arith.constant 0 : i32
    return %arg0, %c0_i32, %arg1, %c0_i32_0 : i32, i32, i32, i32
  }
}

module attributes {stable_mosaic.version = 11 : i64} {
  func.func @qkv_head_proj_kernel(%arg0: i32, %arg1: i32, %arg2: memref<1x256x128xbf16, #tpu.memory_space<vmem>>, %arg3: memref<128x384xbf16, #tpu.memory_space<vmem>>, %arg4: memref<1x384xf32, #tpu.memory_space<vmem>>, %arg5: memref<1x4x256x32xbf16, #tpu.memory_space<vmem>>, %arg6: memref<1x4x256x32xbf16, #tpu.memory_space<vmem>>, %arg7: memref<1x4x256x32xbf16, #tpu.memory_space<vmem>>) attributes {dimension_semantics = [#tpu.dimension_semantics<parallel>, #tpu.dimension_semantics<parallel>], iteration_bounds = array<i64: 2, 2>, scalar_prefetch = 0 : i64, scratch_operands = 0 : i64, tpu.core_type = #tpu.core_type<tc>, window_params = [{transform_indices = @transform_0, window_bounds = array<i64: 1, 256, 128>}, {pipeline_mode = #tpu.pipeline_mode<synchronous>, transform_indices = @transform_1, window_bounds = array<i64: 128, 384>}, {pipeline_mode = #tpu.pipeline_mode<synchronous>, transform_indices = @transform_2, window_bounds = array<i64: 1, 384>}, {transform_indices = @transform_3, window_bounds = array<i64: 1, 4, 256, 32>}, {transform_indices = @transform_4, window_bounds = array<i64: 1, 4, 256, 32>}, {transform_indices = @transform_5, window_bounds = array<i64: 1, 4, 256, 32>}]} {
    %c0 = arith.constant 0 : index
    %c0_0 = arith.constant 0 : index
    %c0_1 = arith.constant 0 : index
    %0 = vector.load %arg2[%c0, %c0_0, %c0_1] : memref<1x256x128xbf16, #tpu.memory_space<vmem>>, vector<1x256x128xbf16>
    %1 = vector.shape_cast %0 : vector<1x256x128xbf16> to vector<256x128xbf16>
    %c0_2 = arith.constant 0 : index
    %c0_3 = arith.constant 0 : index
    %2 = vector.load %arg3[%c0_2, %c0_3] : memref<128x384xbf16, #tpu.memory_space<vmem>>, vector<128x384xbf16>
    %cst = arith.constant dense<0.000000e+00> : vector<256x384xf32>
    %3 = tpu.matmul %1, %2, %cst {dimension_numbers = #tpu.dot_dimension_numbers<[1], [0], [0], [1], [0, 0, 1, 1], [], []>} : vector<256x128xbf16>, vector<128x384xbf16>, vector<256x384xf32> -> vector<256x384xf32>
    %c0_4 = arith.constant 0 : index
    %c0_5 = arith.constant 0 : index
    %4 = vector.load %arg4[%c0_4, %c0_5] : memref<1x384xf32, #tpu.memory_space<vmem>>, vector<1x384xf32>
    %5 = vector.broadcast %4 : vector<1x384xf32> to vector<256x384xf32>
    %6 = arith.addf %3, %5 : vector<256x384xf32>
    %7 = arith.truncf %6 : vector<256x384xf32> to vector<256x384xbf16>
    %8 = vector.extract_strided_slice %7 {offsets = [0, 0], sizes = [256, 32], strides = [1, 1]} : vector<256x384xbf16> to vector<256x32xbf16>
    %c0_6 = arith.constant 0 : index
    %c0_7 = arith.constant 0 : index
    %c0_8 = arith.constant 0 : index
    %c0_9 = arith.constant 0 : index
    %9 = vector.load %arg5[%c0_6, %c0_7, %c0_8, %c0_9] : memref<1x4x256x32xbf16, #tpu.memory_space<vmem>>, vector<1x1x256x32xbf16>
    %10 = vector.shape_cast %9 : vector<1x1x256x32xbf16> to vector<256x32xbf16>
    %11 = vector.shape_cast %8 : vector<256x32xbf16> to vector<1x1x256x32xbf16>
    tpu.vector_store %arg5[%c0_6, %c0_7, %c0_8, %c0_9], %11 {strides = array<i32>} : memref<1x4x256x32xbf16, #tpu.memory_space<vmem>>, vector<1x1x256x32xbf16>,
    %12 = vector.extract_strided_slice %7 {offsets = [0, 128], sizes = [256, 32], strides = [1, 1]} : vector<256x384xbf16> to vector<256x32xbf16>
    %c0_10 = arith.constant 0 : index
    %c0_11 = arith.constant 0 : index
    %c0_12 = arith.constant 0 : index
    %c0_13 = arith.constant 0 : index
    %13 = vector.load %arg6[%c0_10, %c0_11, %c0_12, %c0_13] : memref<1x4x256x32xbf16, #tpu.memory_space<vmem>>, vector<1x1x256x32xbf16>
    %14 = vector.shape_cast %13 : vector<1x1x256x32xbf16> to vector<256x32xbf16>
    %15 = vector.shape_cast %12 : vector<256x32xbf16> to vector<1x1x256x32xbf16>
    tpu.vector_store %arg6[%c0_10, %c0_11, %c0_12, %c0_13], %15 {strides = array<i32>} : memref<1x4x256x32xbf16, #tpu.memory_space<vmem>>, vector<1x1x256x32xbf16>,
    %16 = vector.extract_strided_slice %7 {offsets = [0, 256], sizes = [256, 32], strides = [1, 1]} : vector<256x384xbf16> to vector<256x32xbf16>
    %c0_14 = arith.constant 0 : index
    %c0_15 = arith.constant 0 : index
    %c0_16 = arith.constant 0 : index
    %c0_17 = arith.constant 0 : index
    %17 = vector.load %arg7[%c0_14, %c0_15, %c0_16, %c0_17] : memref<1x4x256x32xbf16, #tpu.memory_space<vmem>>, vector<1x1x256x32xbf16>
    %18 = vector.shape_cast %17 : vector<1x1x256x32xbf16> to vector<256x32xbf16>
    %19 = vector.shape_cast %16 : vector<256x32xbf16> to vector<1x1x256x32xbf16>
    tpu.vector_store %arg7[%c0_14, %c0_15, %c0_16, %c0_17], %19 {strides = array<i32>} : memref<1x4x256x32xbf16, #tpu.memory_space<vmem>>, vector<1x1x256x32xbf16>,
    %20 = vector.extract_strided_slice %7 {offsets = [0, 32], sizes = [256, 32], strides = [1, 1]} : vector<256x384xbf16> to vector<256x32xbf16>
    %c0_18 = arith.constant 0 : index
    %c1 = arith.constant 1 : index
    %c0_19 = arith.constant 0 : index
    %c0_20 = arith.constant 0 : index
    %21 = vector.load %arg5[%c0_18, %c1, %c0_19, %c0_20] : memref<1x4x256x32xbf16, #tpu.memory_space<vmem>>, vector<1x1x256x32xbf16>
    %22 = vector.shape_cast %21 : vector<1x1x256x32xbf16> to vector<256x32xbf16>
    %23 = vector.shape_cast %20 : vector<256x32xbf16> to vector<1x1x256x32xbf16>
    tpu.vector_store %arg5[%c0_18, %c1, %c0_19, %c0_20], %23 {strides = array<i32>} : memref<1x4x256x32xbf16, #tpu.memory_space<vmem>>, vector<1x1x256x32xbf16>,
    %24 = vector.extract_strided_slice %7 {offsets = [0, 160], sizes = [256, 32], strides = [1, 1]} : vector<256x384xbf16> to vector<256x32xbf16>
    %c0_21 = arith.constant 0 : index
    %c1_22 = arith.constant 1 : index
    %c0_23 = arith.constant 0 : index
    %c0_24 = arith.constant 0 : index
    %25 = vector.load %arg6[%c0_21, %c1_22, %c0_23, %c0_24] : memref<1x4x256x32xbf16, #tpu.memory_space<vmem>>, vector<1x1x256x32xbf16>
    %26 = vector.shape_cast %25 : vector<1x1x256x32xbf16> to vector<256x32xbf16>
    %27 = vector.shape_cast %24 : vector<256x32xbf16> to vector<1x1x256x32xbf16>
    tpu.vector_store %arg6[%c0_21, %c1_22, %c0_23, %c0_24], %27 {strides = array<i32>} : memref<1x4x256x32xbf16, #tpu.memory_space<vmem>>, vector<1x1x256x32xbf16>,
    %28 = vector.extract_strided_slice %7 {offsets = [0, 288], sizes = [256, 32], strides = [1, 1]} : vector<256x384xbf16> to vector<256x32xbf16>
    %c0_25 = arith.constant 0 : index
    %c1_26 = arith.constant 1 : index
    %c0_27 = arith.constant 0 : index
    %c0_28 = arith.constant 0 : index
    %29 = vector.load %arg7[%c0_25, %c1_26, %c0_27, %c0_28] : memref<1x4x256x32xbf16, #tpu.memory_space<vmem>>, vector<1x1x256x32xbf16>
    %30 = vector.shape_cast %29 : vector<1x1x256x32xbf16> to vector<256x32xbf16>
    %31 = vector.shape_cast %28 : vector<256x32xbf16> to vector<1x1x256x32xbf16>
    tpu.vector_store %arg7[%c0_25, %c1_26, %c0_27, %c0_28], %31 {strides = array<i32>} : memref<1x4x256x32xbf16, #tpu.memory_space<vmem>>, vector<1x1x256x32xbf16>,
    %32 = vector.extract_strided_slice %7 {offsets = [0, 64], sizes = [256, 32], strides = [1, 1]} : vector<256x384xbf16> to vector<256x32xbf16>
    %c0_29 = arith.constant 0 : index
    %c2 = arith.constant 2 : index
    %c0_30 = arith.constant 0 : index
    %c0_31 = arith.constant 0 : index
    %33 = vector.load %arg5[%c0_29, %c2, %c0_30, %c0_31] : memref<1x4x256x32xbf16, #tpu.memory_space<vmem>>, vector<1x1x256x32xbf16>
    %34 = vector.shape_cast %33 : vector<1x1x256x32xbf16> to vector<256x32xbf16>
    %35 = vector.shape_cast %32 : vector<256x32xbf16> to vector<1x1x256x32xbf16>
    tpu.vector_store %arg5[%c0_29, %c2, %c0_30, %c0_31], %35 {strides = array<i32>} : memref<1x4x256x32xbf16, #tpu.memory_space<vmem>>, vector<1x1x256x32xbf16>,
    %36 = vector.extract_strided_slice %7 {offsets = [0, 192], sizes = [256, 32], strides = [1, 1]} : vector<256x384xbf16> to vector<256x32xbf16>
    %c0_32 = arith.constant 0 : index
    %c2_33 = arith.constant 2 : index
    %c0_34 = arith.constant 0 : index
    %c0_35 = arith.constant 0 : index
    %37 = vector.load %arg6[%c0_32, %c2_33, %c0_34, %c0_35] : memref<1x4x256x32xbf16, #tpu.memory_space<vmem>>, vector<1x1x256x32xbf16>
    %38 = vector.shape_cast %37 : vector<1x1x256x32xbf16> to vector<256x32xbf16>
    %39 = vector.shape_cast %36 : vector<256x32xbf16> to vector<1x1x256x32xbf16>
    tpu.vector_store %arg6[%c0_32, %c2_33, %c0_34, %c0_35], %39 {strides = array<i32>} : memref<1x4x256x32xbf16, #tpu.memory_space<vmem>>, vector<1x1x256x32xbf16>,
    %40 = vector.extract_strided_slice %7 {offsets = [0, 320], sizes = [256, 32], strides = [1, 1]} : vector<256x384xbf16> to vector<256x32xbf16>
    %c0_36 = arith.constant 0 : index
    %c2_37 = arith.constant 2 : index
    %c0_38 = arith.constant 0 : index
    %c0_39 = arith.constant 0 : index
    %41 = vector.load %arg7[%c0_36, %c2_37, %c0_38, %c0_39] : memref<1x4x256x32xbf16, #tpu.memory_space<vmem>>, vector<1x1x256x32xbf16>
    %42 = vector.shape_cast %41 : vector<1x1x256x32xbf16> to vector<256x32xbf16>
    %43 = vector.shape_cast %40 : vector<256x32xbf16> to vector<1x1x256x32xbf16>
    tpu.vector_store %arg7[%c0_36, %c2_37, %c0_38, %c0_39], %43 {strides = array<i32>} : memref<1x4x256x32xbf16, #tpu.memory_space<vmem>>, vector<1x1x256x32xbf16>,
    %44 = vector.extract_strided_slice %7 {offsets = [0, 96], sizes = [256, 32], strides = [1, 1]} : vector<256x384xbf16> to vector<256x32xbf16>
    %c0_40 = arith.constant 0 : index
    %c3 = arith.constant 3 : index
    %c0_41 = arith.constant 0 : index
    %c0_42 = arith.constant 0 : index
    %45 = vector.load %arg5[%c0_40, %c3, %c0_41, %c0_42] : memref<1x4x256x32xbf16, #tpu.memory_space<vmem>>, vector<1x1x256x32xbf16>
    %46 = vector.shape_cast %45 : vector<1x1x256x32xbf16> to vector<256x32xbf16>
    %47 = vector.shape_cast %44 : vector<256x32xbf16> to vector<1x1x256x32xbf16>
    tpu.vector_store %arg5[%c0_40, %c3, %c0_41, %c0_42], %47 {strides = array<i32>} : memref<1x4x256x32xbf16, #tpu.memory_space<vmem>>, vector<1x1x256x32xbf16>,
    %48 = vector.extract_strided_slice %7 {offsets = [0, 224], sizes = [256, 32], strides = [1, 1]} : vector<256x384xbf16> to vector<256x32xbf16>
    %c0_43 = arith.constant 0 : index
    %c3_44 = arith.constant 3 : index
    %c0_45 = arith.constant 0 : index
    %c0_46 = arith.constant 0 : index
    %49 = vector.load %arg6[%c0_43, %c3_44, %c0_45, %c0_46] : memref<1x4x256x32xbf16, #tpu.memory_space<vmem>>, vector<1x1x256x32xbf16>
    %50 = vector.shape_cast %49 : vector<1x1x256x32xbf16> to vector<256x32xbf16>
    %51 = vector.shape_cast %48 : vector<256x32xbf16> to vector<1x1x256x32xbf16>
    tpu.vector_store %arg6[%c0_43, %c3_44, %c0_45, %c0_46], %51 {strides = array<i32>} : memref<1x4x256x32xbf16, #tpu.memory_space<vmem>>, vector<1x1x256x32xbf16>,
    %52 = vector.extract_strided_slice %7 {offsets = [0, 352], sizes = [256, 32], strides = [1, 1]} : vector<256x384xbf16> to vector<256x32xbf16>
    %c0_47 = arith.constant 0 : index
    %c3_48 = arith.constant 3 : index
    %c0_49 = arith.constant 0 : index
    %c0_50 = arith.constant 0 : index
    %53 = vector.load %arg7[%c0_47, %c3_48, %c0_49, %c0_50] : memref<1x4x256x32xbf16, #tpu.memory_space<vmem>>, vector<1x1x256x32xbf16>
    %54 = vector.shape_cast %53 : vector<1x1x256x32xbf16> to vector<256x32xbf16>
    %55 = vector.shape_cast %52 : vector<256x32xbf16> to vector<1x1x256x32xbf16>
    tpu.vector_store %arg7[%c0_47, %c3_48, %c0_49, %c0_50], %55 {strides = array<i32>} : memref<1x4x256x32xbf16, #tpu.memory_space<vmem>>, vector<1x1x256x32xbf16>,
    return
  }
  func.func @transform_0(%arg0: i32, %arg1: i32) -> (i32, i32, i32) {
    %c0_i32 = arith.constant 0 : i32
    %c0_i32_0 = arith.constant 0 : i32
    return %arg0, %arg1, %c0_i32 : i32, i32, i32
  }
  func.func @transform_1(%arg0: i32, %arg1: i32) -> (i32, i32) {
    %c0_i32 = arith.constant 0 : i32
    %c0_i32_0 = arith.constant 0 : i32
    %c0_i32_1 = arith.constant 0 : i32
    return %c0_i32, %c0_i32_0 : i32, i32
  }
  func.func @transform_2(%arg0: i32, %arg1: i32) -> (i32, i32) {
    %c0_i32 = arith.constant 0 : i32
    %c0_i32_0 = arith.constant 0 : i32
    %c0_i32_1 = arith.constant 0 : i32
    return %c0_i32, %c0_i32_0 : i32, i32
  }
  func.func @transform_3(%arg0: i32, %arg1: i32) -> (i32, i32, i32, i32) {
    %c0_i32 = arith.constant 0 : i32
    %c0_i32_0 = arith.constant 0 : i32
    %c0_i32_1 = arith.constant 0 : i32
    return %arg0, %c0_i32, %arg1, %c0_i32_0 : i32, i32, i32, i32
  }
  func.func @transform_4(%arg0: i32, %arg1: i32) -> (i32, i32, i32, i32) {
    %c0_i32 = arith.constant 0 : i32
    %c0_i32_0 = arith.constant 0 : i32
    %c0_i32_1 = arith.constant 0 : i32
    return %arg0, %c0_i32, %arg1, %c0_i32_0 : i32, i32, i32, i32
  }
  func.func @transform_5(%arg0: i32, %arg1: i32) -> (i32, i32, i32, i32) {
    %c0_i32 = arith.constant 0 : i32
    %c0_i32_0 = arith.constant 0 : i32
    %c0_i32_1 = arith.constant 0 : i32
    return %arg0, %c0_i32, %arg1, %c0_i32_0 : i32, i32, i32, i32
  }
}

</mosaic_0001>

<llo_original>
// kernel: tpu_custom_call.1
$region0: #{tpu_custom_call.1}
  #allocation0 [shape = 'u32[]', space=smem, size = 0x4, offset = 0x4, fixed_abs, tag = 'smem constant byte address 0x4 - core index']
  #allocation1 [shape = 'u32[144,128]{1,0:T(1,128)}', space=vmem, size = 0x12000, scoped, tag = 'internal scratch']
  %s0 = inlined_call_operand.hbm [shape: bf16[2,512,128], index: 0, kind: input, shape index: {}]
  %s1 = inlined_call_operand.hbm [shape: bf16[128,384], index: 1, kind: input, shape index: {}]
  %s2 = inlined_call_operand.vmem [shape: f32[1,384], index: 2, kind: input, shape index: {}]
  %s3 = inlined_call_operand.vmem [shape: bf16[2,4,512,32], index: 3, kind: output, shape index: {0}]
  %s4 = inlined_call_operand.vmem [shape: bf16[2,4,512,32], index: 4, kind: output, shape index: {1}]
  %s5 = inlined_call_operand.vmem [shape: bf16[2,4,512,32], index: 5, kind: output, shape index: {2}]
  %6 = xla_tuple %s3, %s4, %s5
  %s7 = sld [smem:[#allocation0]]
  $region180: #{tpu_custom_call.1} parent=0
    _
  %s9 = ssub.s32 1, %s7
  %s10 = scalar_select 0, %s9, %s7
  $region1: #{tpu_custom_call.1} parent=0
    #allocation2 [shape = 'u8[131072]{0}', space=vmem, size = 0x20000, scoped, tag = 'input window, operand 0']
    #allocation3 [shape = 's32[2]{0}', space=sflag, size = 0x8, scoped, tag = 'scoped memory for tpu_custom_call.1']
    #allocation4 [shape = 'u8[98304]{0}', space=vmem, size = 0x18000, scoped, tag = 'input window, operand 1, single buffered']
    #allocation5 [shape = 's32[1]{0}', space=sflag, size = 0x4, scoped, tag = 'scoped memory for tpu_custom_call.1']
    #allocation6 [shape = 'u8[524288]{0}', space=vmem, size = 0x80000, scoped, tag = 'output window, operand 0']
    #allocation7 [shape = 'u8[524288]{0}', space=vmem, size = 0x80000, scoped, tag = 'output window, operand 1']
    #allocation8 [shape = 'u8[524288]{0}', space=vmem, size = 0x80000, scoped, tag = 'output window, operand 2']
    %11 = vsyncpa [#allocation3], 0
    %s12 = scalar_lea.sflag [#allocation3], 1
    %13 = vsyncpa %s12, 0
    %14 = vsyncpa [#allocation5], 0
    loop: start=0, step=1, limit=6
    $region2: #{tpu_custom_call.1} parent=1 // loop_pre_header
      _
    $region3: #{tpu_custom_call.1} parent=1 // loop_header
      %s16 = sphi 0, %s20
      %p17 = scmp.ge.s32.totalorder %s16, 6
      %s23 = sphi 0, %s35
      %s24 = sphi 0, %s31
      %s25 = sphi 0, %s23
      %s26 = sphi 0, %s24
      %s27 = sphi 0, %s25
      %s28 = sphi 0, %s26
      %s40 = sphi 0, %s42
      %s43 = sphi 0, %s40
      %s44 = sphi 0, %s43
      %s60 = sphi 0, %s44
      %s64 = sphi 0, %s64
      %s66 = sphi 0, %s64
      %s67 = sphi 0, %s66
      %s81 = sphi 0, %s67
      %s85 = sphi 0, %s85
      %s87 = sphi 0, %s85
      %s88 = sphi 0, %s87
      %s102 = sphi 0, %s88
      %s110 = sphi 0, %s112
      %s113 = sphi 0, %s110
      %s114 = sphi 0, %s113
      %s130 = sphi 0, %s114
      %s138 = sphi 0, %s140
      %s141 = sphi 0, %s138
      %s142 = sphi 0, %s141
      %s158 = sphi 0, %s142
      %s166 = sphi 0, %s168
      %s169 = sphi 0, %s166
      %s170 = sphi 0, %s169
      %s186 = sphi 0, %s170
    $region4: #{tpu_custom_call.1} parent=1 // loop_header_branch
      %19 = sbr.rel (%p17) target = $region8
    $region5: #{tpu_custom_call.1} parent=1 // loop_body
      %s21 = ssub.s32 %s16, 1
      %s22 = ssub.s32 %s16, 2
      %s29 = sadd.s32 1, %s24
      %p30 = scmp.ge.s32.totalorder %s29, 2
      %s31 = scalar_select %p30, 0, %s29
      %s32 = sadd.s32 1, %s23
      %s33 = scalar_select %p30, %s32, %s23
      %p34 = scmp.ge.s32.totalorder %s33, 2
      %s35 = scalar_select %p34, 0, %s33
      %s36 = ssub.s32 %s23, %s35
      %s37 = ssub.s32 %s24, %s31
      %s38 = sor.u32 %s36, %s37
      %p39 = scmp.eq.s32.totalorder %s38, 0
      %s41 = sadd.s32 %s40, 1
      %s42 = scalar_select %p39, %s40, %s41
      %p45 = pneg %p39
      %p46 = scmp.eq.s32.totalorder %s16, 3
      %p47 = por %p45, %p46
      %p48 = scmp.ne.s32.totalorder %s40, %s43
      %p49 = scmp.eq.s32.totalorder %s16, 0
      %p50 = por %p48, %p49
      %p51 = scmp.ne.s32.totalorder %s40, %s43
      %p52 = scmp.eq.s32.totalorder %s21, 3
      %p53 = por %p51, %p52
      %p54 = scmp.ne.s32.totalorder %s43, %s44
      %p55 = scmp.eq.s32.totalorder %s21, 0
      %p56 = por %p54, %p55
      %p57 = scmp.ne.s32.totalorder %s43, %s44
      %p58 = scmp.eq.s32.totalorder %s22, 3
      %p59 = por %p57, %p58
      %p61 = scmp.ne.s32.totalorder %s44, %s60
      %p62 = scmp.eq.s32.totalorder %s22, 0
      %p63 = por %p61, %p62
      %s65 = sadd.s32 %s64, 1
      %p68 = scmp.eq.s32.totalorder %s16, 3
      %p69 = scmp.ne.s32.totalorder %s64, %s66
      %p70 = scmp.eq.s32.totalorder %s16, 0
      %p71 = por %p69, %p70
      %p72 = scmp.ne.s32.totalorder %s64, %s66
      %p73 = scmp.eq.s32.totalorder %s21, 3
      %p74 = por %p72, %p73
      %p75 = scmp.ne.s32.totalorder %s66, %s67
      %p76 = scmp.eq.s32.totalorder %s21, 0
      %p77 = por %p75, %p76
      %p78 = scmp.ne.s32.totalorder %s66, %s67
      %p79 = scmp.eq.s32.totalorder %s22, 3
      %p80 = por %p78, %p79
      %p82 = scmp.ne.s32.totalorder %s67, %s81
      %p83 = scmp.eq.s32.totalorder %s22, 0
      %p84 = por %p82, %p83
      %s86 = sadd.s32 %s85, 1
      %p89 = scmp.eq.s32.totalorder %s16, 3
      %p90 = scmp.ne.s32.totalorder %s85, %s87
      %p91 = scmp.eq.s32.totalorder %s16, 0
      %p92 = por %p90, %p91
      %p93 = scmp.ne.s32.totalorder %s85, %s87
      %p94 = scmp.eq.s32.totalorder %s21, 3
      %p95 = por %p93, %p94
      %p96 = scmp.ne.s32.totalorder %s87, %s88
      %p97 = scmp.eq.s32.totalorder %s21, 0
      %p98 = por %p96, %p97
      %p99 = scmp.ne.s32.totalorder %s87, %s88
      %p100 = scmp.eq.s32.totalorder %s22, 3
      %p101 = por %p99, %p100
      %p103 = scmp.ne.s32.totalorder %s88, %s102
      %p104 = scmp.eq.s32.totalorder %s22, 0
      %p105 = por %p103, %p104
      %s106 = ssub.s32 %s23, %s35
      %s107 = ssub.s32 %s24, %s31
      %s108 = sor.u32 %s106, %s107
      %p109 = scmp.eq.s32.totalorder %s108, 0
      %s111 = sadd.s32 %s110, 1
      %s112 = scalar_select %p109, %s110, %s111
      %p115 = pneg %p109
      %p116 = scmp.eq.s32.totalorder %s16, 3
      %p117 = por %p115, %p116
      %p118 = scmp.ne.s32.totalorder %s110, %s113
      %p119 = scmp.eq.s32.totalorder %s16, 0
      %p120 = por %p118, %p119
      %p121 = scmp.ne.s32.totalorder %s110, %s113
      %p122 = scmp.eq.s32.totalorder %s21, 3
      %p123 = por %p121, %p122
      %p124 = scmp.ne.s32.totalorder %s113, %s114
      %p125 = scmp.eq.s32.totalorder %s21, 0
      %p126 = por %p124, %p125
      %p127 = scmp.ne.s32.totalorder %s113, %s114
      %p128 = scmp.eq.s32.totalorder %s22, 3
      %p129 = por %p127, %p128
      %p131 = scmp.ne.s32.totalorder %s114, %s130
      %p132 = scmp.eq.s32.totalorder %s22, 0
      %p133 = por %p131, %p132
      %s134 = ssub.s32 %s23, %s35
      %s135 = ssub.s32 %s24, %s31
      %s136 = sor.u32 %s134, %s135
      %p137 = scmp.eq.s32.totalorder %s136, 0
      %s139 = sadd.s32 %s138, 1
      %s140 = scalar_select %p137, %s138, %s139
      %p143 = pneg %p137
      %p144 = scmp.eq.s32.totalorder %s16, 3
      %p145 = por %p143, %p144
      %p146 = scmp.ne.s32.totalorder %s138, %s141
      %p147 = scmp.eq.s32.totalorder %s16, 0
      %p148 = por %p146, %p147
      %p149 = scmp.ne.s32.totalorder %s138, %s141
      %p150 = scmp.eq.s32.totalorder %s21, 3
      %p151 = por %p149, %p150
      %p152 = scmp.ne.s32.totalorder %s141, %s142
      %p153 = scmp.eq.s32.totalorder %s21, 0
      %p154 = por %p152, %p153
      %p155 = scmp.ne.s32.totalorder %s141, %s142
      %p156 = scmp.eq.s32.totalorder %s22, 3
      %p157 = por %p155, %p156
      %p159 = scmp.ne.s32.totalorder %s142, %s158
      %p160 = scmp.eq.s32.totalorder %s22, 0
      %p161 = por %p159, %p160
      %s162 = ssub.s32 %s23, %s35
      %s163 = ssub.s32 %s24, %s31
      %s164 = sor.u32 %s162, %s163
      %p165 = scmp.eq.s32.totalorder %s164, 0
      %s167 = sadd.s32 %s166, 1
      %s168 = scalar_select %p165, %s166, %s167
      %p171 = pneg %p165
      %p172 = scmp.eq.s32.totalorder %s16, 3
      %p173 = por %p171, %p172
      %p174 = scmp.ne.s32.totalorder %s166, %s169
      %p175 = scmp.eq.s32.totalorder %s16, 0
      %p176 = por %p174, %p175
      %p177 = scmp.ne.s32.totalorder %s166, %s169
      %p178 = scmp.eq.s32.totalorder %s21, 3
      %p179 = por %p177, %p178
      %p180 = scmp.ne.s32.totalorder %s169, %s170
      %p181 = scmp.eq.s32.totalorder %s21, 0
      %p182 = por %p180, %p181
      %p183 = scmp.ne.s32.totalorder %s169, %s170
      %p184 = scmp.eq.s32.totalorder %s22, 3
      %p185 = por %p183, %p184
      %p187 = scmp.ne.s32.totalorder %s170, %s186
      %p188 = scmp.eq.s32.totalorder %s22, 0
      %p189 = por %p187, %p188
      %p190 = scmp.le.s32.totalorder 1, %s16
      %p191 = scmp.lt.s32.totalorder %s16, 5
      %p192 = pnand %p190, %p191
      %p193 = pneg %p192
      // Predicated region
      $region9: #{tpu_custom_call.1} parent=5 // pred_check
        _
      $region10: #{tpu_custom_call.1} parent=5 // pred_check_branch
        %195 = sbr.rel (%p192) target = $region12
      $region11: #{tpu_custom_call.1} parent=5 // pred_region
        %s196 = ssub.s32 %s16, 1
        // Predicated region
        $region13: #{tpu_custom_call.1} parent=11 // pred_check
          %p197 = pneg %p77
        $region14: #{tpu_custom_call.1} parent=11 // pred_check_branch
          %199 = sbr.rel (%p197) target = $region16
        $region15: #{tpu_custom_call.1} parent=11 // pred_region
          %s201 = ssub.s32 3072, 3072
          %202 = vsyncadd [#allocation5], %s201
          %s203 = sshll.u32 [#allocation4], 4
          %s204 = int_to_ptr.vmem [resolvable:$true] %s203
          %209 = dma.hbm_to_vmem [thread:$0]  %s1, 3072, %s204, [#allocation5], 192, 192, 12
        $region16: #{tpu_custom_call.1} parent=11 // pred_fallthru
          _
        // Predicated region
        $region17: #{tpu_custom_call.1} parent=11 // pred_check
          %p210 = pneg %p98
        $region18: #{tpu_custom_call.1} parent=11 // pred_check_branch
          %212 = sbr.rel (%p210) target = $region20
        $region19: #{tpu_custom_call.1} parent=11 // pred_region
          _
        $region20: #{tpu_custom_call.1} parent=11 // pred_fallthru
          _
      $region12: #{tpu_custom_call.1} parent=5 // pred_fallthru
        _
      %p213 = scmp.lt.s32.totalorder %s16, 4
      // Predicated region
      $region21: #{tpu_custom_call.1} parent=5 // pred_check
        %p214 = pneg %p213
      $region22: #{tpu_custom_call.1} parent=5 // pred_check_branch
        %216 = sbr.rel (%p214) target = $region24
      $region23: #{tpu_custom_call.1} parent=5 // pred_region
        // Predicated region
        $region25: #{tpu_custom_call.1} parent=23 // pred_check
          %p217 = pneg %p50
        $region26: #{tpu_custom_call.1} parent=23 // pred_check_branch
          %219 = sbr.rel (%p217) target = $region28
        $region27: #{tpu_custom_call.1} parent=23 // pred_region
          %s220 = sand.u32 %s40, 1
          %s221 = scalar_lea.sflag [#allocation3], %s220
          %s222 = sand.u32 %s40, 1
          %s223 = smul.addr %s222, 128
          %s224 = scalar_lea.vmem [#allocation2], %s223
          %s225 = smul.u32 32, %s24
          %s227 = ssub.s32 2048, 2048
          %228 = vsyncadd %s221, %s227
          %s229 = smul.addr %s23, 64
          %s230 = sadd.s32 %s225, %s229
          %s231 = smul.addr %s230, 64
          %s232 = scalar_lea.hbm %s0, %s231
          %s233 = sshll.u32 %s224, 4
          %s234 = int_to_ptr.vmem [resolvable:$true] %s233
          %239 = dma.hbm_to_vmem [thread:$0]  %s232, 2048, %s234, %s221, 64, 64, 4
        $region28: #{tpu_custom_call.1} parent=23 // pred_fallthru
          _
      $region24: #{tpu_custom_call.1} parent=5 // pred_fallthru
        _
      %p240 = scmp.le.s32.totalorder 1, %s16
      %p241 = scmp.lt.s32.totalorder %s16, 5
      %p242 = pnand %p240, %p241
      %p243 = pneg %p242
      // Predicated region
      $region29: #{tpu_custom_call.1} parent=5 // pred_check
        _
      $region30: #{tpu_custom_call.1} parent=5 // pred_check_branch
        %245 = sbr.rel (%p242) target = $region32
      $region31: #{tpu_custom_call.1} parent=5 // pred_region
        %s246 = ssub.s32 %s16, 1
        %s247 = sand.u32 %s43, 1
        %s248 = scalar_lea.sflag [#allocation3], %s247
        %s249 = sand.u32 %s43, 1
        %s250 = smul.addr %s249, 128
        %s251 = scalar_lea.vmem [#allocation2], %s250
        // Predicated region
        $region33: #{tpu_custom_call.1} parent=31 // pred_check
          %p252 = pneg %p56
        $region34: #{tpu_custom_call.1} parent=31 // pred_check_branch
          %254 = sbr.rel (%p252) target = $region36
        $region35: #{tpu_custom_call.1} parent=31 // pred_region
          %255 = dma.done %s248, 2048
        $region36: #{tpu_custom_call.1} parent=31 // pred_fallthru
          _
        // Predicated region
        $region37: #{tpu_custom_call.1} parent=31 // pred_check
          %p256 = pneg %p77
        $region38: #{tpu_custom_call.1} parent=31 // pred_check_branch
          %258 = sbr.rel (%p256) target = $region40
        $region39: #{tpu_custom_call.1} parent=31 // pred_region
          %259 = dma.done [#allocation5], 3072
        $region40: #{tpu_custom_call.1} parent=31 // pred_fallthru
          _
        %s260 = sand.u32 %s43, 1
        %s261 = scalar_lea.sflag [#allocation3], %s260
        %s262 = sand.u32 %s43, 1
        %s263 = smul.addr %s262, 128
        %s264 = scalar_lea.vmem [#allocation2], %s263
        %p265 = pneg %p56
        %p266 = pneg %p53
        %p267 = pneg %p77
        %p268 = pneg %p74
        %p269 = pneg %p98
        %p270 = pneg %p95
        %p271 = pneg %p126
        %p272 = pneg %p123
        %s273 = sand.u32 %s113, 1
        %s274 = sand.u32 %s113, 1
        %s275 = smul.addr %s274, 512
        %s276 = scalar_lea.vmem [#allocation6], %s275
        %p277 = pneg %p154
        %p278 = pneg %p151
        %s279 = sand.u32 %s141, 1
        %s280 = sand.u32 %s141, 1
        %s281 = smul.addr %s280, 512
        %s282 = scalar_lea.vmem [#allocation7], %s281
        %p283 = pneg %p182
        %p284 = pneg %p179
        %s285 = sand.u32 %s169, 1
        %s286 = sand.u32 %s169, 1
        %s287 = smul.addr %s286, 512
        %s288 = scalar_lea.vmem [#allocation8], %s287
        %s289 = smul.u32 32, %s26
        %s290 = smul.u32 32, %s26
        %s291 = smul.u32 32, %s26
        %s292 = smul.u32 32, %s26
        %v294 = vld [vmem:[%s251] sm:$0xf]
        %v295 = vld [vmem:[%s251 + $0x4] sm:$0xf]
        %v296 = vld [vmem:[%s251 + $0x8] sm:$0xf]
        %v297 = vld [vmem:[%s251 + $0xc] sm:$0xf]
        %v298 = vld [vmem:[%s251 + $0x10] sm:$0xf]
        %v299 = vld [vmem:[%s251 + $0x14] sm:$0xf]
        %v300 = vld [vmem:[%s251 + $0x18] sm:$0xf]
        %v301 = vld [vmem:[%s251 + $0x1c] sm:$0xf]
        %v302 = vld [vmem:[%s251 + $0x20] sm:$0xf]
        %v303 = vld [vmem:[%s251 + $0x24] sm:$0xf]
        %v304 = vld [vmem:[%s251 + $0x28] sm:$0xf]
        %v305 = vld [vmem:[%s251 + $0x2c] sm:$0xf]
        %v306 = vld [vmem:[%s251 + $0x30] sm:$0xf]
        %v307 = vld [vmem:[%s251 + $0x34] sm:$0xf]
        %v308 = vld [vmem:[%s251 + $0x38] sm:$0xf]
        %v309 = vld [vmem:[%s251 + $0x3c] sm:$0xf]
        %v310 = vld [vmem:[%s251 + $0x40] sm:$0xf]
        %v311 = vld [vmem:[%s251 + $0x44] sm:$0xf]
        %v312 = vld [vmem:[%s251 + $0x48] sm:$0xf]
        %v313 = vld [vmem:[%s251 + $0x4c] sm:$0xf]
        %v314 = vld [vmem:[%s251 + $0x50] sm:$0xf]
        %v315 = vld [vmem:[%s251 + $0x54] sm:$0xf]
        %v316 = vld [vmem:[%s251 + $0x58] sm:$0xf]
        %v317 = vld [vmem:[%s251 + $0x5c] sm:$0xf]
        %v318 = vld [vmem:[%s251 + $0x60] sm:$0xf]
        %v319 = vld [vmem:[%s251 + $0x64] sm:$0xf]
        %v320 = vld [vmem:[%s251 + $0x68] sm:$0xf]
        %v321 = vld [vmem:[%s251 + $0x6c] sm:$0xf]
        %v322 = vld [vmem:[%s251 + $0x70] sm:$0xf]
        %v323 = vld [vmem:[%s251 + $0x74] sm:$0xf]
        %v324 = vld [vmem:[%s251 + $0x78] sm:$0xf]
        %v325 = vld [vmem:[%s251 + $0x7c] sm:$0xf]
        %v326 = vld [vmem:[#allocation4] sm:$0xff]
        %v327 = vld [vmem:[#allocation4 + $0x8] sm:$0xf]
        %v328 = vld [vmem:[#allocation4 + $0xc] sm:$0xff]
        %v329 = vld [vmem:[#allocation4 + $0x14] sm:$0xf]
        %v330 = vld [vmem:[#allocation4 + $0x18] sm:$0xff]
        %v331 = vld [vmem:[#allocation4 + $0x20] sm:$0xf]
        %v332 = vld [vmem:[#allocation4 + $0x24] sm:$0xff]
        %v333 = vld [vmem:[#allocation4 + $0x2c] sm:$0xf]
        %v334 = vld [vmem:[#allocation4 + $0x30] sm:$0xff]
        %v335 = vld [vmem:[#allocation4 + $0x38] sm:$0xf]
        %v336 = vld [vmem:[#allocation4 + $0x3c] sm:$0xff]
        %v337 = vld [vmem:[#allocation4 + $0x44] sm:$0xf]
        %v338 = vld [vmem:[#allocation4 + $0x48] sm:$0xff]
        %v339 = vld [vmem:[#allocation4 + $0x50] sm:$0xf]
        %v340 = vld [vmem:[#allocation4 + $0x54] sm:$0xff]
        %v341 = vld [vmem:[#allocation4 + $0x5c] sm:$0xf]
        %v342 = vld [vmem:[#allocation4 + $0x60] sm:$0xff]
        %v343 = vld [vmem:[#allocation4 + $0x68] sm:$0xf]
        %v344 = vld [vmem:[#allocation4 + $0x6c] sm:$0xff]
        %v345 = vld [vmem:[#allocation4 + $0x74] sm:$0xf]
        %v346 = vld [vmem:[#allocation4 + $0x78] sm:$0xff]
        %v347 = vld [vmem:[#allocation4 + $0x80] sm:$0xf]
        %v348 = vld [vmem:[#allocation4 + $0x84] sm:$0xff]
        %v349 = vld [vmem:[#allocation4 + $0x8c] sm:$0xf]
        %v350 = vld [vmem:[#allocation4 + $0x90] sm:$0xff]
        %v351 = vld [vmem:[#allocation4 + $0x98] sm:$0xf]
        %v352 = vld [vmem:[#allocation4 + $0x9c] sm:$0xff]
        %v353 = vld [vmem:[#allocation4 + $0xa4] sm:$0xf]
        %v354 = vld [vmem:[#allocation4 + $0xa8] sm:$0xff]
        %v355 = vld [vmem:[#allocation4 + $0xb0] sm:$0xf]
        %v356 = vld [vmem:[#allocation4 + $0xb4] sm:$0xff]
        %v357 = vld [vmem:[#allocation4 + $0xbc] sm:$0xf]
        %v358 = vld [vmem:[%s2] sm:$0x7]
        %v360 = vlaneseq
        %v361 = vshrl.u32 %v360, 7
        %v362 = vsub.s32 0, %v361
        %v363 = vrot.slane %v358, %v362
        %v364 = vlaneseq
        %v365 = vshrl.u32 %v364, 7
        %v366 = vsub.s32 1, %v365
        %v367 = vrot.slane %v358, %v366
        %v368 = vlaneseq
        %v369 = vshrl.u32 %v368, 7
        %v370 = vsub.s32 2, %v369
        %v371 = vrot.slane %v358, %v370
        %v407 = vunpack.c.l.b16 %v294
        %v408 = vunpack.c.l.b16 %v295
        %v409 = vunpack.c.l.b16 %v296
        %v410 = vunpack.c.l.b16 %v297
        %v411 = vunpack.c.l.b16 %v298
        %v412 = vunpack.c.l.b16 %v299
        %v413 = vunpack.c.l.b16 %v300
        %v414 = vunpack.c.l.b16 %v301
        %v415 = vunpack.c.l.b16 %v302
        %v416 = vunpack.c.l.b16 %v303
        %v417 = vunpack.c.l.b16 %v304
        %v418 = vunpack.c.l.b16 %v305
        %v419 = vunpack.c.l.b16 %v306
        %v420 = vunpack.c.l.b16 %v307
        %v421 = vunpack.c.l.b16 %v308
        %v422 = vunpack.c.l.b16 %v309
        %v423 = vunpack.c.l.b16 %v310
        %v424 = vunpack.c.l.b16 %v311
        %v425 = vunpack.c.l.b16 %v312
        %v426 = vunpack.c.l.b16 %v313
        %v427 = vunpack.c.l.b16 %v314
        %v428 = vunpack.c.l.b16 %v315
        %v429 = vunpack.c.l.b16 %v316
        %v430 = vunpack.c.l.b16 %v317
        %v431 = vunpack.c.l.b16 %v318
        %v432 = vunpack.c.l.b16 %v319
        %v433 = vunpack.c.l.b16 %v320
        %v434 = vunpack.c.l.b16 %v321
        %v435 = vunpack.c.l.b16 %v322
        %v436 = vunpack.c.l.b16 %v323
        %v437 = vunpack.c.l.b16 %v324
        %v438 = vunpack.c.l.b16 %v325
        %v439 = vpack.c.b16 %v408, %v407
        %v440 = vpack.c.b16 %v410, %v409
        %v441 = vpack.c.b16 %v412, %v411
        %v442 = vpack.c.b16 %v414, %v413
        %v443 = vpack.c.b16 %v416, %v415
        %v444 = vpack.c.b16 %v418, %v417
        %v445 = vpack.c.b16 %v420, %v419
        %v446 = vpack.c.b16 %v422, %v421
        %v447 = vpack.c.b16 %v424, %v423
        %v448 = vpack.c.b16 %v426, %v425
        %v449 = vpack.c.b16 %v428, %v427
        %v450 = vpack.c.b16 %v430, %v429
        %v451 = vpack.c.b16 %v432, %v431
        %v452 = vpack.c.b16 %v434, %v433
        %v453 = vpack.c.b16 %v436, %v435
        %v454 = vpack.c.b16 %v438, %v437
        %v503 = vunpack.c.l.b16 %v326
        %v504 = vunpack.c.h.b16 %v326
        %v505 = vunpack.c.l.b16 %v327
        %v506 = vunpack.c.l.b16 %v328
        %v507 = vunpack.c.h.b16 %v328
        %v508 = vunpack.c.l.b16 %v329
        %v509 = vunpack.c.l.b16 %v330
        %v510 = vunpack.c.h.b16 %v330
        %v511 = vunpack.c.l.b16 %v331
        %v512 = vunpack.c.l.b16 %v332
        %v513 = vunpack.c.h.b16 %v332
        %v514 = vunpack.c.l.b16 %v333
        %v515 = vunpack.c.l.b16 %v334
        %v516 = vunpack.c.h.b16 %v334
        %v517 = vunpack.c.l.b16 %v335
        %v518 = vunpack.c.l.b16 %v336
        %v519 = vunpack.c.h.b16 %v336
        %v520 = vunpack.c.l.b16 %v337
        %v521 = vunpack.c.l.b16 %v338
        %v522 = vunpack.c.h.b16 %v338
        %v523 = vunpack.c.l.b16 %v339
        %v524 = vunpack.c.l.b16 %v340
        %v525 = vunpack.c.h.b16 %v340
        %v526 = vunpack.c.l.b16 %v341
        %v527 = vunpack.c.l.b16 %v342
        %v528 = vunpack.c.h.b16 %v342
        %v529 = vunpack.c.l.b16 %v343
        %v530 = vunpack.c.l.b16 %v344
        %v531 = vunpack.c.h.b16 %v344
        %v532 = vunpack.c.l.b16 %v345
        %v533 = vunpack.c.l.b16 %v346
        %v534 = vunpack.c.h.b16 %v346
        %v535 = vunpack.c.l.b16 %v347
        %v536 = vunpack.c.l.b16 %v348
        %v537 = vunpack.c.h.b16 %v348
        %v538 = vunpack.c.l.b16 %v349
        %v539 = vunpack.c.l.b16 %v350
        %v540 = vunpack.c.h.b16 %v350
        %v541 = vunpack.c.l.b16 %v351
        %v542 = vunpack.c.l.b16 %v352
        %v543 = vunpack.c.h.b16 %v352
        %v544 = vunpack.c.l.b16 %v353
        %v545 = vunpack.c.l.b16 %v354
        %v546 = vunpack.c.h.b16 %v354
        %v547 = vunpack.c.l.b16 %v355
        %v548 = vunpack.c.l.b16 %v356
        %v549 = vunpack.c.h.b16 %v356
        %v550 = vunpack.c.l.b16 %v357
        %v551 = vpack.c.b16 %v506, %v503
        %v552 = vpack.c.b16 %v507, %v504
        %v553 = vpack.c.b16 %v508, %v505
        %v554 = vpack.c.b16 %v512, %v509
        %v555 = vpack.c.b16 %v513, %v510
        %v556 = vpack.c.b16 %v514, %v511
        %v557 = vpack.c.b16 %v518, %v515
        %v558 = vpack.c.b16 %v519, %v516
        %v559 = vpack.c.b16 %v520, %v517
        %v560 = vpack.c.b16 %v524, %v521
        %v561 = vpack.c.b16 %v525, %v522
        %v562 = vpack.c.b16 %v526, %v523
        %v563 = vpack.c.b16 %v530, %v527
        %v564 = vpack.c.b16 %v531, %v528
        %v565 = vpack.c.b16 %v532, %v529
        %v566 = vpack.c.b16 %v536, %v533
        %v567 = vpack.c.b16 %v537, %v534
        %v568 = vpack.c.b16 %v538, %v535
        %v569 = vpack.c.b16 %v542, %v539
        %v570 = vpack.c.b16 %v543, %v540
        %v571 = vpack.c.b16 %v544, %v541
        %v572 = vpack.c.b16 %v548, %v545
        %v573 = vpack.c.b16 %v549, %v546
        %v574 = vpack.c.b16 %v550, %v547
        %599 = vmatprep.subr.bf16.mxu0 %v552
        %600 = vmatpush1.bf16.msra.mxu0 %v551
        %601 = vmatprep.subr.bf16.mxu0 %v555
        %602 = vmatpush1.bf16.msra.mxu0 %v554
        %603 = vmatprep.subr.bf16.mxu0 %v558
        %604 = vmatpush1.bf16.msra.mxu0 %v557
        %605 = vmatprep.subr.bf16.mxu0 %v561
        %606 = vmatpush1.bf16.msra.mxu0 %v560
        %607 = vmatprep.subr.bf16.mxu0 %v564
        %608 = vmatpush1.bf16.msra.mxu0 %v563
        %609 = vmatprep.subr.bf16.mxu0 %v567
        %610 = vmatpush1.bf16.msra.mxu0 %v566
        %611 = vmatprep.subr.bf16.mxu0 %v570
        %612 = vmatpush1.bf16.msra.mxu0 %v569
        %613 = vmatprep.subr.bf16.mxu0 %v573
        %614 = vmatpush1.bf16.msra.mxu0 %v572
        %615 = vmatprep.subr.bf16.mxu0 0
        %616 = vmatpush1.bf16.msra.mxu0 0
        %617 = vmatprep.subr.bf16.mxu0 0
        %618 = vmatpush1.bf16.msra.mxu0 0
        %619 = vmatprep.subr.bf16.mxu0 0
        %620 = vmatpush1.bf16.msra.mxu0 0
        %621 = vmatprep.subr.bf16.mxu0 0
        %622 = vmatpush1.bf16.msra.mxu0 0
        %623 = vmatprep.subr.bf16.mxu0 0
        %624 = vmatpush1.bf16.msra.mxu0 0
        %625 = vmatprep.subr.bf16.mxu0 0
        %626 = vmatpush1.bf16.msra.mxu0 0
        %627 = vmatprep.subr.bf16.mxu0 0
        %628 = vmatpush1.bf16.msra.mxu0 0
        %629 = vmatprep.subr.bf16.mxu0 0
        %630 = vmatpush1.bf16.msra.mxu0 0
        %631 = vmatprep.mubr.bf16.mxu0 0
        %632 = vmatmul.mubr.bf16.gmra.mrb[0].mxu0 %v439
        %v633 = vpop.f32.mrb[0].mxu0
        %v634 = vadd.f32 %v363, %v633
        %v635 = vpop.f32.mrb[0].mxu0
        %v636 = vadd.f32 %v367, %v635
        %v637 = vpop.f32.mrb[0].mxu0
        %v638 = vadd.f32 %v363, %v637
        %v639 = vpop.f32.mrb[0].mxu0
        %v640 = vadd.f32 %v367, %v639
        %641 = vmatprep.mubr.bf16.mxu0 0
        %642 = vmatmul.mubr.bf16.gmra.mrb[0].mxu0 %v440
        %v643 = vpop.f32.mrb[0].mxu0
        %v644 = vadd.f32 %v363, %v643
        %v645 = vpop.f32.mrb[0].mxu0
        %v646 = vadd.f32 %v367, %v645
        %v647 = vpop.f32.mrb[0].mxu0
        %v648 = vadd.f32 %v363, %v647
        %v649 = vpop.f32.mrb[0].mxu0
        %v650 = vadd.f32 %v367, %v649
        %651 = vmatprep.mubr.bf16.mxu0 0
        %652 = vmatmul.mubr.bf16.gmra.mrb[0].mxu0 %v441
        %v653 = vpop.f32.mrb[0].mxu0
        %v654 = vadd.f32 %v363, %v653
        %v655 = vpop.f32.mrb[0].mxu0
        %v656 = vadd.f32 %v367, %v655
        %v657 = vpop.f32.mrb[0].mxu0
        %v658 = vadd.f32 %v363, %v657
        %v659 = vpop.f32.mrb[0].mxu0
        %v660 = vadd.f32 %v367, %v659
        %661 = vmatprep.mubr.bf16.mxu0 0
        %662 = vmatmul.mubr.bf16.gmra.mrb[0].mxu0 %v442
        %v663 = vpop.f32.mrb[0].mxu0
        %v664 = vadd.f32 %v363, %v663
        %v665 = vpop.f32.mrb[0].mxu0
        %v666 = vadd.f32 %v367, %v665
        %v667 = vpop.f32.mrb[0].mxu0
        %v668 = vadd.f32 %v363, %v667
        %v669 = vpop.f32.mrb[0].mxu0
        %v670 = vadd.f32 %v367, %v669
        %671 = vmatprep.mubr.bf16.mxu0 0
        %672 = vmatmul.mubr.bf16.gmra.mrb[0].mxu0 %v443
        %v673 = vpop.f32.mrb[0].mxu0
        %v674 = vadd.f32 %v363, %v673
        %v675 = vpop.f32.mrb[0].mxu0
        %v676 = vadd.f32 %v367, %v675
        %v677 = vpop.f32.mrb[0].mxu0
        %v678 = vadd.f32 %v363, %v677
        %v679 = vpop.f32.mrb[0].mxu0
        %v680 = vadd.f32 %v367, %v679
        %681 = vmatprep.mubr.bf16.mxu0 0
        %682 = vmatmul.mubr.bf16.gmra.mrb[0].mxu0 %v444
        %v683 = vpop.f32.mrb[0].mxu0
        %v684 = vadd.f32 %v363, %v683
        %v685 = vpop.f32.mrb[0].mxu0
        %v686 = vadd.f32 %v367, %v685
        %v687 = vpop.f32.mrb[0].mxu0
        %v688 = vadd.f32 %v363, %v687
        %v689 = vpop.f32.mrb[0].mxu0
        %v690 = vadd.f32 %v367, %v689
        %691 = vmatprep.mubr.bf16.mxu0 0
        %692 = vmatmul.mubr.bf16.gmra.mrb[0].mxu0 %v445
        %v693 = vpop.f32.mrb[0].mxu0
        %v694 = vadd.f32 %v363, %v693
        %v695 = vpop.f32.mrb[0].mxu0
        %v696 = vadd.f32 %v367, %v695
        %v697 = vpop.f32.mrb[0].mxu0
        %v698 = vadd.f32 %v363, %v697
        %v699 = vpop.f32.mrb[0].mxu0
        %v700 = vadd.f32 %v367, %v699
        %701 = vmatprep.mubr.bf16.mxu0 0
        %702 = vmatmul.mubr.bf16.gmra.mrb[0].mxu0 %v446
        %v703 = vpop.f32.mrb[0].mxu0
        %v704 = vadd.f32 %v363, %v703
        %v705 = vpop.f32.mrb[0].mxu0
        %v706 = vadd.f32 %v367, %v705
        %v707 = vpop.f32.mrb[0].mxu0
        %v708 = vadd.f32 %v363, %v707
        %v709 = vpop.f32.mrb[0].mxu0
        %v710 = vadd.f32 %v367, %v709
        %711 = vmatprep.mubr.bf16.mxu0 0
        %712 = vmatmul.mubr.bf16.gmra.mrb[0].mxu0 %v447
        %v713 = vpop.f32.mrb[0].mxu0
        %v714 = vadd.f32 %v363, %v713
        %v715 = vpop.f32.mrb[0].mxu0
        %v716 = vadd.f32 %v367, %v715
        %v717 = vpop.f32.mrb[0].mxu0
        %v718 = vadd.f32 %v363, %v717
        %v719 = vpop.f32.mrb[0].mxu0
        %v720 = vadd.f32 %v367, %v719
        %721 = vmatprep.mubr.bf16.mxu0 0
        %722 = vmatmul.mubr.bf16.gmra.mrb[0].mxu0 %v448
        %v723 = vpop.f32.mrb[0].mxu0
        %v724 = vadd.f32 %v363, %v723
        %v725 = vpop.f32.mrb[0].mxu0
        %v726 = vadd.f32 %v367, %v725
        %v727 = vpop.f32.mrb[0].mxu0
        %v728 = vadd.f32 %v363, %v727
        %v729 = vpop.f32.mrb[0].mxu0
        %v730 = vadd.f32 %v367, %v729
        %731 = vmatprep.mubr.bf16.mxu0 0
        %732 = vmatmul.mubr.bf16.gmra.mrb[0].mxu0 %v449
        %v733 = vpop.f32.mrb[0].mxu0
        %v734 = vadd.f32 %v363, %v733
        %v735 = vpop.f32.mrb[0].mxu0
        %v736 = vadd.f32 %v367, %v735
        %v737 = vpop.f32.mrb[0].mxu0
        %v738 = vadd.f32 %v363, %v737
        %v739 = vpop.f32.mrb[0].mxu0
        %v740 = vadd.f32 %v367, %v739
        %741 = vmatprep.mubr.bf16.mxu0 0
        %742 = vmatmul.mubr.bf16.gmra.mrb[0].mxu0 %v450
        %v743 = vpop.f32.mrb[0].mxu0
        %v744 = vadd.f32 %v363, %v743
        %v745 = vpop.f32.mrb[0].mxu0
        %v746 = vadd.f32 %v367, %v745
        %v747 = vpop.f32.mrb[0].mxu0
        %v748 = vadd.f32 %v363, %v747
        %v749 = vpop.f32.mrb[0].mxu0
        %v750 = vadd.f32 %v367, %v749
        %751 = vmatprep.mubr.bf16.mxu0 0
        %752 = vmatmul.mubr.bf16.gmra.mrb[0].mxu0 %v451
        %v753 = vpop.f32.mrb[0].mxu0
        %v754 = vadd.f32 %v363, %v753
        %v755 = vpop.f32.mrb[0].mxu0
        %v756 = vadd.f32 %v367, %v755
        %v757 = vpop.f32.mrb[0].mxu0
        %v758 = vadd.f32 %v363, %v757
        %v759 = vpop.f32.mrb[0].mxu0
        %v760 = vadd.f32 %v367, %v759
        %761 = vmatprep.mubr.bf16.mxu0 0
        %762 = vmatmul.mubr.bf16.gmra.mrb[0].mxu0 %v452
        %v763 = vpop.f32.mrb[0].mxu0
        %v764 = vadd.f32 %v363, %v763
        %v765 = vpop.f32.mrb[0].mxu0
        %v766 = vadd.f32 %v367, %v765
        %v767 = vpop.f32.mrb[0].mxu0
        %v768 = vadd.f32 %v363, %v767
        %v769 = vpop.f32.mrb[0].mxu0
        %v770 = vadd.f32 %v367, %v769
        %771 = vmatprep.mubr.bf16.mxu0 0
        %772 = vmatmul.mubr.bf16.gmra.mrb[0].mxu0 %v453
        %v773 = vpop.f32.mrb[0].mxu0
        %v774 = vadd.f32 %v363, %v773
        %v775 = vpop.f32.mrb[0].mxu0
        %v776 = vadd.f32 %v367, %v775
        %v777 = vpop.f32.mrb[0].mxu0
        %v778 = vadd.f32 %v363, %v777
        %v779 = vpop.f32.mrb[0].mxu0
        %v780 = vadd.f32 %v367, %v779
        %781 = vmatprep.mubr.bf16.mxu0 0
        %782 = vmatmul.mubr.bf16.gmra.mrb[0].mxu0 %v454
        %v783 = vpop.f32.mrb[0].mxu0
        %v784 = vadd.f32 %v363, %v783
        %v785 = vpop.f32.mrb[0].mxu0
        %v786 = vadd.f32 %v367, %v785
        %v787 = vpop.f32.mrb[0].mxu0
        %v788 = vadd.f32 %v363, %v787
        %v789 = vpop.f32.mrb[0].mxu0
        %v790 = vadd.f32 %v367, %v789
        %791 = vdwg.mxu0
        %792 = vmatprep.subr.bf16.mxu0 0
        %793 = vmatpush1.bf16.msra.mxu0 %v553
        %794 = vmatprep.subr.bf16.mxu0 0
        %795 = vmatpush1.bf16.msra.mxu0 %v556
        %796 = vmatprep.subr.bf16.mxu0 0
        %797 = vmatpush1.bf16.msra.mxu0 %v559
        %798 = vmatprep.subr.bf16.mxu0 0
        %799 = vmatpush1.bf16.msra.mxu0 %v562
        %800 = vmatprep.subr.bf16.mxu0 0
        %801 = vmatpush1.bf16.msra.mxu0 %v565
        %802 = vmatprep.subr.bf16.mxu0 0
        %803 = vmatpush1.bf16.msra.mxu0 %v568
        %804 = vmatprep.subr.bf16.mxu0 0
        %805 = vmatpush1.bf16.msra.mxu0 %v571
        %806 = vmatprep.subr.bf16.mxu0 0
        %807 = vmatpush1.bf16.msra.mxu0 %v574
        %808 = vmatprep.subr.bf16.mxu0 0
        %809 = vmatpush1.bf16.msra.mxu0 0
        %810 = vmatprep.subr.bf16.mxu0 0
        %811 = vmatpush1.bf16.msra.mxu0 0
        %812 = vmatprep.subr.bf16.mxu0 0
        %813 = vmatpush1.bf16.msra.mxu0 0
        %814 = vmatprep.subr.bf16.mxu0 0
        %815 = vmatpush1.bf16.msra.mxu0 0
        %816 = vmatprep.subr.bf16.mxu0 0
        %817 = vmatpush1.bf16.msra.mxu0 0
        %818 = vmatprep.subr.bf16.mxu0 0
        %819 = vmatpush1.bf16.msra.mxu0 0
        %820 = vmatprep.subr.bf16.mxu0 0
        %821 = vmatpush1.bf16.msra.mxu0 0
        %822 = vmatprep.subr.bf16.mxu0 0
        %823 = vmatpush1.bf16.msra.mxu0 0
        %824 = vmatprep.mubr.bf16.mxu0 0
        %825 = vmatmul.mubr.bf16.gmra.mrb[0].mxu0 %v439
        %v826 = vpop.f32.mrb[0].mxu0
        %v827 = vadd.f32 %v371, %v826
        %v828 = vpop.f32.mrb[0].mxu0
        %v829 = vpop.f32.mrb[0].mxu0
        %v830 = vadd.f32 %v371, %v829
        %v831 = vpop.f32.mrb[0].mxu0
        %832 = vmatprep.mubr.bf16.mxu0 0
        %833 = vmatmul.mubr.bf16.gmra.mrb[0].mxu0 %v440
        %v834 = vpop.f32.mrb[0].mxu0
        %v835 = vadd.f32 %v371, %v834
        %v836 = vpop.f32.mrb[0].mxu0
        %v837 = vpop.f32.mrb[0].mxu0
        %v838 = vadd.f32 %v371, %v837
        %v839 = vpop.f32.mrb[0].mxu0
        %840 = vmatprep.mubr.bf16.mxu0 0
        %841 = vmatmul.mubr.bf16.gmra.mrb[0].mxu0 %v441
        %v842 = vpop.f32.mrb[0].mxu0
        %v843 = vadd.f32 %v371, %v842
        %v844 = vpop.f32.mrb[0].mxu0
        %v845 = vpop.f32.mrb[0].mxu0
        %v846 = vadd.f32 %v371, %v845
        %v847 = vpop.f32.mrb[0].mxu0
        %848 = vmatprep.mubr.bf16.mxu0 0
        %849 = vmatmul.mubr.bf16.gmra.mrb[0].mxu0 %v442
        %v850 = vpop.f32.mrb[0].mxu0
        %v851 = vadd.f32 %v371, %v850
        %v852 = vpop.f32.mrb[0].mxu0
        %v853 = vpop.f32.mrb[0].mxu0
        %v854 = vadd.f32 %v371, %v853
        %v855 = vpop.f32.mrb[0].mxu0
        %856 = vmatprep.mubr.bf16.mxu0 0
        %857 = vmatmul.mubr.bf16.gmra.mrb[0].mxu0 %v443
        %v858 = vpop.f32.mrb[0].mxu0
        %v859 = vadd.f32 %v371, %v858
        %v860 = vpop.f32.mrb[0].mxu0
        %v861 = vpop.f32.mrb[0].mxu0
        %v862 = vadd.f32 %v371, %v861
        %v863 = vpop.f32.mrb[0].mxu0
        %864 = vmatprep.mubr.bf16.mxu0 0
        %865 = vmatmul.mubr.bf16.gmra.mrb[0].mxu0 %v444
        %v866 = vpop.f32.mrb[0].mxu0
        %v867 = vadd.f32 %v371, %v866
        %v868 = vpop.f32.mrb[0].mxu0
        %v869 = vpop.f32.mrb[0].mxu0
        %v870 = vadd.f32 %v371, %v869
        %v871 = vpop.f32.mrb[0].mxu0
        %872 = vmatprep.mubr.bf16.mxu0 0
        %873 = vmatmul.mubr.bf16.gmra.mrb[0].mxu0 %v445
        %v874 = vpop.f32.mrb[0].mxu0
        %v875 = vadd.f32 %v371, %v874
        %v876 = vpop.f32.mrb[0].mxu0
        %v877 = vpop.f32.mrb[0].mxu0
        %v878 = vadd.f32 %v371, %v877
        %v879 = vpop.f32.mrb[0].mxu0
        %880 = vmatprep.mubr.bf16.mxu0 0
        %881 = vmatmul.mubr.bf16.gmra.mrb[0].mxu0 %v446
        %v882 = vpop.f32.mrb[0].mxu0
        %v883 = vadd.f32 %v371, %v882
        %v884 = vpop.f32.mrb[0].mxu0
        %v885 = vpop.f32.mrb[0].mxu0
        %v886 = vadd.f32 %v371, %v885
        %v887 = vpop.f32.mrb[0].mxu0
        %888 = vmatprep.mubr.bf16.mxu0 0
        %889 = vmatmul.mubr.bf16.gmra.mrb[0].mxu0 %v447
        %v890 = vpop.f32.mrb[0].mxu0
        %v891 = vadd.f32 %v371, %v890
        %v892 = vpop.f32.mrb[0].mxu0
        %v893 = vpop.f32.mrb[0].mxu0
        %v894 = vadd.f32 %v371, %v893
        %v895 = vpop.f32.mrb[0].mxu0
        %896 = vmatprep.mubr.bf16.mxu0 0
        %897 = vmatmul.mubr.bf16.gmra.mrb[0].mxu0 %v448
        %v898 = vpop.f32.mrb[0].mxu0
        %v899 = vadd.f32 %v371, %v898
        %v900 = vpop.f32.mrb[0].mxu0
        %v901 = vpop.f32.mrb[0].mxu0
        %v902 = vadd.f32 %v371, %v901
        %v903 = vpop.f32.mrb[0].mxu0
        %904 = vmatprep.mubr.bf16.mxu0 0
        %905 = vmatmul.mubr.bf16.gmra.mrb[0].mxu0 %v449
        %v906 = vpop.f32.mrb[0].mxu0
        %v907 = vadd.f32 %v371, %v906
        %v908 = vpop.f32.mrb[0].mxu0
        %v909 = vpop.f32.mrb[0].mxu0
        %v910 = vadd.f32 %v371, %v909
        %v911 = vpop.f32.mrb[0].mxu0
        %912 = vmatprep.mubr.bf16.mxu0 0
        %913 = vmatmul.mubr.bf16.gmra.mrb[0].mxu0 %v450
        %v914 = vpop.f32.mrb[0].mxu0
        %v915 = vadd.f32 %v371, %v914
        %v916 = vpop.f32.mrb[0].mxu0
        %v917 = vpop.f32.mrb[0].mxu0
        %v918 = vadd.f32 %v371, %v917
        %v919 = vpop.f32.mrb[0].mxu0
        %920 = vmatprep.mubr.bf16.mxu0 0
        %921 = vmatmul.mubr.bf16.gmra.mrb[0].mxu0 %v451
        %v922 = vpop.f32.mrb[0].mxu0
        %v923 = vadd.f32 %v371, %v922
        %v924 = vpop.f32.mrb[0].mxu0
        %v925 = vpop.f32.mrb[0].mxu0
        %v926 = vadd.f32 %v371, %v925
        %v927 = vpop.f32.mrb[0].mxu0
        %928 = vmatprep.mubr.bf16.mxu0 0
        %929 = vmatmul.mubr.bf16.gmra.mrb[0].mxu0 %v452
        %v930 = vpop.f32.mrb[0].mxu0
        %v931 = vadd.f32 %v371, %v930
        %v932 = vpop.f32.mrb[0].mxu0
        %v933 = vpop.f32.mrb[0].mxu0
        %v934 = vadd.f32 %v371, %v933
        %v935 = vpop.f32.mrb[0].mxu0
        %936 = vmatprep.mubr.bf16.mxu0 0
        %937 = vmatmul.mubr.bf16.gmra.mrb[0].mxu0 %v453
        %v938 = vpop.f32.mrb[0].mxu0
        %v939 = vadd.f32 %v371, %v938
        %v940 = vpop.f32.mrb[0].mxu0
        %v941 = vpop.f32.mrb[0].mxu0
        %v942 = vadd.f32 %v371, %v941
        %v943 = vpop.f32.mrb[0].mxu0
        %944 = vmatprep.mubr.bf16.mxu0 0
        %945 = vmatmul.mubr.bf16.gmra.mrb[0].mxu0 %v454
        %v946 = vpop.f32.mrb[0].mxu0
        %v947 = vadd.f32 %v371, %v946
        %v948 = vpop.f32.mrb[0].mxu0
        %v949 = vpop.f32.mrb[0].mxu0
        %v950 = vadd.f32 %v371, %v949
        %v951 = vpop.f32.mrb[0].mxu0
        %952 = vdwg.mxu0
        %v953 = vpack.c.bf16 %v638, %v634
        %v954 = vpack.c.bf16 %v640, %v636
        %v955 = vpack.c.bf16 %v830, %v827
        %v956 = vpack.c.bf16 %v648, %v644
        %v957 = vpack.c.bf16 %v650, %v646
        %v958 = vpack.c.bf16 %v838, %v835
        %v959 = vpack.c.bf16 %v658, %v654
        %v960 = vpack.c.bf16 %v660, %v656
        %v961 = vpack.c.bf16 %v846, %v843
        %v962 = vpack.c.bf16 %v668, %v664
        %v963 = vpack.c.bf16 %v670, %v666
        %v964 = vpack.c.bf16 %v854, %v851
        %v965 = vpack.c.bf16 %v678, %v674
        %v966 = vpack.c.bf16 %v680, %v676
        %v967 = vpack.c.bf16 %v862, %v859
        %v968 = vpack.c.bf16 %v688, %v684
        %v969 = vpack.c.bf16 %v690, %v686
        %v970 = vpack.c.bf16 %v870, %v867
        %v971 = vpack.c.bf16 %v698, %v694
        %v972 = vpack.c.bf16 %v700, %v696
        %v973 = vpack.c.bf16 %v878, %v875
        %v974 = vpack.c.bf16 %v708, %v704
        %v975 = vpack.c.bf16 %v710, %v706
        %v976 = vpack.c.bf16 %v886, %v883
        %v977 = vpack.c.bf16 %v718, %v714
        %v978 = vpack.c.bf16 %v720, %v716
        %v979 = vpack.c.bf16 %v894, %v891
        %v980 = vpack.c.bf16 %v728, %v724
        %v981 = vpack.c.bf16 %v730, %v726
        %v982 = vpack.c.bf16 %v902, %v899
        %v983 = vpack.c.bf16 %v738, %v734
        %v984 = vpack.c.bf16 %v740, %v736
        %v985 = vpack.c.bf16 %v910, %v907
        %v986 = vpack.c.bf16 %v748, %v744
        %v987 = vpack.c.bf16 %v750, %v746
        %v988 = vpack.c.bf16 %v918, %v915
        %v989 = vpack.c.bf16 %v758, %v754
        %v990 = vpack.c.bf16 %v760, %v756
        %v991 = vpack.c.bf16 %v926, %v923
        %v992 = vpack.c.bf16 %v768, %v764
        %v993 = vpack.c.bf16 %v770, %v766
        %v994 = vpack.c.bf16 %v934, %v931
        %v995 = vpack.c.bf16 %v778, %v774
        %v996 = vpack.c.bf16 %v780, %v776
        %v997 = vpack.c.bf16 %v942, %v939
        %v998 = vpack.c.bf16 %v788, %v784
        %v999 = vpack.c.bf16 %v790, %v786
        %v1000 = vpack.c.bf16 %v950, %v947
        %v1017 = vunpack.c.l.b16 %v953
        %v1018 = vunpack.c.h.b16 %v953
        %v1019 = vunpack.c.l.b16 %v956
        %v1020 = vunpack.c.h.b16 %v956
        %v1021 = vunpack.c.l.b16 %v959
        %v1022 = vunpack.c.h.b16 %v959
        %v1023 = vunpack.c.l.b16 %v962
        %v1024 = vunpack.c.h.b16 %v962
        %v1025 = vunpack.c.l.b16 %v965
        %v1026 = vunpack.c.h.b16 %v965
        %v1027 = vunpack.c.l.b16 %v968
        %v1028 = vunpack.c.h.b16 %v968
        %v1029 = vunpack.c.l.b16 %v971
        %v1030 = vunpack.c.h.b16 %v971
        %v1031 = vunpack.c.l.b16 %v974
        %v1032 = vunpack.c.h.b16 %v974
        %v1033 = vunpack.c.l.b16 %v977
        %v1034 = vunpack.c.h.b16 %v977
        %v1035 = vunpack.c.l.b16 %v980
        %v1036 = vunpack.c.h.b16 %v980
        %v1037 = vunpack.c.l.b16 %v983
        %v1038 = vunpack.c.h.b16 %v983
        %v1039 = vunpack.c.l.b16 %v986
        %v1040 = vunpack.c.h.b16 %v986
        %v1041 = vunpack.c.l.b16 %v989
        %v1042 = vunpack.c.h.b16 %v989
        %v1043 = vunpack.c.l.b16 %v992
        %v1044 = vunpack.c.h.b16 %v992
        %v1045 = vunpack.c.l.b16 %v995
        %v1046 = vunpack.c.h.b16 %v995
        %v1047 = vunpack.c.l.b16 %v998
        %v1048 = vunpack.c.h.b16 %v998
        %v1049 = vpack.c.b16 %v1017, %v1017
        %v1050 = vpack.c.b16 %v1018, %v1018
        %v1051 = vpack.c.b16 %v1019, %v1019
        %v1052 = vpack.c.b16 %v1020, %v1020
        %v1053 = vpack.c.b16 %v1021, %v1021
        %v1054 = vpack.c.b16 %v1022, %v1022
        %v1055 = vpack.c.b16 %v1023, %v1023
        %v1056 = vpack.c.b16 %v1024, %v1024
        %v1057 = vpack.c.b16 %v1025, %v1025
        %v1058 = vpack.c.b16 %v1026, %v1026
        %v1059 = vpack.c.b16 %v1027, %v1027
        %v1060 = vpack.c.b16 %v1028, %v1028
        %v1061 = vpack.c.b16 %v1029, %v1029
        %v1062 = vpack.c.b16 %v1030, %v1030
        %v1063 = vpack.c.b16 %v1031, %v1031
        %v1064 = vpack.c.b16 %v1032, %v1032
        %v1065 = vpack.c.b16 %v1033, %v1033
        %v1066 = vpack.c.b16 %v1034, %v1034
        %v1067 = vpack.c.b16 %v1035, %v1035
        %v1068 = vpack.c.b16 %v1036, %v1036
        %v1069 = vpack.c.b16 %v1037, %v1037
        %v1070 = vpack.c.b16 %v1038, %v1038
        %v1071 = vpack.c.b16 %v1039, %v1039
        %v1072 = vpack.c.b16 %v1040, %v1040
        %v1073 = vpack.c.b16 %v1041, %v1041
        %v1074 = vpack.c.b16 %v1042, %v1042
        %v1075 = vpack.c.b16 %v1043, %v1043
        %v1076 = vpack.c.b16 %v1044, %v1044
        %v1077 = vpack.c.b16 %v1045, %v1045
        %v1078 = vpack.c.b16 %v1046, %v1046
        %v1079 = vpack.c.b16 %v1047, %v1047
        %v1080 = vpack.c.b16 %v1048, %v1048
        %vm1113 = vcmask 257024
        %1114 = vst.msk [vmem:[%s276] sm:$0xf] %vm1113, %v1049
        %1115 = vst.msk [vmem:[%s276 + $0x4] sm:$0xf] %vm1113, %v1050
        %1116 = vst.msk [vmem:[%s276 + $0x8] sm:$0xf] %vm1113, %v1051
        %1117 = vst.msk [vmem:[%s276 + $0xc] sm:$0xf] %vm1113, %v1052
        %1118 = vst.msk [vmem:[%s276 + $0x10] sm:$0xf] %vm1113, %v1053
        %1119 = vst.msk [vmem:[%s276 + $0x14] sm:$0xf] %vm1113, %v1054
        %1120 = vst.msk [vmem:[%s276 + $0x18] sm:$0xf] %vm1113, %v1055
        %1121 = vst.msk [vmem:[%s276 + $0x1c] sm:$0xf] %vm1113, %v1056
        %1122 = vst.msk [vmem:[%s276 + $0x20] sm:$0xf] %vm1113, %v1057
        %1123 = vst.msk [vmem:[%s276 + $0x24] sm:$0xf] %vm1113, %v1058
        %1124 = vst.msk [vmem:[%s276 + $0x28] sm:$0xf] %vm1113, %v1059
        %1125 = vst.msk [vmem:[%s276 + $0x2c] sm:$0xf] %vm1113, %v1060
        %1126 = vst.msk [vmem:[%s276 + $0x30] sm:$0xf] %vm1113, %v1061
        %1127 = vst.msk [vmem:[%s276 + $0x34] sm:$0xf] %vm1113, %v1062
        %1128 = vst.msk [vmem:[%s276 + $0x38] sm:$0xf] %vm1113, %v1063
        %1129 = vst.msk [vmem:[%s276 + $0x3c] sm:$0xf] %vm1113, %v1064
        %1130 = vst.msk [vmem:[%s276 + $0x40] sm:$0xf] %vm1113, %v1065
        %1131 = vst.msk [vmem:[%s276 + $0x44] sm:$0xf] %vm1113, %v1066
        %1132 = vst.msk [vmem:[%s276 + $0x48] sm:$0xf] %vm1113, %v1067
        %1133 = vst.msk [vmem:[%s276 + $0x4c] sm:$0xf] %vm1113, %v1068
        %1134 = vst.msk [vmem:[%s276 + $0x50] sm:$0xf] %vm1113, %v1069
        %1135 = vst.msk [vmem:[%s276 + $0x54] sm:$0xf] %vm1113, %v1070
        %1136 = vst.msk [vmem:[%s276 + $0x58] sm:$0xf] %vm1113, %v1071
        %1137 = vst.msk [vmem:[%s276 + $0x5c] sm:$0xf] %vm1113, %v1072
        %1138 = vst.msk [vmem:[%s276 + $0x60] sm:$0xf] %vm1113, %v1073
        %1139 = vst.msk [vmem:[%s276 + $0x64] sm:$0xf] %vm1113, %v1074
        %1140 = vst.msk [vmem:[%s276 + $0x68] sm:$0xf] %vm1113, %v1075
        %1141 = vst.msk [vmem:[%s276 + $0x6c] sm:$0xf] %vm1113, %v1076
        %1142 = vst.msk [vmem:[%s276 + $0x70] sm:$0xf] %vm1113, %v1077
        %1143 = vst.msk [vmem:[%s276 + $0x74] sm:$0xf] %vm1113, %v1078
        %1144 = vst.msk [vmem:[%s276 + $0x78] sm:$0xf] %vm1113, %v1079
        %1145 = vst.msk [vmem:[%s276 + $0x7c] sm:$0xf] %vm1113, %v1080
        %v1162 = vunpack.c.l.b16 %v954
        %v1163 = vunpack.c.h.b16 %v954
        %v1164 = vunpack.c.l.b16 %v957
        %v1165 = vunpack.c.h.b16 %v957
        %v1166 = vunpack.c.l.b16 %v960
        %v1167 = vunpack.c.h.b16 %v960
        %v1168 = vunpack.c.l.b16 %v963
        %v1169 = vunpack.c.h.b16 %v963
        %v1170 = vunpack.c.l.b16 %v966
        %v1171 = vunpack.c.h.b16 %v966
        %v1172 = vunpack.c.l.b16 %v969
        %v1173 = vunpack.c.h.b16 %v969
        %v1174 = vunpack.c.l.b16 %v972
        %v1175 = vunpack.c.h.b16 %v972
        %v1176 = vunpack.c.l.b16 %v975
        %v1177 = vunpack.c.h.b16 %v975
        %v1178 = vunpack.c.l.b16 %v978
        %v1179 = vunpack.c.h.b16 %v978
        %v1180 = vunpack.c.l.b16 %v981
        %v1181 = vunpack.c.h.b16 %v981
        %v1182 = vunpack.c.l.b16 %v984
        %v1183 = vunpack.c.h.b16 %v984
        %v1184 = vunpack.c.l.b16 %v987
        %v1185 = vunpack.c.h.b16 %v987
        %v1186 = vunpack.c.l.b16 %v990
        %v1187 = vunpack.c.h.b16 %v990
        %v1188 = vunpack.c.l.b16 %v993
        %v1189 = vunpack.c.h.b16 %v993
        %v1190 = vunpack.c.l.b16 %v996
        %v1191 = vunpack.c.h.b16 %v996
        %v1192 = vunpack.c.l.b16 %v999
        %v1193 = vunpack.c.h.b16 %v999
        %v1194 = vpack.c.b16 %v1162, %v1162
        %v1195 = vpack.c.b16 %v1163, %v1163
        %v1196 = vpack.c.b16 %v1164, %v1164
        %v1197 = vpack.c.b16 %v1165, %v1165
        %v1198 = vpack.c.b16 %v1166, %v1166
        %v1199 = vpack.c.b16 %v1167, %v1167
        %v1200 = vpack.c.b16 %v1168, %v1168
        %v1201 = vpack.c.b16 %v1169, %v1169
        %v1202 = vpack.c.b16 %v1170, %v1170
        %v1203 = vpack.c.b16 %v1171, %v1171
        %v1204 = vpack.c.b16 %v1172, %v1172
        %v1205 = vpack.c.b16 %v1173, %v1173
        %v1206 = vpack.c.b16 %v1174, %v1174
        %v1207 = vpack.c.b16 %v1175, %v1175
        %v1208 = vpack.c.b16 %v1176, %v1176
        %v1209 = vpack.c.b16 %v1177, %v1177
        %v1210 = vpack.c.b16 %v1178, %v1178
        %v1211 = vpack.c.b16 %v1179, %v1179
        %v1212 = vpack.c.b16 %v1180, %v1180
        %v1213 = vpack.c.b16 %v1181, %v1181
        %v1214 = vpack.c.b16 %v1182, %v1182
        %v1215 = vpack.c.b16 %v1183, %v1183
        %v1216 = vpack.c.b16 %v1184, %v1184
        %v1217 = vpack.c.b16 %v1185, %v1185
        %v1218 = vpack.c.b16 %v1186, %v1186
        %v1219 = vpack.c.b16 %v1187, %v1187
        %v1220 = vpack.c.b16 %v1188, %v1188
        %v1221 = vpack.c.b16 %v1189, %v1189
        %v1222 = vpack.c.b16 %v1190, %v1190
        %v1223 = vpack.c.b16 %v1191, %v1191
        %v1224 = vpack.c.b16 %v1192, %v1192
        %v1225 = vpack.c.b16 %v1193, %v1193
        %1258 = vst.msk [vmem:[%s282] sm:$0xf] %vm1113, %v1194
        %1259 = vst.msk [vmem:[%s282 + $0x4] sm:$0xf] %vm1113, %v1195
        %1260 = vst.msk [vmem:[%s282 + $0x8] sm:$0xf] %vm1113, %v1196
        %1261 = vst.msk [vmem:[%s282 + $0xc] sm:$0xf] %vm1113, %v1197
        %1262 = vst.msk [vmem:[%s282 + $0x10] sm:$0xf] %vm1113, %v1198
        %1263 = vst.msk [vmem:[%s282 + $0x14] sm:$0xf] %vm1113, %v1199
        %1264 = vst.msk [vmem:[%s282 + $0x18] sm:$0xf] %vm1113, %v1200
        %1265 = vst.msk [vmem:[%s282 + $0x1c] sm:$0xf] %vm1113, %v1201
        %1266 = vst.msk [vmem:[%s282 + $0x20] sm:$0xf] %vm1113, %v1202
        %1267 = vst.msk [vmem:[%s282 + $0x24] sm:$0xf] %vm1113, %v1203
        %1268 = vst.msk [vmem:[%s282 + $0x28] sm:$0xf] %vm1113, %v1204
        %1269 = vst.msk [vmem:[%s282 + $0x2c] sm:$0xf] %vm1113, %v1205
        %1270 = vst.msk [vmem:[%s282 + $0x30] sm:$0xf] %vm1113, %v1206
        %1271 = vst.msk [vmem:[%s282 + $0x34] sm:$0xf] %vm1113, %v1207
        %1272 = vst.msk [vmem:[%s282 + $0x38] sm:$0xf] %vm1113, %v1208
        %1273 = vst.msk [vmem:[%s282 + $0x3c] sm:$0xf] %vm1113, %v1209
        %1274 = vst.msk [vmem:[%s282 + $0x40] sm:$0xf] %vm1113, %v1210
        %1275 = vst.msk [vmem:[%s282 + $0x44] sm:$0xf] %vm1113, %v1211
        %1276 = vst.msk [vmem:[%s282 + $0x48] sm:$0xf] %vm1113, %v1212
        %1277 = vst.msk [vmem:[%s282 + $0x4c] sm:$0xf] %vm1113, %v1213
        %1278 = vst.msk [vmem:[%s282 + $0x50] sm:$0xf] %vm1113, %v1214
        %1279 = vst.msk [vmem:[%s282 + $0x54] sm:$0xf] %vm1113, %v1215
        %1280 = vst.msk [vmem:[%s282 + $0x58] sm:$0xf] %vm1113, %v1216
        %1281 = vst.msk [vmem:[%s282 + $0x5c] sm:$0xf] %vm1113, %v1217
        %1282 = vst.msk [vmem:[%s282 + $0x60] sm:$0xf] %vm1113, %v1218
        %1283 = vst.msk [vmem:[%s282 + $0x64] sm:$0xf] %vm1113, %v1219
        %1284 = vst.msk [vmem:[%s282 + $0x68] sm:$0xf] %vm1113, %v1220
        %1285 = vst.msk [vmem:[%s282 + $0x6c] sm:$0xf] %vm1113, %v1221
        %1286 = vst.msk [vmem:[%s282 + $0x70] sm:$0xf] %vm1113, %v1222
        %1287 = vst.msk [vmem:[%s282 + $0x74] sm:$0xf] %vm1113, %v1223
        %1288 = vst.msk [vmem:[%s282 + $0x78] sm:$0xf] %vm1113, %v1224
        %1289 = vst.msk [vmem:[%s282 + $0x7c] sm:$0xf] %vm1113, %v1225
        %v1306 = vunpack.c.l.b16 %v955
        %v1307 = vunpack.c.h.b16 %v955
        %v1308 = vunpack.c.l.b16 %v958
        %v1309 = vunpack.c.h.b16 %v958
        %v1310 = vunpack.c.l.b16 %v961
        %v1311 = vunpack.c.h.b16 %v961
        %v1312 = vunpack.c.l.b16 %v964
        %v1313 = vunpack.c.h.b16 %v964
        %v1314 = vunpack.c.l.b16 %v967
        %v1315 = vunpack.c.h.b16 %v967
        %v1316 = vunpack.c.l.b16 %v970
        %v1317 = vunpack.c.h.b16 %v970
        %v1318 = vunpack.c.l.b16 %v973
        %v1319 = vunpack.c.h.b16 %v973
        %v1320 = vunpack.c.l.b16 %v976
        %v1321 = vunpack.c.h.b16 %v976
        %v1322 = vunpack.c.l.b16 %v979
        %v1323 = vunpack.c.h.b16 %v979
        %v1324 = vunpack.c.l.b16 %v982
        %v1325 = vunpack.c.h.b16 %v982
        %v1326 = vunpack.c.l.b16 %v985
        %v1327 = vunpack.c.h.b16 %v985
        %v1328 = vunpack.c.l.b16 %v988
        %v1329 = vunpack.c.h.b16 %v988
        %v1330 = vunpack.c.l.b16 %v991
        %v1331 = vunpack.c.h.b16 %v991
        %v1332 = vunpack.c.l.b16 %v994
        %v1333 = vunpack.c.h.b16 %v994
        %v1334 = vunpack.c.l.b16 %v997
        %v1335 = vunpack.c.h.b16 %v997
        %v1336 = vunpack.c.l.b16 %v1000
        %v1337 = vunpack.c.h.b16 %v1000
        %v1338 = vpack.c.b16 %v1306, %v1306
        %v1339 = vpack.c.b16 %v1307, %v1307
        %v1340 = vpack.c.b16 %v1308, %v1308
        %v1341 = vpack.c.b16 %v1309, %v1309
        %v1342 = vpack.c.b16 %v1310, %v1310
        %v1343 = vpack.c.b16 %v1311, %v1311
        %v1344 = vpack.c.b16 %v1312, %v1312
        %v1345 = vpack.c.b16 %v1313, %v1313
        %v1346 = vpack.c.b16 %v1314, %v1314
        %v1347 = vpack.c.b16 %v1315, %v1315
        %v1348 = vpack.c.b16 %v1316, %v1316
        %v1349 = vpack.c.b16 %v1317, %v1317
        %v1350 = vpack.c.b16 %v1318, %v1318
        %v1351 = vpack.c.b16 %v1319, %v1319
        %v1352 = vpack.c.b16 %v1320, %v1320
        %v1353 = vpack.c.b16 %v1321, %v1321
        %v1354 = vpack.c.b16 %v1322, %v1322
        %v1355 = vpack.c.b16 %v1323, %v1323
        %v1356 = vpack.c.b16 %v1324, %v1324
        %v1357 = vpack.c.b16 %v1325, %v1325
        %v1358 = vpack.c.b16 %v1326, %v1326
        %v1359 = vpack.c.b16 %v1327, %v1327
        %v1360 = vpack.c.b16 %v1328, %v1328
        %v1361 = vpack.c.b16 %v1329, %v1329
        %v1362 = vpack.c.b16 %v1330, %v1330
        %v1363 = vpack.c.b16 %v1331, %v1331
        %v1364 = vpack.c.b16 %v1332, %v1332
        %v1365 = vpack.c.b16 %v1333, %v1333
        %v1366 = vpack.c.b16 %v1334, %v1334
        %v1367 = vpack.c.b16 %v1335, %v1335
        %v1368 = vpack.c.b16 %v1336, %v1336
        %v1369 = vpack.c.b16 %v1337, %v1337
        %1402 = vst.msk [vmem:[%s288] sm:$0xf] %vm1113, %v1338
        %1403 = vst.msk [vmem:[%s288 + $0x4] sm:$0xf] %vm1113, %v1339
        %1404 = vst.msk [vmem:[%s288 + $0x8] sm:$0xf] %vm1113, %v1340
        %1405 = vst.msk [vmem:[%s288 + $0xc] sm:$0xf] %vm1113, %v1341
        %1406 = vst.msk [vmem:[%s288 + $0x10] sm:$0xf] %vm1113, %v1342
        %1407 = vst.msk [vmem:[%s288 + $0x14] sm:$0xf] %vm1113, %v1343
        %1408 = vst.msk [vmem:[%s288 + $0x18] sm:$0xf] %vm1113, %v1344
        %1409 = vst.msk [vmem:[%s288 + $0x1c] sm:$0xf] %vm1113, %v1345
        %1410 = vst.msk [vmem:[%s288 + $0x20] sm:$0xf] %vm1113, %v1346
        %1411 = vst.msk [vmem:[%s288 + $0x24] sm:$0xf] %vm1113, %v1347
        %1412 = vst.msk [vmem:[%s288 + $0x28] sm:$0xf] %vm1113, %v1348
        %1413 = vst.msk [vmem:[%s288 + $0x2c] sm:$0xf] %vm1113, %v1349
        %1414 = vst.msk [vmem:[%s288 + $0x30] sm:$0xf] %vm1113, %v1350
        %1415 = vst.msk [vmem:[%s288 + $0x34] sm:$0xf] %vm1113, %v1351
        %1416 = vst.msk [vmem:[%s288 + $0x38] sm:$0xf] %vm1113, %v1352
        %1417 = vst.msk [vmem:[%s288 + $0x3c] sm:$0xf] %vm1113, %v1353
        %1418 = vst.msk [vmem:[%s288 + $0x40] sm:$0xf] %vm1113, %v1354
        %1419 = vst.msk [vmem:[%s288 + $0x44] sm:$0xf] %vm1113, %v1355
        %1420 = vst.msk [vmem:[%s288 + $0x48] sm:$0xf] %vm1113, %v1356
        %1421 = vst.msk [vmem:[%s288 + $0x4c] sm:$0xf] %vm1113, %v1357
        %1422 = vst.msk [vmem:[%s288 + $0x50] sm:$0xf] %vm1113, %v1358
        %1423 = vst.msk [vmem:[%s288 + $0x54] sm:$0xf] %vm1113, %v1359
        %1424 = vst.msk [vmem:[%s288 + $0x58] sm:$0xf] %vm1113, %v1360
        %1425 = vst.msk [vmem:[%s288 + $0x5c] sm:$0xf] %vm1113, %v1361
        %1426 = vst.msk [vmem:[%s288 + $0x60] sm:$0xf] %vm1113, %v1362
        %1427 = vst.msk [vmem:[%s288 + $0x64] sm:$0xf] %vm1113, %v1363
        %1428 = vst.msk [vmem:[%s288 + $0x68] sm:$0xf] %vm1113, %v1364
        %1429 = vst.msk [vmem:[%s288 + $0x6c] sm:$0xf] %vm1113, %v1365
        %1430 = vst.msk [vmem:[%s288 + $0x70] sm:$0xf] %vm1113, %v1366
        %1431 = vst.msk [vmem:[%s288 + $0x74] sm:$0xf] %vm1113, %v1367
        %1432 = vst.msk [vmem:[%s288 + $0x78] sm:$0xf] %vm1113, %v1368
        %1433 = vst.msk [vmem:[%s288 + $0x7c] sm:$0xf] %vm1113, %v1369
        %1434 = vrot.lane.b32.xlu0 %v1049, 96
        %v1435 = vpop.permute.xlu0 %1434
        %1436 = vrot.lane.b32.xlu0 %v1050, 96
        %v1437 = vpop.permute.xlu0 %1436
        %1438 = vrot.lane.b32.xlu0 %v1051, 96
        %v1439 = vpop.permute.xlu0 %1438
        %1440 = vrot.lane.b32.xlu0 %v1052, 96
        %v1441 = vpop.permute.xlu0 %1440
        %1442 = vrot.lane.b32.xlu0 %v1053, 96
        %v1443 = vpop.permute.xlu0 %1442
        %1444 = vrot.lane.b32.xlu0 %v1054, 96
        %v1445 = vpop.permute.xlu0 %1444
        %1446 = vrot.lane.b32.xlu0 %v1055, 96
        %v1447 = vpop.permute.xlu0 %1446
        %1448 = vrot.lane.b32.xlu0 %v1056, 96
        %v1449 = vpop.permute.xlu0 %1448
        %1450 = vrot.lane.b32.xlu0 %v1057, 96
        %v1451 = vpop.permute.xlu0 %1450
        %1452 = vrot.lane.b32.xlu0 %v1058, 96
        %v1453 = vpop.permute.xlu0 %1452
        %1454 = vrot.lane.b32.xlu0 %v1059, 96
        %v1455 = vpop.permute.xlu0 %1454
        %1456 = vrot.lane.b32.xlu0 %v1060, 96
        %v1457 = vpop.permute.xlu0 %1456
        %1458 = vrot.lane.b32.xlu0 %v1061, 96
        %v1459 = vpop.permute.xlu0 %1458
        %1460 = vrot.lane.b32.xlu0 %v1062, 96
        %v1461 = vpop.permute.xlu0 %1460
        %1462 = vrot.lane.b32.xlu0 %v1063, 96
        %v1463 = vpop.permute.xlu0 %1462
        %1464 = vrot.lane.b32.xlu0 %v1064, 96
        %v1465 = vpop.permute.xlu0 %1464
        %1466 = vrot.lane.b32.xlu0 %v1065, 96
        %v1467 = vpop.permute.xlu0 %1466
        %1468 = vrot.lane.b32.xlu0 %v1066, 96
        %v1469 = vpop.permute.xlu0 %1468
        %1470 = vrot.lane.b32.xlu0 %v1067, 96
        %v1471 = vpop.permute.xlu0 %1470
        %1472 = vrot.lane.b32.xlu0 %v1068, 96
        %v1473 = vpop.permute.xlu0 %1472
        %1474 = vrot.lane.b32.xlu0 %v1069, 96
        %v1475 = vpop.permute.xlu0 %1474
        %1476 = vrot.lane.b32.xlu0 %v1070, 96
        %v1477 = vpop.permute.xlu0 %1476
        %1478 = vrot.lane.b32.xlu0 %v1071, 96
        %v1479 = vpop.permute.xlu0 %1478
        %1480 = vrot.lane.b32.xlu0 %v1072, 96
        %v1481 = vpop.permute.xlu0 %1480
        %1482 = vrot.lane.b32.xlu0 %v1073, 96
        %v1483 = vpop.permute.xlu0 %1482
        %1484 = vrot.lane.b32.xlu0 %v1074, 96
        %v1485 = vpop.permute.xlu0 %1484
        %1486 = vrot.lane.b32.xlu0 %v1075, 96
        %v1487 = vpop.permute.xlu0 %1486
        %1488 = vrot.lane.b32.xlu0 %v1076, 96
        %v1489 = vpop.permute.xlu0 %1488
        %1490 = vrot.lane.b32.xlu0 %v1077, 96
        %v1491 = vpop.permute.xlu0 %1490
        %1492 = vrot.lane.b32.xlu0 %v1078, 96
        %v1493 = vpop.permute.xlu0 %1492
        %1494 = vrot.lane.b32.xlu0 %v1079, 96
        %v1495 = vpop.permute.xlu0 %1494
        %1496 = vrot.lane.b32.xlu0 %v1080, 96
        %v1497 = vpop.permute.xlu0 %1496
        %s1530 = scalar_lea.vmem %s276, 128 [#allocation6]
        %1531 = vst.msk [vmem:[%s1530] sm:$0xf] %vm1113, %v1435
        %1532 = vst.msk [vmem:[%s1530 + $0x4] sm:$0xf] %vm1113, %v1437
        %1533 = vst.msk [vmem:[%s1530 + $0x8] sm:$0xf] %vm1113, %v1439
        %1534 = vst.msk [vmem:[%s1530 + $0xc] sm:$0xf] %vm1113, %v1441
        %1535 = vst.msk [vmem:[%s1530 + $0x10] sm:$0xf] %vm1113, %v1443
        %1536 = vst.msk [vmem:[%s1530 + $0x14] sm:$0xf] %vm1113, %v1445
        %1537 = vst.msk [vmem:[%s1530 + $0x18] sm:$0xf] %vm1113, %v1447
        %1538 = vst.msk [vmem:[%s1530 + $0x1c] sm:$0xf] %vm1113, %v1449
        %1539 = vst.msk [vmem:[%s1530 + $0x20] sm:$0xf] %vm1113, %v1451
        %1540 = vst.msk [vmem:[%s1530 + $0x24] sm:$0xf] %vm1113, %v1453
        %1541 = vst.msk [vmem:[%s1530 + $0x28] sm:$0xf] %vm1113, %v1455
        %1542 = vst.msk [vmem:[%s1530 + $0x2c] sm:$0xf] %vm1113, %v1457
        %1543 = vst.msk [vmem:[%s1530 + $0x30] sm:$0xf] %vm1113, %v1459
        %1544 = vst.msk [vmem:[%s1530 + $0x34] sm:$0xf] %vm1113, %v1461
        %1545 = vst.msk [vmem:[%s1530 + $0x38] sm:$0xf] %vm1113, %v1463
        %1546 = vst.msk [vmem:[%s1530 + $0x3c] sm:$0xf] %vm1113, %v1465
        %1547 = vst.msk [vmem:[%s1530 + $0x40] sm:$0xf] %vm1113, %v1467
        %1548 = vst.msk [vmem:[%s1530 + $0x44] sm:$0xf] %vm1113, %v1469
        %1549 = vst.msk [vmem:[%s1530 + $0x48] sm:$0xf] %vm1113, %v1471
        %1550 = vst.msk [vmem:[%s1530 + $0x4c] sm:$0xf] %vm1113, %v1473
        %1551 = vst.msk [vmem:[%s1530 + $0x50] sm:$0xf] %vm1113, %v1475
        %1552 = vst.msk [vmem:[%s1530 + $0x54] sm:$0xf] %vm1113, %v1477
        %1553 = vst.msk [vmem:[%s1530 + $0x58] sm:$0xf] %vm1113, %v1479
        %1554 = vst.msk [vmem:[%s1530 + $0x5c] sm:$0xf] %vm1113, %v1481
        %1555 = vst.msk [vmem:[%s1530 + $0x60] sm:$0xf] %vm1113, %v1483
        %1556 = vst.msk [vmem:[%s1530 + $0x64] sm:$0xf] %vm1113, %v1485
        %1557 = vst.msk [vmem:[%s1530 + $0x68] sm:$0xf] %vm1113, %v1487
        %1558 = vst.msk [vmem:[%s1530 + $0x6c] sm:$0xf] %vm1113, %v1489
        %1559 = vst.msk [vmem:[%s1530 + $0x70] sm:$0xf] %vm1113, %v1491
        %1560 = vst.msk [vmem:[%s1530 + $0x74] sm:$0xf] %vm1113, %v1493
        %1561 = vst.msk [vmem:[%s1530 + $0x78] sm:$0xf] %vm1113, %v1495
        %1562 = vst.msk [vmem:[%s1530 + $0x7c] sm:$0xf] %vm1113, %v1497
        %1563 = vrot.lane.b32.xlu0 %v1194, 96
        %v1564 = vpop.permute.xlu0 %1563
        %1565 = vrot.lane.b32.xlu0 %v1195, 96
        %v1566 = vpop.permute.xlu0 %1565
        %1567 = vrot.lane.b32.xlu0 %v1196, 96
        %v1568 = vpop.permute.xlu0 %1567
        %1569 = vrot.lane.b32.xlu0 %v1197, 96
        %v1570 = vpop.permute.xlu0 %1569
        %1571 = vrot.lane.b32.xlu0 %v1198, 96
        %v1572 = vpop.permute.xlu0 %1571
        %1573 = vrot.lane.b32.xlu0 %v1199, 96
        %v1574 = vpop.permute.xlu0 %1573
        %1575 = vrot.lane.b32.xlu0 %v1200, 96
        %v1576 = vpop.permute.xlu0 %1575
        %1577 = vrot.lane.b32.xlu0 %v1201, 96
        %v1578 = vpop.permute.xlu0 %1577
        %1579 = vrot.lane.b32.xlu0 %v1202, 96
        %v1580 = vpop.permute.xlu0 %1579
        %1581 = vrot.lane.b32.xlu0 %v1203, 96
        %v1582 = vpop.permute.xlu0 %1581
        %1583 = vrot.lane.b32.xlu0 %v1204, 96
        %v1584 = vpop.permute.xlu0 %1583
        %1585 = vrot.lane.b32.xlu0 %v1205, 96
        %v1586 = vpop.permute.xlu0 %1585
        %1587 = vrot.lane.b32.xlu0 %v1206, 96
        %v1588 = vpop.permute.xlu0 %1587
        %1589 = vrot.lane.b32.xlu0 %v1207, 96
        %v1590 = vpop.permute.xlu0 %1589
        %1591 = vrot.lane.b32.xlu0 %v1208, 96
        %v1592 = vpop.permute.xlu0 %1591
        %1593 = vrot.lane.b32.xlu0 %v1209, 96
        %v1594 = vpop.permute.xlu0 %1593
        %1595 = vrot.lane.b32.xlu0 %v1210, 96
        %v1596 = vpop.permute.xlu0 %1595
        %1597 = vrot.lane.b32.xlu0 %v1211, 96
        %v1598 = vpop.permute.xlu0 %1597
        %1599 = vrot.lane.b32.xlu0 %v1212, 96
        %v1600 = vpop.permute.xlu0 %1599
        %1601 = vrot.lane.b32.xlu0 %v1213, 96
        %v1602 = vpop.permute.xlu0 %1601
        %1603 = vrot.lane.b32.xlu0 %v1214, 96
        %v1604 = vpop.permute.xlu0 %1603
        %1605 = vrot.lane.b32.xlu0 %v1215, 96
        %v1606 = vpop.permute.xlu0 %1605
        %1607 = vrot.lane.b32.xlu0 %v1216, 96
        %v1608 = vpop.permute.xlu0 %1607
        %1609 = vrot.lane.b32.xlu0 %v1217, 96
        %v1610 = vpop.permute.xlu0 %1609
        %1611 = vrot.lane.b32.xlu0 %v1218, 96
        %v1612 = vpop.permute.xlu0 %1611
        %1613 = vrot.lane.b32.xlu0 %v1219, 96
        %v1614 = vpop.permute.xlu0 %1613
        %1615 = vrot.lane.b32.xlu0 %v1220, 96
        %v1616 = vpop.permute.xlu0 %1615
        %1617 = vrot.lane.b32.xlu0 %v1221, 96
        %v1618 = vpop.permute.xlu0 %1617
        %1619 = vrot.lane.b32.xlu0 %v1222, 96
        %v1620 = vpop.permute.xlu0 %1619
        %1621 = vrot.lane.b32.xlu0 %v1223, 96
        %v1622 = vpop.permute.xlu0 %1621
        %1623 = vrot.lane.b32.xlu0 %v1224, 96
        %v1624 = vpop.permute.xlu0 %1623
        %1625 = vrot.lane.b32.xlu0 %v1225, 96
        %v1626 = vpop.permute.xlu0 %1625
        %s1659 = scalar_lea.vmem %s282, 128 [#allocation7]
        %1660 = vst.msk [vmem:[%s1659] sm:$0xf] %vm1113, %v1564
        %1661 = vst.msk [vmem:[%s1659 + $0x4] sm:$0xf] %vm1113, %v1566
        %1662 = vst.msk [vmem:[%s1659 + $0x8] sm:$0xf] %vm1113, %v1568
        %1663 = vst.msk [vmem:[%s1659 + $0xc] sm:$0xf] %vm1113, %v1570
        %1664 = vst.msk [vmem:[%s1659 + $0x10] sm:$0xf] %vm1113, %v1572
        %1665 = vst.msk [vmem:[%s1659 + $0x14] sm:$0xf] %vm1113, %v1574
        %1666 = vst.msk [vmem:[%s1659 + $0x18] sm:$0xf] %vm1113, %v1576
        %1667 = vst.msk [vmem:[%s1659 + $0x1c] sm:$0xf] %vm1113, %v1578
        %1668 = vst.msk [vmem:[%s1659 + $0x20] sm:$0xf] %vm1113, %v1580
        %1669 = vst.msk [vmem:[%s1659 + $0x24] sm:$0xf] %vm1113, %v1582
        %1670 = vst.msk [vmem:[%s1659 + $0x28] sm:$0xf] %vm1113, %v1584
        %1671 = vst.msk [vmem:[%s1659 + $0x2c] sm:$0xf] %vm1113, %v1586
        %1672 = vst.msk [vmem:[%s1659 + $0x30] sm:$0xf] %vm1113, %v1588
        %1673 = vst.msk [vmem:[%s1659 + $0x34] sm:$0xf] %vm1113, %v1590
        %1674 = vst.msk [vmem:[%s1659 + $0x38] sm:$0xf] %vm1113, %v1592
        %1675 = vst.msk [vmem:[%s1659 + $0x3c] sm:$0xf] %vm1113, %v1594
        %1676 = vst.msk [vmem:[%s1659 + $0x40] sm:$0xf] %vm1113, %v1596
        %1677 = vst.msk [vmem:[%s1659 + $0x44] sm:$0xf] %vm1113, %v1598
        %1678 = vst.msk [vmem:[%s1659 + $0x48] sm:$0xf] %vm1113, %v1600
        %1679 = vst.msk [vmem:[%s1659 + $0x4c] sm:$0xf] %vm1113, %v1602
        %1680 = vst.msk [vmem:[%s1659 + $0x50] sm:$0xf] %vm1113, %v1604
        %1681 = vst.msk [vmem:[%s1659 + $0x54] sm:$0xf] %vm1113, %v1606
        %1682 = vst.msk [vmem:[%s1659 + $0x58] sm:$0xf] %vm1113, %v1608
        %1683 = vst.msk [vmem:[%s1659 + $0x5c] sm:$0xf] %vm1113, %v1610
        %1684 = vst.msk [vmem:[%s1659 + $0x60] sm:$0xf] %vm1113, %v1612
        %1685 = vst.msk [vmem:[%s1659 + $0x64] sm:$0xf] %vm1113, %v1614
        %1686 = vst.msk [vmem:[%s1659 + $0x68] sm:$0xf] %vm1113, %v1616
        %1687 = vst.msk [vmem:[%s1659 + $0x6c] sm:$0xf] %vm1113, %v1618
        %1688 = vst.msk [vmem:[%s1659 + $0x70] sm:$0xf] %vm1113, %v1620
        %1689 = vst.msk [vmem:[%s1659 + $0x74] sm:$0xf] %vm1113, %v1622
        %1690 = vst.msk [vmem:[%s1659 + $0x78] sm:$0xf] %vm1113, %v1624
        %1691 = vst.msk [vmem:[%s1659 + $0x7c] sm:$0xf] %vm1113, %v1626
        %1692 = vrot.lane.b32.xlu0 %v1338, 96
        %v1693 = vpop.permute.xlu0 %1692
        %1694 = vrot.lane.b32.xlu0 %v1339, 96
        %v1695 = vpop.permute.xlu0 %1694
        %1696 = vrot.lane.b32.xlu0 %v1340, 96
        %v1697 = vpop.permute.xlu0 %1696
        %1698 = vrot.lane.b32.xlu0 %v1341, 96
        %v1699 = vpop.permute.xlu0 %1698
        %1700 = vrot.lane.b32.xlu0 %v1342, 96
        %v1701 = vpop.permute.xlu0 %1700
        %1702 = vrot.lane.b32.xlu0 %v1343, 96
        %v1703 = vpop.permute.xlu0 %1702
        %1704 = vrot.lane.b32.xlu0 %v1344, 96
        %v1705 = vpop.permute.xlu0 %1704
        %1706 = vrot.lane.b32.xlu0 %v1345, 96
        %v1707 = vpop.permute.xlu0 %1706
        %1708 = vrot.lane.b32.xlu0 %v1346, 96
        %v1709 = vpop.permute.xlu0 %1708
        %1710 = vrot.lane.b32.xlu0 %v1347, 96
        %v1711 = vpop.permute.xlu0 %1710
        %1712 = vrot.lane.b32.xlu0 %v1348, 96
        %v1713 = vpop.permute.xlu0 %1712
        %1714 = vrot.lane.b32.xlu0 %v1349, 96
        %v1715 = vpop.permute.xlu0 %1714
        %1716 = vrot.lane.b32.xlu0 %v1350, 96
        %v1717 = vpop.permute.xlu0 %1716
        %1718 = vrot.lane.b32.xlu0 %v1351, 96
        %v1719 = vpop.permute.xlu0 %1718
        %1720 = vrot.lane.b32.xlu0 %v1352, 96
        %v1721 = vpop.permute.xlu0 %1720
        %1722 = vrot.lane.b32.xlu0 %v1353, 96
        %v1723 = vpop.permute.xlu0 %1722
        %1724 = vrot.lane.b32.xlu0 %v1354, 96
        %v1725 = vpop.permute.xlu0 %1724
        %1726 = vrot.lane.b32.xlu0 %v1355, 96
        %v1727 = vpop.permute.xlu0 %1726
        %1728 = vrot.lane.b32.xlu0 %v1356, 96
        %v1729 = vpop.permute.xlu0 %1728
        %1730 = vrot.lane.b32.xlu0 %v1357, 96
        %v1731 = vpop.permute.xlu0 %1730
        %1732 = vrot.lane.b32.xlu0 %v1358, 96
        %v1733 = vpop.permute.xlu0 %1732
        %1734 = vrot.lane.b32.xlu0 %v1359, 96
        %v1735 = vpop.permute.xlu0 %1734
        %1736 = vrot.lane.b32.xlu0 %v1360, 96
        %v1737 = vpop.permute.xlu0 %1736
        %1738 = vrot.lane.b32.xlu0 %v1361, 96
        %v1739 = vpop.permute.xlu0 %1738
        %1740 = vrot.lane.b32.xlu0 %v1362, 96
        %v1741 = vpop.permute.xlu0 %1740
        %1742 = vrot.lane.b32.xlu0 %v1363, 96
        %v1743 = vpop.permute.xlu0 %1742
        %1744 = vrot.lane.b32.xlu0 %v1364, 96
        %v1745 = vpop.permute.xlu0 %1744
        %1746 = vrot.lane.b32.xlu0 %v1365, 96
        %v1747 = vpop.permute.xlu0 %1746
        %1748 = vrot.lane.b32.xlu0 %v1366, 96
        %v1749 = vpop.permute.xlu0 %1748
        %1750 = vrot.lane.b32.xlu0 %v1367, 96
        %v1751 = vpop.permute.xlu0 %1750
        %1752 = vrot.lane.b32.xlu0 %v1368, 96
        %v1753 = vpop.permute.xlu0 %1752
        %1754 = vrot.lane.b32.xlu0 %v1369, 96
        %v1755 = vpop.permute.xlu0 %1754
        %s1788 = scalar_lea.vmem %s288, 128 [#allocation8]
        %1789 = vst.msk [vmem:[%s1788] sm:$0xf] %vm1113, %v1693
        %1790 = vst.msk [vmem:[%s1788 + $0x4] sm:$0xf] %vm1113, %v1695
        %1791 = vst.msk [vmem:[%s1788 + $0x8] sm:$0xf] %vm1113, %v1697
        %1792 = vst.msk [vmem:[%s1788 + $0xc] sm:$0xf] %vm1113, %v1699
        %1793 = vst.msk [vmem:[%s1788 + $0x10] sm:$0xf] %vm1113, %v1701
        %1794 = vst.msk [vmem:[%s1788 + $0x14] sm:$0xf] %vm1113, %v1703
        %1795 = vst.msk [vmem:[%s1788 + $0x18] sm:$0xf] %vm1113, %v1705
        %1796 = vst.msk [vmem:[%s1788 + $0x1c] sm:$0xf] %vm1113, %v1707
        %1797 = vst.msk [vmem:[%s1788 + $0x20] sm:$0xf] %vm1113, %v1709
        %1798 = vst.msk [vmem:[%s1788 + $0x24] sm:$0xf] %vm1113, %v1711
        %1799 = vst.msk [vmem:[%s1788 + $0x28] sm:$0xf] %vm1113, %v1713
        %1800 = vst.msk [vmem:[%s1788 + $0x2c] sm:$0xf] %vm1113, %v1715
        %1801 = vst.msk [vmem:[%s1788 + $0x30] sm:$0xf] %vm1113, %v1717
        %1802 = vst.msk [vmem:[%s1788 + $0x34] sm:$0xf] %vm1113, %v1719
        %1803 = vst.msk [vmem:[%s1788 + $0x38] sm:$0xf] %vm1113, %v1721
        %1804 = vst.msk [vmem:[%s1788 + $0x3c] sm:$0xf] %vm1113, %v1723
        %1805 = vst.msk [vmem:[%s1788 + $0x40] sm:$0xf] %vm1113, %v1725
        %1806 = vst.msk [vmem:[%s1788 + $0x44] sm:$0xf] %vm1113, %v1727
        %1807 = vst.msk [vmem:[%s1788 + $0x48] sm:$0xf] %vm1113, %v1729
        %1808 = vst.msk [vmem:[%s1788 + $0x4c] sm:$0xf] %vm1113, %v1731
        %1809 = vst.msk [vmem:[%s1788 + $0x50] sm:$0xf] %vm1113, %v1733
        %1810 = vst.msk [vmem:[%s1788 + $0x54] sm:$0xf] %vm1113, %v1735
        %1811 = vst.msk [vmem:[%s1788 + $0x58] sm:$0xf] %vm1113, %v1737
        %1812 = vst.msk [vmem:[%s1788 + $0x5c] sm:$0xf] %vm1113, %v1739
        %1813 = vst.msk [vmem:[%s1788 + $0x60] sm:$0xf] %vm1113, %v1741
        %1814 = vst.msk [vmem:[%s1788 + $0x64] sm:$0xf] %vm1113, %v1743
        %1815 = vst.msk [vmem:[%s1788 + $0x68] sm:$0xf] %vm1113, %v1745
        %1816 = vst.msk [vmem:[%s1788 + $0x6c] sm:$0xf] %vm1113, %v1747
        %1817 = vst.msk [vmem:[%s1788 + $0x70] sm:$0xf] %vm1113, %v1749
        %1818 = vst.msk [vmem:[%s1788 + $0x74] sm:$0xf] %vm1113, %v1751
        %1819 = vst.msk [vmem:[%s1788 + $0x78] sm:$0xf] %vm1113, %v1753
        %1820 = vst.msk [vmem:[%s1788 + $0x7c] sm:$0xf] %vm1113, %v1755
        %1821 = vrot.lane.b32.xlu0 %v1049, 64
        %v1822 = vpop.permute.xlu0 %1821
        %1823 = vrot.lane.b32.xlu0 %v1050, 64
        %v1824 = vpop.permute.xlu0 %1823
        %1825 = vrot.lane.b32.xlu0 %v1051, 64
        %v1826 = vpop.permute.xlu0 %1825
        %1827 = vrot.lane.b32.xlu0 %v1052, 64
        %v1828 = vpop.permute.xlu0 %1827
        %1829 = vrot.lane.b32.xlu0 %v1053, 64
        %v1830 = vpop.permute.xlu0 %1829
        %1831 = vrot.lane.b32.xlu0 %v1054, 64
        %v1832 = vpop.permute.xlu0 %1831
        %1833 = vrot.lane.b32.xlu0 %v1055, 64
        %v1834 = vpop.permute.xlu0 %1833
        %1835 = vrot.lane.b32.xlu0 %v1056, 64
        %v1836 = vpop.permute.xlu0 %1835
        %1837 = vrot.lane.b32.xlu0 %v1057, 64
        %v1838 = vpop.permute.xlu0 %1837
        %1839 = vrot.lane.b32.xlu0 %v1058, 64
        %v1840 = vpop.permute.xlu0 %1839
        %1841 = vrot.lane.b32.xlu0 %v1059, 64
        %v1842 = vpop.permute.xlu0 %1841
        %1843 = vrot.lane.b32.xlu0 %v1060, 64
        %v1844 = vpop.permute.xlu0 %1843
        %1845 = vrot.lane.b32.xlu0 %v1061, 64
        %v1846 = vpop.permute.xlu0 %1845
        %1847 = vrot.lane.b32.xlu0 %v1062, 64
        %v1848 = vpop.permute.xlu0 %1847
        %1849 = vrot.lane.b32.xlu0 %v1063, 64
        %v1850 = vpop.permute.xlu0 %1849
        %1851 = vrot.lane.b32.xlu0 %v1064, 64
        %v1852 = vpop.permute.xlu0 %1851
        %1853 = vrot.lane.b32.xlu0 %v1065, 64
        %v1854 = vpop.permute.xlu0 %1853
        %1855 = vrot.lane.b32.xlu0 %v1066, 64
        %v1856 = vpop.permute.xlu0 %1855
        %1857 = vrot.lane.b32.xlu0 %v1067, 64
        %v1858 = vpop.permute.xlu0 %1857
        %1859 = vrot.lane.b32.xlu0 %v1068, 64
        %v1860 = vpop.permute.xlu0 %1859
        %1861 = vrot.lane.b32.xlu0 %v1069, 64
        %v1862 = vpop.permute.xlu0 %1861
        %1863 = vrot.lane.b32.xlu0 %v1070, 64
        %v1864 = vpop.permute.xlu0 %1863
        %1865 = vrot.lane.b32.xlu0 %v1071, 64
        %v1866 = vpop.permute.xlu0 %1865
        %1867 = vrot.lane.b32.xlu0 %v1072, 64
        %v1868 = vpop.permute.xlu0 %1867
        %1869 = vrot.lane.b32.xlu0 %v1073, 64
        %v1870 = vpop.permute.xlu0 %1869
        %1871 = vrot.lane.b32.xlu0 %v1074, 64
        %v1872 = vpop.permute.xlu0 %1871
        %1873 = vrot.lane.b32.xlu0 %v1075, 64
        %v1874 = vpop.permute.xlu0 %1873
        %1875 = vrot.lane.b32.xlu0 %v1076, 64
        %v1876 = vpop.permute.xlu0 %1875
        %1877 = vrot.lane.b32.xlu0 %v1077, 64
        %v1878 = vpop.permute.xlu0 %1877
        %1879 = vrot.lane.b32.xlu0 %v1078, 64
        %v1880 = vpop.permute.xlu0 %1879
        %1881 = vrot.lane.b32.xlu0 %v1079, 64
        %v1882 = vpop.permute.xlu0 %1881
        %1883 = vrot.lane.b32.xlu0 %v1080, 64
        %v1884 = vpop.permute.xlu0 %1883
        %s1917 = scalar_lea.vmem %s276, 256 [#allocation6]
        %1918 = vst.msk [vmem:[%s1917] sm:$0xf] %vm1113, %v1822
        %1919 = vst.msk [vmem:[%s1917 + $0x4] sm:$0xf] %vm1113, %v1824
        %1920 = vst.msk [vmem:[%s1917 + $0x8] sm:$0xf] %vm1113, %v1826
        %1921 = vst.msk [vmem:[%s1917 + $0xc] sm:$0xf] %vm1113, %v1828
        %1922 = vst.msk [vmem:[%s1917 + $0x10] sm:$0xf] %vm1113, %v1830
        %1923 = vst.msk [vmem:[%s1917 + $0x14] sm:$0xf] %vm1113, %v1832
        %1924 = vst.msk [vmem:[%s1917 + $0x18] sm:$0xf] %vm1113, %v1834
        %1925 = vst.msk [vmem:[%s1917 + $0x1c] sm:$0xf] %vm1113, %v1836
        %1926 = vst.msk [vmem:[%s1917 + $0x20] sm:$0xf] %vm1113, %v1838
        %1927 = vst.msk [vmem:[%s1917 + $0x24] sm:$0xf] %vm1113, %v1840
        %1928 = vst.msk [vmem:[%s1917 + $0x28] sm:$0xf] %vm1113, %v1842
        %1929 = vst.msk [vmem:[%s1917 + $0x2c] sm:$0xf] %vm1113, %v1844
        %1930 = vst.msk [vmem:[%s1917 + $0x30] sm:$0xf] %vm1113, %v1846
        %1931 = vst.msk [vmem:[%s1917 + $0x34] sm:$0xf] %vm1113, %v1848
        %1932 = vst.msk [vmem:[%s1917 + $0x38] sm:$0xf] %vm1113, %v1850
        %1933 = vst.msk [vmem:[%s1917 + $0x3c] sm:$0xf] %vm1113, %v1852
        %1934 = vst.msk [vmem:[%s1917 + $0x40] sm:$0xf] %vm1113, %v1854
        %1935 = vst.msk [vmem:[%s1917 + $0x44] sm:$0xf] %vm1113, %v1856
        %1936 = vst.msk [vmem:[%s1917 + $0x48] sm:$0xf] %vm1113, %v1858
        %1937 = vst.msk [vmem:[%s1917 + $0x4c] sm:$0xf] %vm1113, %v1860
        %1938 = vst.msk [vmem:[%s1917 + $0x50] sm:$0xf] %vm1113, %v1862
        %1939 = vst.msk [vmem:[%s1917 + $0x54] sm:$0xf] %vm1113, %v1864
        %1940 = vst.msk [vmem:[%s1917 + $0x58] sm:$0xf] %vm1113, %v1866
        %1941 = vst.msk [vmem:[%s1917 + $0x5c] sm:$0xf] %vm1113, %v1868
        %1942 = vst.msk [vmem:[%s1917 + $0x60] sm:$0xf] %vm1113, %v1870
        %1943 = vst.msk [vmem:[%s1917 + $0x64] sm:$0xf] %vm1113, %v1872
        %1944 = vst.msk [vmem:[%s1917 + $0x68] sm:$0xf] %vm1113, %v1874
        %1945 = vst.msk [vmem:[%s1917 + $0x6c] sm:$0xf] %vm1113, %v1876
        %1946 = vst.msk [vmem:[%s1917 + $0x70] sm:$0xf] %vm1113, %v1878
        %1947 = vst.msk [vmem:[%s1917 + $0x74] sm:$0xf] %vm1113, %v1880
        %1948 = vst.msk [vmem:[%s1917 + $0x78] sm:$0xf] %vm1113, %v1882
        %1949 = vst.msk [vmem:[%s1917 + $0x7c] sm:$0xf] %vm1113, %v1884
        %1950 = vrot.lane.b32.xlu0 %v1194, 64
        %v1951 = vpop.permute.xlu0 %1950
        %1952 = vrot.lane.b32.xlu0 %v1195, 64
        %v1953 = vpop.permute.xlu0 %1952
        %1954 = vrot.lane.b32.xlu0 %v1196, 64
        %v1955 = vpop.permute.xlu0 %1954
        %1956 = vrot.lane.b32.xlu0 %v1197, 64
        %v1957 = vpop.permute.xlu0 %1956
        %1958 = vrot.lane.b32.xlu0 %v1198, 64
        %v1959 = vpop.permute.xlu0 %1958
        %1960 = vrot.lane.b32.xlu0 %v1199, 64
        %v1961 = vpop.permute.xlu0 %1960
        %1962 = vrot.lane.b32.xlu0 %v1200, 64
        %v1963 = vpop.permute.xlu0 %1962
        %1964 = vrot.lane.b32.xlu0 %v1201, 64
        %v1965 = vpop.permute.xlu0 %1964
        %1966 = vrot.lane.b32.xlu0 %v1202, 64
        %v1967 = vpop.permute.xlu0 %1966
        %1968 = vrot.lane.b32.xlu0 %v1203, 64
        %v1969 = vpop.permute.xlu0 %1968
        %1970 = vrot.lane.b32.xlu0 %v1204, 64
        %v1971 = vpop.permute.xlu0 %1970
        %1972 = vrot.lane.b32.xlu0 %v1205, 64
        %v1973 = vpop.permute.xlu0 %1972
        %1974 = vrot.lane.b32.xlu0 %v1206, 64
        %v1975 = vpop.permute.xlu0 %1974
        %1976 = vrot.lane.b32.xlu0 %v1207, 64
        %v1977 = vpop.permute.xlu0 %1976
        %1978 = vrot.lane.b32.xlu0 %v1208, 64
        %v1979 = vpop.permute.xlu0 %1978
        %1980 = vrot.lane.b32.xlu0 %v1209, 64
        %v1981 = vpop.permute.xlu0 %1980
        %1982 = vrot.lane.b32.xlu0 %v1210, 64
        %v1983 = vpop.permute.xlu0 %1982
        %1984 = vrot.lane.b32.xlu0 %v1211, 64
        %v1985 = vpop.permute.xlu0 %1984
        %1986 = vrot.lane.b32.xlu0 %v1212, 64
        %v1987 = vpop.permute.xlu0 %1986
        %1988 = vrot.lane.b32.xlu0 %v1213, 64
        %v1989 = vpop.permute.xlu0 %1988
        %1990 = vrot.lane.b32.xlu0 %v1214, 64
        %v1991 = vpop.permute.xlu0 %1990
        %1992 = vrot.lane.b32.xlu0 %v1215, 64
        %v1993 = vpop.permute.xlu0 %1992
        %1994 = vrot.lane.b32.xlu0 %v1216, 64
        %v1995 = vpop.permute.xlu0 %1994
        %1996 = vrot.lane.b32.xlu0 %v1217, 64
        %v1997 = vpop.permute.xlu0 %1996
        %1998 = vrot.lane.b32.xlu0 %v1218, 64
        %v1999 = vpop.permute.xlu0 %1998
        %2000 = vrot.lane.b32.xlu0 %v1219, 64
        %v2001 = vpop.permute.xlu0 %2000
        %2002 = vrot.lane.b32.xlu0 %v1220, 64
        %v2003 = vpop.permute.xlu0 %2002
        %2004 = vrot.lane.b32.xlu0 %v1221, 64
        %v2005 = vpop.permute.xlu0 %2004
        %2006 = vrot.lane.b32.xlu0 %v1222, 64
        %v2007 = vpop.permute.xlu0 %2006
        %2008 = vrot.lane.b32.xlu0 %v1223, 64
        %v2009 = vpop.permute.xlu0 %2008
        %2010 = vrot.lane.b32.xlu0 %v1224, 64
        %v2011 = vpop.permute.xlu0 %2010
        %2012 = vrot.lane.b32.xlu0 %v1225, 64
        %v2013 = vpop.permute.xlu0 %2012
        %s2046 = scalar_lea.vmem %s282, 256 [#allocation7]
        %2047 = vst.msk [vmem:[%s2046] sm:$0xf] %vm1113, %v1951
        %2048 = vst.msk [vmem:[%s2046 + $0x4] sm:$0xf] %vm1113, %v1953
        %2049 = vst.msk [vmem:[%s2046 + $0x8] sm:$0xf] %vm1113, %v1955
        %2050 = vst.msk [vmem:[%s2046 + $0xc] sm:$0xf] %vm1113, %v1957
        %2051 = vst.msk [vmem:[%s2046 + $0x10] sm:$0xf] %vm1113, %v1959
        %2052 = vst.msk [vmem:[%s2046 + $0x14] sm:$0xf] %vm1113, %v1961
        %2053 = vst.msk [vmem:[%s2046 + $0x18] sm:$0xf] %vm1113, %v1963
        %2054 = vst.msk [vmem:[%s2046 + $0x1c] sm:$0xf] %vm1113, %v1965
        %2055 = vst.msk [vmem:[%s2046 + $0x20] sm:$0xf] %vm1113, %v1967
        %2056 = vst.msk [vmem:[%s2046 + $0x24] sm:$0xf] %vm1113, %v1969
        %2057 = vst.msk [vmem:[%s2046 + $0x28] sm:$0xf] %vm1113, %v1971
        %2058 = vst.msk [vmem:[%s2046 + $0x2c] sm:$0xf] %vm1113, %v1973
        %2059 = vst.msk [vmem:[%s2046 + $0x30] sm:$0xf] %vm1113, %v1975
        %2060 = vst.msk [vmem:[%s2046 + $0x34] sm:$0xf] %vm1113, %v1977
        %2061 = vst.msk [vmem:[%s2046 + $0x38] sm:$0xf] %vm1113, %v1979
        %2062 = vst.msk [vmem:[%s2046 + $0x3c] sm:$0xf] %vm1113, %v1981
        %2063 = vst.msk [vmem:[%s2046 + $0x40] sm:$0xf] %vm1113, %v1983
        %2064 = vst.msk [vmem:[%s2046 + $0x44] sm:$0xf] %vm1113, %v1985
        %2065 = vst.msk [vmem:[%s2046 + $0x48] sm:$0xf] %vm1113, %v1987
        %2066 = vst.msk [vmem:[%s2046 + $0x4c] sm:$0xf] %vm1113, %v1989
        %2067 = vst.msk [vmem:[%s2046 + $0x50] sm:$0xf] %vm1113, %v1991
        %2068 = vst.msk [vmem:[%s2046 + $0x54] sm:$0xf] %vm1113, %v1993
        %2069 = vst.msk [vmem:[%s2046 + $0x58] sm:$0xf] %vm1113, %v1995
        %2070 = vst.msk [vmem:[%s2046 + $0x5c] sm:$0xf] %vm1113, %v1997
        %2071 = vst.msk [vmem:[%s2046 + $0x60] sm:$0xf] %vm1113, %v1999
        %2072 = vst.msk [vmem:[%s2046 + $0x64] sm:$0xf] %vm1113, %v2001
        %2073 = vst.msk [vmem:[%s2046 + $0x68] sm:$0xf] %vm1113, %v2003
        %2074 = vst.msk [vmem:[%s2046 + $0x6c] sm:$0xf] %vm1113, %v2005
        %2075 = vst.msk [vmem:[%s2046 + $0x70] sm:$0xf] %vm1113, %v2007
        %2076 = vst.msk [vmem:[%s2046 + $0x74] sm:$0xf] %vm1113, %v2009
        %2077 = vst.msk [vmem:[%s2046 + $0x78] sm:$0xf] %vm1113, %v2011
        %2078 = vst.msk [vmem:[%s2046 + $0x7c] sm:$0xf] %vm1113, %v2013
        %2079 = vrot.lane.b32.xlu0 %v1338, 64
        %v2080 = vpop.permute.xlu0 %2079
        %2081 = vrot.lane.b32.xlu0 %v1339, 64
        %v2082 = vpop.permute.xlu0 %2081
        %2083 = vrot.lane.b32.xlu0 %v1340, 64
        %v2084 = vpop.permute.xlu0 %2083
        %2085 = vrot.lane.b32.xlu0 %v1341, 64
        %v2086 = vpop.permute.xlu0 %2085
        %2087 = vrot.lane.b32.xlu0 %v1342, 64
        %v2088 = vpop.permute.xlu0 %2087
        %2089 = vrot.lane.b32.xlu0 %v1343, 64
        %v2090 = vpop.permute.xlu0 %2089
        %2091 = vrot.lane.b32.xlu0 %v1344, 64
        %v2092 = vpop.permute.xlu0 %2091
        %2093 = vrot.lane.b32.xlu0 %v1345, 64
        %v2094 = vpop.permute.xlu0 %2093
        %2095 = vrot.lane.b32.xlu0 %v1346, 64
        %v2096 = vpop.permute.xlu0 %2095
        %2097 = vrot.lane.b32.xlu0 %v1347, 64
        %v2098 = vpop.permute.xlu0 %2097
        %2099 = vrot.lane.b32.xlu0 %v1348, 64
        %v2100 = vpop.permute.xlu0 %2099
        %2101 = vrot.lane.b32.xlu0 %v1349, 64
        %v2102 = vpop.permute.xlu0 %2101
        %2103 = vrot.lane.b32.xlu0 %v1350, 64
        %v2104 = vpop.permute.xlu0 %2103
        %2105 = vrot.lane.b32.xlu0 %v1351, 64
        %v2106 = vpop.permute.xlu0 %2105
        %2107 = vrot.lane.b32.xlu0 %v1352, 64
        %v2108 = vpop.permute.xlu0 %2107
        %2109 = vrot.lane.b32.xlu0 %v1353, 64
        %v2110 = vpop.permute.xlu0 %2109
        %2111 = vrot.lane.b32.xlu0 %v1354, 64
        %v2112 = vpop.permute.xlu0 %2111
        %2113 = vrot.lane.b32.xlu0 %v1355, 64
        %v2114 = vpop.permute.xlu0 %2113
        %2115 = vrot.lane.b32.xlu0 %v1356, 64
        %v2116 = vpop.permute.xlu0 %2115
        %2117 = vrot.lane.b32.xlu0 %v1357, 64
        %v2118 = vpop.permute.xlu0 %2117
        %2119 = vrot.lane.b32.xlu0 %v1358, 64
        %v2120 = vpop.permute.xlu0 %2119
        %2121 = vrot.lane.b32.xlu0 %v1359, 64
        %v2122 = vpop.permute.xlu0 %2121
        %2123 = vrot.lane.b32.xlu0 %v1360, 64
        %v2124 = vpop.permute.xlu0 %2123
        %2125 = vrot.lane.b32.xlu0 %v1361, 64
        %v2126 = vpop.permute.xlu0 %2125
        %2127 = vrot.lane.b32.xlu0 %v1362, 64
        %v2128 = vpop.permute.xlu0 %2127
        %2129 = vrot.lane.b32.xlu0 %v1363, 64
        %v2130 = vpop.permute.xlu0 %2129
        %2131 = vrot.lane.b32.xlu0 %v1364, 64
        %v2132 = vpop.permute.xlu0 %2131
        %2133 = vrot.lane.b32.xlu0 %v1365, 64
        %v2134 = vpop.permute.xlu0 %2133
        %2135 = vrot.lane.b32.xlu0 %v1366, 64
        %v2136 = vpop.permute.xlu0 %2135
        %2137 = vrot.lane.b32.xlu0 %v1367, 64
        %v2138 = vpop.permute.xlu0 %2137
        %2139 = vrot.lane.b32.xlu0 %v1368, 64
        %v2140 = vpop.permute.xlu0 %2139
        %2141 = vrot.lane.b32.xlu0 %v1369, 64
        %v2142 = vpop.permute.xlu0 %2141
        %s2175 = scalar_lea.vmem %s288, 256 [#allocation8]
        %2176 = vst.msk [vmem:[%s2175] sm:$0xf] %vm1113, %v2080
        %2177 = vst.msk [vmem:[%s2175 + $0x4] sm:$0xf] %vm1113, %v2082
        %2178 = vst.msk [vmem:[%s2175 + $0x8] sm:$0xf] %vm1113, %v2084
        %2179 = vst.msk [vmem:[%s2175 + $0xc] sm:$0xf] %vm1113, %v2086
        %2180 = vst.msk [vmem:[%s2175 + $0x10] sm:$0xf] %vm1113, %v2088
        %2181 = vst.msk [vmem:[%s2175 + $0x14] sm:$0xf] %vm1113, %v2090
        %2182 = vst.msk [vmem:[%s2175 + $0x18] sm:$0xf] %vm1113, %v2092
        %2183 = vst.msk [vmem:[%s2175 + $0x1c] sm:$0xf] %vm1113, %v2094
        %2184 = vst.msk [vmem:[%s2175 + $0x20] sm:$0xf] %vm1113, %v2096
        %2185 = vst.msk [vmem:[%s2175 + $0x24] sm:$0xf] %vm1113, %v2098
        %2186 = vst.msk [vmem:[%s2175 + $0x28] sm:$0xf] %vm1113, %v2100
        %2187 = vst.msk [vmem:[%s2175 + $0x2c] sm:$0xf] %vm1113, %v2102
        %2188 = vst.msk [vmem:[%s2175 + $0x30] sm:$0xf] %vm1113, %v2104
        %2189 = vst.msk [vmem:[%s2175 + $0x34] sm:$0xf] %vm1113, %v2106
        %2190 = vst.msk [vmem:[%s2175 + $0x38] sm:$0xf] %vm1113, %v2108
        %2191 = vst.msk [vmem:[%s2175 + $0x3c] sm:$0xf] %vm1113, %v2110
        %2192 = vst.msk [vmem:[%s2175 + $0x40] sm:$0xf] %vm1113, %v2112
        %2193 = vst.msk [vmem:[%s2175 + $0x44] sm:$0xf] %vm1113, %v2114
        %2194 = vst.msk [vmem:[%s2175 + $0x48] sm:$0xf] %vm1113, %v2116
        %2195 = vst.msk [vmem:[%s2175 + $0x4c] sm:$0xf] %vm1113, %v2118
        %2196 = vst.msk [vmem:[%s2175 + $0x50] sm:$0xf] %vm1113, %v2120
        %2197 = vst.msk [vmem:[%s2175 + $0x54] sm:$0xf] %vm1113, %v2122
        %2198 = vst.msk [vmem:[%s2175 + $0x58] sm:$0xf] %vm1113, %v2124
        %2199 = vst.msk [vmem:[%s2175 + $0x5c] sm:$0xf] %vm1113, %v2126
        %2200 = vst.msk [vmem:[%s2175 + $0x60] sm:$0xf] %vm1113, %v2128
        %2201 = vst.msk [vmem:[%s2175 + $0x64] sm:$0xf] %vm1113, %v2130
        %2202 = vst.msk [vmem:[%s2175 + $0x68] sm:$0xf] %vm1113, %v2132
        %2203 = vst.msk [vmem:[%s2175 + $0x6c] sm:$0xf] %vm1113, %v2134
        %2204 = vst.msk [vmem:[%s2175 + $0x70] sm:$0xf] %vm1113, %v2136
        %2205 = vst.msk [vmem:[%s2175 + $0x74] sm:$0xf] %vm1113, %v2138
        %2206 = vst.msk [vmem:[%s2175 + $0x78] sm:$0xf] %vm1113, %v2140
        %2207 = vst.msk [vmem:[%s2175 + $0x7c] sm:$0xf] %vm1113, %v2142
        %2208 = vrot.lane.b32.xlu0 %v1049, 32
        %v2209 = vpop.permute.xlu0 %2208
        %2210 = vrot.lane.b32.xlu0 %v1050, 32
        %v2211 = vpop.permute.xlu0 %2210
        %2212 = vrot.lane.b32.xlu0 %v1051, 32
        %v2213 = vpop.permute.xlu0 %2212
        %2214 = vrot.lane.b32.xlu0 %v1052, 32
        %v2215 = vpop.permute.xlu0 %2214
        %2216 = vrot.lane.b32.xlu0 %v1053, 32
        %v2217 = vpop.permute.xlu0 %2216
        %2218 = vrot.lane.b32.xlu0 %v1054, 32
        %v2219 = vpop.permute.xlu0 %2218
        %2220 = vrot.lane.b32.xlu0 %v1055, 32
        %v2221 = vpop.permute.xlu0 %2220
        %2222 = vrot.lane.b32.xlu0 %v1056, 32
        %v2223 = vpop.permute.xlu0 %2222
        %2224 = vrot.lane.b32.xlu0 %v1057, 32
        %v2225 = vpop.permute.xlu0 %2224
        %2226 = vrot.lane.b32.xlu0 %v1058, 32
        %v2227 = vpop.permute.xlu0 %2226
        %2228 = vrot.lane.b32.xlu0 %v1059, 32
        %v2229 = vpop.permute.xlu0 %2228
        %2230 = vrot.lane.b32.xlu0 %v1060, 32
        %v2231 = vpop.permute.xlu0 %2230
        %2232 = vrot.lane.b32.xlu0 %v1061, 32
        %v2233 = vpop.permute.xlu0 %2232
        %2234 = vrot.lane.b32.xlu0 %v1062, 32
        %v2235 = vpop.permute.xlu0 %2234
        %2236 = vrot.lane.b32.xlu0 %v1063, 32
        %v2237 = vpop.permute.xlu0 %2236
        %2238 = vrot.lane.b32.xlu0 %v1064, 32
        %v2239 = vpop.permute.xlu0 %2238
        %2240 = vrot.lane.b32.xlu0 %v1065, 32
        %v2241 = vpop.permute.xlu0 %2240
        %2242 = vrot.lane.b32.xlu0 %v1066, 32
        %v2243 = vpop.permute.xlu0 %2242
        %2244 = vrot.lane.b32.xlu0 %v1067, 32
        %v2245 = vpop.permute.xlu0 %2244
        %2246 = vrot.lane.b32.xlu0 %v1068, 32
        %v2247 = vpop.permute.xlu0 %2246
        %2248 = vrot.lane.b32.xlu0 %v1069, 32
        %v2249 = vpop.permute.xlu0 %2248
        %2250 = vrot.lane.b32.xlu0 %v1070, 32
        %v2251 = vpop.permute.xlu0 %2250
        %2252 = vrot.lane.b32.xlu0 %v1071, 32
        %v2253 = vpop.permute.xlu0 %2252
        %2254 = vrot.lane.b32.xlu0 %v1072, 32
        %v2255 = vpop.permute.xlu0 %2254
        %2256 = vrot.lane.b32.xlu0 %v1073, 32
        %v2257 = vpop.permute.xlu0 %2256
        %2258 = vrot.lane.b32.xlu0 %v1074, 32
        %v2259 = vpop.permute.xlu0 %2258
        %2260 = vrot.lane.b32.xlu0 %v1075, 32
        %v2261 = vpop.permute.xlu0 %2260
        %2262 = vrot.lane.b32.xlu0 %v1076, 32
        %v2263 = vpop.permute.xlu0 %2262
        %2264 = vrot.lane.b32.xlu0 %v1077, 32
        %v2265 = vpop.permute.xlu0 %2264
        %2266 = vrot.lane.b32.xlu0 %v1078, 32
        %v2267 = vpop.permute.xlu0 %2266
        %2268 = vrot.lane.b32.xlu0 %v1079, 32
        %v2269 = vpop.permute.xlu0 %2268
        %2270 = vrot.lane.b32.xlu0 %v1080, 32
        %v2271 = vpop.permute.xlu0 %2270
        %s2304 = scalar_lea.vmem %s276, 384 [#allocation6]
        %2305 = vst.msk [vmem:[%s2304] sm:$0xf] %vm1113, %v2209
        %2306 = vst.msk [vmem:[%s2304 + $0x4] sm:$0xf] %vm1113, %v2211
        %2307 = vst.msk [vmem:[%s2304 + $0x8] sm:$0xf] %vm1113, %v2213
        %2308 = vst.msk [vmem:[%s2304 + $0xc] sm:$0xf] %vm1113, %v2215
        %2309 = vst.msk [vmem:[%s2304 + $0x10] sm:$0xf] %vm1113, %v2217
        %2310 = vst.msk [vmem:[%s2304 + $0x14] sm:$0xf] %vm1113, %v2219
        %2311 = vst.msk [vmem:[%s2304 + $0x18] sm:$0xf] %vm1113, %v2221
        %2312 = vst.msk [vmem:[%s2304 + $0x1c] sm:$0xf] %vm1113, %v2223
        %2313 = vst.msk [vmem:[%s2304 + $0x20] sm:$0xf] %vm1113, %v2225
        %2314 = vst.msk [vmem:[%s2304 + $0x24] sm:$0xf] %vm1113, %v2227
        %2315 = vst.msk [vmem:[%s2304 + $0x28] sm:$0xf] %vm1113, %v2229
        %2316 = vst.msk [vmem:[%s2304 + $0x2c] sm:$0xf] %vm1113, %v2231
        %2317 = vst.msk [vmem:[%s2304 + $0x30] sm:$0xf] %vm1113, %v2233
        %2318 = vst.msk [vmem:[%s2304 + $0x34] sm:$0xf] %vm1113, %v2235
        %2319 = vst.msk [vmem:[%s2304 + $0x38] sm:$0xf] %vm1113, %v2237
        %2320 = vst.msk [vmem:[%s2304 + $0x3c] sm:$0xf] %vm1113, %v2239
        %2321 = vst.msk [vmem:[%s2304 + $0x40] sm:$0xf] %vm1113, %v2241
        %2322 = vst.msk [vmem:[%s2304 + $0x44] sm:$0xf] %vm1113, %v2243
        %2323 = vst.msk [vmem:[%s2304 + $0x48] sm:$0xf] %vm1113, %v2245
        %2324 = vst.msk [vmem:[%s2304 + $0x4c] sm:$0xf] %vm1113, %v2247
        %2325 = vst.msk [vmem:[%s2304 + $0x50] sm:$0xf] %vm1113, %v2249
        %2326 = vst.msk [vmem:[%s2304 + $0x54] sm:$0xf] %vm1113, %v2251
        %2327 = vst.msk [vmem:[%s2304 + $0x58] sm:$0xf] %vm1113, %v2253
        %2328 = vst.msk [vmem:[%s2304 + $0x5c] sm:$0xf] %vm1113, %v2255
        %2329 = vst.msk [vmem:[%s2304 + $0x60] sm:$0xf] %vm1113, %v2257
        %2330 = vst.msk [vmem:[%s2304 + $0x64] sm:$0xf] %vm1113, %v2259
        %2331 = vst.msk [vmem:[%s2304 + $0x68] sm:$0xf] %vm1113, %v2261
        %2332 = vst.msk [vmem:[%s2304 + $0x6c] sm:$0xf] %vm1113, %v2263
        %2333 = vst.msk [vmem:[%s2304 + $0x70] sm:$0xf] %vm1113, %v2265
        %2334 = vst.msk [vmem:[%s2304 + $0x74] sm:$0xf] %vm1113, %v2267
        %2335 = vst.msk [vmem:[%s2304 + $0x78] sm:$0xf] %vm1113, %v2269
        %2336 = vst.msk [vmem:[%s2304 + $0x7c] sm:$0xf] %vm1113, %v2271
        %2337 = vrot.lane.b32.xlu0 %v1194, 32
        %v2338 = vpop.permute.xlu0 %2337
        %2339 = vrot.lane.b32.xlu0 %v1195, 32
        %v2340 = vpop.permute.xlu0 %2339
        %2341 = vrot.lane.b32.xlu0 %v1196, 32
        %v2342 = vpop.permute.xlu0 %2341
        %2343 = vrot.lane.b32.xlu0 %v1197, 32
        %v2344 = vpop.permute.xlu0 %2343
        %2345 = vrot.lane.b32.xlu0 %v1198, 32
        %v2346 = vpop.permute.xlu0 %2345
        %2347 = vrot.lane.b32.xlu0 %v1199, 32
        %v2348 = vpop.permute.xlu0 %2347
        %2349 = vrot.lane.b32.xlu0 %v1200, 32
        %v2350 = vpop.permute.xlu0 %2349
        %2351 = vrot.lane.b32.xlu0 %v1201, 32
        %v2352 = vpop.permute.xlu0 %2351
        %2353 = vrot.lane.b32.xlu0 %v1202, 32
        %v2354 = vpop.permute.xlu0 %2353
        %2355 = vrot.lane.b32.xlu0 %v1203, 32
        %v2356 = vpop.permute.xlu0 %2355
        %2357 = vrot.lane.b32.xlu0 %v1204, 32
        %v2358 = vpop.permute.xlu0 %2357
        %2359 = vrot.lane.b32.xlu0 %v1205, 32
        %v2360 = vpop.permute.xlu0 %2359
        %2361 = vrot.lane.b32.xlu0 %v1206, 32
        %v2362 = vpop.permute.xlu0 %2361
        %2363 = vrot.lane.b32.xlu0 %v1207, 32
        %v2364 = vpop.permute.xlu0 %2363
        %2365 = vrot.lane.b32.xlu0 %v1208, 32
        %v2366 = vpop.permute.xlu0 %2365
        %2367 = vrot.lane.b32.xlu0 %v1209, 32
        %v2368 = vpop.permute.xlu0 %2367
        %2369 = vrot.lane.b32.xlu0 %v1210, 32
        %v2370 = vpop.permute.xlu0 %2369
        %2371 = vrot.lane.b32.xlu0 %v1211, 32
        %v2372 = vpop.permute.xlu0 %2371
        %2373 = vrot.lane.b32.xlu0 %v1212, 32
        %v2374 = vpop.permute.xlu0 %2373
        %2375 = vrot.lane.b32.xlu0 %v1213, 32
        %v2376 = vpop.permute.xlu0 %2375
        %2377 = vrot.lane.b32.xlu0 %v1214, 32
        %v2378 = vpop.permute.xlu0 %2377
        %2379 = vrot.lane.b32.xlu0 %v1215, 32
        %v2380 = vpop.permute.xlu0 %2379
        %2381 = vrot.lane.b32.xlu0 %v1216, 32
        %v2382 = vpop.permute.xlu0 %2381
        %2383 = vrot.lane.b32.xlu0 %v1217, 32
        %v2384 = vpop.permute.xlu0 %2383
        %2385 = vrot.lane.b32.xlu0 %v1218, 32
        %v2386 = vpop.permute.xlu0 %2385
        %2387 = vrot.lane.b32.xlu0 %v1219, 32
        %v2388 = vpop.permute.xlu0 %2387
        %2389 = vrot.lane.b32.xlu0 %v1220, 32
        %v2390 = vpop.permute.xlu0 %2389
        %2391 = vrot.lane.b32.xlu0 %v1221, 32
        %v2392 = vpop.permute.xlu0 %2391
        %2393 = vrot.lane.b32.xlu0 %v1222, 32
        %v2394 = vpop.permute.xlu0 %2393
        %2395 = vrot.lane.b32.xlu0 %v1223, 32
        %v2396 = vpop.permute.xlu0 %2395
        %2397 = vrot.lane.b32.xlu0 %v1224, 32
        %v2398 = vpop.permute.xlu0 %2397
        %2399 = vrot.lane.b32.xlu0 %v1225, 32
        %v2400 = vpop.permute.xlu0 %2399
        %s2433 = scalar_lea.vmem %s282, 384 [#allocation7]
        %2434 = vst.msk [vmem:[%s2433] sm:$0xf] %vm1113, %v2338
        %2435 = vst.msk [vmem:[%s2433 + $0x4] sm:$0xf] %vm1113, %v2340
        %2436 = vst.msk [vmem:[%s2433 + $0x8] sm:$0xf] %vm1113, %v2342
        %2437 = vst.msk [vmem:[%s2433 + $0xc] sm:$0xf] %vm1113, %v2344
        %2438 = vst.msk [vmem:[%s2433 + $0x10] sm:$0xf] %vm1113, %v2346
        %2439 = vst.msk [vmem:[%s2433 + $0x14] sm:$0xf] %vm1113, %v2348
        %2440 = vst.msk [vmem:[%s2433 + $0x18] sm:$0xf] %vm1113, %v2350
        %2441 = vst.msk [vmem:[%s2433 + $0x1c] sm:$0xf] %vm1113, %v2352
        %2442 = vst.msk [vmem:[%s2433 + $0x20] sm:$0xf] %vm1113, %v2354
        %2443 = vst.msk [vmem:[%s2433 + $0x24] sm:$0xf] %vm1113, %v2356
        %2444 = vst.msk [vmem:[%s2433 + $0x28] sm:$0xf] %vm1113, %v2358
        %2445 = vst.msk [vmem:[%s2433 + $0x2c] sm:$0xf] %vm1113, %v2360
        %2446 = vst.msk [vmem:[%s2433 + $0x30] sm:$0xf] %vm1113, %v2362
        %2447 = vst.msk [vmem:[%s2433 + $0x34] sm:$0xf] %vm1113, %v2364
        %2448 = vst.msk [vmem:[%s2433 + $0x38] sm:$0xf] %vm1113, %v2366
        %2449 = vst.msk [vmem:[%s2433 + $0x3c] sm:$0xf] %vm1113, %v2368
        %2450 = vst.msk [vmem:[%s2433 + $0x40] sm:$0xf] %vm1113, %v2370
        %2451 = vst.msk [vmem:[%s2433 + $0x44] sm:$0xf] %vm1113, %v2372
        %2452 = vst.msk [vmem:[%s2433 + $0x48] sm:$0xf] %vm1113, %v2374
        %2453 = vst.msk [vmem:[%s2433 + $0x4c] sm:$0xf] %vm1113, %v2376
        %2454 = vst.msk [vmem:[%s2433 + $0x50] sm:$0xf] %vm1113, %v2378
        %2455 = vst.msk [vmem:[%s2433 + $0x54] sm:$0xf] %vm1113, %v2380
        %2456 = vst.msk [vmem:[%s2433 + $0x58] sm:$0xf] %vm1113, %v2382
        %2457 = vst.msk [vmem:[%s2433 + $0x5c] sm:$0xf] %vm1113, %v2384
        %2458 = vst.msk [vmem:[%s2433 + $0x60] sm:$0xf] %vm1113, %v2386
        %2459 = vst.msk [vmem:[%s2433 + $0x64] sm:$0xf] %vm1113, %v2388
        %2460 = vst.msk [vmem:[%s2433 + $0x68] sm:$0xf] %vm1113, %v2390
        %2461 = vst.msk [vmem:[%s2433 + $0x6c] sm:$0xf] %vm1113, %v2392
        %2462 = vst.msk [vmem:[%s2433 + $0x70] sm:$0xf] %vm1113, %v2394
        %2463 = vst.msk [vmem:[%s2433 + $0x74] sm:$0xf] %vm1113, %v2396
        %2464 = vst.msk [vmem:[%s2433 + $0x78] sm:$0xf] %vm1113, %v2398
        %2465 = vst.msk [vmem:[%s2433 + $0x7c] sm:$0xf] %vm1113, %v2400
        %2466 = vrot.lane.b32.xlu0 %v1338, 32
        %v2467 = vpop.permute.xlu0 %2466
        %2468 = vrot.lane.b32.xlu0 %v1339, 32
        %v2469 = vpop.permute.xlu0 %2468
        %2470 = vrot.lane.b32.xlu0 %v1340, 32
        %v2471 = vpop.permute.xlu0 %2470
        %2472 = vrot.lane.b32.xlu0 %v1341, 32
        %v2473 = vpop.permute.xlu0 %2472
        %2474 = vrot.lane.b32.xlu0 %v1342, 32
        %v2475 = vpop.permute.xlu0 %2474
        %2476 = vrot.lane.b32.xlu0 %v1343, 32
        %v2477 = vpop.permute.xlu0 %2476
        %2478 = vrot.lane.b32.xlu0 %v1344, 32
        %v2479 = vpop.permute.xlu0 %2478
        %2480 = vrot.lane.b32.xlu0 %v1345, 32
        %v2481 = vpop.permute.xlu0 %2480
        %2482 = vrot.lane.b32.xlu0 %v1346, 32
        %v2483 = vpop.permute.xlu0 %2482
        %2484 = vrot.lane.b32.xlu0 %v1347, 32
        %v2485 = vpop.permute.xlu0 %2484
        %2486 = vrot.lane.b32.xlu0 %v1348, 32
        %v2487 = vpop.permute.xlu0 %2486
        %2488 = vrot.lane.b32.xlu0 %v1349, 32
        %v2489 = vpop.permute.xlu0 %2488
        %2490 = vrot.lane.b32.xlu0 %v1350, 32
        %v2491 = vpop.permute.xlu0 %2490
        %2492 = vrot.lane.b32.xlu0 %v1351, 32
        %v2493 = vpop.permute.xlu0 %2492
        %2494 = vrot.lane.b32.xlu0 %v1352, 32
        %v2495 = vpop.permute.xlu0 %2494
        %2496 = vrot.lane.b32.xlu0 %v1353, 32
        %v2497 = vpop.permute.xlu0 %2496
        %2498 = vrot.lane.b32.xlu0 %v1354, 32
        %v2499 = vpop.permute.xlu0 %2498
        %2500 = vrot.lane.b32.xlu0 %v1355, 32
        %v2501 = vpop.permute.xlu0 %2500
        %2502 = vrot.lane.b32.xlu0 %v1356, 32
        %v2503 = vpop.permute.xlu0 %2502
        %2504 = vrot.lane.b32.xlu0 %v1357, 32
        %v2505 = vpop.permute.xlu0 %2504
        %2506 = vrot.lane.b32.xlu0 %v1358, 32
        %v2507 = vpop.permute.xlu0 %2506
        %2508 = vrot.lane.b32.xlu0 %v1359, 32
        %v2509 = vpop.permute.xlu0 %2508
        %2510 = vrot.lane.b32.xlu0 %v1360, 32
        %v2511 = vpop.permute.xlu0 %2510
        %2512 = vrot.lane.b32.xlu0 %v1361, 32
        %v2513 = vpop.permute.xlu0 %2512
        %2514 = vrot.lane.b32.xlu0 %v1362, 32
        %v2515 = vpop.permute.xlu0 %2514
        %2516 = vrot.lane.b32.xlu0 %v1363, 32
        %v2517 = vpop.permute.xlu0 %2516
        %2518 = vrot.lane.b32.xlu0 %v1364, 32
        %v2519 = vpop.permute.xlu0 %2518
        %2520 = vrot.lane.b32.xlu0 %v1365, 32
        %v2521 = vpop.permute.xlu0 %2520
        %2522 = vrot.lane.b32.xlu0 %v1366, 32
        %v2523 = vpop.permute.xlu0 %2522
        %2524 = vrot.lane.b32.xlu0 %v1367, 32
        %v2525 = vpop.permute.xlu0 %2524
        %2526 = vrot.lane.b32.xlu0 %v1368, 32
        %v2527 = vpop.permute.xlu0 %2526
        %2528 = vrot.lane.b32.xlu0 %v1369, 32
        %v2529 = vpop.permute.xlu0 %2528
        %s2562 = scalar_lea.vmem %s288, 384 [#allocation8]
        %2563 = vst.msk [vmem:[%s2562] sm:$0xf] %vm1113, %v2467
        %2564 = vst.msk [vmem:[%s2562 + $0x4] sm:$0xf] %vm1113, %v2469
        %2565 = vst.msk [vmem:[%s2562 + $0x8] sm:$0xf] %vm1113, %v2471
        %2566 = vst.msk [vmem:[%s2562 + $0xc] sm:$0xf] %vm1113, %v2473
        %2567 = vst.msk [vmem:[%s2562 + $0x10] sm:$0xf] %vm1113, %v2475
        %2568 = vst.msk [vmem:[%s2562 + $0x14] sm:$0xf] %vm1113, %v2477
        %2569 = vst.msk [vmem:[%s2562 + $0x18] sm:$0xf] %vm1113, %v2479
        %2570 = vst.msk [vmem:[%s2562 + $0x1c] sm:$0xf] %vm1113, %v2481
        %2571 = vst.msk [vmem:[%s2562 + $0x20] sm:$0xf] %vm1113, %v2483
        %2572 = vst.msk [vmem:[%s2562 + $0x24] sm:$0xf] %vm1113, %v2485
        %2573 = vst.msk [vmem:[%s2562 + $0x28] sm:$0xf] %vm1113, %v2487
        %2574 = vst.msk [vmem:[%s2562 + $0x2c] sm:$0xf] %vm1113, %v2489
        %2575 = vst.msk [vmem:[%s2562 + $0x30] sm:$0xf] %vm1113, %v2491
        %2576 = vst.msk [vmem:[%s2562 + $0x34] sm:$0xf] %vm1113, %v2493
        %2577 = vst.msk [vmem:[%s2562 + $0x38] sm:$0xf] %vm1113, %v2495
        %2578 = vst.msk [vmem:[%s2562 + $0x3c] sm:$0xf] %vm1113, %v2497
        %2579 = vst.msk [vmem:[%s2562 + $0x40] sm:$0xf] %vm1113, %v2499
        %2580 = vst.msk [vmem:[%s2562 + $0x44] sm:$0xf] %vm1113, %v2501
        %2581 = vst.msk [vmem:[%s2562 + $0x48] sm:$0xf] %vm1113, %v2503
        %2582 = vst.msk [vmem:[%s2562 + $0x4c] sm:$0xf] %vm1113, %v2505
        %2583 = vst.msk [vmem:[%s2562 + $0x50] sm:$0xf] %vm1113, %v2507
        %2584 = vst.msk [vmem:[%s2562 + $0x54] sm:$0xf] %vm1113, %v2509
        %2585 = vst.msk [vmem:[%s2562 + $0x58] sm:$0xf] %vm1113, %v2511
        %2586 = vst.msk [vmem:[%s2562 + $0x5c] sm:$0xf] %vm1113, %v2513
        %2587 = vst.msk [vmem:[%s2562 + $0x60] sm:$0xf] %vm1113, %v2515
        %2588 = vst.msk [vmem:[%s2562 + $0x64] sm:$0xf] %vm1113, %v2517
        %2589 = vst.msk [vmem:[%s2562 + $0x68] sm:$0xf] %vm1113, %v2519
        %2590 = vst.msk [vmem:[%s2562 + $0x6c] sm:$0xf] %vm1113, %v2521
        %2591 = vst.msk [vmem:[%s2562 + $0x70] sm:$0xf] %vm1113, %v2523
        %2592 = vst.msk [vmem:[%s2562 + $0x74] sm:$0xf] %vm1113, %v2525
        %2593 = vst.msk [vmem:[%s2562 + $0x78] sm:$0xf] %vm1113, %v2527
        %2594 = vst.msk [vmem:[%s2562 + $0x7c] sm:$0xf] %vm1113, %v2529
        %s2595 = sand.u32 %s113, 1
        %s2596 = sand.u32 %s113, 1
        %s2597 = smul.addr %s2596, 512
        %s2598 = scalar_lea.vmem [#allocation6], %s2597
        %s2599 = sand.u32 %s141, 1
        %s2600 = sand.u32 %s141, 1
        %s2601 = smul.addr %s2600, 512
        %s2602 = scalar_lea.vmem [#allocation7], %s2601
        %s2603 = sand.u32 %s169, 1
        %s2604 = sand.u32 %s169, 1
        %s2605 = smul.addr %s2604, 512
        %s2606 = scalar_lea.vmem [#allocation8], %s2605
        // Predicated region
        $region41: #{tpu_custom_call.1} parent=31 // pred_check
          %p2607 = pneg %p123
        $region42: #{tpu_custom_call.1} parent=31 // pred_check_branch
          %2609 = sbr.rel (%p2607) target = $region44
        $region43: #{tpu_custom_call.1} parent=31 // pred_region
          %s2610 = smul.u32 32, %s26
          %s2611 = smul.addr %s25, 256
          %s2612 = sadd.s32 %s2610, %s2611
          %s2613 = smul.addr %s2612, 4
          %s2614 = scalar_lea.vmem %s3, %s2613
          // Predicated region
          $region45: #{tpu_custom_call.1} parent=43 // pred_check
            _
          $region46: #{tpu_custom_call.1} parent=43 // pred_check_branch
            %2616 = sbr.rel (0) target = $region48
          $region47: #{tpu_custom_call.1} parent=43 // pred_region
            // Predicated region
            $region49: #{tpu_custom_call.1} parent=47 // pred_check
              _
            $region50: #{tpu_custom_call.1} parent=47 // pred_check_branch
              %2618 = sbr.rel target = $region52
            $region51: #{tpu_custom_call.1} parent=47 // pred_region
              // Predicated region
              $region64: #{tpu_custom_call.1} parent=51 // pred_check
                _
              $region65: #{tpu_custom_call.1} parent=51 // pred_check_branch
                %2887 = sbr.rel (0) target = $region67
              $region66: #{tpu_custom_call.1} parent=51 // pred_region
                loop: start=0, step=1, limit=1
                $region68: #{tpu_custom_call.1} parent=66 // loop_pre_header
                  _
                $region69: #{tpu_custom_call.1} parent=66 // loop_header
                  %s2889 = sphi 0, %s2893
                  %p2890 = scmp.ge.s32.totalorder %s2889, 1
                  %s2894 = sphi %s2598, %s2598
                  %s2895 = sphi %s2614, %s2614
                $region70: #{tpu_custom_call.1} parent=66 // loop_header_branch
                  %2892 = sbr.rel (%p2890) target = $region74
                $region71: #{tpu_custom_call.1} parent=66 // loop_body
                  _
                $region72: #{tpu_custom_call.1} parent=66 // loop_footer
                  %s2893 = sadd.s32 1, %s2889
                $region73: #{tpu_custom_call.1} parent=66 // loop_footer_branch
                  %2888 = sbr.rel target = $region69
                $region74: #{tpu_custom_call.1} parent=66 // loop_exit
                  _
                loop: start=0, step=1, limit=1
                $region75: #{tpu_custom_call.1} parent=66 // loop_pre_header
                  _
                $region76: #{tpu_custom_call.1} parent=66 // loop_header
                  %s2898 = sphi 0, %s2902
                  %p2899 = scmp.ge.s32.totalorder %s2898, 1
                  %s2903 = sphi %s2598, %s2598
                  %s2904 = sphi %s2614, %s2614
                $region77: #{tpu_custom_call.1} parent=66 // loop_header_branch
                  %2901 = sbr.rel (%p2899) target = $region81
                $region78: #{tpu_custom_call.1} parent=66 // loop_body
                  %v2905 = vld [vmem:[%s2903] sm:$0xf]
                  %2906 = vst [vmem:[%s2904] sm:$0xf] %v2905
                  %v2907 = vld [vmem:[%s2903 + $0x4] sm:$0xf]
                  %2908 = vst [vmem:[%s2904 + $0x4] sm:$0xf] %v2907
                  %v2909 = vld [vmem:[%s2903 + $0x8] sm:$0xf]
                  %2910 = vst [vmem:[%s2904 + $0x8] sm:$0xf] %v2909
                  %v2911 = vld [vmem:[%s2903 + $0xc] sm:$0xf]
                  %2912 = vst [vmem:[%s2904 + $0xc] sm:$0xf] %v2911
                  %v2913 = vld [vmem:[%s2903 + $0x10] sm:$0xf]
                  %2914 = vst [vmem:[%s2904 + $0x10] sm:$0xf] %v2913
                  %v2915 = vld [vmem:[%s2903 + $0x14] sm:$0xf]
                  %2916 = vst [vmem:[%s2904 + $0x14] sm:$0xf] %v2915
                  %v2917 = vld [vmem:[%s2903 + $0x18] sm:$0xf]
                  %2918 = vst [vmem:[%s2904 + $0x18] sm:$0xf] %v2917
                  %v2919 = vld [vmem:[%s2903 + $0x1c] sm:$0xf]
                  %2920 = vst [vmem:[%s2904 + $0x1c] sm:$0xf] %v2919
                  %v2921 = vld [vmem:[%s2903 + $0x20] sm:$0xf]
                  %2922 = vst [vmem:[%s2904 + $0x20] sm:$0xf] %v2921
                  %v2923 = vld [vmem:[%s2903 + $0x24] sm:$0xf]
                  %2924 = vst [vmem:[%s2904 + $0x24] sm:$0xf] %v2923
                  %v2925 = vld [vmem:[%s2903 + $0x28] sm:$0xf]
                  %2926 = vst [vmem:[%s2904 + $0x28] sm:$0xf] %v2925
                  %v2927 = vld [vmem:[%s2903 + $0x2c] sm:$0xf]
                  %2928 = vst [vmem:[%s2904 + $0x2c] sm:$0xf] %v2927
                  %v2929 = vld [vmem:[%s2903 + $0x30] sm:$0xf]
                  %2930 = vst [vmem:[%s2904 + $0x30] sm:$0xf] %v2929
                  %v2931 = vld [vmem:[%s2903 + $0x34] sm:$0xf]
                  %2932 = vst [vmem:[%s2904 + $0x34] sm:$0xf] %v2931
                  %v2933 = vld [vmem:[%s2903 + $0x38] sm:$0xf]
                  %2934 = vst [vmem:[%s2904 + $0x38] sm:$0xf] %v2933
                  %v2935 = vld [vmem:[%s2903 + $0x3c] sm:$0xf]
                  %2936 = vst [vmem:[%s2904 + $0x3c] sm:$0xf] %v2935
                  %v2937 = vld [vmem:[%s2903 + $0x40] sm:$0xf]
                  %2938 = vst [vmem:[%s2904 + $0x40] sm:$0xf] %v2937
                  %v2939 = vld [vmem:[%s2903 + $0x44] sm:$0xf]
                  %2940 = vst [vmem:[%s2904 + $0x44] sm:$0xf] %v2939
                  %v2941 = vld [vmem:[%s2903 + $0x48] sm:$0xf]
                  %2942 = vst [vmem:[%s2904 + $0x48] sm:$0xf] %v2941
                  %v2943 = vld [vmem:[%s2903 + $0x4c] sm:$0xf]
                  %2944 = vst [vmem:[%s2904 + $0x4c] sm:$0xf] %v2943
                  %v2945 = vld [vmem:[%s2903 + $0x50] sm:$0xf]
                  %2946 = vst [vmem:[%s2904 + $0x50] sm:$0xf] %v2945
                  %v2947 = vld [vmem:[%s2903 + $0x54] sm:$0xf]
                  %2948 = vst [vmem:[%s2904 + $0x54] sm:$0xf] %v2947
                  %v2949 = vld [vmem:[%s2903 + $0x58] sm:$0xf]
                  %2950 = vst [vmem:[%s2904 + $0x58] sm:$0xf] %v2949
                  %v2951 = vld [vmem:[%s2903 + $0x5c] sm:$0xf]
                  %2952 = vst [vmem:[%s2904 + $0x5c] sm:$0xf] %v2951
                  %v2953 = vld [vmem:[%s2903 + $0x60] sm:$0xf]
                  %2954 = vst [vmem:[%s2904 + $0x60] sm:$0xf] %v2953
                  %v2955 = vld [vmem:[%s2903 + $0x64] sm:$0xf]
                  %2956 = vst [vmem:[%s2904 + $0x64] sm:$0xf] %v2955
                  %v2957 = vld [vmem:[%s2903 + $0x68] sm:$0xf]
                  %2958 = vst [vmem:[%s2904 + $0x68] sm:$0xf] %v2957
                  %v2959 = vld [vmem:[%s2903 + $0x6c] sm:$0xf]
                  %2960 = vst [vmem:[%s2904 + $0x6c] sm:$0xf] %v2959
                  %v2961 = vld [vmem:[%s2903 + $0x70] sm:$0xf]
                  %2962 = vst [vmem:[%s2904 + $0x70] sm:$0xf] %v2961
                  %v2963 = vld [vmem:[%s2903 + $0x74] sm:$0xf]
                  %2964 = vst [vmem:[%s2904 + $0x74] sm:$0xf] %v2963
                  %v2965 = vld [vmem:[%s2903 + $0x78] sm:$0xf]
                  %2966 = vst [vmem:[%s2904 + $0x78] sm:$0xf] %v2965
                  %v2967 = vld [vmem:[%s2903 + $0x7c] sm:$0xf]
                  %2968 = vst [vmem:[%s2904 + $0x7c] sm:$0xf] %v2967
                  %v2969 = vld [vmem:[%s2903 + $0x80] sm:$0xf]
                  %2970 = vst [vmem:[%s2904 + $0x100] sm:$0xf] %v2969
                  %v2971 = vld [vmem:[%s2903 + $0x84] sm:$0xf]
                  %2972 = vst [vmem:[%s2904 + $0x104] sm:$0xf] %v2971
                  %v2973 = vld [vmem:[%s2903 + $0x88] sm:$0xf]
                  %2974 = vst [vmem:[%s2904 + $0x108] sm:$0xf] %v2973
                  %v2975 = vld [vmem:[%s2903 + $0x8c] sm:$0xf]
                  %2976 = vst [vmem:[%s2904 + $0x10c] sm:$0xf] %v2975
                  %v2977 = vld [vmem:[%s2903 + $0x90] sm:$0xf]
                  %2978 = vst [vmem:[%s2904 + $0x110] sm:$0xf] %v2977
                  %v2979 = vld [vmem:[%s2903 + $0x94] sm:$0xf]
                  %2980 = vst [vmem:[%s2904 + $0x114] sm:$0xf] %v2979
                  %v2981 = vld [vmem:[%s2903 + $0x98] sm:$0xf]
                  %2982 = vst [vmem:[%s2904 + $0x118] sm:$0xf] %v2981
                  %v2983 = vld [vmem:[%s2903 + $0x9c] sm:$0xf]
                  %2984 = vst [vmem:[%s2904 + $0x11c] sm:$0xf] %v2983
                  %v2985 = vld [vmem:[%s2903 + $0xa0] sm:$0xf]
                  %2986 = vst [vmem:[%s2904 + $0x120] sm:$0xf] %v2985
                  %v2987 = vld [vmem:[%s2903 + $0xa4] sm:$0xf]
                  %2988 = vst [vmem:[%s2904 + $0x124] sm:$0xf] %v2987
                  %v2989 = vld [vmem:[%s2903 + $0xa8] sm:$0xf]
                  %2990 = vst [vmem:[%s2904 + $0x128] sm:$0xf] %v2989
                  %v2991 = vld [vmem:[%s2903 + $0xac] sm:$0xf]
                  %2992 = vst [vmem:[%s2904 + $0x12c] sm:$0xf] %v2991
                  %v2993 = vld [vmem:[%s2903 + $0xb0] sm:$0xf]
                  %2994 = vst [vmem:[%s2904 + $0x130] sm:$0xf] %v2993
                  %v2995 = vld [vmem:[%s2903 + $0xb4] sm:$0xf]
                  %2996 = vst [vmem:[%s2904 + $0x134] sm:$0xf] %v2995
                  %v2997 = vld [vmem:[%s2903 + $0xb8] sm:$0xf]
                  %2998 = vst [vmem:[%s2904 + $0x138] sm:$0xf] %v2997
                  %v2999 = vld [vmem:[%s2903 + $0xbc] sm:$0xf]
                  %3000 = vst [vmem:[%s2904 + $0x13c] sm:$0xf] %v2999
                  %v3001 = vld [vmem:[%s2903 + $0xc0] sm:$0xf]
                  %3002 = vst [vmem:[%s2904 + $0x140] sm:$0xf] %v3001
                  %v3003 = vld [vmem:[%s2903 + $0xc4] sm:$0xf]
                  %3004 = vst [vmem:[%s2904 + $0x144] sm:$0xf] %v3003
                  %v3005 = vld [vmem:[%s2903 + $0xc8] sm:$0xf]
                  %3006 = vst [vmem:[%s2904 + $0x148] sm:$0xf] %v3005
                  %v3007 = vld [vmem:[%s2903 + $0xcc] sm:$0xf]
                  %3008 = vst [vmem:[%s2904 + $0x14c] sm:$0xf] %v3007
                  %v3009 = vld [vmem:[%s2903 + $0xd0] sm:$0xf]
                  %3010 = vst [vmem:[%s2904 + $0x150] sm:$0xf] %v3009
                  %v3011 = vld [vmem:[%s2903 + $0xd4] sm:$0xf]
                  %3012 = vst [vmem:[%s2904 + $0x154] sm:$0xf] %v3011
                  %v3013 = vld [vmem:[%s2903 + $0xd8] sm:$0xf]
                  %3014 = vst [vmem:[%s2904 + $0x158] sm:$0xf] %v3013
                  %v3015 = vld [vmem:[%s2903 + $0xdc] sm:$0xf]
                  %3016 = vst [vmem:[%s2904 + $0x15c] sm:$0xf] %v3015
                  %v3017 = vld [vmem:[%s2903 + $0xe0] sm:$0xf]
                  %3018 = vst [vmem:[%s2904 + $0x160] sm:$0xf] %v3017
                  %v3019 = vld [vmem:[%s2903 + $0xe4] sm:$0xf]
                  %3020 = vst [vmem:[%s2904 + $0x164] sm:$0xf] %v3019
                  %v3021 = vld [vmem:[%s2903 + $0xe8] sm:$0xf]
                  %3022 = vst [vmem:[%s2904 + $0x168] sm:$0xf] %v3021
                  %v3023 = vld [vmem:[%s2903 + $0xec] sm:$0xf]
                  %3024 = vst [vmem:[%s2904 + $0x16c] sm:$0xf] %v3023
                  %v3025 = vld [vmem:[%s2903 + $0xf0] sm:$0xf]
                  %3026 = vst [vmem:[%s2904 + $0x170] sm:$0xf] %v3025
                  %v3027 = vld [vmem:[%s2903 + $0xf4] sm:$0xf]
                  %3028 = vst [vmem:[%s2904 + $0x174] sm:$0xf] %v3027
                  %v3029 = vld [vmem:[%s2903 + $0xf8] sm:$0xf]
                  %3030 = vst [vmem:[%s2904 + $0x178] sm:$0xf] %v3029
                  %v3031 = vld [vmem:[%s2903 + $0xfc] sm:$0xf]
                  %3032 = vst [vmem:[%s2904 + $0x17c] sm:$0xf] %v3031
                  %v3033 = vld [vmem:[%s2903 + $0x100] sm:$0xf]
                  %3034 = vst [vmem:[%s2904 + $0x200] sm:$0xf] %v3033
                  %v3035 = vld [vmem:[%s2903 + $0x104] sm:$0xf]
                  %3036 = vst [vmem:[%s2904 + $0x204] sm:$0xf] %v3035
                  %v3037 = vld [vmem:[%s2903 + $0x108] sm:$0xf]
                  %3038 = vst [vmem:[%s2904 + $0x208] sm:$0xf] %v3037
                  %v3039 = vld [vmem:[%s2903 + $0x10c] sm:$0xf]
                  %3040 = vst [vmem:[%s2904 + $0x20c] sm:$0xf] %v3039
                  %v3041 = vld [vmem:[%s2903 + $0x110] sm:$0xf]
                  %3042 = vst [vmem:[%s2904 + $0x210] sm:$0xf] %v3041
                  %v3043 = vld [vmem:[%s2903 + $0x114] sm:$0xf]
                  %3044 = vst [vmem:[%s2904 + $0x214] sm:$0xf] %v3043
                  %v3045 = vld [vmem:[%s2903 + $0x118] sm:$0xf]
                  %3046 = vst [vmem:[%s2904 + $0x218] sm:$0xf] %v3045
                  %v3047 = vld [vmem:[%s2903 + $0x11c] sm:$0xf]
                  %3048 = vst [vmem:[%s2904 + $0x21c] sm:$0xf] %v3047
                  %v3049 = vld [vmem:[%s2903 + $0x120] sm:$0xf]
                  %3050 = vst [vmem:[%s2904 + $0x220] sm:$0xf] %v3049
                  %v3051 = vld [vmem:[%s2903 + $0x124] sm:$0xf]
                  %3052 = vst [vmem:[%s2904 + $0x224] sm:$0xf] %v3051
                  %v3053 = vld [vmem:[%s2903 + $0x128] sm:$0xf]
                  %3054 = vst [vmem:[%s2904 + $0x228] sm:$0xf] %v3053
                  %v3055 = vld [vmem:[%s2903 + $0x12c] sm:$0xf]
                  %3056 = vst [vmem:[%s2904 + $0x22c] sm:$0xf] %v3055
                  %v3057 = vld [vmem:[%s2903 + $0x130] sm:$0xf]
                  %3058 = vst [vmem:[%s2904 + $0x230] sm:$0xf] %v3057
                  %v3059 = vld [vmem:[%s2903 + $0x134] sm:$0xf]
                  %3060 = vst [vmem:[%s2904 + $0x234] sm:$0xf] %v3059
                  %v3061 = vld [vmem:[%s2903 + $0x138] sm:$0xf]
                  %3062 = vst [vmem:[%s2904 + $0x238] sm:$0xf] %v3061
                  %v3063 = vld [vmem:[%s2903 + $0x13c] sm:$0xf]
                  %3064 = vst [vmem:[%s2904 + $0x23c] sm:$0xf] %v3063
                  %v3065 = vld [vmem:[%s2903 + $0x140] sm:$0xf]
                  %3066 = vst [vmem:[%s2904 + $0x240] sm:$0xf] %v3065
                  %v3067 = vld [vmem:[%s2903 + $0x144] sm:$0xf]
                  %3068 = vst [vmem:[%s2904 + $0x244] sm:$0xf] %v3067
                  %v3069 = vld [vmem:[%s2903 + $0x148] sm:$0xf]
                  %3070 = vst [vmem:[%s2904 + $0x248] sm:$0xf] %v3069
                  %v3071 = vld [vmem:[%s2903 + $0x14c] sm:$0xf]
                  %3072 = vst [vmem:[%s2904 + $0x24c] sm:$0xf] %v3071
                  %v3073 = vld [vmem:[%s2903 + $0x150] sm:$0xf]
                  %3074 = vst [vmem:[%s2904 + $0x250] sm:$0xf] %v3073
                  %v3075 = vld [vmem:[%s2903 + $0x154] sm:$0xf]
                  %3076 = vst [vmem:[%s2904 + $0x254] sm:$0xf] %v3075
                  %v3077 = vld [vmem:[%s2903 + $0x158] sm:$0xf]
                  %3078 = vst [vmem:[%s2904 + $0x258] sm:$0xf] %v3077
                  %v3079 = vld [vmem:[%s2903 + $0x15c] sm:$0xf]
                  %3080 = vst [vmem:[%s2904 + $0x25c] sm:$0xf] %v3079
                  %v3081 = vld [vmem:[%s2903 + $0x160] sm:$0xf]
                  %3082 = vst [vmem:[%s2904 + $0x260] sm:$0xf] %v3081
                  %v3083 = vld [vmem:[%s2903 + $0x164] sm:$0xf]
                  %3084 = vst [vmem:[%s2904 + $0x264] sm:$0xf] %v3083
                  %v3085 = vld [vmem:[%s2903 + $0x168] sm:$0xf]
                  %3086 = vst [vmem:[%s2904 + $0x268] sm:$0xf] %v3085
                  %v3087 = vld [vmem:[%s2903 + $0x16c] sm:$0xf]
                  %3088 = vst [vmem:[%s2904 + $0x26c] sm:$0xf] %v3087
                  %v3089 = vld [vmem:[%s2903 + $0x170] sm:$0xf]
                  %3090 = vst [vmem:[%s2904 + $0x270] sm:$0xf] %v3089
                  %v3091 = vld [vmem:[%s2903 + $0x174] sm:$0xf]
                  %3092 = vst [vmem:[%s2904 + $0x274] sm:$0xf] %v3091
                  %v3093 = vld [vmem:[%s2903 + $0x178] sm:$0xf]
                  %3094 = vst [vmem:[%s2904 + $0x278] sm:$0xf] %v3093
                  %v3095 = vld [vmem:[%s2903 + $0x17c] sm:$0xf]
                  %3096 = vst [vmem:[%s2904 + $0x27c] sm:$0xf] %v3095
                  %v3097 = vld [vmem:[%s2903 + $0x180] sm:$0xf]
                  %3098 = vst [vmem:[%s2904 + $0x300] sm:$0xf] %v3097
                  %v3099 = vld [vmem:[%s2903 + $0x184] sm:$0xf]
                  %3100 = vst [vmem:[%s2904 + $0x304] sm:$0xf] %v3099
                  %v3101 = vld [vmem:[%s2903 + $0x188] sm:$0xf]
                  %3102 = vst [vmem:[%s2904 + $0x308] sm:$0xf] %v3101
                  %v3103 = vld [vmem:[%s2903 + $0x18c] sm:$0xf]
                  %3104 = vst [vmem:[%s2904 + $0x30c] sm:$0xf] %v3103
                  %v3105 = vld [vmem:[%s2903 + $0x190] sm:$0xf]
                  %3106 = vst [vmem:[%s2904 + $0x310] sm:$0xf] %v3105
                  %v3107 = vld [vmem:[%s2903 + $0x194] sm:$0xf]
                  %3108 = vst [vmem:[%s2904 + $0x314] sm:$0xf] %v3107
                  %v3109 = vld [vmem:[%s2903 + $0x198] sm:$0xf]
                  %3110 = vst [vmem:[%s2904 + $0x318] sm:$0xf] %v3109
                  %v3111 = vld [vmem:[%s2903 + $0x19c] sm:$0xf]
                  %3112 = vst [vmem:[%s2904 + $0x31c] sm:$0xf] %v3111
                  %v3113 = vld [vmem:[%s2903 + $0x1a0] sm:$0xf]
                  %3114 = vst [vmem:[%s2904 + $0x320] sm:$0xf] %v3113
                  %v3115 = vld [vmem:[%s2903 + $0x1a4] sm:$0xf]
                  %3116 = vst [vmem:[%s2904 + $0x324] sm:$0xf] %v3115
                  %v3117 = vld [vmem:[%s2903 + $0x1a8] sm:$0xf]
                  %3118 = vst [vmem:[%s2904 + $0x328] sm:$0xf] %v3117
                  %v3119 = vld [vmem:[%s2903 + $0x1ac] sm:$0xf]
                  %3120 = vst [vmem:[%s2904 + $0x32c] sm:$0xf] %v3119
                  %v3121 = vld [vmem:[%s2903 + $0x1b0] sm:$0xf]
                  %3122 = vst [vmem:[%s2904 + $0x330] sm:$0xf] %v3121
                  %v3123 = vld [vmem:[%s2903 + $0x1b4] sm:$0xf]
                  %3124 = vst [vmem:[%s2904 + $0x334] sm:$0xf] %v3123
                  %v3125 = vld [vmem:[%s2903 + $0x1b8] sm:$0xf]
                  %3126 = vst [vmem:[%s2904 + $0x338] sm:$0xf] %v3125
                  %v3127 = vld [vmem:[%s2903 + $0x1bc] sm:$0xf]
                  %3128 = vst [vmem:[%s2904 + $0x33c] sm:$0xf] %v3127
                  %v3129 = vld [vmem:[%s2903 + $0x1c0] sm:$0xf]
                  %3130 = vst [vmem:[%s2904 + $0x340] sm:$0xf] %v3129
                  %v3131 = vld [vmem:[%s2903 + $0x1c4] sm:$0xf]
                  %3132 = vst [vmem:[%s2904 + $0x344] sm:$0xf] %v3131
                  %v3133 = vld [vmem:[%s2903 + $0x1c8] sm:$0xf]
                  %3134 = vst [vmem:[%s2904 + $0x348] sm:$0xf] %v3133
                  %v3135 = vld [vmem:[%s2903 + $0x1cc] sm:$0xf]
                  %3136 = vst [vmem:[%s2904 + $0x34c] sm:$0xf] %v3135
                  %v3137 = vld [vmem:[%s2903 + $0x1d0] sm:$0xf]
                  %3138 = vst [vmem:[%s2904 + $0x350] sm:$0xf] %v3137
                  %v3139 = vld [vmem:[%s2903 + $0x1d4] sm:$0xf]
                  %3140 = vst [vmem:[%s2904 + $0x354] sm:$0xf] %v3139
                  %v3141 = vld [vmem:[%s2903 + $0x1d8] sm:$0xf]
                  %3142 = vst [vmem:[%s2904 + $0x358] sm:$0xf] %v3141
                  %v3143 = vld [vmem:[%s2903 + $0x1dc] sm:$0xf]
                  %3144 = vst [vmem:[%s2904 + $0x35c] sm:$0xf] %v3143
                  %v3145 = vld [vmem:[%s2903 + $0x1e0] sm:$0xf]
                  %3146 = vst [vmem:[%s2904 + $0x360] sm:$0xf] %v3145
                  %v3147 = vld [vmem:[%s2903 + $0x1e4] sm:$0xf]
                  %3148 = vst [vmem:[%s2904 + $0x364] sm:$0xf] %v3147
                  %v3149 = vld [vmem:[%s2903 + $0x1e8] sm:$0xf]
                  %3150 = vst [vmem:[%s2904 + $0x368] sm:$0xf] %v3149
                  %v3151 = vld [vmem:[%s2903 + $0x1ec] sm:$0xf]
                  %3152 = vst [vmem:[%s2904 + $0x36c] sm:$0xf] %v3151
                  %v3153 = vld [vmem:[%s2903 + $0x1f0] sm:$0xf]
                  %3154 = vst [vmem:[%s2904 + $0x370] sm:$0xf] %v3153
                  %v3155 = vld [vmem:[%s2903 + $0x1f4] sm:$0xf]
                  %3156 = vst [vmem:[%s2904 + $0x374] sm:$0xf] %v3155
                  %v3157 = vld [vmem:[%s2903 + $0x1f8] sm:$0xf]
                  %3158 = vst [vmem:[%s2904 + $0x378] sm:$0xf] %v3157
                  %v3159 = vld [vmem:[%s2903 + $0x1fc] sm:$0xf]
                  %3160 = vst [vmem:[%s2904 + $0x37c] sm:$0xf] %v3159
                $region79: #{tpu_custom_call.1} parent=66 // loop_footer
                  %s2902 = sadd.s32 1, %s2898
                $region80: #{tpu_custom_call.1} parent=66 // loop_footer_branch
                  %2897 = sbr.rel target = $region76
                $region81: #{tpu_custom_call.1} parent=66 // loop_exit
                  _
              $region67: #{tpu_custom_call.1} parent=51 // pred_fallthru
                _
            $region52: #{tpu_custom_call.1} parent=47 // pred_fallthru
              _
            // Predicated region
            $region53: #{tpu_custom_call.1} parent=47 // pred_check
              _
            $region54: #{tpu_custom_call.1} parent=47 // pred_check_branch
              %2620 = sbr.rel (0) target = $region56
            $region55: #{tpu_custom_call.1} parent=47 // pred_region
              loop: start=0, step=1, limit=1
              $region57: #{tpu_custom_call.1} parent=55 // loop_pre_header
                _
              $region58: #{tpu_custom_call.1} parent=55 // loop_header
                %s2623 = sphi 0, %s2627
                %p2624 = scmp.ge.s32.totalorder %s2623, 1
                %s2628 = sphi %s2598, %s2598
                %s2629 = sphi %s2614, %s2614
              $region59: #{tpu_custom_call.1} parent=55 // loop_header_branch
                %2626 = sbr.rel (%p2624) target = $region63
              $region60: #{tpu_custom_call.1} parent=55 // loop_body
                %v2630 = vld [vmem:[%s2628] sm:$0xf]
                %2631 = vst [vmem:[%s2629] sm:$0xf] %v2630
                %v2632 = vld [vmem:[%s2628 + $0x4] sm:$0xf]
                %2633 = vst [vmem:[%s2629 + $0x4] sm:$0xf] %v2632
                %v2634 = vld [vmem:[%s2628 + $0x8] sm:$0xf]
                %2635 = vst [vmem:[%s2629 + $0x8] sm:$0xf] %v2634
                %v2636 = vld [vmem:[%s2628 + $0xc] sm:$0xf]
                %2637 = vst [vmem:[%s2629 + $0xc] sm:$0xf] %v2636
                %v2638 = vld [vmem:[%s2628 + $0x10] sm:$0xf]
                %2639 = vst [vmem:[%s2629 + $0x10] sm:$0xf] %v2638
                %v2640 = vld [vmem:[%s2628 + $0x14] sm:$0xf]
                %2641 = vst [vmem:[%s2629 + $0x14] sm:$0xf] %v2640
                %v2642 = vld [vmem:[%s2628 + $0x18] sm:$0xf]
                %2643 = vst [vmem:[%s2629 + $0x18] sm:$0xf] %v2642
                %v2644 = vld [vmem:[%s2628 + $0x1c] sm:$0xf]
                %2645 = vst [vmem:[%s2629 + $0x1c] sm:$0xf] %v2644
                %v2646 = vld [vmem:[%s2628 + $0x20] sm:$0xf]
                %2647 = vst [vmem:[%s2629 + $0x20] sm:$0xf] %v2646
                %v2648 = vld [vmem:[%s2628 + $0x24] sm:$0xf]
                %2649 = vst [vmem:[%s2629 + $0x24] sm:$0xf] %v2648
                %v2650 = vld [vmem:[%s2628 + $0x28] sm:$0xf]
                %2651 = vst [vmem:[%s2629 + $0x28] sm:$0xf] %v2650
                %v2652 = vld [vmem:[%s2628 + $0x2c] sm:$0xf]
                %2653 = vst [vmem:[%s2629 + $0x2c] sm:$0xf] %v2652
                %v2654 = vld [vmem:[%s2628 + $0x30] sm:$0xf]
                %2655 = vst [vmem:[%s2629 + $0x30] sm:$0xf] %v2654
                %v2656 = vld [vmem:[%s2628 + $0x34] sm:$0xf]
                %2657 = vst [vmem:[%s2629 + $0x34] sm:$0xf] %v2656
                %v2658 = vld [vmem:[%s2628 + $0x38] sm:$0xf]
                %2659 = vst [vmem:[%s2629 + $0x38] sm:$0xf] %v2658
                %v2660 = vld [vmem:[%s2628 + $0x3c] sm:$0xf]
                %2661 = vst [vmem:[%s2629 + $0x3c] sm:$0xf] %v2660
                %v2662 = vld [vmem:[%s2628 + $0x40] sm:$0xf]
                %2663 = vst [vmem:[%s2629 + $0x40] sm:$0xf] %v2662
                %v2664 = vld [vmem:[%s2628 + $0x44] sm:$0xf]
                %2665 = vst [vmem:[%s2629 + $0x44] sm:$0xf] %v2664
                %v2666 = vld [vmem:[%s2628 + $0x48] sm:$0xf]
                %2667 = vst [vmem:[%s2629 + $0x48] sm:$0xf] %v2666
                %v2668 = vld [vmem:[%s2628 + $0x4c] sm:$0xf]
                %2669 = vst [vmem:[%s2629 + $0x4c] sm:$0xf] %v2668
                %v2670 = vld [vmem:[%s2628 + $0x50] sm:$0xf]
                %2671 = vst [vmem:[%s2629 + $0x50] sm:$0xf] %v2670
                %v2672 = vld [vmem:[%s2628 + $0x54] sm:$0xf]
                %2673 = vst [vmem:[%s2629 + $0x54] sm:$0xf] %v2672
                %v2674 = vld [vmem:[%s2628 + $0x58] sm:$0xf]
                %2675 = vst [vmem:[%s2629 + $0x58] sm:$0xf] %v2674
                %v2676 = vld [vmem:[%s2628 + $0x5c] sm:$0xf]
                %2677 = vst [vmem:[%s2629 + $0x5c] sm:$0xf] %v2676
                %v2678 = vld [vmem:[%s2628 + $0x60] sm:$0xf]
                %2679 = vst [vmem:[%s2629 + $0x60] sm:$0xf] %v2678
                %v2680 = vld [vmem:[%s2628 + $0x64] sm:$0xf]
                %2681 = vst [vmem:[%s2629 + $0x64] sm:$0xf] %v2680
                %v2682 = vld [vmem:[%s2628 + $0x68] sm:$0xf]
                %2683 = vst [vmem:[%s2629 + $0x68] sm:$0xf] %v2682
                %v2684 = vld [vmem:[%s2628 + $0x6c] sm:$0xf]
                %2685 = vst [vmem:[%s2629 + $0x6c] sm:$0xf] %v2684
                %v2686 = vld [vmem:[%s2628 + $0x70] sm:$0xf]
                %2687 = vst [vmem:[%s2629 + $0x70] sm:$0xf] %v2686
                %v2688 = vld [vmem:[%s2628 + $0x74] sm:$0xf]
                %2689 = vst [vmem:[%s2629 + $0x74] sm:$0xf] %v2688
                %v2690 = vld [vmem:[%s2628 + $0x78] sm:$0xf]
                %2691 = vst [vmem:[%s2629 + $0x78] sm:$0xf] %v2690
                %v2692 = vld [vmem:[%s2628 + $0x7c] sm:$0xf]
                %2693 = vst [vmem:[%s2629 + $0x7c] sm:$0xf] %v2692
                %v2694 = vld [vmem:[%s2628 + $0x80] sm:$0xf]
                %2695 = vst [vmem:[%s2629 + $0x100] sm:$0xf] %v2694
                %v2696 = vld [vmem:[%s2628 + $0x84] sm:$0xf]
                %2697 = vst [vmem:[%s2629 + $0x104] sm:$0xf] %v2696
                %v2698 = vld [vmem:[%s2628 + $0x88] sm:$0xf]
                %2699 = vst [vmem:[%s2629 + $0x108] sm:$0xf] %v2698
                %v2700 = vld [vmem:[%s2628 + $0x8c] sm:$0xf]
                %2701 = vst [vmem:[%s2629 + $0x10c] sm:$0xf] %v2700
                %v2702 = vld [vmem:[%s2628 + $0x90] sm:$0xf]
                %2703 = vst [vmem:[%s2629 + $0x110] sm:$0xf] %v2702
                %v2704 = vld [vmem:[%s2628 + $0x94] sm:$0xf]
                %2705 = vst [vmem:[%s2629 + $0x114] sm:$0xf] %v2704
                %v2706 = vld [vmem:[%s2628 + $0x98] sm:$0xf]
                %2707 = vst [vmem:[%s2629 + $0x118] sm:$0xf] %v2706
                %v2708 = vld [vmem:[%s2628 + $0x9c] sm:$0xf]
                %2709 = vst [vmem:[%s2629 + $0x11c] sm:$0xf] %v2708
                %v2710 = vld [vmem:[%s2628 + $0xa0] sm:$0xf]
                %2711 = vst [vmem:[%s2629 + $0x120] sm:$0xf] %v2710
                %v2712 = vld [vmem:[%s2628 + $0xa4] sm:$0xf]
                %2713 = vst [vmem:[%s2629 + $0x124] sm:$0xf] %v2712
                %v2714 = vld [vmem:[%s2628 + $0xa8] sm:$0xf]
                %2715 = vst [vmem:[%s2629 + $0x128] sm:$0xf] %v2714
                %v2716 = vld [vmem:[%s2628 + $0xac] sm:$0xf]
                %2717 = vst [vmem:[%s2629 + $0x12c] sm:$0xf] %v2716
                %v2718 = vld [vmem:[%s2628 + $0xb0] sm:$0xf]
                %2719 = vst [vmem:[%s2629 + $0x130] sm:$0xf] %v2718
                %v2720 = vld [vmem:[%s2628 + $0xb4] sm:$0xf]
                %2721 = vst [vmem:[%s2629 + $0x134] sm:$0xf] %v2720
                %v2722 = vld [vmem:[%s2628 + $0xb8] sm:$0xf]
                %2723 = vst [vmem:[%s2629 + $0x138] sm:$0xf] %v2722
                %v2724 = vld [vmem:[%s2628 + $0xbc] sm:$0xf]
                %2725 = vst [vmem:[%s2629 + $0x13c] sm:$0xf] %v2724
                %v2726 = vld [vmem:[%s2628 + $0xc0] sm:$0xf]
                %2727 = vst [vmem:[%s2629 + $0x140] sm:$0xf] %v2726
                %v2728 = vld [vmem:[%s2628 + $0xc4] sm:$0xf]
                %2729 = vst [vmem:[%s2629 + $0x144] sm:$0xf] %v2728
                %v2730 = vld [vmem:[%s2628 + $0xc8] sm:$0xf]
                %2731 = vst [vmem:[%s2629 + $0x148] sm:$0xf] %v2730
                %v2732 = vld [vmem:[%s2628 + $0xcc] sm:$0xf]
                %2733 = vst [vmem:[%s2629 + $0x14c] sm:$0xf] %v2732
                %v2734 = vld [vmem:[%s2628 + $0xd0] sm:$0xf]
                %2735 = vst [vmem:[%s2629 + $0x150] sm:$0xf] %v2734
                %v2736 = vld [vmem:[%s2628 + $0xd4] sm:$0xf]
                %2737 = vst [vmem:[%s2629 + $0x154] sm:$0xf] %v2736
                %v2738 = vld [vmem:[%s2628 + $0xd8] sm:$0xf]
                %2739 = vst [vmem:[%s2629 + $0x158] sm:$0xf] %v2738
                %v2740 = vld [vmem:[%s2628 + $0xdc] sm:$0xf]
                %2741 = vst [vmem:[%s2629 + $0x15c] sm:$0xf] %v2740
                %v2742 = vld [vmem:[%s2628 + $0xe0] sm:$0xf]
                %2743 = vst [vmem:[%s2629 + $0x160] sm:$0xf] %v2742
                %v2744 = vld [vmem:[%s2628 + $0xe4] sm:$0xf]
                %2745 = vst [vmem:[%s2629 + $0x164] sm:$0xf] %v2744
                %v2746 = vld [vmem:[%s2628 + $0xe8] sm:$0xf]
                %2747 = vst [vmem:[%s2629 + $0x168] sm:$0xf] %v2746
                %v2748 = vld [vmem:[%s2628 + $0xec] sm:$0xf]
                %2749 = vst [vmem:[%s2629 + $0x16c] sm:$0xf] %v2748
                %v2750 = vld [vmem:[%s2628 + $0xf0] sm:$0xf]
                %2751 = vst [vmem:[%s2629 + $0x170] sm:$0xf] %v2750
                %v2752 = vld [vmem:[%s2628 + $0xf4] sm:$0xf]
                %2753 = vst [vmem:[%s2629 + $0x174] sm:$0xf] %v2752
                %v2754 = vld [vmem:[%s2628 + $0xf8] sm:$0xf]
                %2755 = vst [vmem:[%s2629 + $0x178] sm:$0xf] %v2754
                %v2756 = vld [vmem:[%s2628 + $0xfc] sm:$0xf]
                %2757 = vst [vmem:[%s2629 + $0x17c] sm:$0xf] %v2756
                %v2758 = vld [vmem:[%s2628 + $0x100] sm:$0xf]
                %2759 = vst [vmem:[%s2629 + $0x200] sm:$0xf] %v2758
                %v2760 = vld [vmem:[%s2628 + $0x104] sm:$0xf]
                %2761 = vst [vmem:[%s2629 + $0x204] sm:$0xf] %v2760
                %v2762 = vld [vmem:[%s2628 + $0x108] sm:$0xf]
                %2763 = vst [vmem:[%s2629 + $0x208] sm:$0xf] %v2762
                %v2764 = vld [vmem:[%s2628 + $0x10c] sm:$0xf]
                %2765 = vst [vmem:[%s2629 + $0x20c] sm:$0xf] %v2764
                %v2766 = vld [vmem:[%s2628 + $0x110] sm:$0xf]
                %2767 = vst [vmem:[%s2629 + $0x210] sm:$0xf] %v2766
                %v2768 = vld [vmem:[%s2628 + $0x114] sm:$0xf]
                %2769 = vst [vmem:[%s2629 + $0x214] sm:$0xf] %v2768
                %v2770 = vld [vmem:[%s2628 + $0x118] sm:$0xf]
                %2771 = vst [vmem:[%s2629 + $0x218] sm:$0xf] %v2770
                %v2772 = vld [vmem:[%s2628 + $0x11c] sm:$0xf]
                %2773 = vst [vmem:[%s2629 + $0x21c] sm:$0xf] %v2772
                %v2774 = vld [vmem:[%s2628 + $0x120] sm:$0xf]
                %2775 = vst [vmem:[%s2629 + $0x220] sm:$0xf] %v2774
                %v2776 = vld [vmem:[%s2628 + $0x124] sm:$0xf]
                %2777 = vst [vmem:[%s2629 + $0x224] sm:$0xf] %v2776
                %v2778 = vld [vmem:[%s2628 + $0x128] sm:$0xf]
                %2779 = vst [vmem:[%s2629 + $0x228] sm:$0xf] %v2778
                %v2780 = vld [vmem:[%s2628 + $0x12c] sm:$0xf]
                %2781 = vst [vmem:[%s2629 + $0x22c] sm:$0xf] %v2780
                %v2782 = vld [vmem:[%s2628 + $0x130] sm:$0xf]
                %2783 = vst [vmem:[%s2629 + $0x230] sm:$0xf] %v2782
                %v2784 = vld [vmem:[%s2628 + $0x134] sm:$0xf]
                %2785 = vst [vmem:[%s2629 + $0x234] sm:$0xf] %v2784
                %v2786 = vld [vmem:[%s2628 + $0x138] sm:$0xf]
                %2787 = vst [vmem:[%s2629 + $0x238] sm:$0xf] %v2786
                %v2788 = vld [vmem:[%s2628 + $0x13c] sm:$0xf]
                %2789 = vst [vmem:[%s2629 + $0x23c] sm:$0xf] %v2788
                %v2790 = vld [vmem:[%s2628 + $0x140] sm:$0xf]
                %2791 = vst [vmem:[%s2629 + $0x240] sm:$0xf] %v2790
                %v2792 = vld [vmem:[%s2628 + $0x144] sm:$0xf]
                %2793 = vst [vmem:[%s2629 + $0x244] sm:$0xf] %v2792
                %v2794 = vld [vmem:[%s2628 + $0x148] sm:$0xf]
                %2795 = vst [vmem:[%s2629 + $0x248] sm:$0xf] %v2794
                %v2796 = vld [vmem:[%s2628 + $0x14c] sm:$0xf]
                %2797 = vst [vmem:[%s2629 + $0x24c] sm:$0xf] %v2796
                %v2798 = vld [vmem:[%s2628 + $0x150] sm:$0xf]
                %2799 = vst [vmem:[%s2629 + $0x250] sm:$0xf] %v2798
                %v2800 = vld [vmem:[%s2628 + $0x154] sm:$0xf]
                %2801 = vst [vmem:[%s2629 + $0x254] sm:$0xf] %v2800
                %v2802 = vld [vmem:[%s2628 + $0x158] sm:$0xf]
                %2803 = vst [vmem:[%s2629 + $0x258] sm:$0xf] %v2802
                %v2804 = vld [vmem:[%s2628 + $0x15c] sm:$0xf]
                %2805 = vst [vmem:[%s2629 + $0x25c] sm:$0xf] %v2804
                %v2806 = vld [vmem:[%s2628 + $0x160] sm:$0xf]
                %2807 = vst [vmem:[%s2629 + $0x260] sm:$0xf] %v2806
                %v2808 = vld [vmem:[%s2628 + $0x164] sm:$0xf]
                %2809 = vst [vmem:[%s2629 + $0x264] sm:$0xf] %v2808
                %v2810 = vld [vmem:[%s2628 + $0x168] sm:$0xf]
                %2811 = vst [vmem:[%s2629 + $0x268] sm:$0xf] %v2810
                %v2812 = vld [vmem:[%s2628 + $0x16c] sm:$0xf]
                %2813 = vst [vmem:[%s2629 + $0x26c] sm:$0xf] %v2812
                %v2814 = vld [vmem:[%s2628 + $0x170] sm:$0xf]
                %2815 = vst [vmem:[%s2629 + $0x270] sm:$0xf] %v2814
                %v2816 = vld [vmem:[%s2628 + $0x174] sm:$0xf]
                %2817 = vst [vmem:[%s2629 + $0x274] sm:$0xf] %v2816
                %v2818 = vld [vmem:[%s2628 + $0x178] sm:$0xf]
                %2819 = vst [vmem:[%s2629 + $0x278] sm:$0xf] %v2818
                %v2820 = vld [vmem:[%s2628 + $0x17c] sm:$0xf]
                %2821 = vst [vmem:[%s2629 + $0x27c] sm:$0xf] %v2820
                %v2822 = vld [vmem:[%s2628 + $0x180] sm:$0xf]
                %2823 = vst [vmem:[%s2629 + $0x300] sm:$0xf] %v2822
                %v2824 = vld [vmem:[%s2628 + $0x184] sm:$0xf]
                %2825 = vst [vmem:[%s2629 + $0x304] sm:$0xf] %v2824
                %v2826 = vld [vmem:[%s2628 + $0x188] sm:$0xf]
                %2827 = vst [vmem:[%s2629 + $0x308] sm:$0xf] %v2826
                %v2828 = vld [vmem:[%s2628 + $0x18c] sm:$0xf]
                %2829 = vst [vmem:[%s2629 + $0x30c] sm:$0xf] %v2828
                %v2830 = vld [vmem:[%s2628 + $0x190] sm:$0xf]
                %2831 = vst [vmem:[%s2629 + $0x310] sm:$0xf] %v2830
                %v2832 = vld [vmem:[%s2628 + $0x194] sm:$0xf]
                %2833 = vst [vmem:[%s2629 + $0x314] sm:$0xf] %v2832
                %v2834 = vld [vmem:[%s2628 + $0x198] sm:$0xf]
                %2835 = vst [vmem:[%s2629 + $0x318] sm:$0xf] %v2834
                %v2836 = vld [vmem:[%s2628 + $0x19c] sm:$0xf]
                %2837 = vst [vmem:[%s2629 + $0x31c] sm:$0xf] %v2836
                %v2838 = vld [vmem:[%s2628 + $0x1a0] sm:$0xf]
                %2839 = vst [vmem:[%s2629 + $0x320] sm:$0xf] %v2838
                %v2840 = vld [vmem:[%s2628 + $0x1a4] sm:$0xf]
                %2841 = vst [vmem:[%s2629 + $0x324] sm:$0xf] %v2840
                %v2842 = vld [vmem:[%s2628 + $0x1a8] sm:$0xf]
                %2843 = vst [vmem:[%s2629 + $0x328] sm:$0xf] %v2842
                %v2844 = vld [vmem:[%s2628 + $0x1ac] sm:$0xf]
                %2845 = vst [vmem:[%s2629 + $0x32c] sm:$0xf] %v2844
                %v2846 = vld [vmem:[%s2628 + $0x1b0] sm:$0xf]
                %2847 = vst [vmem:[%s2629 + $0x330] sm:$0xf] %v2846
                %v2848 = vld [vmem:[%s2628 + $0x1b4] sm:$0xf]
                %2849 = vst [vmem:[%s2629 + $0x334] sm:$0xf] %v2848
                %v2850 = vld [vmem:[%s2628 + $0x1b8] sm:$0xf]
                %2851 = vst [vmem:[%s2629 + $0x338] sm:$0xf] %v2850
                %v2852 = vld [vmem:[%s2628 + $0x1bc] sm:$0xf]
                %2853 = vst [vmem:[%s2629 + $0x33c] sm:$0xf] %v2852
                %v2854 = vld [vmem:[%s2628 + $0x1c0] sm:$0xf]
                %2855 = vst [vmem:[%s2629 + $0x340] sm:$0xf] %v2854
                %v2856 = vld [vmem:[%s2628 + $0x1c4] sm:$0xf]
                %2857 = vst [vmem:[%s2629 + $0x344] sm:$0xf] %v2856
                %v2858 = vld [vmem:[%s2628 + $0x1c8] sm:$0xf]
                %2859 = vst [vmem:[%s2629 + $0x348] sm:$0xf] %v2858
                %v2860 = vld [vmem:[%s2628 + $0x1cc] sm:$0xf]
                %2861 = vst [vmem:[%s2629 + $0x34c] sm:$0xf] %v2860
                %v2862 = vld [vmem:[%s2628 + $0x1d0] sm:$0xf]
                %2863 = vst [vmem:[%s2629 + $0x350] sm:$0xf] %v2862
                %v2864 = vld [vmem:[%s2628 + $0x1d4] sm:$0xf]
                %2865 = vst [vmem:[%s2629 + $0x354] sm:$0xf] %v2864
                %v2866 = vld [vmem:[%s2628 + $0x1d8] sm:$0xf]
                %2867 = vst [vmem:[%s2629 + $0x358] sm:$0xf] %v2866
                %v2868 = vld [vmem:[%s2628 + $0x1dc] sm:$0xf]
                %2869 = vst [vmem:[%s2629 + $0x35c] sm:$0xf] %v2868
                %v2870 = vld [vmem:[%s2628 + $0x1e0] sm:$0xf]
                %2871 = vst [vmem:[%s2629 + $0x360] sm:$0xf] %v2870
                %v2872 = vld [vmem:[%s2628 + $0x1e4] sm:$0xf]
                %2873 = vst [vmem:[%s2629 + $0x364] sm:$0xf] %v2872
                %v2874 = vld [vmem:[%s2628 + $0x1e8] sm:$0xf]
                %2875 = vst [vmem:[%s2629 + $0x368] sm:$0xf] %v2874
                %v2876 = vld [vmem:[%s2628 + $0x1ec] sm:$0xf]
                %2877 = vst [vmem:[%s2629 + $0x36c] sm:$0xf] %v2876
                %v2878 = vld [vmem:[%s2628 + $0x1f0] sm:$0xf]
                %2879 = vst [vmem:[%s2629 + $0x370] sm:$0xf] %v2878
                %v2880 = vld [vmem:[%s2628 + $0x1f4] sm:$0xf]
                %2881 = vst [vmem:[%s2629 + $0x374] sm:$0xf] %v2880
                %v2882 = vld [vmem:[%s2628 + $0x1f8] sm:$0xf]
                %2883 = vst [vmem:[%s2629 + $0x378] sm:$0xf] %v2882
                %v2884 = vld [vmem:[%s2628 + $0x1fc] sm:$0xf]
                %2885 = vst [vmem:[%s2629 + $0x37c] sm:$0xf] %v2884
              $region61: #{tpu_custom_call.1} parent=55 // loop_footer
                %s2627 = sadd.s32 1, %s2623
              $region62: #{tpu_custom_call.1} parent=55 // loop_footer_branch
                %2622 = sbr.rel target = $region58
              $region63: #{tpu_custom_call.1} parent=55 // loop_exit
                _
            $region56: #{tpu_custom_call.1} parent=47 // pred_fallthru
              _
          $region48: #{tpu_custom_call.1} parent=43 // pred_fallthru
            _
          %3161 = vnop
        $region44: #{tpu_custom_call.1} parent=31 // pred_fallthru
          _
        // Predicated region
        $region82: #{tpu_custom_call.1} parent=31 // pred_check
          %p3162 = pneg %p151
        $region83: #{tpu_custom_call.1} parent=31 // pred_check_branch
          %3164 = sbr.rel (%p3162) target = $region85
        $region84: #{tpu_custom_call.1} parent=31 // pred_region
          %s3165 = smul.u32 32, %s26
          %s3166 = smul.addr %s25, 256
          %s3167 = sadd.s32 %s3165, %s3166
          %s3168 = smul.addr %s3167, 4
          %s3169 = scalar_lea.vmem %s4, %s3168
          // Predicated region
          $region86: #{tpu_custom_call.1} parent=84 // pred_check
            _
          $region87: #{tpu_custom_call.1} parent=84 // pred_check_branch
            %3171 = sbr.rel (0) target = $region89
          $region88: #{tpu_custom_call.1} parent=84 // pred_region
            // Predicated region
            $region90: #{tpu_custom_call.1} parent=88 // pred_check
              _
            $region91: #{tpu_custom_call.1} parent=88 // pred_check_branch
              %3173 = sbr.rel target = $region93
            $region92: #{tpu_custom_call.1} parent=88 // pred_region
              // Predicated region
              $region105: #{tpu_custom_call.1} parent=92 // pred_check
                _
              $region106: #{tpu_custom_call.1} parent=92 // pred_check_branch
                %3442 = sbr.rel (0) target = $region108
              $region107: #{tpu_custom_call.1} parent=92 // pred_region
                loop: start=0, step=1, limit=1
                $region109: #{tpu_custom_call.1} parent=107 // loop_pre_header
                  _
                $region110: #{tpu_custom_call.1} parent=107 // loop_header
                  %s3444 = sphi 0, %s3448
                  %p3445 = scmp.ge.s32.totalorder %s3444, 1
                  %s3449 = sphi %s2602, %s2602
                  %s3450 = sphi %s3169, %s3169
                $region111: #{tpu_custom_call.1} parent=107 // loop_header_branch
                  %3447 = sbr.rel (%p3445) target = $region115
                $region112: #{tpu_custom_call.1} parent=107 // loop_body
                  _
                $region113: #{tpu_custom_call.1} parent=107 // loop_footer
                  %s3448 = sadd.s32 1, %s3444
                $region114: #{tpu_custom_call.1} parent=107 // loop_footer_branch
                  %3443 = sbr.rel target = $region110
                $region115: #{tpu_custom_call.1} parent=107 // loop_exit
                  _
                loop: start=0, step=1, limit=1
                $region116: #{tpu_custom_call.1} parent=107 // loop_pre_header
                  _
                $region117: #{tpu_custom_call.1} parent=107 // loop_header
                  %s3453 = sphi 0, %s3457
                  %p3454 = scmp.ge.s32.totalorder %s3453, 1
                  %s3458 = sphi %s2602, %s2602
                  %s3459 = sphi %s3169, %s3169
                $region118: #{tpu_custom_call.1} parent=107 // loop_header_branch
                  %3456 = sbr.rel (%p3454) target = $region122
                $region119: #{tpu_custom_call.1} parent=107 // loop_body
                  %v3460 = vld [vmem:[%s3458] sm:$0xf]
                  %3461 = vst [vmem:[%s3459] sm:$0xf] %v3460
                  %v3462 = vld [vmem:[%s3458 + $0x4] sm:$0xf]
                  %3463 = vst [vmem:[%s3459 + $0x4] sm:$0xf] %v3462
                  %v3464 = vld [vmem:[%s3458 + $0x8] sm:$0xf]
                  %3465 = vst [vmem:[%s3459 + $0x8] sm:$0xf] %v3464
                  %v3466 = vld [vmem:[%s3458 + $0xc] sm:$0xf]
                  %3467 = vst [vmem:[%s3459 + $0xc] sm:$0xf] %v3466
                  %v3468 = vld [vmem:[%s3458 + $0x10] sm:$0xf]
                  %3469 = vst [vmem:[%s3459 + $0x10] sm:$0xf] %v3468
                  %v3470 = vld [vmem:[%s3458 + $0x14] sm:$0xf]
                  %3471 = vst [vmem:[%s3459 + $0x14] sm:$0xf] %v3470
                  %v3472 = vld [vmem:[%s3458 + $0x18] sm:$0xf]
                  %3473 = vst [vmem:[%s3459 + $0x18] sm:$0xf] %v3472
                  %v3474 = vld [vmem:[%s3458 + $0x1c] sm:$0xf]
                  %3475 = vst [vmem:[%s3459 + $0x1c] sm:$0xf] %v3474
                  %v3476 = vld [vmem:[%s3458 + $0x20] sm:$0xf]
                  %3477 = vst [vmem:[%s3459 + $0x20] sm:$0xf] %v3476
                  %v3478 = vld [vmem:[%s3458 + $0x24] sm:$0xf]
                  %3479 = vst [vmem:[%s3459 + $0x24] sm:$0xf] %v3478
                  %v3480 = vld [vmem:[%s3458 + $0x28] sm:$0xf]
                  %3481 = vst [vmem:[%s3459 + $0x28] sm:$0xf] %v3480
                  %v3482 = vld [vmem:[%s3458 + $0x2c] sm:$0xf]
                  %3483 = vst [vmem:[%s3459 + $0x2c] sm:$0xf] %v3482
                  %v3484 = vld [vmem:[%s3458 + $0x30] sm:$0xf]
                  %3485 = vst [vmem:[%s3459 + $0x30] sm:$0xf] %v3484
                  %v3486 = vld [vmem:[%s3458 + $0x34] sm:$0xf]
                  %3487 = vst [vmem:[%s3459 + $0x34] sm:$0xf] %v3486
                  %v3488 = vld [vmem:[%s3458 + $0x38] sm:$0xf]
                  %3489 = vst [vmem:[%s3459 + $0x38] sm:$0xf] %v3488
                  %v3490 = vld [vmem:[%s3458 + $0x3c] sm:$0xf]
                  %3491 = vst [vmem:[%s3459 + $0x3c] sm:$0xf] %v3490
                  %v3492 = vld [vmem:[%s3458 + $0x40] sm:$0xf]
                  %3493 = vst [vmem:[%s3459 + $0x40] sm:$0xf] %v3492
                  %v3494 = vld [vmem:[%s3458 + $0x44] sm:$0xf]
                  %3495 = vst [vmem:[%s3459 + $0x44] sm:$0xf] %v3494
                  %v3496 = vld [vmem:[%s3458 + $0x48] sm:$0xf]
                  %3497 = vst [vmem:[%s3459 + $0x48] sm:$0xf] %v3496
                  %v3498 = vld [vmem:[%s3458 + $0x4c] sm:$0xf]
                  %3499 = vst [vmem:[%s3459 + $0x4c] sm:$0xf] %v3498
                  %v3500 = vld [vmem:[%s3458 + $0x50] sm:$0xf]
                  %3501 = vst [vmem:[%s3459 + $0x50] sm:$0xf] %v3500
                  %v3502 = vld [vmem:[%s3458 + $0x54] sm:$0xf]
                  %3503 = vst [vmem:[%s3459 + $0x54] sm:$0xf] %v3502
                  %v3504 = vld [vmem:[%s3458 + $0x58] sm:$0xf]
                  %3505 = vst [vmem:[%s3459 + $0x58] sm:$0xf] %v3504
                  %v3506 = vld [vmem:[%s3458 + $0x5c] sm:$0xf]
                  %3507 = vst [vmem:[%s3459 + $0x5c] sm:$0xf] %v3506
                  %v3508 = vld [vmem:[%s3458 + $0x60] sm:$0xf]
                  %3509 = vst [vmem:[%s3459 + $0x60] sm:$0xf] %v3508
                  %v3510 = vld [vmem:[%s3458 + $0x64] sm:$0xf]
                  %3511 = vst [vmem:[%s3459 + $0x64] sm:$0xf] %v3510
                  %v3512 = vld [vmem:[%s3458 + $0x68] sm:$0xf]
                  %3513 = vst [vmem:[%s3459 + $0x68] sm:$0xf] %v3512
                  %v3514 = vld [vmem:[%s3458 + $0x6c] sm:$0xf]
                  %3515 = vst [vmem:[%s3459 + $0x6c] sm:$0xf] %v3514
                  %v3516 = vld [vmem:[%s3458 + $0x70] sm:$0xf]
                  %3517 = vst [vmem:[%s3459 + $0x70] sm:$0xf] %v3516
                  %v3518 = vld [vmem:[%s3458 + $0x74] sm:$0xf]
                  %3519 = vst [vmem:[%s3459 + $0x74] sm:$0xf] %v3518
                  %v3520 = vld [vmem:[%s3458 + $0x78] sm:$0xf]
                  %3521 = vst [vmem:[%s3459 + $0x78] sm:$0xf] %v3520
                  %v3522 = vld [vmem:[%s3458 + $0x7c] sm:$0xf]
                  %3523 = vst [vmem:[%s3459 + $0x7c] sm:$0xf] %v3522
                  %v3524 = vld [vmem:[%s3458 + $0x80] sm:$0xf]
                  %3525 = vst [vmem:[%s3459 + $0x100] sm:$0xf] %v3524
                  %v3526 = vld [vmem:[%s3458 + $0x84] sm:$0xf]
                  %3527 = vst [vmem:[%s3459 + $0x104] sm:$0xf] %v3526
                  %v3528 = vld [vmem:[%s3458 + $0x88] sm:$0xf]
                  %3529 = vst [vmem:[%s3459 + $0x108] sm:$0xf] %v3528
                  %v3530 = vld [vmem:[%s3458 + $0x8c] sm:$0xf]
                  %3531 = vst [vmem:[%s3459 + $0x10c] sm:$0xf] %v3530
                  %v3532 = vld [vmem:[%s3458 + $0x90] sm:$0xf]
                  %3533 = vst [vmem:[%s3459 + $0x110] sm:$0xf] %v3532
                  %v3534 = vld [vmem:[%s3458 + $0x94] sm:$0xf]
                  %3535 = vst [vmem:[%s3459 + $0x114] sm:$0xf] %v3534
                  %v3536 = vld [vmem:[%s3458 + $0x98] sm:$0xf]
                  %3537 = vst [vmem:[%s3459 + $0x118] sm:$0xf] %v3536
                  %v3538 = vld [vmem:[%s3458 + $0x9c] sm:$0xf]
                  %3539 = vst [vmem:[%s3459 + $0x11c] sm:$0xf] %v3538
                  %v3540 = vld [vmem:[%s3458 + $0xa0] sm:$0xf]
                  %3541 = vst [vmem:[%s3459 + $0x120] sm:$0xf] %v3540
                  %v3542 = vld [vmem:[%s3458 + $0xa4] sm:$0xf]
                  %3543 = vst [vmem:[%s3459 + $0x124] sm:$0xf] %v3542
                  %v3544 = vld [vmem:[%s3458 + $0xa8] sm:$0xf]
                  %3545 = vst [vmem:[%s3459 + $0x128] sm:$0xf] %v3544
                  %v3546 = vld [vmem:[%s3458 + $0xac] sm:$0xf]
                  %3547 = vst [vmem:[%s3459 + $0x12c] sm:$0xf] %v3546
                  %v3548 = vld [vmem:[%s3458 + $0xb0] sm:$0xf]
                  %3549 = vst [vmem:[%s3459 + $0x130] sm:$0xf] %v3548
                  %v3550 = vld [vmem:[%s3458 + $0xb4] sm:$0xf]
                  %3551 = vst [vmem:[%s3459 + $0x134] sm:$0xf] %v3550
                  %v3552 = vld [vmem:[%s3458 + $0xb8] sm:$0xf]
                  %3553 = vst [vmem:[%s3459 + $0x138] sm:$0xf] %v3552
                  %v3554 = vld [vmem:[%s3458 + $0xbc] sm:$0xf]
                  %3555 = vst [vmem:[%s3459 + $0x13c] sm:$0xf] %v3554
                  %v3556 = vld [vmem:[%s3458 + $0xc0] sm:$0xf]
                  %3557 = vst [vmem:[%s3459 + $0x140] sm:$0xf] %v3556
                  %v3558 = vld [vmem:[%s3458 + $0xc4] sm:$0xf]
                  %3559 = vst [vmem:[%s3459 + $0x144] sm:$0xf] %v3558
                  %v3560 = vld [vmem:[%s3458 + $0xc8] sm:$0xf]
                  %3561 = vst [vmem:[%s3459 + $0x148] sm:$0xf] %v3560
                  %v3562 = vld [vmem:[%s3458 + $0xcc] sm:$0xf]
                  %3563 = vst [vmem:[%s3459 + $0x14c] sm:$0xf] %v3562
                  %v3564 = vld [vmem:[%s3458 + $0xd0] sm:$0xf]
                  %3565 = vst [vmem:[%s3459 + $0x150] sm:$0xf] %v3564
                  %v3566 = vld [vmem:[%s3458 + $0xd4] sm:$0xf]
                  %3567 = vst [vmem:[%s3459 + $0x154] sm:$0xf] %v3566
                  %v3568 = vld [vmem:[%s3458 + $0xd8] sm:$0xf]
                  %3569 = vst [vmem:[%s3459 + $0x158] sm:$0xf] %v3568
                  %v3570 = vld [vmem:[%s3458 + $0xdc] sm:$0xf]
                  %3571 = vst [vmem:[%s3459 + $0x15c] sm:$0xf] %v3570
                  %v3572 = vld [vmem:[%s3458 + $0xe0] sm:$0xf]
                  %3573 = vst [vmem:[%s3459 + $0x160] sm:$0xf] %v3572
                  %v3574 = vld [vmem:[%s3458 + $0xe4] sm:$0xf]
                  %3575 = vst [vmem:[%s3459 + $0x164] sm:$0xf] %v3574
                  %v3576 = vld [vmem:[%s3458 + $0xe8] sm:$0xf]
                  %3577 = vst [vmem:[%s3459 + $0x168] sm:$0xf] %v3576
                  %v3578 = vld [vmem:[%s3458 + $0xec] sm:$0xf]
                  %3579 = vst [vmem:[%s3459 + $0x16c] sm:$0xf] %v3578
                  %v3580 = vld [vmem:[%s3458 + $0xf0] sm:$0xf]
                  %3581 = vst [vmem:[%s3459 + $0x170] sm:$0xf] %v3580
                  %v3582 = vld [vmem:[%s3458 + $0xf4] sm:$0xf]
                  %3583 = vst [vmem:[%s3459 + $0x174] sm:$0xf] %v3582
                  %v3584 = vld [vmem:[%s3458 + $0xf8] sm:$0xf]
                  %3585 = vst [vmem:[%s3459 + $0x178] sm:$0xf] %v3584
                  %v3586 = vld [vmem:[%s3458 + $0xfc] sm:$0xf]
                  %3587 = vst [vmem:[%s3459 + $0x17c] sm:$0xf] %v3586
                  %v3588 = vld [vmem:[%s3458 + $0x100] sm:$0xf]
                  %3589 = vst [vmem:[%s3459 + $0x200] sm:$0xf] %v3588
                  %v3590 = vld [vmem:[%s3458 + $0x104] sm:$0xf]
                  %3591 = vst [vmem:[%s3459 + $0x204] sm:$0xf] %v3590
                  %v3592 = vld [vmem:[%s3458 + $0x108] sm:$0xf]
                  %3593 = vst [vmem:[%s3459 + $0x208] sm:$0xf] %v3592
                  %v3594 = vld [vmem:[%s3458 + $0x10c] sm:$0xf]
                  %3595 = vst [vmem:[%s3459 + $0x20c] sm:$0xf] %v3594
                  %v3596 = vld [vmem:[%s3458 + $0x110] sm:$0xf]
                  %3597 = vst [vmem:[%s3459 + $0x210] sm:$0xf] %v3596
                  %v3598 = vld [vmem:[%s3458 + $0x114] sm:$0xf]
                  %3599 = vst [vmem:[%s3459 + $0x214] sm:$0xf] %v3598
                  %v3600 = vld [vmem:[%s3458 + $0x118] sm:$0xf]
                  %3601 = vst [vmem:[%s3459 + $0x218] sm:$0xf] %v3600
                  %v3602 = vld [vmem:[%s3458 + $0x11c] sm:$0xf]
                  %3603 = vst [vmem:[%s3459 + $0x21c] sm:$0xf] %v3602
                  %v3604 = vld [vmem:[%s3458 + $0x120] sm:$0xf]
                  %3605 = vst [vmem:[%s3459 + $0x220] sm:$0xf] %v3604
                  %v3606 = vld [vmem:[%s3458 + $0x124] sm:$0xf]
                  %3607 = vst [vmem:[%s3459 + $0x224] sm:$0xf] %v3606
                  %v3608 = vld [vmem:[%s3458 + $0x128] sm:$0xf]
                  %3609 = vst [vmem:[%s3459 + $0x228] sm:$0xf] %v3608
                  %v3610 = vld [vmem:[%s3458 + $0x12c] sm:$0xf]
                  %3611 = vst [vmem:[%s3459 + $0x22c] sm:$0xf] %v3610
                  %v3612 = vld [vmem:[%s3458 + $0x130] sm:$0xf]
                  %3613 = vst [vmem:[%s3459 + $0x230] sm:$0xf] %v3612
                  %v3614 = vld [vmem:[%s3458 + $0x134] sm:$0xf]
                  %3615 = vst [vmem:[%s3459 + $0x234] sm:$0xf] %v3614
                  %v3616 = vld [vmem:[%s3458 + $0x138] sm:$0xf]
                  %3617 = vst [vmem:[%s3459 + $0x238] sm:$0xf] %v3616
                  %v3618 = vld [vmem:[%s3458 + $0x13c] sm:$0xf]
                  %3619 = vst [vmem:[%s3459 + $0x23c] sm:$0xf] %v3618
                  %v3620 = vld [vmem:[%s3458 + $0x140] sm:$0xf]
                  %3621 = vst [vmem:[%s3459 + $0x240] sm:$0xf] %v3620
                  %v3622 = vld [vmem:[%s3458 + $0x144] sm:$0xf]
                  %3623 = vst [vmem:[%s3459 + $0x244] sm:$0xf] %v3622
                  %v3624 = vld [vmem:[%s3458 + $0x148] sm:$0xf]
                  %3625 = vst [vmem:[%s3459 + $0x248] sm:$0xf] %v3624
                  %v3626 = vld [vmem:[%s3458 + $0x14c] sm:$0xf]
                  %3627 = vst [vmem:[%s3459 + $0x24c] sm:$0xf] %v3626
                  %v3628 = vld [vmem:[%s3458 + $0x150] sm:$0xf]
                  %3629 = vst [vmem:[%s3459 + $0x250] sm:$0xf] %v3628
                  %v3630 = vld [vmem:[%s3458 + $0x154] sm:$0xf]
                  %3631 = vst [vmem:[%s3459 + $0x254] sm:$0xf] %v3630
                  %v3632 = vld [vmem:[%s3458 + $0x158] sm:$0xf]
                  %3633 = vst [vmem:[%s3459 + $0x258] sm:$0xf] %v3632
                  %v3634 = vld [vmem:[%s3458 + $0x15c] sm:$0xf]
                  %3635 = vst [vmem:[%s3459 + $0x25c] sm:$0xf] %v3634
                  %v3636 = vld [vmem:[%s3458 + $0x160] sm:$0xf]
                  %3637 = vst [vmem:[%s3459 + $0x260] sm:$0xf] %v3636
                  %v3638 = vld [vmem:[%s3458 + $0x164] sm:$0xf]
                  %3639 = vst [vmem:[%s3459 + $0x264] sm:$0xf] %v3638
                  %v3640 = vld [vmem:[%s3458 + $0x168] sm:$0xf]
                  %3641 = vst [vmem:[%s3459 + $0x268] sm:$0xf] %v3640
                  %v3642 = vld [vmem:[%s3458 + $0x16c] sm:$0xf]
                  %3643 = vst [vmem:[%s3459 + $0x26c] sm:$0xf] %v3642
                  %v3644 = vld [vmem:[%s3458 + $0x170] sm:$0xf]
                  %3645 = vst [vmem:[%s3459 + $0x270] sm:$0xf] %v3644
                  %v3646 = vld [vmem:[%s3458 + $0x174] sm:$0xf]
                  %3647 = vst [vmem:[%s3459 + $0x274] sm:$0xf] %v3646
                  %v3648 = vld [vmem:[%s3458 + $0x178] sm:$0xf]
                  %3649 = vst [vmem:[%s3459 + $0x278] sm:$0xf] %v3648
                  %v3650 = vld [vmem:[%s3458 + $0x17c] sm:$0xf]
                  %3651 = vst [vmem:[%s3459 + $0x27c] sm:$0xf] %v3650
                  %v3652 = vld [vmem:[%s3458 + $0x180] sm:$0xf]
                  %3653 = vst [vmem:[%s3459 + $0x300] sm:$0xf] %v3652
                  %v3654 = vld [vmem:[%s3458 + $0x184] sm:$0xf]
                  %3655 = vst [vmem:[%s3459 + $0x304] sm:$0xf] %v3654
                  %v3656 = vld [vmem:[%s3458 + $0x188] sm:$0xf]
                  %3657 = vst [vmem:[%s3459 + $0x308] sm:$0xf] %v3656
                  %v3658 = vld [vmem:[%s3458 + $0x18c] sm:$0xf]
                  %3659 = vst [vmem:[%s3459 + $0x30c] sm:$0xf] %v3658
                  %v3660 = vld [vmem:[%s3458 + $0x190] sm:$0xf]
                  %3661 = vst [vmem:[%s3459 + $0x310] sm:$0xf] %v3660
                  %v3662 = vld [vmem:[%s3458 + $0x194] sm:$0xf]
                  %3663 = vst [vmem:[%s3459 + $0x314] sm:$0xf] %v3662
                  %v3664 = vld [vmem:[%s3458 + $0x198] sm:$0xf]
                  %3665 = vst [vmem:[%s3459 + $0x318] sm:$0xf] %v3664
                  %v3666 = vld [vmem:[%s3458 + $0x19c] sm:$0xf]
                  %3667 = vst [vmem:[%s3459 + $0x31c] sm:$0xf] %v3666
                  %v3668 = vld [vmem:[%s3458 + $0x1a0] sm:$0xf]
                  %3669 = vst [vmem:[%s3459 + $0x320] sm:$0xf] %v3668
                  %v3670 = vld [vmem:[%s3458 + $0x1a4] sm:$0xf]
                  %3671 = vst [vmem:[%s3459 + $0x324] sm:$0xf] %v3670
                  %v3672 = vld [vmem:[%s3458 + $0x1a8] sm:$0xf]
                  %3673 = vst [vmem:[%s3459 + $0x328] sm:$0xf] %v3672
                  %v3674 = vld [vmem:[%s3458 + $0x1ac] sm:$0xf]
                  %3675 = vst [vmem:[%s3459 + $0x32c] sm:$0xf] %v3674
                  %v3676 = vld [vmem:[%s3458 + $0x1b0] sm:$0xf]
                  %3677 = vst [vmem:[%s3459 + $0x330] sm:$0xf] %v3676
                  %v3678 = vld [vmem:[%s3458 + $0x1b4] sm:$0xf]
                  %3679 = vst [vmem:[%s3459 + $0x334] sm:$0xf] %v3678
                  %v3680 = vld [vmem:[%s3458 + $0x1b8] sm:$0xf]
                  %3681 = vst [vmem:[%s3459 + $0x338] sm:$0xf] %v3680
                  %v3682 = vld [vmem:[%s3458 + $0x1bc] sm:$0xf]
                  %3683 = vst [vmem:[%s3459 + $0x33c] sm:$0xf] %v3682
                  %v3684 = vld [vmem:[%s3458 + $0x1c0] sm:$0xf]
                  %3685 = vst [vmem:[%s3459 + $0x340] sm:$0xf] %v3684
                  %v3686 = vld [vmem:[%s3458 + $0x1c4] sm:$0xf]
                  %3687 = vst [vmem:[%s3459 + $0x344] sm:$0xf] %v3686
                  %v3688 = vld [vmem:[%s3458 + $0x1c8] sm:$0xf]
                  %3689 = vst [vmem:[%s3459 + $0x348] sm:$0xf] %v3688
                  %v3690 = vld [vmem:[%s3458 + $0x1cc] sm:$0xf]
                  %3691 = vst [vmem:[%s3459 + $0x34c] sm:$0xf] %v3690
                  %v3692 = vld [vmem:[%s3458 + $0x1d0] sm:$0xf]
                  %3693 = vst [vmem:[%s3459 + $0x350] sm:$0xf] %v3692
                  %v3694 = vld [vmem:[%s3458 + $0x1d4] sm:$0xf]
                  %3695 = vst [vmem:[%s3459 + $0x354] sm:$0xf] %v3694
                  %v3696 = vld [vmem:[%s3458 + $0x1d8] sm:$0xf]
                  %3697 = vst [vmem:[%s3459 + $0x358] sm:$0xf] %v3696
                  %v3698 = vld [vmem:[%s3458 + $0x1dc] sm:$0xf]
                  %3699 = vst [vmem:[%s3459 + $0x35c] sm:$0xf] %v3698
                  %v3700 = vld [vmem:[%s3458 + $0x1e0] sm:$0xf]
                  %3701 = vst [vmem:[%s3459 + $0x360] sm:$0xf] %v3700
                  %v3702 = vld [vmem:[%s3458 + $0x1e4] sm:$0xf]
                  %3703 = vst [vmem:[%s3459 + $0x364] sm:$0xf] %v3702
                  %v3704 = vld [vmem:[%s3458 + $0x1e8] sm:$0xf]
                  %3705 = vst [vmem:[%s3459 + $0x368] sm:$0xf] %v3704
                  %v3706 = vld [vmem:[%s3458 + $0x1ec] sm:$0xf]
                  %3707 = vst [vmem:[%s3459 + $0x36c] sm:$0xf] %v3706
                  %v3708 = vld [vmem:[%s3458 + $0x1f0] sm:$0xf]
                  %3709 = vst [vmem:[%s3459 + $0x370] sm:$0xf] %v3708
                  %v3710 = vld [vmem:[%s3458 + $0x1f4] sm:$0xf]
                  %3711 = vst [vmem:[%s3459 + $0x374] sm:$0xf] %v3710
                  %v3712 = vld [vmem:[%s3458 + $0x1f8] sm:$0xf]
                  %3713 = vst [vmem:[%s3459 + $0x378] sm:$0xf] %v3712
                  %v3714 = vld [vmem:[%s3458 + $0x1fc] sm:$0xf]
                  %3715 = vst [vmem:[%s3459 + $0x37c] sm:$0xf] %v3714
                $region120: #{tpu_custom_call.1} parent=107 // loop_footer
                  %s3457 = sadd.s32 1, %s3453
                $region121: #{tpu_custom_call.1} parent=107 // loop_footer_branch
                  %3452 = sbr.rel target = $region117
                $region122: #{tpu_custom_call.1} parent=107 // loop_exit
                  _
              $region108: #{tpu_custom_call.1} parent=92 // pred_fallthru
                _
            $region93: #{tpu_custom_call.1} parent=88 // pred_fallthru
              _
            // Predicated region
            $region94: #{tpu_custom_call.1} parent=88 // pred_check
              _
            $region95: #{tpu_custom_call.1} parent=88 // pred_check_branch
              %3175 = sbr.rel (0) target = $region97
            $region96: #{tpu_custom_call.1} parent=88 // pred_region
              loop: start=0, step=1, limit=1
              $region98: #{tpu_custom_call.1} parent=96 // loop_pre_header
                _
              $region99: #{tpu_custom_call.1} parent=96 // loop_header
                %s3178 = sphi 0, %s3182
                %p3179 = scmp.ge.s32.totalorder %s3178, 1
                %s3183 = sphi %s2602, %s2602
                %s3184 = sphi %s3169, %s3169
              $region100: #{tpu_custom_call.1} parent=96 // loop_header_branch
                %3181 = sbr.rel (%p3179) target = $region104
              $region101: #{tpu_custom_call.1} parent=96 // loop_body
                %v3185 = vld [vmem:[%s3183] sm:$0xf]
                %3186 = vst [vmem:[%s3184] sm:$0xf] %v3185
                %v3187 = vld [vmem:[%s3183 + $0x4] sm:$0xf]
                %3188 = vst [vmem:[%s3184 + $0x4] sm:$0xf] %v3187
                %v3189 = vld [vmem:[%s3183 + $0x8] sm:$0xf]
                %3190 = vst [vmem:[%s3184 + $0x8] sm:$0xf] %v3189
                %v3191 = vld [vmem:[%s3183 + $0xc] sm:$0xf]
                %3192 = vst [vmem:[%s3184 + $0xc] sm:$0xf] %v3191
                %v3193 = vld [vmem:[%s3183 + $0x10] sm:$0xf]
                %3194 = vst [vmem:[%s3184 + $0x10] sm:$0xf] %v3193
                %v3195 = vld [vmem:[%s3183 + $0x14] sm:$0xf]
                %3196 = vst [vmem:[%s3184 + $0x14] sm:$0xf] %v3195
                %v3197 = vld [vmem:[%s3183 + $0x18] sm:$0xf]
                %3198 = vst [vmem:[%s3184 + $0x18] sm:$0xf] %v3197
                %v3199 = vld [vmem:[%s3183 + $0x1c] sm:$0xf]
                %3200 = vst [vmem:[%s3184 + $0x1c] sm:$0xf] %v3199
                %v3201 = vld [vmem:[%s3183 + $0x20] sm:$0xf]
                %3202 = vst [vmem:[%s3184 + $0x20] sm:$0xf] %v3201
                %v3203 = vld [vmem:[%s3183 + $0x24] sm:$0xf]
                %3204 = vst [vmem:[%s3184 + $0x24] sm:$0xf] %v3203
                %v3205 = vld [vmem:[%s3183 + $0x28] sm:$0xf]
                %3206 = vst [vmem:[%s3184 + $0x28] sm:$0xf] %v3205
                %v3207 = vld [vmem:[%s3183 + $0x2c] sm:$0xf]
                %3208 = vst [vmem:[%s3184 + $0x2c] sm:$0xf] %v3207
                %v3209 = vld [vmem:[%s3183 + $0x30] sm:$0xf]
                %3210 = vst [vmem:[%s3184 + $0x30] sm:$0xf] %v3209
                %v3211 = vld [vmem:[%s3183 + $0x34] sm:$0xf]
                %3212 = vst [vmem:[%s3184 + $0x34] sm:$0xf] %v3211
                %v3213 = vld [vmem:[%s3183 + $0x38] sm:$0xf]
                %3214 = vst [vmem:[%s3184 + $0x38] sm:$0xf] %v3213
                %v3215 = vld [vmem:[%s3183 + $0x3c] sm:$0xf]
                %3216 = vst [vmem:[%s3184 + $0x3c] sm:$0xf] %v3215
                %v3217 = vld [vmem:[%s3183 + $0x40] sm:$0xf]
                %3218 = vst [vmem:[%s3184 + $0x40] sm:$0xf] %v3217
                %v3219 = vld [vmem:[%s3183 + $0x44] sm:$0xf]
                %3220 = vst [vmem:[%s3184 + $0x44] sm:$0xf] %v3219
                %v3221 = vld [vmem:[%s3183 + $0x48] sm:$0xf]
                %3222 = vst [vmem:[%s3184 + $0x48] sm:$0xf] %v3221
                %v3223 = vld [vmem:[%s3183 + $0x4c] sm:$0xf]
                %3224 = vst [vmem:[%s3184 + $0x4c] sm:$0xf] %v3223
                %v3225 = vld [vmem:[%s3183 + $0x50] sm:$0xf]
                %3226 = vst [vmem:[%s3184 + $0x50] sm:$0xf] %v3225
                %v3227 = vld [vmem:[%s3183 + $0x54] sm:$0xf]
                %3228 = vst [vmem:[%s3184 + $0x54] sm:$0xf] %v3227
                %v3229 = vld [vmem:[%s3183 + $0x58] sm:$0xf]
                %3230 = vst [vmem:[%s3184 + $0x58] sm:$0xf] %v3229
                %v3231 = vld [vmem:[%s3183 + $0x5c] sm:$0xf]
                %3232 = vst [vmem:[%s3184 + $0x5c] sm:$0xf] %v3231
                %v3233 = vld [vmem:[%s3183 + $0x60] sm:$0xf]
                %3234 = vst [vmem:[%s3184 + $0x60] sm:$0xf] %v3233
                %v3235 = vld [vmem:[%s3183 + $0x64] sm:$0xf]
                %3236 = vst [vmem:[%s3184 + $0x64] sm:$0xf] %v3235
                %v3237 = vld [vmem:[%s3183 + $0x68] sm:$0xf]
                %3238 = vst [vmem:[%s3184 + $0x68] sm:$0xf] %v3237
                %v3239 = vld [vmem:[%s3183 + $0x6c] sm:$0xf]
                %3240 = vst [vmem:[%s3184 + $0x6c] sm:$0xf] %v3239
                %v3241 = vld [vmem:[%s3183 + $0x70] sm:$0xf]
                %3242 = vst [vmem:[%s3184 + $0x70] sm:$0xf] %v3241
                %v3243 = vld [vmem:[%s3183 + $0x74] sm:$0xf]
                %3244 = vst [vmem:[%s3184 + $0x74] sm:$0xf] %v3243
                %v3245 = vld [vmem:[%s3183 + $0x78] sm:$0xf]
                %3246 = vst [vmem:[%s3184 + $0x78] sm:$0xf] %v3245
                %v3247 = vld [vmem:[%s3183 + $0x7c] sm:$0xf]
                %3248 = vst [vmem:[%s3184 + $0x7c] sm:$0xf] %v3247
                %v3249 = vld [vmem:[%s3183 + $0x80] sm:$0xf]
                %3250 = vst [vmem:[%s3184 + $0x100] sm:$0xf] %v3249
                %v3251 = vld [vmem:[%s3183 + $0x84] sm:$0xf]
                %3252 = vst [vmem:[%s3184 + $0x104] sm:$0xf] %v3251
                %v3253 = vld [vmem:[%s3183 + $0x88] sm:$0xf]
                %3254 = vst [vmem:[%s3184 + $0x108] sm:$0xf] %v3253
                %v3255 = vld [vmem:[%s3183 + $0x8c] sm:$0xf]
                %3256 = vst [vmem:[%s3184 + $0x10c] sm:$0xf] %v3255
                %v3257 = vld [vmem:[%s3183 + $0x90] sm:$0xf]
                %3258 = vst [vmem:[%s3184 + $0x110] sm:$0xf] %v3257
                %v3259 = vld [vmem:[%s3183 + $0x94] sm:$0xf]
                %3260 = vst [vmem:[%s3184 + $0x114] sm:$0xf] %v3259
                %v3261 = vld [vmem:[%s3183 + $0x98] sm:$0xf]
                %3262 = vst [vmem:[%s3184 + $0x118] sm:$0xf] %v3261
                %v3263 = vld [vmem:[%s3183 + $0x9c] sm:$0xf]
                %3264 = vst [vmem:[%s3184 + $0x11c] sm:$0xf] %v3263
                %v3265 = vld [vmem:[%s3183 + $0xa0] sm:$0xf]
                %3266 = vst [vmem:[%s3184 + $0x120] sm:$0xf] %v3265
                %v3267 = vld [vmem:[%s3183 + $0xa4] sm:$0xf]
                %3268 = vst [vmem:[%s3184 + $0x124] sm:$0xf] %v3267
                %v3269 = vld [vmem:[%s3183 + $0xa8] sm:$0xf]
                %3270 = vst [vmem:[%s3184 + $0x128] sm:$0xf] %v3269
                %v3271 = vld [vmem:[%s3183 + $0xac] sm:$0xf]
                %3272 = vst [vmem:[%s3184 + $0x12c] sm:$0xf] %v3271
                %v3273 = vld [vmem:[%s3183 + $0xb0] sm:$0xf]
                %3274 = vst [vmem:[%s3184 + $0x130] sm:$0xf] %v3273
                %v3275 = vld [vmem:[%s3183 + $0xb4] sm:$0xf]
                %3276 = vst [vmem:[%s3184 + $0x134] sm:$0xf] %v3275
                %v3277 = vld [vmem:[%s3183 + $0xb8] sm:$0xf]
                %3278 = vst [vmem:[%s3184 + $0x138] sm:$0xf] %v3277
                %v3279 = vld [vmem:[%s3183 + $0xbc] sm:$0xf]
                %3280 = vst [vmem:[%s3184 + $0x13c] sm:$0xf] %v3279
                %v3281 = vld [vmem:[%s3183 + $0xc0] sm:$0xf]
                %3282 = vst [vmem:[%s3184 + $0x140] sm:$0xf] %v3281
                %v3283 = vld [vmem:[%s3183 + $0xc4] sm:$0xf]
                %3284 = vst [vmem:[%s3184 + $0x144] sm:$0xf] %v3283
                %v3285 = vld [vmem:[%s3183 + $0xc8] sm:$0xf]
                %3286 = vst [vmem:[%s3184 + $0x148] sm:$0xf] %v3285
                %v3287 = vld [vmem:[%s3183 + $0xcc] sm:$0xf]
                %3288 = vst [vmem:[%s3184 + $0x14c] sm:$0xf] %v3287
                %v3289 = vld [vmem:[%s3183 + $0xd0] sm:$0xf]
                %3290 = vst [vmem:[%s3184 + $0x150] sm:$0xf] %v3289
                %v3291 = vld [vmem:[%s3183 + $0xd4] sm:$0xf]
                %3292 = vst [vmem:[%s3184 + $0x154] sm:$0xf] %v3291
                %v3293 = vld [vmem:[%s3183 + $0xd8] sm:$0xf]
                %3294 = vst [vmem:[%s3184 + $0x158] sm:$0xf] %v3293
                %v3295 = vld [vmem:[%s3183 + $0xdc] sm:$0xf]
                %3296 = vst [vmem:[%s3184 + $0x15c] sm:$0xf] %v3295
                %v3297 = vld [vmem:[%s3183 + $0xe0] sm:$0xf]
                %3298 = vst [vmem:[%s3184 + $0x160] sm:$0xf] %v3297
                %v3299 = vld [vmem:[%s3183 + $0xe4] sm:$0xf]
                %3300 = vst [vmem:[%s3184 + $0x164] sm:$0xf] %v3299
                %v3301 = vld [vmem:[%s3183 + $0xe8] sm:$0xf]
                %3302 = vst [vmem:[%s3184 + $0x168] sm:$0xf] %v3301
                %v3303 = vld [vmem:[%s3183 + $0xec] sm:$0xf]
                %3304 = vst [vmem:[%s3184 + $0x16c] sm:$0xf] %v3303
                %v3305 = vld [vmem:[%s3183 + $0xf0] sm:$0xf]
                %3306 = vst [vmem:[%s3184 + $0x170] sm:$0xf] %v3305
                %v3307 = vld [vmem:[%s3183 + $0xf4] sm:$0xf]
                %3308 = vst [vmem:[%s3184 + $0x174] sm:$0xf] %v3307
                %v3309 = vld [vmem:[%s3183 + $0xf8] sm:$0xf]
                %3310 = vst [vmem:[%s3184 + $0x178] sm:$0xf] %v3309
                %v3311 = vld [vmem:[%s3183 + $0xfc] sm:$0xf]
                %3312 = vst [vmem:[%s3184 + $0x17c] sm:$0xf] %v3311
                %v3313 = vld [vmem:[%s3183 + $0x100] sm:$0xf]
                %3314 = vst [vmem:[%s3184 + $0x200] sm:$0xf] %v3313
                %v3315 = vld [vmem:[%s3183 + $0x104] sm:$0xf]
                %3316 = vst [vmem:[%s3184 + $0x204] sm:$0xf] %v3315
                %v3317 = vld [vmem:[%s3183 + $0x108] sm:$0xf]
                %3318 = vst [vmem:[%s3184 + $0x208] sm:$0xf] %v3317
                %v3319 = vld [vmem:[%s3183 + $0x10c] sm:$0xf]
                %3320 = vst [vmem:[%s3184 + $0x20c] sm:$0xf] %v3319
                %v3321 = vld [vmem:[%s3183 + $0x110] sm:$0xf]
                %3322 = vst [vmem:[%s3184 + $0x210] sm:$0xf] %v3321
                %v3323 = vld [vmem:[%s3183 + $0x114] sm:$0xf]
                %3324 = vst [vmem:[%s3184 + $0x214] sm:$0xf] %v3323
                %v3325 = vld [vmem:[%s3183 + $0x118] sm:$0xf]
                %3326 = vst [vmem:[%s3184 + $0x218] sm:$0xf] %v3325
                %v3327 = vld [vmem:[%s3183 + $0x11c] sm:$0xf]
                %3328 = vst [vmem:[%s3184 + $0x21c] sm:$0xf] %v3327
                %v3329 = vld [vmem:[%s3183 + $0x120] sm:$0xf]
                %3330 = vst [vmem:[%s3184 + $0x220] sm:$0xf] %v3329
                %v3331 = vld [vmem:[%s3183 + $0x124] sm:$0xf]
                %3332 = vst [vmem:[%s3184 + $0x224] sm:$0xf] %v3331
                %v3333 = vld [vmem:[%s3183 + $0x128] sm:$0xf]
                %3334 = vst [vmem:[%s3184 + $0x228] sm:$0xf] %v3333
                %v3335 = vld [vmem:[%s3183 + $0x12c] sm:$0xf]
                %3336 = vst [vmem:[%s3184 + $0x22c] sm:$0xf] %v3335
                %v3337 = vld [vmem:[%s3183 + $0x130] sm:$0xf]
                %3338 = vst [vmem:[%s3184 + $0x230] sm:$0xf] %v3337
                %v3339 = vld [vmem:[%s3183 + $0x134] sm:$0xf]
                %3340 = vst [vmem:[%s3184 + $0x234] sm:$0xf] %v3339
                %v3341 = vld [vmem:[%s3183 + $0x138] sm:$0xf]
                %3342 = vst [vmem:[%s3184 + $0x238] sm:$0xf] %v3341
                %v3343 = vld [vmem:[%s3183 + $0x13c] sm:$0xf]
                %3344 = vst [vmem:[%s3184 + $0x23c] sm:$0xf] %v3343
                %v3345 = vld [vmem:[%s3183 + $0x140] sm:$0xf]
                %3346 = vst [vmem:[%s3184 + $0x240] sm:$0xf] %v3345
                %v3347 = vld [vmem:[%s3183 + $0x144] sm:$0xf]
                %3348 = vst [vmem:[%s3184 + $0x244] sm:$0xf] %v3347
                %v3349 = vld [vmem:[%s3183 + $0x148] sm:$0xf]
                %3350 = vst [vmem:[%s3184 + $0x248] sm:$0xf] %v3349
                %v3351 = vld [vmem:[%s3183 + $0x14c] sm:$0xf]
                %3352 = vst [vmem:[%s3184 + $0x24c] sm:$0xf] %v3351
                %v3353 = vld [vmem:[%s3183 + $0x150] sm:$0xf]
                %3354 = vst [vmem:[%s3184 + $0x250] sm:$0xf] %v3353
                %v3355 = vld [vmem:[%s3183 + $0x154] sm:$0xf]
                %3356 = vst [vmem:[%s3184 + $0x254] sm:$0xf] %v3355
                %v3357 = vld [vmem:[%s3183 + $0x158] sm:$0xf]
                %3358 = vst [vmem:[%s3184 + $0x258] sm:$0xf] %v3357
                %v3359 = vld [vmem:[%s3183 + $0x15c] sm:$0xf]
                %3360 = vst [vmem:[%s3184 + $0x25c] sm:$0xf] %v3359
                %v3361 = vld [vmem:[%s3183 + $0x160] sm:$0xf]
                %3362 = vst [vmem:[%s3184 + $0x260] sm:$0xf] %v3361
                %v3363 = vld [vmem:[%s3183 + $0x164] sm:$0xf]
                %3364 = vst [vmem:[%s3184 + $0x264] sm:$0xf] %v3363
                %v3365 = vld [vmem:[%s3183 + $0x168] sm:$0xf]
                %3366 = vst [vmem:[%s3184 + $0x268] sm:$0xf] %v3365
                %v3367 = vld [vmem:[%s3183 + $0x16c] sm:$0xf]
                %3368 = vst [vmem:[%s3184 + $0x26c] sm:$0xf] %v3367
                %v3369 = vld [vmem:[%s3183 + $0x170] sm:$0xf]
                %3370 = vst [vmem:[%s3184 + $0x270] sm:$0xf] %v3369
                %v3371 = vld [vmem:[%s3183 + $0x174] sm:$0xf]
                %3372 = vst [vmem:[%s3184 + $0x274] sm:$0xf] %v3371
                %v3373 = vld [vmem:[%s3183 + $0x178] sm:$0xf]
                %3374 = vst [vmem:[%s3184 + $0x278] sm:$0xf] %v3373
                %v3375 = vld [vmem:[%s3183 + $0x17c] sm:$0xf]
                %3376 = vst [vmem:[%s3184 + $0x27c] sm:$0xf] %v3375
                %v3377 = vld [vmem:[%s3183 + $0x180] sm:$0xf]
                %3378 = vst [vmem:[%s3184 + $0x300] sm:$0xf] %v3377
                %v3379 = vld [vmem:[%s3183 + $0x184] sm:$0xf]
                %3380 = vst [vmem:[%s3184 + $0x304] sm:$0xf] %v3379
                %v3381 = vld [vmem:[%s3183 + $0x188] sm:$0xf]
                %3382 = vst [vmem:[%s3184 + $0x308] sm:$0xf] %v3381
                %v3383 = vld [vmem:[%s3183 + $0x18c] sm:$0xf]
                %3384 = vst [vmem:[%s3184 + $0x30c] sm:$0xf] %v3383
                %v3385 = vld [vmem:[%s3183 + $0x190] sm:$0xf]
                %3386 = vst [vmem:[%s3184 + $0x310] sm:$0xf] %v3385
                %v3387 = vld [vmem:[%s3183 + $0x194] sm:$0xf]
                %3388 = vst [vmem:[%s3184 + $0x314] sm:$0xf] %v3387
                %v3389 = vld [vmem:[%s3183 + $0x198] sm:$0xf]
                %3390 = vst [vmem:[%s3184 + $0x318] sm:$0xf] %v3389
                %v3391 = vld [vmem:[%s3183 + $0x19c] sm:$0xf]
                %3392 = vst [vmem:[%s3184 + $0x31c] sm:$0xf] %v3391
                %v3393 = vld [vmem:[%s3183 + $0x1a0] sm:$0xf]
                %3394 = vst [vmem:[%s3184 + $0x320] sm:$0xf] %v3393
                %v3395 = vld [vmem:[%s3183 + $0x1a4] sm:$0xf]
                %3396 = vst [vmem:[%s3184 + $0x324] sm:$0xf] %v3395
                %v3397 = vld [vmem:[%s3183 + $0x1a8] sm:$0xf]
                %3398 = vst [vmem:[%s3184 + $0x328] sm:$0xf] %v3397
                %v3399 = vld [vmem:[%s3183 + $0x1ac] sm:$0xf]
                %3400 = vst [vmem:[%s3184 + $0x32c] sm:$0xf] %v3399
                %v3401 = vld [vmem:[%s3183 + $0x1b0] sm:$0xf]
                %3402 = vst [vmem:[%s3184 + $0x330] sm:$0xf] %v3401
                %v3403 = vld [vmem:[%s3183 + $0x1b4] sm:$0xf]
                %3404 = vst [vmem:[%s3184 + $0x334] sm:$0xf] %v3403
                %v3405 = vld [vmem:[%s3183 + $0x1b8] sm:$0xf]
                %3406 = vst [vmem:[%s3184 + $0x338] sm:$0xf] %v3405
                %v3407 = vld [vmem:[%s3183 + $0x1bc] sm:$0xf]
                %3408 = vst [vmem:[%s3184 + $0x33c] sm:$0xf] %v3407
                %v3409 = vld [vmem:[%s3183 + $0x1c0] sm:$0xf]
                %3410 = vst [vmem:[%s3184 + $0x340] sm:$0xf] %v3409
                %v3411 = vld [vmem:[%s3183 + $0x1c4] sm:$0xf]
                %3412 = vst [vmem:[%s3184 + $0x344] sm:$0xf] %v3411
                %v3413 = vld [vmem:[%s3183 + $0x1c8] sm:$0xf]
                %3414 = vst [vmem:[%s3184 + $0x348] sm:$0xf] %v3413
                %v3415 = vld [vmem:[%s3183 + $0x1cc] sm:$0xf]
                %3416 = vst [vmem:[%s3184 + $0x34c] sm:$0xf] %v3415
                %v3417 = vld [vmem:[%s3183 + $0x1d0] sm:$0xf]
                %3418 = vst [vmem:[%s3184 + $0x350] sm:$0xf] %v3417
                %v3419 = vld [vmem:[%s3183 + $0x1d4] sm:$0xf]
                %3420 = vst [vmem:[%s3184 + $0x354] sm:$0xf] %v3419
                %v3421 = vld [vmem:[%s3183 + $0x1d8] sm:$0xf]
                %3422 = vst [vmem:[%s3184 + $0x358] sm:$0xf] %v3421
                %v3423 = vld [vmem:[%s3183 + $0x1dc] sm:$0xf]
                %3424 = vst [vmem:[%s3184 + $0x35c] sm:$0xf] %v3423
                %v3425 = vld [vmem:[%s3183 + $0x1e0] sm:$0xf]
                %3426 = vst [vmem:[%s3184 + $0x360] sm:$0xf] %v3425
                %v3427 = vld [vmem:[%s3183 + $0x1e4] sm:$0xf]
                %3428 = vst [vmem:[%s3184 + $0x364] sm:$0xf] %v3427
                %v3429 = vld [vmem:[%s3183 + $0x1e8] sm:$0xf]
                %3430 = vst [vmem:[%s3184 + $0x368] sm:$0xf] %v3429
                %v3431 = vld [vmem:[%s3183 + $0x1ec] sm:$0xf]
                %3432 = vst [vmem:[%s3184 + $0x36c] sm:$0xf] %v3431
                %v3433 = vld [vmem:[%s3183 + $0x1f0] sm:$0xf]
                %3434 = vst [vmem:[%s3184 + $0x370] sm:$0xf] %v3433
                %v3435 = vld [vmem:[%s3183 + $0x1f4] sm:$0xf]
                %3436 = vst [vmem:[%s3184 + $0x374] sm:$0xf] %v3435
                %v3437 = vld [vmem:[%s3183 + $0x1f8] sm:$0xf]
                %3438 = vst [vmem:[%s3184 + $0x378] sm:$0xf] %v3437
                %v3439 = vld [vmem:[%s3183 + $0x1fc] sm:$0xf]
                %3440 = vst [vmem:[%s3184 + $0x37c] sm:$0xf] %v3439
              $region102: #{tpu_custom_call.1} parent=96 // loop_footer
                %s3182 = sadd.s32 1, %s3178
              $region103: #{tpu_custom_call.1} parent=96 // loop_footer_branch
                %3177 = sbr.rel target = $region99
              $region104: #{tpu_custom_call.1} parent=96 // loop_exit
                _
            $region97: #{tpu_custom_call.1} parent=88 // pred_fallthru
              _
          $region89: #{tpu_custom_call.1} parent=84 // pred_fallthru
            _
          %3716 = vnop
        $region85: #{tpu_custom_call.1} parent=31 // pred_fallthru
          _
        // Predicated region
        $region123: #{tpu_custom_call.1} parent=31 // pred_check
          %p3717 = pneg %p179
        $region124: #{tpu_custom_call.1} parent=31 // pred_check_branch
          %3719 = sbr.rel (%p3717) target = $region126
        $region125: #{tpu_custom_call.1} parent=31 // pred_region
          %s3720 = smul.u32 32, %s26
          %s3721 = smul.addr %s25, 256
          %s3722 = sadd.s32 %s3720, %s3721
          %s3723 = smul.addr %s3722, 4
          %s3724 = scalar_lea.vmem %s5, %s3723
          // Predicated region
          $region127: #{tpu_custom_call.1} parent=125 // pred_check
            _
          $region128: #{tpu_custom_call.1} parent=125 // pred_check_branch
            %3726 = sbr.rel (0) target = $region130
          $region129: #{tpu_custom_call.1} parent=125 // pred_region
            // Predicated region
            $region131: #{tpu_custom_call.1} parent=129 // pred_check
              _
            $region132: #{tpu_custom_call.1} parent=129 // pred_check_branch
              %3728 = sbr.rel target = $region134
            $region133: #{tpu_custom_call.1} parent=129 // pred_region
              // Predicated region
              $region146: #{tpu_custom_call.1} parent=133 // pred_check
                _
              $region147: #{tpu_custom_call.1} parent=133 // pred_check_branch
                %3997 = sbr.rel (0) target = $region149
              $region148: #{tpu_custom_call.1} parent=133 // pred_region
                loop: start=0, step=1, limit=1
                $region150: #{tpu_custom_call.1} parent=148 // loop_pre_header
                  _
                $region151: #{tpu_custom_call.1} parent=148 // loop_header
                  %s3999 = sphi 0, %s4003
                  %p4000 = scmp.ge.s32.totalorder %s3999, 1
                  %s4004 = sphi %s2606, %s2606
                  %s4005 = sphi %s3724, %s3724
                $region152: #{tpu_custom_call.1} parent=148 // loop_header_branch
                  %4002 = sbr.rel (%p4000) target = $region156
                $region153: #{tpu_custom_call.1} parent=148 // loop_body
                  _
                $region154: #{tpu_custom_call.1} parent=148 // loop_footer
                  %s4003 = sadd.s32 1, %s3999
                $region155: #{tpu_custom_call.1} parent=148 // loop_footer_branch
                  %3998 = sbr.rel target = $region151
                $region156: #{tpu_custom_call.1} parent=148 // loop_exit
                  _
                loop: start=0, step=1, limit=1
                $region157: #{tpu_custom_call.1} parent=148 // loop_pre_header
                  _
                $region158: #{tpu_custom_call.1} parent=148 // loop_header
                  %s4008 = sphi 0, %s4012
                  %p4009 = scmp.ge.s32.totalorder %s4008, 1
                  %s4013 = sphi %s2606, %s2606
                  %s4014 = sphi %s3724, %s3724
                $region159: #{tpu_custom_call.1} parent=148 // loop_header_branch
                  %4011 = sbr.rel (%p4009) target = $region163
                $region160: #{tpu_custom_call.1} parent=148 // loop_body
                  %v4015 = vld [vmem:[%s4013] sm:$0xf]
                  %4016 = vst [vmem:[%s4014] sm:$0xf] %v4015
                  %v4017 = vld [vmem:[%s4013 + $0x4] sm:$0xf]
                  %4018 = vst [vmem:[%s4014 + $0x4] sm:$0xf] %v4017
                  %v4019 = vld [vmem:[%s4013 + $0x8] sm:$0xf]
                  %4020 = vst [vmem:[%s4014 + $0x8] sm:$0xf] %v4019
                  %v4021 = vld [vmem:[%s4013 + $0xc] sm:$0xf]
                  %4022 = vst [vmem:[%s4014 + $0xc] sm:$0xf] %v4021
                  %v4023 = vld [vmem:[%s4013 + $0x10] sm:$0xf]
                  %4024 = vst [vmem:[%s4014 + $0x10] sm:$0xf] %v4023
                  %v4025 = vld [vmem:[%s4013 + $0x14] sm:$0xf]
                  %4026 = vst [vmem:[%s4014 + $0x14] sm:$0xf] %v4025
                  %v4027 = vld [vmem:[%s4013 + $0x18] sm:$0xf]
                  %4028 = vst [vmem:[%s4014 + $0x18] sm:$0xf] %v4027
                  %v4029 = vld [vmem:[%s4013 + $0x1c] sm:$0xf]
                  %4030 = vst [vmem:[%s4014 + $0x1c] sm:$0xf] %v4029
                  %v4031 = vld [vmem:[%s4013 + $0x20] sm:$0xf]
                  %4032 = vst [vmem:[%s4014 + $0x20] sm:$0xf] %v4031
                  %v4033 = vld [vmem:[%s4013 + $0x24] sm:$0xf]
                  %4034 = vst [vmem:[%s4014 + $0x24] sm:$0xf] %v4033
                  %v4035 = vld [vmem:[%s4013 + $0x28] sm:$0xf]
                  %4036 = vst [vmem:[%s4014 + $0x28] sm:$0xf] %v4035
                  %v4037 = vld [vmem:[%s4013 + $0x2c] sm:$0xf]
                  %4038 = vst [vmem:[%s4014 + $0x2c] sm:$0xf] %v4037
                  %v4039 = vld [vmem:[%s4013 + $0x30] sm:$0xf]
                  %4040 = vst [vmem:[%s4014 + $0x30] sm:$0xf] %v4039
                  %v4041 = vld [vmem:[%s4013 + $0x34] sm:$0xf]
                  %4042 = vst [vmem:[%s4014 + $0x34] sm:$0xf] %v4041
                  %v4043 = vld [vmem:[%s4013 + $0x38] sm:$0xf]
                  %4044 = vst [vmem:[%s4014 + $0x38] sm:$0xf] %v4043
                  %v4045 = vld [vmem:[%s4013 + $0x3c] sm:$0xf]
                  %4046 = vst [vmem:[%s4014 + $0x3c] sm:$0xf] %v4045
                  %v4047 = vld [vmem:[%s4013 + $0x40] sm:$0xf]
                  %4048 = vst [vmem:[%s4014 + $0x40] sm:$0xf] %v4047
                  %v4049 = vld [vmem:[%s4013 + $0x44] sm:$0xf]
                  %4050 = vst [vmem:[%s4014 + $0x44] sm:$0xf] %v4049
                  %v4051 = vld [vmem:[%s4013 + $0x48] sm:$0xf]
                  %4052 = vst [vmem:[%s4014 + $0x48] sm:$0xf] %v4051
                  %v4053 = vld [vmem:[%s4013 + $0x4c] sm:$0xf]
                  %4054 = vst [vmem:[%s4014 + $0x4c] sm:$0xf] %v4053
                  %v4055 = vld [vmem:[%s4013 + $0x50] sm:$0xf]
                  %4056 = vst [vmem:[%s4014 + $0x50] sm:$0xf] %v4055
                  %v4057 = vld [vmem:[%s4013 + $0x54] sm:$0xf]
                  %4058 = vst [vmem:[%s4014 + $0x54] sm:$0xf] %v4057
                  %v4059 = vld [vmem:[%s4013 + $0x58] sm:$0xf]
                  %4060 = vst [vmem:[%s4014 + $0x58] sm:$0xf] %v4059
                  %v4061 = vld [vmem:[%s4013 + $0x5c] sm:$0xf]
                  %4062 = vst [vmem:[%s4014 + $0x5c] sm:$0xf] %v4061
                  %v4063 = vld [vmem:[%s4013 + $0x60] sm:$0xf]
                  %4064 = vst [vmem:[%s4014 + $0x60] sm:$0xf] %v4063
                  %v4065 = vld [vmem:[%s4013 + $0x64] sm:$0xf]
                  %4066 = vst [vmem:[%s4014 + $0x64] sm:$0xf] %v4065
                  %v4067 = vld [vmem:[%s4013 + $0x68] sm:$0xf]
                  %4068 = vst [vmem:[%s4014 + $0x68] sm:$0xf] %v4067
                  %v4069 = vld [vmem:[%s4013 + $0x6c] sm:$0xf]
                  %4070 = vst [vmem:[%s4014 + $0x6c] sm:$0xf] %v4069
                  %v4071 = vld [vmem:[%s4013 + $0x70] sm:$0xf]
                  %4072 = vst [vmem:[%s4014 + $0x70] sm:$0xf] %v4071
                  %v4073 = vld [vmem:[%s4013 + $0x74] sm:$0xf]
                  %4074 = vst [vmem:[%s4014 + $0x74] sm:$0xf] %v4073
                  %v4075 = vld [vmem:[%s4013 + $0x78] sm:$0xf]
                  %4076 = vst [vmem:[%s4014 + $0x78] sm:$0xf] %v4075
                  %v4077 = vld [vmem:[%s4013 + $0x7c] sm:$0xf]
                  %4078 = vst [vmem:[%s4014 + $0x7c] sm:$0xf] %v4077
                  %v4079 = vld [vmem:[%s4013 + $0x80] sm:$0xf]
                  %4080 = vst [vmem:[%s4014 + $0x100] sm:$0xf] %v4079
                  %v4081 = vld [vmem:[%s4013 + $0x84] sm:$0xf]
                  %4082 = vst [vmem:[%s4014 + $0x104] sm:$0xf] %v4081
                  %v4083 = vld [vmem:[%s4013 + $0x88] sm:$0xf]
                  %4084 = vst [vmem:[%s4014 + $0x108] sm:$0xf] %v4083
                  %v4085 = vld [vmem:[%s4013 + $0x8c] sm:$0xf]
                  %4086 = vst [vmem:[%s4014 + $0x10c] sm:$0xf] %v4085
                  %v4087 = vld [vmem:[%s4013 + $0x90] sm:$0xf]
                  %4088 = vst [vmem:[%s4014 + $0x110] sm:$0xf] %v4087
                  %v4089 = vld [vmem:[%s4013 + $0x94] sm:$0xf]
                  %4090 = vst [vmem:[%s4014 + $0x114] sm:$0xf] %v4089
                  %v4091 = vld [vmem:[%s4013 + $0x98] sm:$0xf]
                  %4092 = vst [vmem:[%s4014 + $0x118] sm:$0xf] %v4091
                  %v4093 = vld [vmem:[%s4013 + $0x9c] sm:$0xf]
                  %4094 = vst [vmem:[%s4014 + $0x11c] sm:$0xf] %v4093
                  %v4095 = vld [vmem:[%s4013 + $0xa0] sm:$0xf]
                  %4096 = vst [vmem:[%s4014 + $0x120] sm:$0xf] %v4095
                  %v4097 = vld [vmem:[%s4013 + $0xa4] sm:$0xf]
                  %4098 = vst [vmem:[%s4014 + $0x124] sm:$0xf] %v4097
                  %v4099 = vld [vmem:[%s4013 + $0xa8] sm:$0xf]
                  %4100 = vst [vmem:[%s4014 + $0x128] sm:$0xf] %v4099
                  %v4101 = vld [vmem:[%s4013 + $0xac] sm:$0xf]
                  %4102 = vst [vmem:[%s4014 + $0x12c] sm:$0xf] %v4101
                  %v4103 = vld [vmem:[%s4013 + $0xb0] sm:$0xf]
                  %4104 = vst [vmem:[%s4014 + $0x130] sm:$0xf] %v4103
                  %v4105 = vld [vmem:[%s4013 + $0xb4] sm:$0xf]
                  %4106 = vst [vmem:[%s4014 + $0x134] sm:$0xf] %v4105
                  %v4107 = vld [vmem:[%s4013 + $0xb8] sm:$0xf]
                  %4108 = vst [vmem:[%s4014 + $0x138] sm:$0xf] %v4107
                  %v4109 = vld [vmem:[%s4013 + $0xbc] sm:$0xf]
                  %4110 = vst [vmem:[%s4014 + $0x13c] sm:$0xf] %v4109
                  %v4111 = vld [vmem:[%s4013 + $0xc0] sm:$0xf]
                  %4112 = vst [vmem:[%s4014 + $0x140] sm:$0xf] %v4111
                  %v4113 = vld [vmem:[%s4013 + $0xc4] sm:$0xf]
                  %4114 = vst [vmem:[%s4014 + $0x144] sm:$0xf] %v4113
                  %v4115 = vld [vmem:[%s4013 + $0xc8] sm:$0xf]
                  %4116 = vst [vmem:[%s4014 + $0x148] sm:$0xf] %v4115
                  %v4117 = vld [vmem:[%s4013 + $0xcc] sm:$0xf]
                  %4118 = vst [vmem:[%s4014 + $0x14c] sm:$0xf] %v4117
                  %v4119 = vld [vmem:[%s4013 + $0xd0] sm:$0xf]
                  %4120 = vst [vmem:[%s4014 + $0x150] sm:$0xf] %v4119
                  %v4121 = vld [vmem:[%s4013 + $0xd4] sm:$0xf]
                  %4122 = vst [vmem:[%s4014 + $0x154] sm:$0xf] %v4121
                  %v4123 = vld [vmem:[%s4013 + $0xd8] sm:$0xf]
                  %4124 = vst [vmem:[%s4014 + $0x158] sm:$0xf] %v4123
                  %v4125 = vld [vmem:[%s4013 + $0xdc] sm:$0xf]
                  %4126 = vst [vmem:[%s4014 + $0x15c] sm:$0xf] %v4125
                  %v4127 = vld [vmem:[%s4013 + $0xe0] sm:$0xf]
                  %4128 = vst [vmem:[%s4014 + $0x160] sm:$0xf] %v4127
                  %v4129 = vld [vmem:[%s4013 + $0xe4] sm:$0xf]
                  %4130 = vst [vmem:[%s4014 + $0x164] sm:$0xf] %v4129
                  %v4131 = vld [vmem:[%s4013 + $0xe8] sm:$0xf]
                  %4132 = vst [vmem:[%s4014 + $0x168] sm:$0xf] %v4131
                  %v4133 = vld [vmem:[%s4013 + $0xec] sm:$0xf]
                  %4134 = vst [vmem:[%s4014 + $0x16c] sm:$0xf] %v4133
                  %v4135 = vld [vmem:[%s4013 + $0xf0] sm:$0xf]
                  %4136 = vst [vmem:[%s4014 + $0x170] sm:$0xf] %v4135
                  %v4137 = vld [vmem:[%s4013 + $0xf4] sm:$0xf]
                  %4138 = vst [vmem:[%s4014 + $0x174] sm:$0xf] %v4137
                  %v4139 = vld [vmem:[%s4013 + $0xf8] sm:$0xf]
                  %4140 = vst [vmem:[%s4014 + $0x178] sm:$0xf] %v4139
                  %v4141 = vld [vmem:[%s4013 + $0xfc] sm:$0xf]
                  %4142 = vst [vmem:[%s4014 + $0x17c] sm:$0xf] %v4141
                  %v4143 = vld [vmem:[%s4013 + $0x100] sm:$0xf]
                  %4144 = vst [vmem:[%s4014 + $0x200] sm:$0xf] %v4143
                  %v4145 = vld [vmem:[%s4013 + $0x104] sm:$0xf]
                  %4146 = vst [vmem:[%s4014 + $0x204] sm:$0xf] %v4145
                  %v4147 = vld [vmem:[%s4013 + $0x108] sm:$0xf]
                  %4148 = vst [vmem:[%s4014 + $0x208] sm:$0xf] %v4147
                  %v4149 = vld [vmem:[%s4013 + $0x10c] sm:$0xf]
                  %4150 = vst [vmem:[%s4014 + $0x20c] sm:$0xf] %v4149
                  %v4151 = vld [vmem:[%s4013 + $0x110] sm:$0xf]
                  %4152 = vst [vmem:[%s4014 + $0x210] sm:$0xf] %v4151
                  %v4153 = vld [vmem:[%s4013 + $0x114] sm:$0xf]
                  %4154 = vst [vmem:[%s4014 + $0x214] sm:$0xf] %v4153
                  %v4155 = vld [vmem:[%s4013 + $0x118] sm:$0xf]
                  %4156 = vst [vmem:[%s4014 + $0x218] sm:$0xf] %v4155
                  %v4157 = vld [vmem:[%s4013 + $0x11c] sm:$0xf]
                  %4158 = vst [vmem:[%s4014 + $0x21c] sm:$0xf] %v4157
                  %v4159 = vld [vmem:[%s4013 + $0x120] sm:$0xf]
                  %4160 = vst [vmem:[%s4014 + $0x220] sm:$0xf] %v4159
                  %v4161 = vld [vmem:[%s4013 + $0x124] sm:$0xf]
                  %4162 = vst [vmem:[%s4014 + $0x224] sm:$0xf] %v4161
                  %v4163 = vld [vmem:[%s4013 + $0x128] sm:$0xf]
                  %4164 = vst [vmem:[%s4014 + $0x228] sm:$0xf] %v4163
                  %v4165 = vld [vmem:[%s4013 + $0x12c] sm:$0xf]
                  %4166 = vst [vmem:[%s4014 + $0x22c] sm:$0xf] %v4165
                  %v4167 = vld [vmem:[%s4013 + $0x130] sm:$0xf]
                  %4168 = vst [vmem:[%s4014 + $0x230] sm:$0xf] %v4167
                  %v4169 = vld [vmem:[%s4013 + $0x134] sm:$0xf]
                  %4170 = vst [vmem:[%s4014 + $0x234] sm:$0xf] %v4169
                  %v4171 = vld [vmem:[%s4013 + $0x138] sm:$0xf]
                  %4172 = vst [vmem:[%s4014 + $0x238] sm:$0xf] %v4171
                  %v4173 = vld [vmem:[%s4013 + $0x13c] sm:$0xf]
                  %4174 = vst [vmem:[%s4014 + $0x23c] sm:$0xf] %v4173
                  %v4175 = vld [vmem:[%s4013 + $0x140] sm:$0xf]
                  %4176 = vst [vmem:[%s4014 + $0x240] sm:$0xf] %v4175
                  %v4177 = vld [vmem:[%s4013 + $0x144] sm:$0xf]
                  %4178 = vst [vmem:[%s4014 + $0x244] sm:$0xf] %v4177
                  %v4179 = vld [vmem:[%s4013 + $0x148] sm:$0xf]
                  %4180 = vst [vmem:[%s4014 + $0x248] sm:$0xf] %v4179
                  %v4181 = vld [vmem:[%s4013 + $0x14c] sm:$0xf]
                  %4182 = vst [vmem:[%s4014 + $0x24c] sm:$0xf] %v4181
                  %v4183 = vld [vmem:[%s4013 + $0x150] sm:$0xf]
                  %4184 = vst [vmem:[%s4014 + $0x250] sm:$0xf] %v4183
                  %v4185 = vld [vmem:[%s4013 + $0x154] sm:$0xf]
                  %4186 = vst [vmem:[%s4014 + $0x254] sm:$0xf] %v4185
                  %v4187 = vld [vmem:[%s4013 + $0x158] sm:$0xf]
                  %4188 = vst [vmem:[%s4014 + $0x258] sm:$0xf] %v4187
                  %v4189 = vld [vmem:[%s4013 + $0x15c] sm:$0xf]
                  %4190 = vst [vmem:[%s4014 + $0x25c] sm:$0xf] %v4189
                  %v4191 = vld [vmem:[%s4013 + $0x160] sm:$0xf]
                  %4192 = vst [vmem:[%s4014 + $0x260] sm:$0xf] %v4191
                  %v4193 = vld [vmem:[%s4013 + $0x164] sm:$0xf]
                  %4194 = vst [vmem:[%s4014 + $0x264] sm:$0xf] %v4193
                  %v4195 = vld [vmem:[%s4013 + $0x168] sm:$0xf]
                  %4196 = vst [vmem:[%s4014 + $0x268] sm:$0xf] %v4195
                  %v4197 = vld [vmem:[%s4013 + $0x16c] sm:$0xf]
                  %4198 = vst [vmem:[%s4014 + $0x26c] sm:$0xf] %v4197
                  %v4199 = vld [vmem:[%s4013 + $0x170] sm:$0xf]
                  %4200 = vst [vmem:[%s4014 + $0x270] sm:$0xf] %v4199
                  %v4201 = vld [vmem:[%s4013 + $0x174] sm:$0xf]
                  %4202 = vst [vmem:[%s4014 + $0x274] sm:$0xf] %v4201
                  %v4203 = vld [vmem:[%s4013 + $0x178] sm:$0xf]
                  %4204 = vst [vmem:[%s4014 + $0x278] sm:$0xf] %v4203
                  %v4205 = vld [vmem:[%s4013 + $0x17c] sm:$0xf]
                  %4206 = vst [vmem:[%s4014 + $0x27c] sm:$0xf] %v4205
                  %v4207 = vld [vmem:[%s4013 + $0x180] sm:$0xf]
                  %4208 = vst [vmem:[%s4014 + $0x300] sm:$0xf] %v4207
                  %v4209 = vld [vmem:[%s4013 + $0x184] sm:$0xf]
                  %4210 = vst [vmem:[%s4014 + $0x304] sm:$0xf] %v4209
                  %v4211 = vld [vmem:[%s4013 + $0x188] sm:$0xf]
                  %4212 = vst [vmem:[%s4014 + $0x308] sm:$0xf] %v4211
                  %v4213 = vld [vmem:[%s4013 + $0x18c] sm:$0xf]
                  %4214 = vst [vmem:[%s4014 + $0x30c] sm:$0xf] %v4213
                  %v4215 = vld [vmem:[%s4013 + $0x190] sm:$0xf]
                  %4216 = vst [vmem:[%s4014 + $0x310] sm:$0xf] %v4215
                  %v4217 = vld [vmem:[%s4013 + $0x194] sm:$0xf]
                  %4218 = vst [vmem:[%s4014 + $0x314] sm:$0xf] %v4217
                  %v4219 = vld [vmem:[%s4013 + $0x198] sm:$0xf]
                  %4220 = vst [vmem:[%s4014 + $0x318] sm:$0xf] %v4219
                  %v4221 = vld [vmem:[%s4013 + $0x19c] sm:$0xf]
                  %4222 = vst [vmem:[%s4014 + $0x31c] sm:$0xf] %v4221
                  %v4223 = vld [vmem:[%s4013 + $0x1a0] sm:$0xf]
                  %4224 = vst [vmem:[%s4014 + $0x320] sm:$0xf] %v4223
                  %v4225 = vld [vmem:[%s4013 + $0x1a4] sm:$0xf]
                  %4226 = vst [vmem:[%s4014 + $0x324] sm:$0xf] %v4225
                  %v4227 = vld [vmem:[%s4013 + $0x1a8] sm:$0xf]
                  %4228 = vst [vmem:[%s4014 + $0x328] sm:$0xf] %v4227
                  %v4229 = vld [vmem:[%s4013 + $0x1ac] sm:$0xf]
                  %4230 = vst [vmem:[%s4014 + $0x32c] sm:$0xf] %v4229
                  %v4231 = vld [vmem:[%s4013 + $0x1b0] sm:$0xf]
                  %4232 = vst [vmem:[%s4014 + $0x330] sm:$0xf] %v4231
                  %v4233 = vld [vmem:[%s4013 + $0x1b4] sm:$0xf]
                  %4234 = vst [vmem:[%s4014 + $0x334] sm:$0xf] %v4233
                  %v4235 = vld [vmem:[%s4013 + $0x1b8] sm:$0xf]
                  %4236 = vst [vmem:[%s4014 + $0x338] sm:$0xf] %v4235
                  %v4237 = vld [vmem:[%s4013 + $0x1bc] sm:$0xf]
                  %4238 = vst [vmem:[%s4014 + $0x33c] sm:$0xf] %v4237
                  %v4239 = vld [vmem:[%s4013 + $0x1c0] sm:$0xf]
                  %4240 = vst [vmem:[%s4014 + $0x340] sm:$0xf] %v4239
                  %v4241 = vld [vmem:[%s4013 + $0x1c4] sm:$0xf]
                  %4242 = vst [vmem:[%s4014 + $0x344] sm:$0xf] %v4241
                  %v4243 = vld [vmem:[%s4013 + $0x1c8] sm:$0xf]
                  %4244 = vst [vmem:[%s4014 + $0x348] sm:$0xf] %v4243
                  %v4245 = vld [vmem:[%s4013 + $0x1cc] sm:$0xf]
                  %4246 = vst [vmem:[%s4014 + $0x34c] sm:$0xf] %v4245
                  %v4247 = vld [vmem:[%s4013 + $0x1d0] sm:$0xf]
                  %4248 = vst [vmem:[%s4014 + $0x350] sm:$0xf] %v4247
                  %v4249 = vld [vmem:[%s4013 + $0x1d4] sm:$0xf]
                  %4250 = vst [vmem:[%s4014 + $0x354] sm:$0xf] %v4249
                  %v4251 = vld [vmem:[%s4013 + $0x1d8] sm:$0xf]
                  %4252 = vst [vmem:[%s4014 + $0x358] sm:$0xf] %v4251
                  %v4253 = vld [vmem:[%s4013 + $0x1dc] sm:$0xf]
                  %4254 = vst [vmem:[%s4014 + $0x35c] sm:$0xf] %v4253
                  %v4255 = vld [vmem:[%s4013 + $0x1e0] sm:$0xf]
                  %4256 = vst [vmem:[%s4014 + $0x360] sm:$0xf] %v4255
                  %v4257 = vld [vmem:[%s4013 + $0x1e4] sm:$0xf]
                  %4258 = vst [vmem:[%s4014 + $0x364] sm:$0xf] %v4257
                  %v4259 = vld [vmem:[%s4013 + $0x1e8] sm:$0xf]
                  %4260 = vst [vmem:[%s4014 + $0x368] sm:$0xf] %v4259
                  %v4261 = vld [vmem:[%s4013 + $0x1ec] sm:$0xf]
                  %4262 = vst [vmem:[%s4014 + $0x36c] sm:$0xf] %v4261
                  %v4263 = vld [vmem:[%s4013 + $0x1f0] sm:$0xf]
                  %4264 = vst [vmem:[%s4014 + $0x370] sm:$0xf] %v4263
                  %v4265 = vld [vmem:[%s4013 + $0x1f4] sm:$0xf]
                  %4266 = vst [vmem:[%s4014 + $0x374] sm:$0xf] %v4265
                  %v4267 = vld [vmem:[%s4013 + $0x1f8] sm:$0xf]
                  %4268 = vst [vmem:[%s4014 + $0x378] sm:$0xf] %v4267
                  %v4269 = vld [vmem:[%s4013 + $0x1fc] sm:$0xf]
                  %4270 = vst [vmem:[%s4014 + $0x37c] sm:$0xf] %v4269
                $region161: #{tpu_custom_call.1} parent=148 // loop_footer
                  %s4012 = sadd.s32 1, %s4008
                $region162: #{tpu_custom_call.1} parent=148 // loop_footer_branch
                  %4007 = sbr.rel target = $region158
                $region163: #{tpu_custom_call.1} parent=148 // loop_exit
                  _
              $region149: #{tpu_custom_call.1} parent=133 // pred_fallthru
                _
            $region134: #{tpu_custom_call.1} parent=129 // pred_fallthru
              _
            // Predicated region
            $region135: #{tpu_custom_call.1} parent=129 // pred_check
              _
            $region136: #{tpu_custom_call.1} parent=129 // pred_check_branch
              %3730 = sbr.rel (0) target = $region138
            $region137: #{tpu_custom_call.1} parent=129 // pred_region
              loop: start=0, step=1, limit=1
              $region139: #{tpu_custom_call.1} parent=137 // loop_pre_header
                _
              $region140: #{tpu_custom_call.1} parent=137 // loop_header
                %s3733 = sphi 0, %s3737
                %p3734 = scmp.ge.s32.totalorder %s3733, 1
                %s3738 = sphi %s2606, %s2606
                %s3739 = sphi %s3724, %s3724
              $region141: #{tpu_custom_call.1} parent=137 // loop_header_branch
                %3736 = sbr.rel (%p3734) target = $region145
              $region142: #{tpu_custom_call.1} parent=137 // loop_body
                %v3740 = vld [vmem:[%s3738] sm:$0xf]
                %3741 = vst [vmem:[%s3739] sm:$0xf] %v3740
                %v3742 = vld [vmem:[%s3738 + $0x4] sm:$0xf]
                %3743 = vst [vmem:[%s3739 + $0x4] sm:$0xf] %v3742
                %v3744 = vld [vmem:[%s3738 + $0x8] sm:$0xf]
                %3745 = vst [vmem:[%s3739 + $0x8] sm:$0xf] %v3744
                %v3746 = vld [vmem:[%s3738 + $0xc] sm:$0xf]
                %3747 = vst [vmem:[%s3739 + $0xc] sm:$0xf] %v3746
                %v3748 = vld [vmem:[%s3738 + $0x10] sm:$0xf]
                %3749 = vst [vmem:[%s3739 + $0x10] sm:$0xf] %v3748
                %v3750 = vld [vmem:[%s3738 + $0x14] sm:$0xf]
                %3751 = vst [vmem:[%s3739 + $0x14] sm:$0xf] %v3750
                %v3752 = vld [vmem:[%s3738 + $0x18] sm:$0xf]
                %3753 = vst [vmem:[%s3739 + $0x18] sm:$0xf] %v3752
                %v3754 = vld [vmem:[%s3738 + $0x1c] sm:$0xf]
                %3755 = vst [vmem:[%s3739 + $0x1c] sm:$0xf] %v3754
                %v3756 = vld [vmem:[%s3738 + $0x20] sm:$0xf]
                %3757 = vst [vmem:[%s3739 + $0x20] sm:$0xf] %v3756
                %v3758 = vld [vmem:[%s3738 + $0x24] sm:$0xf]
                %3759 = vst [vmem:[%s3739 + $0x24] sm:$0xf] %v3758
                %v3760 = vld [vmem:[%s3738 + $0x28] sm:$0xf]
                %3761 = vst [vmem:[%s3739 + $0x28] sm:$0xf] %v3760
                %v3762 = vld [vmem:[%s3738 + $0x2c] sm:$0xf]
                %3763 = vst [vmem:[%s3739 + $0x2c] sm:$0xf] %v3762
                %v3764 = vld [vmem:[%s3738 + $0x30] sm:$0xf]
                %3765 = vst [vmem:[%s3739 + $0x30] sm:$0xf] %v3764
                %v3766 = vld [vmem:[%s3738 + $0x34] sm:$0xf]
                %3767 = vst [vmem:[%s3739 + $0x34] sm:$0xf] %v3766
                %v3768 = vld [vmem:[%s3738 + $0x38] sm:$0xf]
                %3769 = vst [vmem:[%s3739 + $0x38] sm:$0xf] %v3768
                %v3770 = vld [vmem:[%s3738 + $0x3c] sm:$0xf]
                %3771 = vst [vmem:[%s3739 + $0x3c] sm:$0xf] %v3770
                %v3772 = vld [vmem:[%s3738 + $0x40] sm:$0xf]
                %3773 = vst [vmem:[%s3739 + $0x40] sm:$0xf] %v3772
                %v3774 = vld [vmem:[%s3738 + $0x44] sm:$0xf]
                %3775 = vst [vmem:[%s3739 + $0x44] sm:$0xf] %v3774
                %v3776 = vld [vmem:[%s3738 + $0x48] sm:$0xf]
                %3777 = vst [vmem:[%s3739 + $0x48] sm:$0xf] %v3776
                %v3778 = vld [vmem:[%s3738 + $0x4c] sm:$0xf]
                %3779 = vst [vmem:[%s3739 + $0x4c] sm:$0xf] %v3778
                %v3780 = vld [vmem:[%s3738 + $0x50] sm:$0xf]
                %3781 = vst [vmem:[%s3739 + $0x50] sm:$0xf] %v3780
                %v3782 = vld [vmem:[%s3738 + $0x54] sm:$0xf]
                %3783 = vst [vmem:[%s3739 + $0x54] sm:$0xf] %v3782
                %v3784 = vld [vmem:[%s3738 + $0x58] sm:$0xf]
                %3785 = vst [vmem:[%s3739 + $0x58] sm:$0xf] %v3784
                %v3786 = vld [vmem:[%s3738 + $0x5c] sm:$0xf]
                %3787 = vst [vmem:[%s3739 + $0x5c] sm:$0xf] %v3786
                %v3788 = vld [vmem:[%s3738 + $0x60] sm:$0xf]
                %3789 = vst [vmem:[%s3739 + $0x60] sm:$0xf] %v3788
                %v3790 = vld [vmem:[%s3738 + $0x64] sm:$0xf]
                %3791 = vst [vmem:[%s3739 + $0x64] sm:$0xf] %v3790
                %v3792 = vld [vmem:[%s3738 + $0x68] sm:$0xf]
                %3793 = vst [vmem:[%s3739 + $0x68] sm:$0xf] %v3792
                %v3794 = vld [vmem:[%s3738 + $0x6c] sm:$0xf]
                %3795 = vst [vmem:[%s3739 + $0x6c] sm:$0xf] %v3794
                %v3796 = vld [vmem:[%s3738 + $0x70] sm:$0xf]
                %3797 = vst [vmem:[%s3739 + $0x70] sm:$0xf] %v3796
                %v3798 = vld [vmem:[%s3738 + $0x74] sm:$0xf]
                %3799 = vst [vmem:[%s3739 + $0x74] sm:$0xf] %v3798
                %v3800 = vld [vmem:[%s3738 + $0x78] sm:$0xf]
                %3801 = vst [vmem:[%s3739 + $0x78] sm:$0xf] %v3800
                %v3802 = vld [vmem:[%s3738 + $0x7c] sm:$0xf]
                %3803 = vst [vmem:[%s3739 + $0x7c] sm:$0xf] %v3802
                %v3804 = vld [vmem:[%s3738 + $0x80] sm:$0xf]
                %3805 = vst [vmem:[%s3739 + $0x100] sm:$0xf] %v3804
                %v3806 = vld [vmem:[%s3738 + $0x84] sm:$0xf]
                %3807 = vst [vmem:[%s3739 + $0x104] sm:$0xf] %v3806
                %v3808 = vld [vmem:[%s3738 + $0x88] sm:$0xf]
                %3809 = vst [vmem:[%s3739 + $0x108] sm:$0xf] %v3808
                %v3810 = vld [vmem:[%s3738 + $0x8c] sm:$0xf]
                %3811 = vst [vmem:[%s3739 + $0x10c] sm:$0xf] %v3810
                %v3812 = vld [vmem:[%s3738 + $0x90] sm:$0xf]
                %3813 = vst [vmem:[%s3739 + $0x110] sm:$0xf] %v3812
                %v3814 = vld [vmem:[%s3738 + $0x94] sm:$0xf]
                %3815 = vst [vmem:[%s3739 + $0x114] sm:$0xf] %v3814
                %v3816 = vld [vmem:[%s3738 + $0x98] sm:$0xf]
                %3817 = vst [vmem:[%s3739 + $0x118] sm:$0xf] %v3816
                %v3818 = vld [vmem:[%s3738 + $0x9c] sm:$0xf]
                %3819 = vst [vmem:[%s3739 + $0x11c] sm:$0xf] %v3818
                %v3820 = vld [vmem:[%s3738 + $0xa0] sm:$0xf]
                %3821 = vst [vmem:[%s3739 + $0x120] sm:$0xf] %v3820
                %v3822 = vld [vmem:[%s3738 + $0xa4] sm:$0xf]
                %3823 = vst [vmem:[%s3739 + $0x124] sm:$0xf] %v3822
                %v3824 = vld [vmem:[%s3738 + $0xa8] sm:$0xf]
                %3825 = vst [vmem:[%s3739 + $0x128] sm:$0xf] %v3824
                %v3826 = vld [vmem:[%s3738 + $0xac] sm:$0xf]
                %3827 = vst [vmem:[%s3739 + $0x12c] sm:$0xf] %v3826
                %v3828 = vld [vmem:[%s3738 + $0xb0] sm:$0xf]
                %3829 = vst [vmem:[%s3739 + $0x130] sm:$0xf] %v3828
                %v3830 = vld [vmem:[%s3738 + $0xb4] sm:$0xf]
                %3831 = vst [vmem:[%s3739 + $0x134] sm:$0xf] %v3830
                %v3832 = vld [vmem:[%s3738 + $0xb8] sm:$0xf]
                %3833 = vst [vmem:[%s3739 + $0x138] sm:$0xf] %v3832
                %v3834 = vld [vmem:[%s3738 + $0xbc] sm:$0xf]
                %3835 = vst [vmem:[%s3739 + $0x13c] sm:$0xf] %v3834
                %v3836 = vld [vmem:[%s3738 + $0xc0] sm:$0xf]
                %3837 = vst [vmem:[%s3739 + $0x140] sm:$0xf] %v3836
                %v3838 = vld [vmem:[%s3738 + $0xc4] sm:$0xf]
                %3839 = vst [vmem:[%s3739 + $0x144] sm:$0xf] %v3838
                %v3840 = vld [vmem:[%s3738 + $0xc8] sm:$0xf]
                %3841 = vst [vmem:[%s3739 + $0x148] sm:$0xf] %v3840
                %v3842 = vld [vmem:[%s3738 + $0xcc] sm:$0xf]
                %3843 = vst [vmem:[%s3739 + $0x14c] sm:$0xf] %v3842
                %v3844 = vld [vmem:[%s3738 + $0xd0] sm:$0xf]
                %3845 = vst [vmem:[%s3739 + $0x150] sm:$0xf] %v3844
                %v3846 = vld [vmem:[%s3738 + $0xd4] sm:$0xf]
                %3847 = vst [vmem:[%s3739 + $0x154] sm:$0xf] %v3846
                %v3848 = vld [vmem:[%s3738 + $0xd8] sm:$0xf]
                %3849 = vst [vmem:[%s3739 + $0x158] sm:$0xf] %v3848
                %v3850 = vld [vmem:[%s3738 + $0xdc] sm:$0xf]
                %3851 = vst [vmem:[%s3739 + $0x15c] sm:$0xf] %v3850
                %v3852 = vld [vmem:[%s3738 + $0xe0] sm:$0xf]
                %3853 = vst [vmem:[%s3739 + $0x160] sm:$0xf] %v3852
                %v3854 = vld [vmem:[%s3738 + $0xe4] sm:$0xf]
                %3855 = vst [vmem:[%s3739 + $0x164] sm:$0xf] %v3854
                %v3856 = vld [vmem:[%s3738 + $0xe8] sm:$0xf]
                %3857 = vst [vmem:[%s3739 + $0x168] sm:$0xf] %v3856
                %v3858 = vld [vmem:[%s3738 + $0xec] sm:$0xf]
                %3859 = vst [vmem:[%s3739 + $0x16c] sm:$0xf] %v3858
                %v3860 = vld [vmem:[%s3738 + $0xf0] sm:$0xf]
                %3861 = vst [vmem:[%s3739 + $0x170] sm:$0xf] %v3860
                %v3862 = vld [vmem:[%s3738 + $0xf4] sm:$0xf]
                %3863 = vst [vmem:[%s3739 + $0x174] sm:$0xf] %v3862
                %v3864 = vld [vmem:[%s3738 + $0xf8] sm:$0xf]
                %3865 = vst [vmem:[%s3739 + $0x178] sm:$0xf] %v3864
                %v3866 = vld [vmem:[%s3738 + $0xfc] sm:$0xf]
                %3867 = vst [vmem:[%s3739 + $0x17c] sm:$0xf] %v3866
                %v3868 = vld [vmem:[%s3738 + $0x100] sm:$0xf]
                %3869 = vst [vmem:[%s3739 + $0x200] sm:$0xf] %v3868
                %v3870 = vld [vmem:[%s3738 + $0x104] sm:$0xf]
                %3871 = vst [vmem:[%s3739 + $0x204] sm:$0xf] %v3870
                %v3872 = vld [vmem:[%s3738 + $0x108] sm:$0xf]
                %3873 = vst [vmem:[%s3739 + $0x208] sm:$0xf] %v3872
                %v3874 = vld [vmem:[%s3738 + $0x10c] sm:$0xf]
                %3875 = vst [vmem:[%s3739 + $0x20c] sm:$0xf] %v3874
                %v3876 = vld [vmem:[%s3738 + $0x110] sm:$0xf]
                %3877 = vst [vmem:[%s3739 + $0x210] sm:$0xf] %v3876
                %v3878 = vld [vmem:[%s3738 + $0x114] sm:$0xf]
                %3879 = vst [vmem:[%s3739 + $0x214] sm:$0xf] %v3878
                %v3880 = vld [vmem:[%s3738 + $0x118] sm:$0xf]
                %3881 = vst [vmem:[%s3739 + $0x218] sm:$0xf] %v3880
                %v3882 = vld [vmem:[%s3738 + $0x11c] sm:$0xf]
                %3883 = vst [vmem:[%s3739 + $0x21c] sm:$0xf] %v3882
                %v3884 = vld [vmem:[%s3738 + $0x120] sm:$0xf]
                %3885 = vst [vmem:[%s3739 + $0x220] sm:$0xf] %v3884
                %v3886 = vld [vmem:[%s3738 + $0x124] sm:$0xf]
                %3887 = vst [vmem:[%s3739 + $0x224] sm:$0xf] %v3886
                %v3888 = vld [vmem:[%s3738 + $0x128] sm:$0xf]
                %3889 = vst [vmem:[%s3739 + $0x228] sm:$0xf] %v3888
                %v3890 = vld [vmem:[%s3738 + $0x12c] sm:$0xf]
                %3891 = vst [vmem:[%s3739 + $0x22c] sm:$0xf] %v3890
                %v3892 = vld [vmem:[%s3738 + $0x130] sm:$0xf]
                %3893 = vst [vmem:[%s3739 + $0x230] sm:$0xf] %v3892
                %v3894 = vld [vmem:[%s3738 + $0x134] sm:$0xf]
                %3895 = vst [vmem:[%s3739 + $0x234] sm:$0xf] %v3894
                %v3896 = vld [vmem:[%s3738 + $0x138] sm:$0xf]
                %3897 = vst [vmem:[%s3739 + $0x238] sm:$0xf] %v3896
                %v3898 = vld [vmem:[%s3738 + $0x13c] sm:$0xf]
                %3899 = vst [vmem:[%s3739 + $0x23c] sm:$0xf] %v3898
                %v3900 = vld [vmem:[%s3738 + $0x140] sm:$0xf]
                %3901 = vst [vmem:[%s3739 + $0x240] sm:$0xf] %v3900
                %v3902 = vld [vmem:[%s3738 + $0x144] sm:$0xf]
                %3903 = vst [vmem:[%s3739 + $0x244] sm:$0xf] %v3902
                %v3904 = vld [vmem:[%s3738 + $0x148] sm:$0xf]
                %3905 = vst [vmem:[%s3739 + $0x248] sm:$0xf] %v3904
                %v3906 = vld [vmem:[%s3738 + $0x14c] sm:$0xf]
                %3907 = vst [vmem:[%s3739 + $0x24c] sm:$0xf] %v3906
                %v3908 = vld [vmem:[%s3738 + $0x150] sm:$0xf]
                %3909 = vst [vmem:[%s3739 + $0x250] sm:$0xf] %v3908
                %v3910 = vld [vmem:[%s3738 + $0x154] sm:$0xf]
                %3911 = vst [vmem:[%s3739 + $0x254] sm:$0xf] %v3910
                %v3912 = vld [vmem:[%s3738 + $0x158] sm:$0xf]
                %3913 = vst [vmem:[%s3739 + $0x258] sm:$0xf] %v3912
                %v3914 = vld [vmem:[%s3738 + $0x15c] sm:$0xf]
                %3915 = vst [vmem:[%s3739 + $0x25c] sm:$0xf] %v3914
                %v3916 = vld [vmem:[%s3738 + $0x160] sm:$0xf]
                %3917 = vst [vmem:[%s3739 + $0x260] sm:$0xf] %v3916
                %v3918 = vld [vmem:[%s3738 + $0x164] sm:$0xf]
                %3919 = vst [vmem:[%s3739 + $0x264] sm:$0xf] %v3918
                %v3920 = vld [vmem:[%s3738 + $0x168] sm:$0xf]
                %3921 = vst [vmem:[%s3739 + $0x268] sm:$0xf] %v3920
                %v3922 = vld [vmem:[%s3738 + $0x16c] sm:$0xf]
                %3923 = vst [vmem:[%s3739 + $0x26c] sm:$0xf] %v3922
                %v3924 = vld [vmem:[%s3738 + $0x170] sm:$0xf]
                %3925 = vst [vmem:[%s3739 + $0x270] sm:$0xf] %v3924
                %v3926 = vld [vmem:[%s3738 + $0x174] sm:$0xf]
                %3927 = vst [vmem:[%s3739 + $0x274] sm:$0xf] %v3926
                %v3928 = vld [vmem:[%s3738 + $0x178] sm:$0xf]
                %3929 = vst [vmem:[%s3739 + $0x278] sm:$0xf] %v3928
                %v3930 = vld [vmem:[%s3738 + $0x17c] sm:$0xf]
                %3931 = vst [vmem:[%s3739 + $0x27c] sm:$0xf] %v3930
                %v3932 = vld [vmem:[%s3738 + $0x180] sm:$0xf]
                %3933 = vst [vmem:[%s3739 + $0x300] sm:$0xf] %v3932
                %v3934 = vld [vmem:[%s3738 + $0x184] sm:$0xf]
                %3935 = vst [vmem:[%s3739 + $0x304] sm:$0xf] %v3934
                %v3936 = vld [vmem:[%s3738 + $0x188] sm:$0xf]
                %3937 = vst [vmem:[%s3739 + $0x308] sm:$0xf] %v3936
                %v3938 = vld [vmem:[%s3738 + $0x18c] sm:$0xf]
                %3939 = vst [vmem:[%s3739 + $0x30c] sm:$0xf] %v3938
                %v3940 = vld [vmem:[%s3738 + $0x190] sm:$0xf]
                %3941 = vst [vmem:[%s3739 + $0x310] sm:$0xf] %v3940
                %v3942 = vld [vmem:[%s3738 + $0x194] sm:$0xf]
                %3943 = vst [vmem:[%s3739 + $0x314] sm:$0xf] %v3942
                %v3944 = vld [vmem:[%s3738 + $0x198] sm:$0xf]
                %3945 = vst [vmem:[%s3739 + $0x318] sm:$0xf] %v3944
                %v3946 = vld [vmem:[%s3738 + $0x19c] sm:$0xf]
                %3947 = vst [vmem:[%s3739 + $0x31c] sm:$0xf] %v3946
                %v3948 = vld [vmem:[%s3738 + $0x1a0] sm:$0xf]
                %3949 = vst [vmem:[%s3739 + $0x320] sm:$0xf] %v3948
                %v3950 = vld [vmem:[%s3738 + $0x1a4] sm:$0xf]
                %3951 = vst [vmem:[%s3739 + $0x324] sm:$0xf] %v3950
                %v3952 = vld [vmem:[%s3738 + $0x1a8] sm:$0xf]
                %3953 = vst [vmem:[%s3739 + $0x328] sm:$0xf] %v3952
                %v3954 = vld [vmem:[%s3738 + $0x1ac] sm:$0xf]
                %3955 = vst [vmem:[%s3739 + $0x32c] sm:$0xf] %v3954
                %v3956 = vld [vmem:[%s3738 + $0x1b0] sm:$0xf]
                %3957 = vst [vmem:[%s3739 + $0x330] sm:$0xf] %v3956
                %v3958 = vld [vmem:[%s3738 + $0x1b4] sm:$0xf]
                %3959 = vst [vmem:[%s3739 + $0x334] sm:$0xf] %v3958
                %v3960 = vld [vmem:[%s3738 + $0x1b8] sm:$0xf]
                %3961 = vst [vmem:[%s3739 + $0x338] sm:$0xf] %v3960
                %v3962 = vld [vmem:[%s3738 + $0x1bc] sm:$0xf]
                %3963 = vst [vmem:[%s3739 + $0x33c] sm:$0xf] %v3962
                %v3964 = vld [vmem:[%s3738 + $0x1c0] sm:$0xf]
                %3965 = vst [vmem:[%s3739 + $0x340] sm:$0xf] %v3964
                %v3966 = vld [vmem:[%s3738 + $0x1c4] sm:$0xf]
                %3967 = vst [vmem:[%s3739 + $0x344] sm:$0xf] %v3966
                %v3968 = vld [vmem:[%s3738 + $0x1c8] sm:$0xf]
                %3969 = vst [vmem:[%s3739 + $0x348] sm:$0xf] %v3968
                %v3970 = vld [vmem:[%s3738 + $0x1cc] sm:$0xf]
                %3971 = vst [vmem:[%s3739 + $0x34c] sm:$0xf] %v3970
                %v3972 = vld [vmem:[%s3738 + $0x1d0] sm:$0xf]
                %3973 = vst [vmem:[%s3739 + $0x350] sm:$0xf] %v3972
                %v3974 = vld [vmem:[%s3738 + $0x1d4] sm:$0xf]
                %3975 = vst [vmem:[%s3739 + $0x354] sm:$0xf] %v3974
                %v3976 = vld [vmem:[%s3738 + $0x1d8] sm:$0xf]
                %3977 = vst [vmem:[%s3739 + $0x358] sm:$0xf] %v3976
                %v3978 = vld [vmem:[%s3738 + $0x1dc] sm:$0xf]
                %3979 = vst [vmem:[%s3739 + $0x35c] sm:$0xf] %v3978
                %v3980 = vld [vmem:[%s3738 + $0x1e0] sm:$0xf]
                %3981 = vst [vmem:[%s3739 + $0x360] sm:$0xf] %v3980
                %v3982 = vld [vmem:[%s3738 + $0x1e4] sm:$0xf]
                %3983 = vst [vmem:[%s3739 + $0x364] sm:$0xf] %v3982
                %v3984 = vld [vmem:[%s3738 + $0x1e8] sm:$0xf]
                %3985 = vst [vmem:[%s3739 + $0x368] sm:$0xf] %v3984
                %v3986 = vld [vmem:[%s3738 + $0x1ec] sm:$0xf]
                %3987 = vst [vmem:[%s3739 + $0x36c] sm:$0xf] %v3986
                %v3988 = vld [vmem:[%s3738 + $0x1f0] sm:$0xf]
                %3989 = vst [vmem:[%s3739 + $0x370] sm:$0xf] %v3988
                %v3990 = vld [vmem:[%s3738 + $0x1f4] sm:$0xf]
                %3991 = vst [vmem:[%s3739 + $0x374] sm:$0xf] %v3990
                %v3992 = vld [vmem:[%s3738 + $0x1f8] sm:$0xf]
                %3993 = vst [vmem:[%s3739 + $0x378] sm:$0xf] %v3992
                %v3994 = vld [vmem:[%s3738 + $0x1fc] sm:$0xf]
                %3995 = vst [vmem:[%s3739 + $0x37c] sm:$0xf] %v3994
              $region143: #{tpu_custom_call.1} parent=137 // loop_footer
                %s3737 = sadd.s32 1, %s3733
              $region144: #{tpu_custom_call.1} parent=137 // loop_footer_branch
                %3732 = sbr.rel target = $region140
              $region145: #{tpu_custom_call.1} parent=137 // loop_exit
                _
            $region138: #{tpu_custom_call.1} parent=129 // pred_fallthru
              _
          $region130: #{tpu_custom_call.1} parent=125 // pred_fallthru
            _
          %4271 = vnop
        $region126: #{tpu_custom_call.1} parent=31 // pred_fallthru
          _
      $region32: #{tpu_custom_call.1} parent=5 // pred_fallthru
        _
      %p4272 = scmp.le.s32.totalorder 2, %s16
      // Predicated region
      $region164: #{tpu_custom_call.1} parent=5 // pred_check
        %p4273 = pneg %p4272
      $region165: #{tpu_custom_call.1} parent=5 // pred_check_branch
        %4275 = sbr.rel (%p4273) target = $region167
      $region166: #{tpu_custom_call.1} parent=5 // pred_region
        %s4276 = ssub.s32 %s16, 2
        // Predicated region
        $region168: #{tpu_custom_call.1} parent=166 // pred_check
          %p4277 = pneg %p129
        $region169: #{tpu_custom_call.1} parent=166 // pred_check_branch
          %4279 = sbr.rel (%p4277) target = $region171
        $region170: #{tpu_custom_call.1} parent=166 // pred_region
          %s4280 = sand.u32 %s114, 1
          %s4281 = sand.u32 %s114, 1
          %s4282 = smul.addr %s4281, 512
          %s4283 = scalar_lea.vmem [#allocation6], %s4282
        $region171: #{tpu_custom_call.1} parent=166 // pred_fallthru
          _
        // Predicated region
        $region172: #{tpu_custom_call.1} parent=166 // pred_check
          %p4284 = pneg %p157
        $region173: #{tpu_custom_call.1} parent=166 // pred_check_branch
          %4286 = sbr.rel (%p4284) target = $region175
        $region174: #{tpu_custom_call.1} parent=166 // pred_region
          %s4287 = sand.u32 %s142, 1
          %s4288 = sand.u32 %s142, 1
          %s4289 = smul.addr %s4288, 512
          %s4290 = scalar_lea.vmem [#allocation7], %s4289
        $region175: #{tpu_custom_call.1} parent=166 // pred_fallthru
          _
        // Predicated region
        $region176: #{tpu_custom_call.1} parent=166 // pred_check
          %p4291 = pneg %p185
        $region177: #{tpu_custom_call.1} parent=166 // pred_check_branch
          %4293 = sbr.rel (%p4291) target = $region179
        $region178: #{tpu_custom_call.1} parent=166 // pred_region
          %s4294 = sand.u32 %s170, 1
          %s4295 = sand.u32 %s170, 1
          %s4296 = smul.addr %s4295, 512
          %s4297 = scalar_lea.vmem [#allocation8], %s4296
        $region179: #{tpu_custom_call.1} parent=166 // pred_fallthru
          _
      $region167: #{tpu_custom_call.1} parent=5 // pred_fallthru
        _
    $region6: #{tpu_custom_call.1} parent=1 // loop_footer
      %s20 = sadd.s32 1, %s16
    $region7: #{tpu_custom_call.1} parent=1 // loop_footer_branch
      %15 = sbr.rel target = $region3
    $region8: #{tpu_custom_call.1} parent=1 // loop_exit
      _
    %4298 = vsyncpa [#allocation3], 1
    %s4299 = scalar_lea.sflag [#allocation3], 1
    %4300 = vsyncpa %s4299, 1
    %4301 = vsyncpa [#allocation5], 1

// kernel: tpu_custom_call.1
$region0: #{tpu_custom_call.1}
  #allocation0 [shape = 'u32[]', space=smem, size = 0x4, offset = 0x4, fixed_abs, tag = 'smem constant byte address 0x4 - core index']
  #allocation1 [shape = 'u32[144,128]{1,0:T(1,128)}', space=vmem, size = 0x12000, scoped, tag = 'internal scratch']
  %s0 = inlined_call_operand.hbm [shape: bf16[2,512,128], index: 0, kind: input, shape index: {}]
  %s1 = inlined_call_operand.hbm [shape: bf16[128,384], index: 1, kind: input, shape index: {}]
  %s2 = inlined_call_operand.vmem [shape: f32[1,384], index: 2, kind: input, shape index: {}]
  %s3 = inlined_call_operand.vmem [shape: bf16[2,4,512,32], index: 3, kind: output, shape index: {0}]
  %s4 = inlined_call_operand.vmem [shape: bf16[2,4,512,32], index: 4, kind: output, shape index: {1}]
  %s5 = inlined_call_operand.vmem [shape: bf16[2,4,512,32], index: 5, kind: output, shape index: {2}]
  %6 = xla_tuple %s3, %s4, %s5
  %s7 = sld [smem:[#allocation0]]
  $region180: #{tpu_custom_call.1} parent=0
    _
  %s9 = ssub.s32 1, %s7
  %s10 = scalar_select 0, %s9, %s7
  $region1: #{tpu_custom_call.1} parent=0
    #allocation2 [shape = 'u8[131072]{0}', space=vmem, size = 0x20000, scoped, tag = 'input window, operand 0']
    #allocation3 [shape = 's32[2]{0}', space=sflag, size = 0x8, scoped, tag = 'scoped memory for tpu_custom_call.1']
    #allocation4 [shape = 'u8[98304]{0}', space=vmem, size = 0x18000, scoped, tag = 'input window, operand 1, single buffered']
    #allocation5 [shape = 's32[1]{0}', space=sflag, size = 0x4, scoped, tag = 'scoped memory for tpu_custom_call.1']
    #allocation6 [shape = 'u8[524288]{0}', space=vmem, size = 0x80000, scoped, tag = 'output window, operand 0']
    #allocation7 [shape = 'u8[524288]{0}', space=vmem, size = 0x80000, scoped, tag = 'output window, operand 1']
    #allocation8 [shape = 'u8[524288]{0}', space=vmem, size = 0x80000, scoped, tag = 'output window, operand 2']
    %11 = vsyncpa [#allocation3], 0
    %s12 = scalar_lea.sflag [#allocation3], 1
    %13 = vsyncpa %s12, 0
    %14 = vsyncpa [#allocation5], 0
    loop: start=0, step=1, limit=6
    $region2: #{tpu_custom_call.1} parent=1 // loop_pre_header
      _
    $region3: #{tpu_custom_call.1} parent=1 // loop_header
      %s16 = sphi 0, %s20
      %p17 = scmp.ge.s32.totalorder %s16, 6
      %s23 = sphi 0, %s35
      %s24 = sphi 0, %s31
      %s25 = sphi 0, %s23
      %s26 = sphi 0, %s24
      %s27 = sphi 0, %s25
      %s28 = sphi 0, %s26
      %s40 = sphi 0, %s42
      %s43 = sphi 0, %s40
      %s44 = sphi 0, %s43
      %s60 = sphi 0, %s44
      %s64 = sphi 0, %s64
      %s66 = sphi 0, %s64
      %s67 = sphi 0, %s66
      %s81 = sphi 0, %s67
      %s85 = sphi 0, %s85
      %s87 = sphi 0, %s85
      %s88 = sphi 0, %s87
      %s102 = sphi 0, %s88
      %s110 = sphi 0, %s112
      %s113 = sphi 0, %s110
      %s114 = sphi 0, %s113
      %s130 = sphi 0, %s114
      %s138 = sphi 0, %s140
      %s141 = sphi 0, %s138
      %s142 = sphi 0, %s141
      %s158 = sphi 0, %s142
      %s166 = sphi 0, %s168
      %s169 = sphi 0, %s166
      %s170 = sphi 0, %s169
      %s186 = sphi 0, %s170
    $region4: #{tpu_custom_call.1} parent=1 // loop_header_branch
      %19 = sbr.rel (%p17) target = $region8
    $region5: #{tpu_custom_call.1} parent=1 // loop_body
      %s21 = ssub.s32 %s16, 1
      %s22 = ssub.s32 %s16, 2
      %s29 = sadd.s32 1, %s24
      %p30 = scmp.ge.s32.totalorder %s29, 2
      %s31 = scalar_select %p30, 0, %s29
      %s32 = sadd.s32 1, %s23
      %s33 = scalar_select %p30, %s32, %s23
      %p34 = scmp.ge.s32.totalorder %s33, 2
      %s35 = scalar_select %p34, 0, %s33
      %s36 = ssub.s32 %s23, %s35
      %s37 = ssub.s32 %s24, %s31
      %s38 = sor.u32 %s36, %s37
      %p39 = scmp.eq.s32.totalorder %s38, 0
      %s41 = sadd.s32 %s40, 1
      %s42 = scalar_select %p39, %s40, %s41
      %p45 = pneg %p39
      %p46 = scmp.eq.s32.totalorder %s16, 3
      %p47 = por %p45, %p46
      %p48 = scmp.ne.s32.totalorder %s40, %s43
      %p49 = scmp.eq.s32.totalorder %s16, 0
      %p50 = por %p48, %p49
      %p51 = scmp.ne.s32.totalorder %s40, %s43
      %p52 = scmp.eq.s32.totalorder %s21, 3
      %p53 = por %p51, %p52
      %p54 = scmp.ne.s32.totalorder %s43, %s44
      %p55 = scmp.eq.s32.totalorder %s21, 0
      %p56 = por %p54, %p55
      %p57 = scmp.ne.s32.totalorder %s43, %s44
      %p58 = scmp.eq.s32.totalorder %s22, 3
      %p59 = por %p57, %p58
      %p61 = scmp.ne.s32.totalorder %s44, %s60
      %p62 = scmp.eq.s32.totalorder %s22, 0
      %p63 = por %p61, %p62
      %s65 = sadd.s32 %s64, 1
      %p68 = scmp.eq.s32.totalorder %s16, 3
      %p69 = scmp.ne.s32.totalorder %s64, %s66
      %p70 = scmp.eq.s32.totalorder %s16, 0
      %p71 = por %p69, %p70
      %p72 = scmp.ne.s32.totalorder %s64, %s66
      %p73 = scmp.eq.s32.totalorder %s21, 3
      %p74 = por %p72, %p73
      %p75 = scmp.ne.s32.totalorder %s66, %s67
      %p76 = scmp.eq.s32.totalorder %s21, 0
      %p77 = por %p75, %p76
      %p78 = scmp.ne.s32.totalorder %s66, %s67
      %p79 = scmp.eq.s32.totalorder %s22, 3
      %p80 = por %p78, %p79
      %p82 = scmp.ne.s32.totalorder %s67, %s81
      %p83 = scmp.eq.s32.totalorder %s22, 0
      %p84 = por %p82, %p83
      %s86 = sadd.s32 %s85, 1
      %p89 = scmp.eq.s32.totalorder %s16, 3
      %p90 = scmp.ne.s32.totalorder %s85, %s87
      %p91 = scmp.eq.s32.totalorder %s16, 0
      %p92 = por %p90, %p91
      %p93 = scmp.ne.s32.totalorder %s85, %s87
      %p94 = scmp.eq.s32.totalorder %s21, 3
      %p95 = por %p93, %p94
      %p96 = scmp.ne.s32.totalorder %s87, %s88
      %p97 = scmp.eq.s32.totalorder %s21, 0
      %p98 = por %p96, %p97
      %p99 = scmp.ne.s32.totalorder %s87, %s88
      %p100 = scmp.eq.s32.totalorder %s22, 3
      %p101 = por %p99, %p100
      %p103 = scmp.ne.s32.totalorder %s88, %s102
      %p104 = scmp.eq.s32.totalorder %s22, 0
      %p105 = por %p103, %p104
      %s106 = ssub.s32 %s23, %s35
      %s107 = ssub.s32 %s24, %s31
      %s108 = sor.u32 %s106, %s107
      %p109 = scmp.eq.s32.totalorder %s108, 0
      %s111 = sadd.s32 %s110, 1
      %s112 = scalar_select %p109, %s110, %s111
      %p115 = pneg %p109
      %p116 = scmp.eq.s32.totalorder %s16, 3
      %p117 = por %p115, %p116
      %p118 = scmp.ne.s32.totalorder %s110, %s113
      %p119 = scmp.eq.s32.totalorder %s16, 0
      %p120 = por %p118, %p119
      %p121 = scmp.ne.s32.totalorder %s110, %s113
      %p122 = scmp.eq.s32.totalorder %s21, 3
      %p123 = por %p121, %p122
      %p124 = scmp.ne.s32.totalorder %s113, %s114
      %p125 = scmp.eq.s32.totalorder %s21, 0
      %p126 = por %p124, %p125
      %p127 = scmp.ne.s32.totalorder %s113, %s114
      %p128 = scmp.eq.s32.totalorder %s22, 3
      %p129 = por %p127, %p128
      %p131 = scmp.ne.s32.totalorder %s114, %s130
      %p132 = scmp.eq.s32.totalorder %s22, 0
      %p133 = por %p131, %p132
      %s134 = ssub.s32 %s23, %s35
      %s135 = ssub.s32 %s24, %s31
      %s136 = sor.u32 %s134, %s135
      %p137 = scmp.eq.s32.totalorder %s136, 0
      %s139 = sadd.s32 %s138, 1
      %s140 = scalar_select %p137, %s138, %s139
      %p143 = pneg %p137
      %p144 = scmp.eq.s32.totalorder %s16, 3
      %p145 = por %p143, %p144
      %p146 = scmp.ne.s32.totalorder %s138, %s141
      %p147 = scmp.eq.s32.totalorder %s16, 0
      %p148 = por %p146, %p147
      %p149 = scmp.ne.s32.totalorder %s138, %s141
      %p150 = scmp.eq.s32.totalorder %s21, 3
      %p151 = por %p149, %p150
      %p152 = scmp.ne.s32.totalorder %s141, %s142
      %p153 = scmp.eq.s32.totalorder %s21, 0
      %p154 = por %p152, %p153
      %p155 = scmp.ne.s32.totalorder %s141, %s142
      %p156 = scmp.eq.s32.totalorder %s22, 3
      %p157 = por %p155, %p156
      %p159 = scmp.ne.s32.totalorder %s142, %s158
      %p160 = scmp.eq.s32.totalorder %s22, 0
      %p161 = por %p159, %p160
      %s162 = ssub.s32 %s23, %s35
      %s163 = ssub.s32 %s24, %s31
      %s164 = sor.u32 %s162, %s163
      %p165 = scmp.eq.s32.totalorder %s164, 0
      %s167 = sadd.s32 %s166, 1
      %s168 = scalar_select %p165, %s166, %s167
      %p171 = pneg %p165
      %p172 = scmp.eq.s32.totalorder %s16, 3
      %p173 = por %p171, %p172
      %p174 = scmp.ne.s32.totalorder %s166, %s169
      %p175 = scmp.eq.s32.totalorder %s16, 0
      %p176 = por %p174, %p175
      %p177 = scmp.ne.s32.totalorder %s166, %s169
      %p178 = scmp.eq.s32.totalorder %s21, 3
      %p179 = por %p177, %p178
      %p180 = scmp.ne.s32.totalorder %s169, %s170
      %p181 = scmp.eq.s32.totalorder %s21, 0
      %p182 = por %p180, %p181
      %p183 = scmp.ne.s32.totalorder %s169, %s170
      %p184 = scmp.eq.s32.totalorder %s22, 3
      %p185 = por %p183, %p184
      %p187 = scmp.ne.s32.totalorder %s170, %s186
      %p188 = scmp.eq.s32.totalorder %s22, 0
      %p189 = por %p187, %p188
      %p190 = scmp.le.s32.totalorder 1, %s16
      %p191 = scmp.lt.s32.totalorder %s16, 5
      %p192 = pnand %p190, %p191
      %p193 = pneg %p192
      // Predicated region
      $region9: #{tpu_custom_call.1} parent=5 // pred_check
        _
      $region10: #{tpu_custom_call.1} parent=5 // pred_check_branch
        %195 = sbr.rel (%p192) target = $region12
      $region11: #{tpu_custom_call.1} parent=5 // pred_region
        %s196 = ssub.s32 %s16, 1
        // Predicated region
        $region13: #{tpu_custom_call.1} parent=11 // pred_check
          %p197 = pneg %p77
        $region14: #{tpu_custom_call.1} parent=11 // pred_check_branch
          %199 = sbr.rel (%p197) target = $region16
        $region15: #{tpu_custom_call.1} parent=11 // pred_region
          %s201 = ssub.s32 3072, 3072
          %202 = vsyncadd [#allocation5], %s201
          %s203 = sshll.u32 [#allocation4], 4
          %s204 = int_to_ptr.vmem [resolvable:$true] %s203
          %209 = dma.hbm_to_vmem [thread:$0]  %s1, 3072, %s204, [#allocation5], 192, 192, 12
        $region16: #{tpu_custom_call.1} parent=11 // pred_fallthru
          _
        // Predicated region
        $region17: #{tpu_custom_call.1} parent=11 // pred_check
          %p210 = pneg %p98
        $region18: #{tpu_custom_call.1} parent=11 // pred_check_branch
          %212 = sbr.rel (%p210) target = $region20
        $region19: #{tpu_custom_call.1} parent=11 // pred_region
          _
        $region20: #{tpu_custom_call.1} parent=11 // pred_fallthru
          _
      $region12: #{tpu_custom_call.1} parent=5 // pred_fallthru
        _
      %p213 = scmp.lt.s32.totalorder %s16, 4
      // Predicated region
      $region21: #{tpu_custom_call.1} parent=5 // pred_check
        %p214 = pneg %p213
      $region22: #{tpu_custom_call.1} parent=5 // pred_check_branch
        %216 = sbr.rel (%p214) target = $region24
      $region23: #{tpu_custom_call.1} parent=5 // pred_region
        // Predicated region
        $region25: #{tpu_custom_call.1} parent=23 // pred_check
          %p217 = pneg %p50
        $region26: #{tpu_custom_call.1} parent=23 // pred_check_branch
          %219 = sbr.rel (%p217) target = $region28
        $region27: #{tpu_custom_call.1} parent=23 // pred_region
          %s220 = sand.u32 %s40, 1
          %s221 = scalar_lea.sflag [#allocation3], %s220
          %s222 = sand.u32 %s40, 1
          %s223 = smul.addr %s222, 128
          %s224 = scalar_lea.vmem [#allocation2], %s223
          %s225 = smul.u32 32, %s24
          %s227 = ssub.s32 2048, 2048
          %228 = vsyncadd %s221, %s227
          %s229 = smul.addr %s23, 64
          %s230 = sadd.s32 %s225, %s229
          %s231 = smul.addr %s230, 64
          %s232 = scalar_lea.hbm %s0, %s231
          %s233 = sshll.u32 %s224, 4
          %s234 = int_to_ptr.vmem [resolvable:$true] %s233
          %239 = dma.hbm_to_vmem [thread:$0]  %s232, 2048, %s234, %s221, 64, 64, 4
        $region28: #{tpu_custom_call.1} parent=23 // pred_fallthru
          _
      $region24: #{tpu_custom_call.1} parent=5 // pred_fallthru
        _
      %p240 = scmp.le.s32.totalorder 1, %s16
      %p241 = scmp.lt.s32.totalorder %s16, 5
      %p242 = pnand %p240, %p241
      %p243 = pneg %p242
      // Predicated region
      $region29: #{tpu_custom_call.1} parent=5 // pred_check
        _
      $region30: #{tpu_custom_call.1} parent=5 // pred_check_branch
        %245 = sbr.rel (%p242) target = $region32
      $region31: #{tpu_custom_call.1} parent=5 // pred_region
        %s246 = ssub.s32 %s16, 1
        %s247 = sand.u32 %s43, 1
        %s248 = scalar_lea.sflag [#allocation3], %s247
        %s249 = sand.u32 %s43, 1
        %s250 = smul.addr %s249, 128
        %s251 = scalar_lea.vmem [#allocation2], %s250
        // Predicated region
        $region33: #{tpu_custom_call.1} parent=31 // pred_check
          %p252 = pneg %p56
        $region34: #{tpu_custom_call.1} parent=31 // pred_check_branch
          %254 = sbr.rel (%p252) target = $region36
        $region35: #{tpu_custom_call.1} parent=31 // pred_region
          %255 = dma.done %s248, 2048
        $region36: #{tpu_custom_call.1} parent=31 // pred_fallthru
          _
        // Predicated region
        $region37: #{tpu_custom_call.1} parent=31 // pred_check
          %p256 = pneg %p77
        $region38: #{tpu_custom_call.1} parent=31 // pred_check_branch
          %258 = sbr.rel (%p256) target = $region40
        $region39: #{tpu_custom_call.1} parent=31 // pred_region
          %259 = dma.done [#allocation5], 3072
        $region40: #{tpu_custom_call.1} parent=31 // pred_fallthru
          _
        %s260 = sand.u32 %s43, 1
        %s261 = scalar_lea.sflag [#allocation3], %s260
        %s262 = sand.u32 %s43, 1
        %s263 = smul.addr %s262, 128
        %s264 = scalar_lea.vmem [#allocation2], %s263
        %p265 = pneg %p56
        %p266 = pneg %p53
        %p267 = pneg %p77
        %p268 = pneg %p74
        %p269 = pneg %p98
        %p270 = pneg %p95
        %p271 = pneg %p126
        %p272 = pneg %p123
        %s273 = sand.u32 %s113, 1
        %s274 = sand.u32 %s113, 1
        %s275 = smul.addr %s274, 512
        %s276 = scalar_lea.vmem [#allocation6], %s275
        %p277 = pneg %p154
        %p278 = pneg %p151
        %s279 = sand.u32 %s141, 1
        %s280 = sand.u32 %s141, 1
        %s281 = smul.addr %s280, 512
        %s282 = scalar_lea.vmem [#allocation7], %s281
        %p283 = pneg %p182
        %p284 = pneg %p179
        %s285 = sand.u32 %s169, 1
        %s286 = sand.u32 %s169, 1
        %s287 = smul.addr %s286, 512
        %s288 = scalar_lea.vmem [#allocation8], %s287
        %s289 = smul.u32 32, %s26
        %s290 = smul.u32 32, %s26
        %s291 = smul.u32 32, %s26
        %s292 = smul.u32 32, %s26
        %v294 = vld [vmem:[%s251] sm:$0xf]
        %v295 = vld [vmem:[%s251 + $0x4] sm:$0xf]
        %v296 = vld [vmem:[%s251 + $0x8] sm:$0xf]
        %v297 = vld [vmem:[%s251 + $0xc] sm:$0xf]
        %v298 = vld [vmem:[%s251 + $0x10] sm:$0xf]
        %v299 = vld [vmem:[%s251 + $0x14] sm:$0xf]
        %v300 = vld [vmem:[%s251 + $0x18] sm:$0xf]
        %v301 = vld [vmem:[%s251 + $0x1c] sm:$0xf]
        %v302 = vld [vmem:[%s251 + $0x20] sm:$0xf]
        %v303 = vld [vmem:[%s251 + $0x24] sm:$0xf]
        %v304 = vld [vmem:[%s251 + $0x28] sm:$0xf]
        %v305 = vld [vmem:[%s251 + $0x2c] sm:$0xf]
        %v306 = vld [vmem:[%s251 + $0x30] sm:$0xf]
        %v307 = vld [vmem:[%s251 + $0x34] sm:$0xf]
        %v308 = vld [vmem:[%s251 + $0x38] sm:$0xf]
        %v309 = vld [vmem:[%s251 + $0x3c] sm:$0xf]
        %v310 = vld [vmem:[%s251 + $0x40] sm:$0xf]
        %v311 = vld [vmem:[%s251 + $0x44] sm:$0xf]
        %v312 = vld [vmem:[%s251 + $0x48] sm:$0xf]
        %v313 = vld [vmem:[%s251 + $0x4c] sm:$0xf]
        %v314 = vld [vmem:[%s251 + $0x50] sm:$0xf]
        %v315 = vld [vmem:[%s251 + $0x54] sm:$0xf]
        %v316 = vld [vmem:[%s251 + $0x58] sm:$0xf]
        %v317 = vld [vmem:[%s251 + $0x5c] sm:$0xf]
        %v318 = vld [vmem:[%s251 + $0x60] sm:$0xf]
        %v319 = vld [vmem:[%s251 + $0x64] sm:$0xf]
        %v320 = vld [vmem:[%s251 + $0x68] sm:$0xf]
        %v321 = vld [vmem:[%s251 + $0x6c] sm:$0xf]
        %v322 = vld [vmem:[%s251 + $0x70] sm:$0xf]
        %v323 = vld [vmem:[%s251 + $0x74] sm:$0xf]
        %v324 = vld [vmem:[%s251 + $0x78] sm:$0xf]
        %v325 = vld [vmem:[%s251 + $0x7c] sm:$0xf]
        %v326 = vld [vmem:[#allocation4] sm:$0xff]
        %v327 = vld [vmem:[#allocation4 + $0x8] sm:$0xf]
        %v328 = vld [vmem:[#allocation4 + $0xc] sm:$0xff]
        %v329 = vld [vmem:[#allocation4 + $0x14] sm:$0xf]
        %v330 = vld [vmem:[#allocation4 + $0x18] sm:$0xff]
        %v331 = vld [vmem:[#allocation4 + $0x20] sm:$0xf]
        %v332 = vld [vmem:[#allocation4 + $0x24] sm:$0xff]
        %v333 = vld [vmem:[#allocation4 + $0x2c] sm:$0xf]
        %v334 = vld [vmem:[#allocation4 + $0x30] sm:$0xff]
        %v335 = vld [vmem:[#allocation4 + $0x38] sm:$0xf]
        %v336 = vld [vmem:[#allocation4 + $0x3c] sm:$0xff]
        %v337 = vld [vmem:[#allocation4 + $0x44] sm:$0xf]
        %v338 = vld [vmem:[#allocation4 + $0x48] sm:$0xff]
        %v339 = vld [vmem:[#allocation4 + $0x50] sm:$0xf]
        %v340 = vld [vmem:[#allocation4 + $0x54] sm:$0xff]
        %v341 = vld [vmem:[#allocation4 + $0x5c] sm:$0xf]
        %v342 = vld [vmem:[#allocation4 + $0x60] sm:$0xff]
        %v343 = vld [vmem:[#allocation4 + $0x68] sm:$0xf]
        %v344 = vld [vmem:[#allocation4 + $0x6c] sm:$0xff]
        %v345 = vld [vmem:[#allocation4 + $0x74] sm:$0xf]
        %v346 = vld [vmem:[#allocation4 + $0x78] sm:$0xff]
        %v347 = vld [vmem:[#allocation4 + $0x80] sm:$0xf]
        %v348 = vld [vmem:[#allocation4 + $0x84] sm:$0xff]
        %v349 = vld [vmem:[#allocation4 + $0x8c] sm:$0xf]
        %v350 = vld [vmem:[#allocation4 + $0x90] sm:$0xff]
        %v351 = vld [vmem:[#allocation4 + $0x98] sm:$0xf]
        %v352 = vld [vmem:[#allocation4 + $0x9c] sm:$0xff]
        %v353 = vld [vmem:[#allocation4 + $0xa4] sm:$0xf]
        %v354 = vld [vmem:[#allocation4 + $0xa8] sm:$0xff]
        %v355 = vld [vmem:[#allocation4 + $0xb0] sm:$0xf]
        %v356 = vld [vmem:[#allocation4 + $0xb4] sm:$0xff]
        %v357 = vld [vmem:[#allocation4 + $0xbc] sm:$0xf]
        %v358 = vld [vmem:[%s2] sm:$0x7]
        %v360 = vlaneseq
        %v361 = vshrl.u32 %v360, 7
        %v362 = vsub.s32 0, %v361
        %v363 = vrot.slane %v358, %v362
        %v364 = vlaneseq
        %v365 = vshrl.u32 %v364, 7
        %v366 = vsub.s32 1, %v365
        %v367 = vrot.slane %v358, %v366
        %v368 = vlaneseq
        %v369 = vshrl.u32 %v368, 7
        %v370 = vsub.s32 2, %v369
        %v371 = vrot.slane %v358, %v370
        %v407 = vunpack.c.l.b16 %v294
        %v408 = vunpack.c.l.b16 %v295
        %v409 = vunpack.c.l.b16 %v296
        %v410 = vunpack.c.l.b16 %v297
        %v411 = vunpack.c.l.b16 %v298
        %v412 = vunpack.c.l.b16 %v299
        %v413 = vunpack.c.l.b16 %v300
        %v414 = vunpack.c.l.b16 %v301
        %v415 = vunpack.c.l.b16 %v302
        %v416 = vunpack.c.l.b16 %v303
        %v417 = vunpack.c.l.b16 %v304
        %v418 = vunpack.c.l.b16 %v305
        %v419 = vunpack.c.l.b16 %v306
        %v420 = vunpack.c.l.b16 %v307
        %v421 = vunpack.c.l.b16 %v308
        %v422 = vunpack.c.l.b16 %v309
        %v423 = vunpack.c.l.b16 %v310
        %v424 = vunpack.c.l.b16 %v311
        %v425 = vunpack.c.l.b16 %v312
        %v426 = vunpack.c.l.b16 %v313
        %v427 = vunpack.c.l.b16 %v314
        %v428 = vunpack.c.l.b16 %v315
        %v429 = vunpack.c.l.b16 %v316
        %v430 = vunpack.c.l.b16 %v317
        %v431 = vunpack.c.l.b16 %v318
        %v432 = vunpack.c.l.b16 %v319
        %v433 = vunpack.c.l.b16 %v320
        %v434 = vunpack.c.l.b16 %v321
        %v435 = vunpack.c.l.b16 %v322
        %v436 = vunpack.c.l.b16 %v323
        %v437 = vunpack.c.l.b16 %v324
        %v438 = vunpack.c.l.b16 %v325
        %v439 = vpack.c.b16 %v408, %v407
        %v440 = vpack.c.b16 %v410, %v409
        %v441 = vpack.c.b16 %v412, %v411
        %v442 = vpack.c.b16 %v414, %v413
        %v443 = vpack.c.b16 %v416, %v415
        %v444 = vpack.c.b16 %v418, %v417
        %v445 = vpack.c.b16 %v420, %v419
        %v446 = vpack.c.b16 %v422, %v421
        %v447 = vpack.c.b16 %v424, %v423
        %v448 = vpack.c.b16 %v426, %v425
        %v449 = vpack.c.b16 %v428, %v427
        %v450 = vpack.c.b16 %v430, %v429
        %v451 = vpack.c.b16 %v432, %v431
        %v452 = vpack.c.b16 %v434, %v433
        %v453 = vpack.c.b16 %v436, %v435
        %v454 = vpack.c.b16 %v438, %v437
        %v503 = vunpack.c.l.b16 %v326
        %v504 = vunpack.c.h.b16 %v326
        %v505 = vunpack.c.l.b16 %v327
        %v506 = vunpack.c.l.b16 %v328
        %v507 = vunpack.c.h.b16 %v328
        %v508 = vunpack.c.l.b16 %v329
        %v509 = vunpack.c.l.b16 %v330
        %v510 = vunpack.c.h.b16 %v330
        %v511 = vunpack.c.l.b16 %v331
        %v512 = vunpack.c.l.b16 %v332
        %v513 = vunpack.c.h.b16 %v332
        %v514 = vunpack.c.l.b16 %v333
        %v515 = vunpack.c.l.b16 %v334
        %v516 = vunpack.c.h.b16 %v334
        %v517 = vunpack.c.l.b16 %v335
        %v518 = vunpack.c.l.b16 %v336
        %v519 = vunpack.c.h.b16 %v336
        %v520 = vunpack.c.l.b16 %v337
        %v521 = vunpack.c.l.b16 %v338
        %v522 = vunpack.c.h.b16 %v338
        %v523 = vunpack.c.l.b16 %v339
        %v524 = vunpack.c.l.b16 %v340
        %v525 = vunpack.c.h.b16 %v340
        %v526 = vunpack.c.l.b16 %v341
        %v527 = vunpack.c.l.b16 %v342
        %v528 = vunpack.c.h.b16 %v342
        %v529 = vunpack.c.l.b16 %v343
        %v530 = vunpack.c.l.b16 %v344
        %v531 = vunpack.c.h.b16 %v344
        %v532 = vunpack.c.l.b16 %v345
        %v533 = vunpack.c.l.b16 %v346
        %v534 = vunpack.c.h.b16 %v346
        %v535 = vunpack.c.l.b16 %v347
        %v536 = vunpack.c.l.b16 %v348
        %v537 = vunpack.c.h.b16 %v348
        %v538 = vunpack.c.l.b16 %v349
        %v539 = vunpack.c.l.b16 %v350
        %v540 = vunpack.c.h.b16 %v350
        %v541 = vunpack.c.l.b16 %v351
        %v542 = vunpack.c.l.b16 %v352
        %v543 = vunpack.c.h.b16 %v352
        %v544 = vunpack.c.l.b16 %v353
        %v545 = vunpack.c.l.b16 %v354
        %v546 = vunpack.c.h.b16 %v354
        %v547 = vunpack.c.l.b16 %v355
        %v548 = vunpack.c.l.b16 %v356
        %v549 = vunpack.c.h.b16 %v356
        %v550 = vunpack.c.l.b16 %v357
        %v551 = vpack.c.b16 %v506, %v503
        %v552 = vpack.c.b16 %v507, %v504
        %v553 = vpack.c.b16 %v508, %v505
        %v554 = vpack.c.b16 %v512, %v509
        %v555 = vpack.c.b16 %v513, %v510
        %v556 = vpack.c.b16 %v514, %v511
        %v557 = vpack.c.b16 %v518, %v515
        %v558 = vpack.c.b16 %v519, %v516
        %v559 = vpack.c.b16 %v520, %v517
        %v560 = vpack.c.b16 %v524, %v521
        %v561 = vpack.c.b16 %v525, %v522
        %v562 = vpack.c.b16 %v526, %v523
        %v563 = vpack.c.b16 %v530, %v527
        %v564 = vpack.c.b16 %v531, %v528
        %v565 = vpack.c.b16 %v532, %v529
        %v566 = vpack.c.b16 %v536, %v533
        %v567 = vpack.c.b16 %v537, %v534
        %v568 = vpack.c.b16 %v538, %v535
        %v569 = vpack.c.b16 %v542, %v539
        %v570 = vpack.c.b16 %v543, %v540
        %v571 = vpack.c.b16 %v544, %v541
        %v572 = vpack.c.b16 %v548, %v545
        %v573 = vpack.c.b16 %v549, %v546
        %v574 = vpack.c.b16 %v550, %v547
        %599 = vmatprep.subr.bf16.mxu0 %v552
        %600 = vmatpush1.bf16.msra.mxu0 %v551
        %601 = vmatprep.subr.bf16.mxu0 %v555
        %602 = vmatpush1.bf16.msra.mxu0 %v554
        %603 = vmatprep.subr.bf16.mxu0 %v558
        %604 = vmatpush1.bf16.msra.mxu0 %v557
        %605 = vmatprep.subr.bf16.mxu0 %v561
        %606 = vmatpush1.bf16.msra.mxu0 %v560
        %607 = vmatprep.subr.bf16.mxu0 %v564
        %608 = vmatpush1.bf16.msra.mxu0 %v563
        %609 = vmatprep.subr.bf16.mxu0 %v567
        %610 = vmatpush1.bf16.msra.mxu0 %v566
        %611 = vmatprep.subr.bf16.mxu0 %v570
        %612 = vmatpush1.bf16.msra.mxu0 %v569
        %613 = vmatprep.subr.bf16.mxu0 %v573
        %614 = vmatpush1.bf16.msra.mxu0 %v572
        %615 = vmatprep.subr.bf16.mxu0 0
        %616 = vmatpush1.bf16.msra.mxu0 0
        %617 = vmatprep.subr.bf16.mxu0 0
        %618 = vmatpush1.bf16.msra.mxu0 0
        %619 = vmatprep.subr.bf16.mxu0 0
        %620 = vmatpush1.bf16.msra.mxu0 0
        %621 = vmatprep.subr.bf16.mxu0 0
        %622 = vmatpush1.bf16.msra.mxu0 0
        %623 = vmatprep.subr.bf16.mxu0 0
        %624 = vmatpush1.bf16.msra.mxu0 0
        %625 = vmatprep.subr.bf16.mxu0 0
        %626 = vmatpush1.bf16.msra.mxu0 0
        %627 = vmatprep.subr.bf16.mxu0 0
        %628 = vmatpush1.bf16.msra.mxu0 0
        %629 = vmatprep.subr.bf16.mxu0 0
        %630 = vmatpush1.bf16.msra.mxu0 0
        %631 = vmatprep.mubr.bf16.mxu0 0
        %632 = vmatmul.mubr.bf16.gmra.mrb[0].mxu0 %v439
        %v633 = vpop.f32.mrb[0].mxu0
        %v634 = vadd.f32 %v363, %v633
        %v635 = vpop.f32.mrb[0].mxu0
        %v636 = vadd.f32 %v367, %v635
        %v637 = vpop.f32.mrb[0].mxu0
        %v638 = vadd.f32 %v363, %v637
        %v639 = vpop.f32.mrb[0].mxu0
        %v640 = vadd.f32 %v367, %v639
        %641 = vmatprep.mubr.bf16.mxu0 0
        %642 = vmatmul.mubr.bf16.gmra.mrb[0].mxu0 %v440
        %v643 = vpop.f32.mrb[0].mxu0
        %v644 = vadd.f32 %v363, %v643
        %v645 = vpop.f32.mrb[0].mxu0
        %v646 = vadd.f32 %v367, %v645
        %v647 = vpop.f32.mrb[0].mxu0
        %v648 = vadd.f32 %v363, %v647
        %v649 = vpop.f32.mrb[0].mxu0
        %v650 = vadd.f32 %v367, %v649
        %651 = vmatprep.mubr.bf16.mxu0 0
        %652 = vmatmul.mubr.bf16.gmra.mrb[0].mxu0 %v441
        %v653 = vpop.f32.mrb[0].mxu0
        %v654 = vadd.f32 %v363, %v653
        %v655 = vpop.f32.mrb[0].mxu0
        %v656 = vadd.f32 %v367, %v655
        %v657 = vpop.f32.mrb[0].mxu0
        %v658 = vadd.f32 %v363, %v657
        %v659 = vpop.f32.mrb[0].mxu0
        %v660 = vadd.f32 %v367, %v659
        %661 = vmatprep.mubr.bf16.mxu0 0
        %662 = vmatmul.mubr.bf16.gmra.mrb[0].mxu0 %v442
        %v663 = vpop.f32.mrb[0].mxu0
        %v664 = vadd.f32 %v363, %v663
        %v665 = vpop.f32.mrb[0].mxu0
        %v666 = vadd.f32 %v367, %v665
        %v667 = vpop.f32.mrb[0].mxu0
        %v668 = vadd.f32 %v363, %v667
        %v669 = vpop.f32.mrb[0].mxu0
        %v670 = vadd.f32 %v367, %v669
        %671 = vmatprep.mubr.bf16.mxu0 0
        %672 = vmatmul.mubr.bf16.gmra.mrb[0].mxu0 %v443
        %v673 = vpop.f32.mrb[0].mxu0
        %v674 = vadd.f32 %v363, %v673
        %v675 = vpop.f32.mrb[0].mxu0
        %v676 = vadd.f32 %v367, %v675
        %v677 = vpop.f32.mrb[0].mxu0
        %v678 = vadd.f32 %v363, %v677
        %v679 = vpop.f32.mrb[0].mxu0
        %v680 = vadd.f32 %v367, %v679
        %681 = vmatprep.mubr.bf16.mxu0 0
        %682 = vmatmul.mubr.bf16.gmra.mrb[0].mxu0 %v444
        %v683 = vpop.f32.mrb[0].mxu0
        %v684 = vadd.f32 %v363, %v683
        %v685 = vpop.f32.mrb[0].mxu0
        %v686 = vadd.f32 %v367, %v685
        %v687 = vpop.f32.mrb[0].mxu0
        %v688 = vadd.f32 %v363, %v687
        %v689 = vpop.f32.mrb[0].mxu0
        %v690 = vadd.f32 %v367, %v689
        %691 = vmatprep.mubr.bf16.mxu0 0
        %692 = vmatmul.mubr.bf16.gmra.mrb[0].mxu0 %v445
        %v693 = vpop.f32.mrb[0].mxu0
        %v694 = vadd.f32 %v363, %v693
        %v695 = vpop.f32.mrb[0].mxu0
        %v696 = vadd.f32 %v367, %v695
        %v697 = vpop.f32.mrb[0].mxu0
        %v698 = vadd.f32 %v363, %v697
        %v699 = vpop.f32.mrb[0].mxu0
        %v700 = vadd.f32 %v367, %v699
        %701 = vmatprep.mubr.bf16.mxu0 0
        %702 = vmatmul.mubr.bf16.gmra.mrb[0].mxu0 %v446
        %v703 = vpop.f32.mrb[0].mxu0
        %v704 = vadd.f32 %v363, %v703
        %v705 = vpop.f32.mrb[0].mxu0
        %v706 = vadd.f32 %v367, %v705
        %v707 = vpop.f32.mrb[0].mxu0
        %v708 = vadd.f32 %v363, %v707
        %v709 = vpop.f32.mrb[0].mxu0
        %v710 = vadd.f32 %v367, %v709
        %711 = vmatprep.mubr.bf16.mxu0 0
        %712 = vmatmul.mubr.bf16.gmra.mrb[0].mxu0 %v447
        %v713 = vpop.f32.mrb[0].mxu0
        %v714 = vadd.f32 %v363, %v713
        %v715 = vpop.f32.mrb[0].mxu0
        %v716 = vadd.f32 %v367, %v715
        %v717 = vpop.f32.mrb[0].mxu0
        %v718 = vadd.f32 %v363, %v717
        %v719 = vpop.f32.mrb[0].mxu0
        %v720 = vadd.f32 %v367, %v719
        %721 = vmatprep.mubr.bf16.mxu0 0
        %722 = vmatmul.mubr.bf16.gmra.mrb[0].mxu0 %v448
        %v723 = vpop.f32.mrb[0].mxu0
        %v724 = vadd.f32 %v363, %v723
        %v725 = vpop.f32.mrb[0].mxu0
        %v726 = vadd.f32 %v367, %v725
        %v727 = vpop.f32.mrb[0].mxu0
        %v728 = vadd.f32 %v363, %v727
        %v729 = vpop.f32.mrb[0].mxu0
        %v730 = vadd.f32 %v367, %v729
        %731 = vmatprep.mubr.bf16.mxu0 0
        %732 = vmatmul.mubr.bf16.gmra.mrb[0].mxu0 %v449
        %v733 = vpop.f32.mrb[0].mxu0
        %v734 = vadd.f32 %v363, %v733
        %v735 = vpop.f32.mrb[0].mxu0
        %v736 = vadd.f32 %v367, %v735
        %v737 = vpop.f32.mrb[0].mxu0
        %v738 = vadd.f32 %v363, %v737
        %v739 = vpop.f32.mrb[0].mxu0
        %v740 = vadd.f32 %v367, %v739
        %741 = vmatprep.mubr.bf16.mxu0 0
        %742 = vmatmul.mubr.bf16.gmra.mrb[0].mxu0 %v450
        %v743 = vpop.f32.mrb[0].mxu0
        %v744 = vadd.f32 %v363, %v743
        %v745 = vpop.f32.mrb[0].mxu0
        %v746 = vadd.f32 %v367, %v745
        %v747 = vpop.f32.mrb[0].mxu0
        %v748 = vadd.f32 %v363, %v747
        %v749 = vpop.f32.mrb[0].mxu0
        %v750 = vadd.f32 %v367, %v749
        %751 = vmatprep.mubr.bf16.mxu0 0
        %752 = vmatmul.mubr.bf16.gmra.mrb[0].mxu0 %v451
        %v753 = vpop.f32.mrb[0].mxu0
        %v754 = vadd.f32 %v363, %v753
        %v755 = vpop.f32.mrb[0].mxu0
        %v756 = vadd.f32 %v367, %v755
        %v757 = vpop.f32.mrb[0].mxu0
        %v758 = vadd.f32 %v363, %v757
        %v759 = vpop.f32.mrb[0].mxu0
        %v760 = vadd.f32 %v367, %v759
        %761 = vmatprep.mubr.bf16.mxu0 0
        %762 = vmatmul.mubr.bf16.gmra.mrb[0].mxu0 %v452
        %v763 = vpop.f32.mrb[0].mxu0
        %v764 = vadd.f32 %v363, %v763
        %v765 = vpop.f32.mrb[0].mxu0
        %v766 = vadd.f32 %v367, %v765
        %v767 = vpop.f32.mrb[0].mxu0
        %v768 = vadd.f32 %v363, %v767
        %v769 = vpop.f32.mrb[0].mxu0
        %v770 = vadd.f32 %v367, %v769
        %771 = vmatprep.mubr.bf16.mxu0 0
        %772 = vmatmul.mubr.bf16.gmra.mrb[0].mxu0 %v453
        %v773 = vpop.f32.mrb[0].mxu0
        %v774 = vadd.f32 %v363, %v773
        %v775 = vpop.f32.mrb[0].mxu0
        %v776 = vadd.f32 %v367, %v775
        %v777 = vpop.f32.mrb[0].mxu0
        %v778 = vadd.f32 %v363, %v777
        %v779 = vpop.f32.mrb[0].mxu0
        %v780 = vadd.f32 %v367, %v779
        %781 = vmatprep.mubr.bf16.mxu0 0
        %782 = vmatmul.mubr.bf16.gmra.mrb[0].mxu0 %v454
        %v783 = vpop.f32.mrb[0].mxu0
        %v784 = vadd.f32 %v363, %v783
        %v785 = vpop.f32.mrb[0].mxu0
        %v786 = vadd.f32 %v367, %v785
        %v787 = vpop.f32.mrb[0].mxu0
        %v788 = vadd.f32 %v363, %v787
        %v789 = vpop.f32.mrb[0].mxu0
        %v790 = vadd.f32 %v367, %v789
        %791 = vdwg.mxu0
        %792 = vmatprep.subr.bf16.mxu0 0
        %793 = vmatpush1.bf16.msra.mxu0 %v553
        %794 = vmatprep.subr.bf16.mxu0 0
        %795 = vmatpush1.bf16.msra.mxu0 %v556
        %796 = vmatprep.subr.bf16.mxu0 0
        %797 = vmatpush1.bf16.msra.mxu0 %v559
        %798 = vmatprep.subr.bf16.mxu0 0
        %799 = vmatpush1.bf16.msra.mxu0 %v562
        %800 = vmatprep.subr.bf16.mxu0 0
        %801 = vmatpush1.bf16.msra.mxu0 %v565
        %802 = vmatprep.subr.bf16.mxu0 0
        %803 = vmatpush1.bf16.msra.mxu0 %v568
        %804 = vmatprep.subr.bf16.mxu0 0
        %805 = vmatpush1.bf16.msra.mxu0 %v571
        %806 = vmatprep.subr.bf16.mxu0 0
        %807 = vmatpush1.bf16.msra.mxu0 %v574
        %808 = vmatprep.subr.bf16.mxu0 0
        %809 = vmatpush1.bf16.msra.mxu0 0
        %810 = vmatprep.subr.bf16.mxu0 0
        %811 = vmatpush1.bf16.msra.mxu0 0
        %812 = vmatprep.subr.bf16.mxu0 0
        %813 = vmatpush1.bf16.msra.mxu0 0
        %814 = vmatprep.subr.bf16.mxu0 0
        %815 = vmatpush1.bf16.msra.mxu0 0
        %816 = vmatprep.subr.bf16.mxu0 0
        %817 = vmatpush1.bf16.msra.mxu0 0
        %818 = vmatprep.subr.bf16.mxu0 0
        %819 = vmatpush1.bf16.msra.mxu0 0
        %820 = vmatprep.subr.bf16.mxu0 0
        %821 = vmatpush1.bf16.msra.mxu0 0
        %822 = vmatprep.subr.bf16.mxu0 0
        %823 = vmatpush1.bf16.msra.mxu0 0
        %824 = vmatprep.mubr.bf16.mxu0 0
        %825 = vmatmul.mubr.bf16.gmra.mrb[0].mxu0 %v439
        %v826 = vpop.f32.mrb[0].mxu0
        %v827 = vadd.f32 %v371, %v826
        %v828 = vpop.f32.mrb[0].mxu0
        %v829 = vpop.f32.mrb[0].mxu0
        %v830 = vadd.f32 %v371, %v829
        %v831 = vpop.f32.mrb[0].mxu0
        %832 = vmatprep.mubr.bf16.mxu0 0
        %833 = vmatmul.mubr.bf16.gmra.mrb[0].mxu0 %v440
        %v834 = vpop.f32.mrb[0].mxu0
        %v835 = vadd.f32 %v371, %v834
        %v836 = vpop.f32.mrb[0].mxu0
        %v837 = vpop.f32.mrb[0].mxu0
        %v838 = vadd.f32 %v371, %v837
        %v839 = vpop.f32.mrb[0].mxu0
        %840 = vmatprep.mubr.bf16.mxu0 0
        %841 = vmatmul.mubr.bf16.gmra.mrb[0].mxu0 %v441
        %v842 = vpop.f32.mrb[0].mxu0
        %v843 = vadd.f32 %v371, %v842
        %v844 = vpop.f32.mrb[0].mxu0
        %v845 = vpop.f32.mrb[0].mxu0
        %v846 = vadd.f32 %v371, %v845
        %v847 = vpop.f32.mrb[0].mxu0
        %848 = vmatprep.mubr.bf16.mxu0 0
        %849 = vmatmul.mubr.bf16.gmra.mrb[0].mxu0 %v442
        %v850 = vpop.f32.mrb[0].mxu0
        %v851 = vadd.f32 %v371, %v850
        %v852 = vpop.f32.mrb[0].mxu0
        %v853 = vpop.f32.mrb[0].mxu0
        %v854 = vadd.f32 %v371, %v853
        %v855 = vpop.f32.mrb[0].mxu0
        %856 = vmatprep.mubr.bf16.mxu0 0
        %857 = vmatmul.mubr.bf16.gmra.mrb[0].mxu0 %v443
        %v858 = vpop.f32.mrb[0].mxu0
        %v859 = vadd.f32 %v371, %v858
        %v860 = vpop.f32.mrb[0].mxu0
        %v861 = vpop.f32.mrb[0].mxu0
        %v862 = vadd.f32 %v371, %v861
        %v863 = vpop.f32.mrb[0].mxu0
        %864 = vmatprep.mubr.bf16.mxu0 0
        %865 = vmatmul.mubr.bf16.gmra.mrb[0].mxu0 %v444
        %v866 = vpop.f32.mrb[0].mxu0
        %v867 = vadd.f32 %v371, %v866
        %v868 = vpop.f32.mrb[0].mxu0
        %v869 = vpop.f32.mrb[0].mxu0
        %v870 = vadd.f32 %v371, %v869
        %v871 = vpop.f32.mrb[0].mxu0
        %872 = vmatprep.mubr.bf16.mxu0 0
        %873 = vmatmul.mubr.bf16.gmra.mrb[0].mxu0 %v445
        %v874 = vpop.f32.mrb[0].mxu0
        %v875 = vadd.f32 %v371, %v874
        %v876 = vpop.f32.mrb[0].mxu0
        %v877 = vpop.f32.mrb[0].mxu0
        %v878 = vadd.f32 %v371, %v877
        %v879 = vpop.f32.mrb[0].mxu0
        %880 = vmatprep.mubr.bf16.mxu0 0
        %881 = vmatmul.mubr.bf16.gmra.mrb[0].mxu0 %v446
        %v882 = vpop.f32.mrb[0].mxu0
        %v883 = vadd.f32 %v371, %v882
        %v884 = vpop.f32.mrb[0].mxu0
        %v885 = vpop.f32.mrb[0].mxu0
        %v886 = vadd.f32 %v371, %v885
        %v887 = vpop.f32.mrb[0].mxu0
        %888 = vmatprep.mubr.bf16.mxu0 0
        %889 = vmatmul.mubr.bf16.gmra.mrb[0].mxu0 %v447
        %v890 = vpop.f32.mrb[0].mxu0
        %v891 = vadd.f32 %v371, %v890
        %v892 = vpop.f32.mrb[0].mxu0
        %v893 = vpop.f32.mrb[0].mxu0
        %v894 = vadd.f32 %v371, %v893
        %v895 = vpop.f32.mrb[0].mxu0
        %896 = vmatprep.mubr.bf16.mxu0 0
        %897 = vmatmul.mubr.bf16.gmra.mrb[0].mxu0 %v448
        %v898 = vpop.f32.mrb[0].mxu0
        %v899 = vadd.f32 %v371, %v898
        %v900 = vpop.f32.mrb[0].mxu0
        %v901 = vpop.f32.mrb[0].mxu0
        %v902 = vadd.f32 %v371, %v901
        %v903 = vpop.f32.mrb[0].mxu0
        %904 = vmatprep.mubr.bf16.mxu0 0
        %905 = vmatmul.mubr.bf16.gmra.mrb[0].mxu0 %v449
        %v906 = vpop.f32.mrb[0].mxu0
        %v907 = vadd.f32 %v371, %v906
        %v908 = vpop.f32.mrb[0].mxu0
        %v909 = vpop.f32.mrb[0].mxu0
        %v910 = vadd.f32 %v371, %v909
        %v911 = vpop.f32.mrb[0].mxu0
        %912 = vmatprep.mubr.bf16.mxu0 0
        %913 = vmatmul.mubr.bf16.gmra.mrb[0].mxu0 %v450
        %v914 = vpop.f32.mrb[0].mxu0
        %v915 = vadd.f32 %v371, %v914
        %v916 = vpop.f32.mrb[0].mxu0
        %v917 = vpop.f32.mrb[0].mxu0
        %v918 = vadd.f32 %v371, %v917
        %v919 = vpop.f32.mrb[0].mxu0
        %920 = vmatprep.mubr.bf16.mxu0 0
        %921 = vmatmul.mubr.bf16.gmra.mrb[0].mxu0 %v451
        %v922 = vpop.f32.mrb[0].mxu0
        %v923 = vadd.f32 %v371, %v922
        %v924 = vpop.f32.mrb[0].mxu0
        %v925 = vpop.f32.mrb[0].mxu0
        %v926 = vadd.f32 %v371, %v925
        %v927 = vpop.f32.mrb[0].mxu0
        %928 = vmatprep.mubr.bf16.mxu0 0
        %929 = vmatmul.mubr.bf16.gmra.mrb[0].mxu0 %v452
        %v930 = vpop.f32.mrb[0].mxu0
        %v931 = vadd.f32 %v371, %v930
        %v932 = vpop.f32.mrb[0].mxu0
        %v933 = vpop.f32.mrb[0].mxu0
        %v934 = vadd.f32 %v371, %v933
        %v935 = vpop.f32.mrb[0].mxu0
        %936 = vmatprep.mubr.bf16.mxu0 0
        %937 = vmatmul.mubr.bf16.gmra.mrb[0].mxu0 %v453
        %v938 = vpop.f32.mrb[0].mxu0
        %v939 = vadd.f32 %v371, %v938
        %v940 = vpop.f32.mrb[0].mxu0
        %v941 = vpop.f32.mrb[0].mxu0
        %v942 = vadd.f32 %v371, %v941
        %v943 = vpop.f32.mrb[0].mxu0
        %944 = vmatprep.mubr.bf16.mxu0 0
        %945 = vmatmul.mubr.bf16.gmra.mrb[0].mxu0 %v454
        %v946 = vpop.f32.mrb[0].mxu0
        %v947 = vadd.f32 %v371, %v946
        %v948 = vpop.f32.mrb[0].mxu0
        %v949 = vpop.f32.mrb[0].mxu0
        %v950 = vadd.f32 %v371, %v949
        %v951 = vpop.f32.mrb[0].mxu0
        %952 = vdwg.mxu0
        %v953 = vpack.c.bf16 %v638, %v634
        %v954 = vpack.c.bf16 %v640, %v636
        %v955 = vpack.c.bf16 %v830, %v827
        %v956 = vpack.c.bf16 %v648, %v644
        %v957 = vpack.c.bf16 %v650, %v646
        %v958 = vpack.c.bf16 %v838, %v835
        %v959 = vpack.c.bf16 %v658, %v654
        %v960 = vpack.c.bf16 %v660, %v656
        %v961 = vpack.c.bf16 %v846, %v843
        %v962 = vpack.c.bf16 %v668, %v664
        %v963 = vpack.c.bf16 %v670, %v666
        %v964 = vpack.c.bf16 %v854, %v851
        %v965 = vpack.c.bf16 %v678, %v674
        %v966 = vpack.c.bf16 %v680, %v676
        %v967 = vpack.c.bf16 %v862, %v859
        %v968 = vpack.c.bf16 %v688, %v684
        %v969 = vpack.c.bf16 %v690, %v686
        %v970 = vpack.c.bf16 %v870, %v867
        %v971 = vpack.c.bf16 %v698, %v694
        %v972 = vpack.c.bf16 %v700, %v696
        %v973 = vpack.c.bf16 %v878, %v875
        %v974 = vpack.c.bf16 %v708, %v704
        %v975 = vpack.c.bf16 %v710, %v706
        %v976 = vpack.c.bf16 %v886, %v883
        %v977 = vpack.c.bf16 %v718, %v714
        %v978 = vpack.c.bf16 %v720, %v716
        %v979 = vpack.c.bf16 %v894, %v891
        %v980 = vpack.c.bf16 %v728, %v724
        %v981 = vpack.c.bf16 %v730, %v726
        %v982 = vpack.c.bf16 %v902, %v899
        %v983 = vpack.c.bf16 %v738, %v734
        %v984 = vpack.c.bf16 %v740, %v736
        %v985 = vpack.c.bf16 %v910, %v907
        %v986 = vpack.c.bf16 %v748, %v744
        %v987 = vpack.c.bf16 %v750, %v746
        %v988 = vpack.c.bf16 %v918, %v915
        %v989 = vpack.c.bf16 %v758, %v754
        %v990 = vpack.c.bf16 %v760, %v756
        %v991 = vpack.c.bf16 %v926, %v923
        %v992 = vpack.c.bf16 %v768, %v764
        %v993 = vpack.c.bf16 %v770, %v766
        %v994 = vpack.c.bf16 %v934, %v931
        %v995 = vpack.c.bf16 %v778, %v774
        %v996 = vpack.c.bf16 %v780, %v776
        %v997 = vpack.c.bf16 %v942, %v939
        %v998 = vpack.c.bf16 %v788, %v784
        %v999 = vpack.c.bf16 %v790, %v786
        %v1000 = vpack.c.bf16 %v950, %v947
        %v1017 = vunpack.c.l.b16 %v953
        %v1018 = vunpack.c.h.b16 %v953
        %v1019 = vunpack.c.l.b16 %v956
        %v1020 = vunpack.c.h.b16 %v956
        %v1021 = vunpack.c.l.b16 %v959
        %v1022 = vunpack.c.h.b16 %v959
        %v1023 = vunpack.c.l.b16 %v962
        %v1024 = vunpack.c.h.b16 %v962
        %v1025 = vunpack.c.l.b16 %v965
        %v1026 = vunpack.c.h.b16 %v965
        %v1027 = vunpack.c.l.b16 %v968
        %v1028 = vunpack.c.h.b16 %v968
        %v1029 = vunpack.c.l.b16 %v971
        %v1030 = vunpack.c.h.b16 %v971
        %v1031 = vunpack.c.l.b16 %v974
        %v1032 = vunpack.c.h.b16 %v974
        %v1033 = vunpack.c.l.b16 %v977
        %v1034 = vunpack.c.h.b16 %v977
        %v1035 = vunpack.c.l.b16 %v980
        %v1036 = vunpack.c.h.b16 %v980
        %v1037 = vunpack.c.l.b16 %v983
        %v1038 = vunpack.c.h.b16 %v983
        %v1039 = vunpack.c.l.b16 %v986
        %v1040 = vunpack.c.h.b16 %v986
        %v1041 = vunpack.c.l.b16 %v989
        %v1042 = vunpack.c.h.b16 %v989
        %v1043 = vunpack.c.l.b16 %v992
        %v1044 = vunpack.c.h.b16 %v992
        %v1045 = vunpack.c.l.b16 %v995
        %v1046 = vunpack.c.h.b16 %v995
        %v1047 = vunpack.c.l.b16 %v998
        %v1048 = vunpack.c.h.b16 %v998
        %v1049 = vpack.c.b16 %v1017, %v1017
        %v1050 = vpack.c.b16 %v1018, %v1018
        %v1051 = vpack.c.b16 %v1019, %v1019
        %v1052 = vpack.c.b16 %v1020, %v1020
        %v1053 = vpack.c.b16 %v1021, %v1021
        %v1054 = vpack.c.b16 %v1022, %v1022
        %v1055 = vpack.c.b16 %v1023, %v1023
        %v1056 = vpack.c.b16 %v1024, %v1024
        %v1057 = vpack.c.b16 %v1025, %v1025
        %v1058 = vpack.c.b16 %v1026, %v1026
        %v1059 = vpack.c.b16 %v1027, %v1027
        %v1060 = vpack.c.b16 %v1028, %v1028
        %v1061 = vpack.c.b16 %v1029, %v1029
        %v1062 = vpack.c.b16 %v1030, %v1030
        %v1063 = vpack.c.b16 %v1031, %v1031
        %v1064 = vpack.c.b16 %v1032, %v1032
        %v1065 = vpack.c.b16 %v1033, %v1033
        %v1066 = vpack.c.b16 %v1034, %v1034
        %v1067 = vpack.c.b16 %v1035, %v1035
        %v1068 = vpack.c.b16 %v1036, %v1036
        %v1069 = vpack.c.b16 %v1037, %v1037
        %v1070 = vpack.c.b16 %v1038, %v1038
        %v1071 = vpack.c.b16 %v1039, %v1039
        %v1072 = vpack.c.b16 %v1040, %v1040
        %v1073 = vpack.c.b16 %v1041, %v1041
        %v1074 = vpack.c.b16 %v1042, %v1042
        %v1075 = vpack.c.b16 %v1043, %v1043
        %v1076 = vpack.c.b16 %v1044, %v1044
        %v1077 = vpack.c.b16 %v1045, %v1045
        %v1078 = vpack.c.b16 %v1046, %v1046
        %v1079 = vpack.c.b16 %v1047, %v1047
        %v1080 = vpack.c.b16 %v1048, %v1048
        %vm1113 = vcmask 257024
        %1114 = vst.msk [vmem:[%s276] sm:$0xf] %vm1113, %v1049
        %1115 = vst.msk [vmem:[%s276 + $0x4] sm:$0xf] %vm1113, %v1050
        %1116 = vst.msk [vmem:[%s276 + $0x8] sm:$0xf] %vm1113, %v1051
        %1117 = vst.msk [vmem:[%s276 + $0xc] sm:$0xf] %vm1113, %v1052
        %1118 = vst.msk [vmem:[%s276 + $0x10] sm:$0xf] %vm1113, %v1053
        %1119 = vst.msk [vmem:[%s276 + $0x14] sm:$0xf] %vm1113, %v1054
        %1120 = vst.msk [vmem:[%s276 + $0x18] sm:$0xf] %vm1113, %v1055
        %1121 = vst.msk [vmem:[%s276 + $0x1c] sm:$0xf] %vm1113, %v1056
        %1122 = vst.msk [vmem:[%s276 + $0x20] sm:$0xf] %vm1113, %v1057
        %1123 = vst.msk [vmem:[%s276 + $0x24] sm:$0xf] %vm1113, %v1058
        %1124 = vst.msk [vmem:[%s276 + $0x28] sm:$0xf] %vm1113, %v1059
        %1125 = vst.msk [vmem:[%s276 + $0x2c] sm:$0xf] %vm1113, %v1060
        %1126 = vst.msk [vmem:[%s276 + $0x30] sm:$0xf] %vm1113, %v1061
        %1127 = vst.msk [vmem:[%s276 + $0x34] sm:$0xf] %vm1113, %v1062
        %1128 = vst.msk [vmem:[%s276 + $0x38] sm:$0xf] %vm1113, %v1063
        %1129 = vst.msk [vmem:[%s276 + $0x3c] sm:$0xf] %vm1113, %v1064
        %1130 = vst.msk [vmem:[%s276 + $0x40] sm:$0xf] %vm1113, %v1065
        %1131 = vst.msk [vmem:[%s276 + $0x44] sm:$0xf] %vm1113, %v1066
        %1132 = vst.msk [vmem:[%s276 + $0x48] sm:$0xf] %vm1113, %v1067
        %1133 = vst.msk [vmem:[%s276 + $0x4c] sm:$0xf] %vm1113, %v1068
        %1134 = vst.msk [vmem:[%s276 + $0x50] sm:$0xf] %vm1113, %v1069
        %1135 = vst.msk [vmem:[%s276 + $0x54] sm:$0xf] %vm1113, %v1070
        %1136 = vst.msk [vmem:[%s276 + $0x58] sm:$0xf] %vm1113, %v1071
        %1137 = vst.msk [vmem:[%s276 + $0x5c] sm:$0xf] %vm1113, %v1072
        %1138 = vst.msk [vmem:[%s276 + $0x60] sm:$0xf] %vm1113, %v1073
        %1139 = vst.msk [vmem:[%s276 + $0x64] sm:$0xf] %vm1113, %v1074
        %1140 = vst.msk [vmem:[%s276 + $0x68] sm:$0xf] %vm1113, %v1075
        %1141 = vst.msk [vmem:[%s276 + $0x6c] sm:$0xf] %vm1113, %v1076
        %1142 = vst.msk [vmem:[%s276 + $0x70] sm:$0xf] %vm1113, %v1077
        %1143 = vst.msk [vmem:[%s276 + $0x74] sm:$0xf] %vm1113, %v1078
        %1144 = vst.msk [vmem:[%s276 + $0x78] sm:$0xf] %vm1113, %v1079
        %1145 = vst.msk [vmem:[%s276 + $0x7c] sm:$0xf] %vm1113, %v1080
        %v1162 = vunpack.c.l.b16 %v954
        %v1163 = vunpack.c.h.b16 %v954
        %v1164 = vunpack.c.l.b16 %v957
        %v1165 = vunpack.c.h.b16 %v957
        %v1166 = vunpack.c.l.b16 %v960
        %v1167 = vunpack.c.h.b16 %v960
        %v1168 = vunpack.c.l.b16 %v963
        %v1169 = vunpack.c.h.b16 %v963
        %v1170 = vunpack.c.l.b16 %v966
        %v1171 = vunpack.c.h.b16 %v966
        %v1172 = vunpack.c.l.b16 %v969
        %v1173 = vunpack.c.h.b16 %v969
        %v1174 = vunpack.c.l.b16 %v972
        %v1175 = vunpack.c.h.b16 %v972
        %v1176 = vunpack.c.l.b16 %v975
        %v1177 = vunpack.c.h.b16 %v975
        %v1178 = vunpack.c.l.b16 %v978
        %v1179 = vunpack.c.h.b16 %v978
        %v1180 = vunpack.c.l.b16 %v981
        %v1181 = vunpack.c.h.b16 %v981
        %v1182 = vunpack.c.l.b16 %v984
        %v1183 = vunpack.c.h.b16 %v984
        %v1184 = vunpack.c.l.b16 %v987
        %v1185 = vunpack.c.h.b16 %v987
        %v1186 = vunpack.c.l.b16 %v990
        %v1187 = vunpack.c.h.b16 %v990
        %v1188 = vunpack.c.l.b16 %v993
        %v1189 = vunpack.c.h.b16 %v993
        %v1190 = vunpack.c.l.b16 %v996
        %v1191 = vunpack.c.h.b16 %v996
        %v1192 = vunpack.c.l.b16 %v999
        %v1193 = vunpack.c.h.b16 %v999
        %v1194 = vpack.c.b16 %v1162, %v1162
        %v1195 = vpack.c.b16 %v1163, %v1163
        %v1196 = vpack.c.b16 %v1164, %v1164
        %v1197 = vpack.c.b16 %v1165, %v1165
        %v1198 = vpack.c.b16 %v1166, %v1166
        %v1199 = vpack.c.b16 %v1167, %v1167
        %v1200 = vpack.c.b16 %v1168, %v1168
        %v1201 = vpack.c.b16 %v1169, %v1169
        %v1202 = vpack.c.b16 %v1170, %v1170
        %v1203 = vpack.c.b16 %v1171, %v1171
        %v1204 = vpack.c.b16 %v1172, %v1172
        %v1205 = vpack.c.b16 %v1173, %v1173
        %v1206 = vpack.c.b16 %v1174, %v1174
        %v1207 = vpack.c.b16 %v1175, %v1175
        %v1208 = vpack.c.b16 %v1176, %v1176
        %v1209 = vpack.c.b16 %v1177, %v1177
        %v1210 = vpack.c.b16 %v1178, %v1178
        %v1211 = vpack.c.b16 %v1179, %v1179
        %v1212 = vpack.c.b16 %v1180, %v1180
        %v1213 = vpack.c.b16 %v1181, %v1181
        %v1214 = vpack.c.b16 %v1182, %v1182
        %v1215 = vpack.c.b16 %v1183, %v1183
        %v1216 = vpack.c.b16 %v1184, %v1184
        %v1217 = vpack.c.b16 %v1185, %v1185
        %v1218 = vpack.c.b16 %v1186, %v1186
        %v1219 = vpack.c.b16 %v1187, %v1187
        %v1220 = vpack.c.b16 %v1188, %v1188
        %v1221 = vpack.c.b16 %v1189, %v1189
        %v1222 = vpack.c.b16 %v1190, %v1190
        %v1223 = vpack.c.b16 %v1191, %v1191
        %v1224 = vpack.c.b16 %v1192, %v1192
        %v1225 = vpack.c.b16 %v1193, %v1193
        %1258 = vst.msk [vmem:[%s282] sm:$0xf] %vm1113, %v1194
        %1259 = vst.msk [vmem:[%s282 + $0x4] sm:$0xf] %vm1113, %v1195
        %1260 = vst.msk [vmem:[%s282 + $0x8] sm:$0xf] %vm1113, %v1196
        %1261 = vst.msk [vmem:[%s282 + $0xc] sm:$0xf] %vm1113, %v1197
        %1262 = vst.msk [vmem:[%s282 + $0x10] sm:$0xf] %vm1113, %v1198
        %1263 = vst.msk [vmem:[%s282 + $0x14] sm:$0xf] %vm1113, %v1199
        %1264 = vst.msk [vmem:[%s282 + $0x18] sm:$0xf] %vm1113, %v1200
        %1265 = vst.msk [vmem:[%s282 + $0x1c] sm:$0xf] %vm1113, %v1201
        %1266 = vst.msk [vmem:[%s282 + $0x20] sm:$0xf] %vm1113, %v1202
        %1267 = vst.msk [vmem:[%s282 + $0x24] sm:$0xf] %vm1113, %v1203
        %1268 = vst.msk [vmem:[%s282 + $0x28] sm:$0xf] %vm1113, %v1204
        %1269 = vst.msk [vmem:[%s282 + $0x2c] sm:$0xf] %vm1113, %v1205
        %1270 = vst.msk [vmem:[%s282 + $0x30] sm:$0xf] %vm1113, %v1206
        %1271 = vst.msk [vmem:[%s282 + $0x34] sm:$0xf] %vm1113, %v1207
        %1272 = vst.msk [vmem:[%s282 + $0x38] sm:$0xf] %vm1113, %v1208
        %1273 = vst.msk [vmem:[%s282 + $0x3c] sm:$0xf] %vm1113, %v1209
        %1274 = vst.msk [vmem:[%s282 + $0x40] sm:$0xf] %vm1113, %v1210
        %1275 = vst.msk [vmem:[%s282 + $0x44] sm:$0xf] %vm1113, %v1211
        %1276 = vst.msk [vmem:[%s282 + $0x48] sm:$0xf] %vm1113, %v1212
        %1277 = vst.msk [vmem:[%s282 + $0x4c] sm:$0xf] %vm1113, %v1213
        %1278 = vst.msk [vmem:[%s282 + $0x50] sm:$0xf] %vm1113, %v1214
        %1279 = vst.msk [vmem:[%s282 + $0x54] sm:$0xf] %vm1113, %v1215
        %1280 = vst.msk [vmem:[%s282 + $0x58] sm:$0xf] %vm1113, %v1216
        %1281 = vst.msk [vmem:[%s282 + $0x5c] sm:$0xf] %vm1113, %v1217
        %1282 = vst.msk [vmem:[%s282 + $0x60] sm:$0xf] %vm1113, %v1218
        %1283 = vst.msk [vmem:[%s282 + $0x64] sm:$0xf] %vm1113, %v1219
        %1284 = vst.msk [vmem:[%s282 + $0x68] sm:$0xf] %vm1113, %v1220
        %1285 = vst.msk [vmem:[%s282 + $0x6c] sm:$0xf] %vm1113, %v1221
        %1286 = vst.msk [vmem:[%s282 + $0x70] sm:$0xf] %vm1113, %v1222
        %1287 = vst.msk [vmem:[%s282 + $0x74] sm:$0xf] %vm1113, %v1223
        %1288 = vst.msk [vmem:[%s282 + $0x78] sm:$0xf] %vm1113, %v1224
        %1289 = vst.msk [vmem:[%s282 + $0x7c] sm:$0xf] %vm1113, %v1225
        %v1306 = vunpack.c.l.b16 %v955
        %v1307 = vunpack.c.h.b16 %v955
        %v1308 = vunpack.c.l.b16 %v958
        %v1309 = vunpack.c.h.b16 %v958
        %v1310 = vunpack.c.l.b16 %v961
        %v1311 = vunpack.c.h.b16 %v961
        %v1312 = vunpack.c.l.b16 %v964
        %v1313 = vunpack.c.h.b16 %v964
        %v1314 = vunpack.c.l.b16 %v967
        %v1315 = vunpack.c.h.b16 %v967
        %v1316 = vunpack.c.l.b16 %v970
        %v1317 = vunpack.c.h.b16 %v970
        %v1318 = vunpack.c.l.b16 %v973
        %v1319 = vunpack.c.h.b16 %v973
        %v1320 = vunpack.c.l.b16 %v976
        %v1321 = vunpack.c.h.b16 %v976
        %v1322 = vunpack.c.l.b16 %v979
        %v1323 = vunpack.c.h.b16 %v979
        %v1324 = vunpack.c.l.b16 %v982
        %v1325 = vunpack.c.h.b16 %v982
        %v1326 = vunpack.c.l.b16 %v985
        %v1327 = vunpack.c.h.b16 %v985
        %v1328 = vunpack.c.l.b16 %v988
        %v1329 = vunpack.c.h.b16 %v988
        %v1330 = vunpack.c.l.b16 %v991
        %v1331 = vunpack.c.h.b16 %v991
        %v1332 = vunpack.c.l.b16 %v994
        %v1333 = vunpack.c.h.b16 %v994
        %v1334 = vunpack.c.l.b16 %v997
        %v1335 = vunpack.c.h.b16 %v997
        %v1336 = vunpack.c.l.b16 %v1000
        %v1337 = vunpack.c.h.b16 %v1000
        %v1338 = vpack.c.b16 %v1306, %v1306
        %v1339 = vpack.c.b16 %v1307, %v1307
        %v1340 = vpack.c.b16 %v1308, %v1308
        %v1341 = vpack.c.b16 %v1309, %v1309
        %v1342 = vpack.c.b16 %v1310, %v1310
        %v1343 = vpack.c.b16 %v1311, %v1311
        %v1344 = vpack.c.b16 %v1312, %v1312
        %v1345 = vpack.c.b16 %v1313, %v1313
        %v1346 = vpack.c.b16 %v1314, %v1314
        %v1347 = vpack.c.b16 %v1315, %v1315
        %v1348 = vpack.c.b16 %v1316, %v1316
        %v1349 = vpack.c.b16 %v1317, %v1317
        %v1350 = vpack.c.b16 %v1318, %v1318
        %v1351 = vpack.c.b16 %v1319, %v1319
        %v1352 = vpack.c.b16 %v1320, %v1320
        %v1353 = vpack.c.b16 %v1321, %v1321
        %v1354 = vpack.c.b16 %v1322, %v1322
        %v1355 = vpack.c.b16 %v1323, %v1323
        %v1356 = vpack.c.b16 %v1324, %v1324
        %v1357 = vpack.c.b16 %v1325, %v1325
        %v1358 = vpack.c.b16 %v1326, %v1326
        %v1359 = vpack.c.b16 %v1327, %v1327
        %v1360 = vpack.c.b16 %v1328, %v1328
        %v1361 = vpack.c.b16 %v1329, %v1329
        %v1362 = vpack.c.b16 %v1330, %v1330
        %v1363 = vpack.c.b16 %v1331, %v1331
        %v1364 = vpack.c.b16 %v1332, %v1332
        %v1365 = vpack.c.b16 %v1333, %v1333
        %v1366 = vpack.c.b16 %v1334, %v1334
        %v1367 = vpack.c.b16 %v1335, %v1335
        %v1368 = vpack.c.b16 %v1336, %v1336
        %v1369 = vpack.c.b16 %v1337, %v1337
        %1402 = vst.msk [vmem:[%s288] sm:$0xf] %vm1113, %v1338
        %1403 = vst.msk [vmem:[%s288 + $0x4] sm:$0xf] %vm1113, %v1339
        %1404 = vst.msk [vmem:[%s288 + $0x8] sm:$0xf] %vm1113, %v1340
        %1405 = vst.msk [vmem:[%s288 + $0xc] sm:$0xf] %vm1113, %v1341
        %1406 = vst.msk [vmem:[%s288 + $0x10] sm:$0xf] %vm1113, %v1342
        %1407 = vst.msk [vmem:[%s288 + $0x14] sm:$0xf] %vm1113, %v1343
        %1408 = vst.msk [vmem:[%s288 + $0x18] sm:$0xf] %vm1113, %v1344
        %1409 = vst.msk [vmem:[%s288 + $0x1c] sm:$0xf] %vm1113, %v1345
        %1410 = vst.msk [vmem:[%s288 + $0x20] sm:$0xf] %vm1113, %v1346
        %1411 = vst.msk [vmem:[%s288 + $0x24] sm:$0xf] %vm1113, %v1347
        %1412 = vst.msk [vmem:[%s288 + $0x28] sm:$0xf] %vm1113, %v1348
        %1413 = vst.msk [vmem:[%s288 + $0x2c] sm:$0xf] %vm1113, %v1349
        %1414 = vst.msk [vmem:[%s288 + $0x30] sm:$0xf] %vm1113, %v1350
        %1415 = vst.msk [vmem:[%s288 + $0x34] sm:$0xf] %vm1113, %v1351
        %1416 = vst.msk [vmem:[%s288 + $0x38] sm:$0xf] %vm1113, %v1352
        %1417 = vst.msk [vmem:[%s288 + $0x3c] sm:$0xf] %vm1113, %v1353
        %1418 = vst.msk [vmem:[%s288 + $0x40] sm:$0xf] %vm1113, %v1354
        %1419 = vst.msk [vmem:[%s288 + $0x44] sm:$0xf] %vm1113, %v1355
        %1420 = vst.msk [vmem:[%s288 + $0x48] sm:$0xf] %vm1113, %v1356
        %1421 = vst.msk [vmem:[%s288 + $0x4c] sm:$0xf] %vm1113, %v1357
        %1422 = vst.msk [vmem:[%s288 + $0x50] sm:$0xf] %vm1113, %v1358
        %1423 = vst.msk [vmem:[%s288 + $0x54] sm:$0xf] %vm1113, %v1359
        %1424 = vst.msk [vmem:[%s288 + $0x58] sm:$0xf] %vm1113, %v1360
        %1425 = vst.msk [vmem:[%s288 + $0x5c] sm:$0xf] %vm1113, %v1361
        %1426 = vst.msk [vmem:[%s288 + $0x60] sm:$0xf] %vm1113, %v1362
        %1427 = vst.msk [vmem:[%s288 + $0x64] sm:$0xf] %vm1113, %v1363
        %1428 = vst.msk [vmem:[%s288 + $0x68] sm:$0xf] %vm1113, %v1364
        %1429 = vst.msk [vmem:[%s288 + $0x6c] sm:$0xf] %vm1113, %v1365
        %1430 = vst.msk [vmem:[%s288 + $0x70] sm:$0xf] %vm1113, %v1366
        %1431 = vst.msk [vmem:[%s288 + $0x74] sm:$0xf] %vm1113, %v1367
        %1432 = vst.msk [vmem:[%s288 + $0x78] sm:$0xf] %vm1113, %v1368
        %1433 = vst.msk [vmem:[%s288 + $0x7c] sm:$0xf] %vm1113, %v1369
        %1434 = vrot.lane.b32.xlu0 %v1049, 96
        %v1435 = vpop.permute.xlu0 %1434
        %1436 = vrot.lane.b32.xlu0 %v1050, 96
        %v1437 = vpop.permute.xlu0 %1436
        %1438 = vrot.lane.b32.xlu0 %v1051, 96
        %v1439 = vpop.permute.xlu0 %1438
        %1440 = vrot.lane.b32.xlu0 %v1052, 96
        %v1441 = vpop.permute.xlu0 %1440
        %1442 = vrot.lane.b32.xlu0 %v1053, 96
        %v1443 = vpop.permute.xlu0 %1442
        %1444 = vrot.lane.b32.xlu0 %v1054, 96
        %v1445 = vpop.permute.xlu0 %1444
        %1446 = vrot.lane.b32.xlu0 %v1055, 96
        %v1447 = vpop.permute.xlu0 %1446
        %1448 = vrot.lane.b32.xlu0 %v1056, 96
        %v1449 = vpop.permute.xlu0 %1448
        %1450 = vrot.lane.b32.xlu0 %v1057, 96
        %v1451 = vpop.permute.xlu0 %1450
        %1452 = vrot.lane.b32.xlu0 %v1058, 96
        %v1453 = vpop.permute.xlu0 %1452
        %1454 = vrot.lane.b32.xlu0 %v1059, 96
        %v1455 = vpop.permute.xlu0 %1454
        %1456 = vrot.lane.b32.xlu0 %v1060, 96
        %v1457 = vpop.permute.xlu0 %1456
        %1458 = vrot.lane.b32.xlu0 %v1061, 96
        %v1459 = vpop.permute.xlu0 %1458
        %1460 = vrot.lane.b32.xlu0 %v1062, 96
        %v1461 = vpop.permute.xlu0 %1460
        %1462 = vrot.lane.b32.xlu0 %v1063, 96
        %v1463 = vpop.permute.xlu0 %1462
        %1464 = vrot.lane.b32.xlu0 %v1064, 96
        %v1465 = vpop.permute.xlu0 %1464
        %1466 = vrot.lane.b32.xlu0 %v1065, 96
        %v1467 = vpop.permute.xlu0 %1466
        %1468 = vrot.lane.b32.xlu0 %v1066, 96
        %v1469 = vpop.permute.xlu0 %1468
        %1470 = vrot.lane.b32.xlu0 %v1067, 96
        %v1471 = vpop.permute.xlu0 %1470
        %1472 = vrot.lane.b32.xlu0 %v1068, 96
        %v1473 = vpop.permute.xlu0 %1472
        %1474 = vrot.lane.b32.xlu0 %v1069, 96
        %v1475 = vpop.permute.xlu0 %1474
        %1476 = vrot.lane.b32.xlu0 %v1070, 96
        %v1477 = vpop.permute.xlu0 %1476
        %1478 = vrot.lane.b32.xlu0 %v1071, 96
        %v1479 = vpop.permute.xlu0 %1478
        %1480 = vrot.lane.b32.xlu0 %v1072, 96
        %v1481 = vpop.permute.xlu0 %1480
        %1482 = vrot.lane.b32.xlu0 %v1073, 96
        %v1483 = vpop.permute.xlu0 %1482
        %1484 = vrot.lane.b32.xlu0 %v1074, 96
        %v1485 = vpop.permute.xlu0 %1484
        %1486 = vrot.lane.b32.xlu0 %v1075, 96
        %v1487 = vpop.permute.xlu0 %1486
        %1488 = vrot.lane.b32.xlu0 %v1076, 96
        %v1489 = vpop.permute.xlu0 %1488
        %1490 = vrot.lane.b32.xlu0 %v1077, 96
        %v1491 = vpop.permute.xlu0 %1490
        %1492 = vrot.lane.b32.xlu0 %v1078, 96
        %v1493 = vpop.permute.xlu0 %1492
        %1494 = vrot.lane.b32.xlu0 %v1079, 96
        %v1495 = vpop.permute.xlu0 %1494
        %1496 = vrot.lane.b32.xlu0 %v1080, 96
        %v1497 = vpop.permute.xlu0 %1496
        %s1530 = scalar_lea.vmem %s276, 128 [#allocation6]
        %1531 = vst.msk [vmem:[%s1530] sm:$0xf] %vm1113, %v1435
        %1532 = vst.msk [vmem:[%s1530 + $0x4] sm:$0xf] %vm1113, %v1437
        %1533 = vst.msk [vmem:[%s1530 + $0x8] sm:$0xf] %vm1113, %v1439
        %1534 = vst.msk [vmem:[%s1530 + $0xc] sm:$0xf] %vm1113, %v1441
        %1535 = vst.msk [vmem:[%s1530 + $0x10] sm:$0xf] %vm1113, %v1443
        %1536 = vst.msk [vmem:[%s1530 + $0x14] sm:$0xf] %vm1113, %v1445
        %1537 = vst.msk [vmem:[%s1530 + $0x18] sm:$0xf] %vm1113, %v1447
        %1538 = vst.msk [vmem:[%s1530 + $0x1c] sm:$0xf] %vm1113, %v1449
        %1539 = vst.msk [vmem:[%s1530 + $0x20] sm:$0xf] %vm1113, %v1451
        %1540 = vst.msk [vmem:[%s1530 + $0x24] sm:$0xf] %vm1113, %v1453
        %1541 = vst.msk [vmem:[%s1530 + $0x28] sm:$0xf] %vm1113, %v1455
        %1542 = vst.msk [vmem:[%s1530 + $0x2c] sm:$0xf] %vm1113, %v1457
        %1543 = vst.msk [vmem:[%s1530 + $0x30] sm:$0xf] %vm1113, %v1459
        %1544 = vst.msk [vmem:[%s1530 + $0x34] sm:$0xf] %vm1113, %v1461
        %1545 = vst.msk [vmem:[%s1530 + $0x38] sm:$0xf] %vm1113, %v1463
        %1546 = vst.msk [vmem:[%s1530 + $0x3c] sm:$0xf] %vm1113, %v1465
        %1547 = vst.msk [vmem:[%s1530 + $0x40] sm:$0xf] %vm1113, %v1467
        %1548 = vst.msk [vmem:[%s1530 + $0x44] sm:$0xf] %vm1113, %v1469
        %1549 = vst.msk [vmem:[%s1530 + $0x48] sm:$0xf] %vm1113, %v1471
        %1550 = vst.msk [vmem:[%s1530 + $0x4c] sm:$0xf] %vm1113, %v1473
        %1551 = vst.msk [vmem:[%s1530 + $0x50] sm:$0xf] %vm1113, %v1475
        %1552 = vst.msk [vmem:[%s1530 + $0x54] sm:$0xf] %vm1113, %v1477
        %1553 = vst.msk [vmem:[%s1530 + $0x58] sm:$0xf] %vm1113, %v1479
        %1554 = vst.msk [vmem:[%s1530 + $0x5c] sm:$0xf] %vm1113, %v1481
        %1555 = vst.msk [vmem:[%s1530 + $0x60] sm:$0xf] %vm1113, %v1483
        %1556 = vst.msk [vmem:[%s1530 + $0x64] sm:$0xf] %vm1113, %v1485
        %1557 = vst.msk [vmem:[%s1530 + $0x68] sm:$0xf] %vm1113, %v1487
        %1558 = vst.msk [vmem:[%s1530 + $0x6c] sm:$0xf] %vm1113, %v1489
        %1559 = vst.msk [vmem:[%s1530 + $0x70] sm:$0xf] %vm1113, %v1491
        %1560 = vst.msk [vmem:[%s1530 + $0x74] sm:$0xf] %vm1113, %v1493
        %1561 = vst.msk [vmem:[%s1530 + $0x78] sm:$0xf] %vm1113, %v1495
        %1562 = vst.msk [vmem:[%s1530 + $0x7c] sm:$0xf] %vm1113, %v1497
        %1563 = vrot.lane.b32.xlu0 %v1194, 96
        %v1564 = vpop.permute.xlu0 %1563
        %1565 = vrot.lane.b32.xlu0 %v1195, 96
        %v1566 = vpop.permute.xlu0 %1565
        %1567 = vrot.lane.b32.xlu0 %v1196, 96
        %v1568 = vpop.permute.xlu0 %1567
        %1569 = vrot.lane.b32.xlu0 %v1197, 96
        %v1570 = vpop.permute.xlu0 %1569
        %1571 = vrot.lane.b32.xlu0 %v1198, 96
        %v1572 = vpop.permute.xlu0 %1571
        %1573 = vrot.lane.b32.xlu0 %v1199, 96
        %v1574 = vpop.permute.xlu0 %1573
        %1575 = vrot.lane.b32.xlu0 %v1200, 96
        %v1576 = vpop.permute.xlu0 %1575
        %1577 = vrot.lane.b32.xlu0 %v1201, 96
        %v1578 = vpop.permute.xlu0 %1577
        %1579 = vrot.lane.b32.xlu0 %v1202, 96
        %v1580 = vpop.permute.xlu0 %1579
        %1581 = vrot.lane.b32.xlu0 %v1203, 96
        %v1582 = vpop.permute.xlu0 %1581
        %1583 = vrot.lane.b32.xlu0 %v1204, 96
        %v1584 = vpop.permute.xlu0 %1583
        %1585 = vrot.lane.b32.xlu0 %v1205, 96
        %v1586 = vpop.permute.xlu0 %1585
        %1587 = vrot.lane.b32.xlu0 %v1206, 96
        %v1588 = vpop.permute.xlu0 %1587
        %1589 = vrot.lane.b32.xlu0 %v1207, 96
        %v1590 = vpop.permute.xlu0 %1589
        %1591 = vrot.lane.b32.xlu0 %v1208, 96
        %v1592 = vpop.permute.xlu0 %1591
        %1593 = vrot.lane.b32.xlu0 %v1209, 96
        %v1594 = vpop.permute.xlu0 %1593
        %1595 = vrot.lane.b32.xlu0 %v1210, 96
        %v1596 = vpop.permute.xlu0 %1595
        %1597 = vrot.lane.b32.xlu0 %v1211, 96
        %v1598 = vpop.permute.xlu0 %1597
        %1599 = vrot.lane.b32.xlu0 %v1212, 96
        %v1600 = vpop.permute.xlu0 %1599
        %1601 = vrot.lane.b32.xlu0 %v1213, 96
        %v1602 = vpop.permute.xlu0 %1601
        %1603 = vrot.lane.b32.xlu0 %v1214, 96
        %v1604 = vpop.permute.xlu0 %1603
        %1605 = vrot.lane.b32.xlu0 %v1215, 96
        %v1606 = vpop.permute.xlu0 %1605
        %1607 = vrot.lane.b32.xlu0 %v1216, 96
        %v1608 = vpop.permute.xlu0 %1607
        %1609 = vrot.lane.b32.xlu0 %v1217, 96
        %v1610 = vpop.permute.xlu0 %1609
        %1611 = vrot.lane.b32.xlu0 %v1218, 96
        %v1612 = vpop.permute.xlu0 %1611
        %1613 = vrot.lane.b32.xlu0 %v1219, 96
        %v1614 = vpop.permute.xlu0 %1613
        %1615 = vrot.lane.b32.xlu0 %v1220, 96
        %v1616 = vpop.permute.xlu0 %1615
        %1617 = vrot.lane.b32.xlu0 %v1221, 96
        %v1618 = vpop.permute.xlu0 %1617
        %1619 = vrot.lane.b32.xlu0 %v1222, 96
        %v1620 = vpop.permute.xlu0 %1619
        %1621 = vrot.lane.b32.xlu0 %v1223, 96
        %v1622 = vpop.permute.xlu0 %1621
        %1623 = vrot.lane.b32.xlu0 %v1224, 96
        %v1624 = vpop.permute.xlu0 %1623
        %1625 = vrot.lane.b32.xlu0 %v1225, 96
        %v1626 = vpop.permute.xlu0 %1625
        %s1659 = scalar_lea.vmem %s282, 128 [#allocation7]
        %1660 = vst.msk [vmem:[%s1659] sm:$0xf] %vm1113, %v1564
        %1661 = vst.msk [vmem:[%s1659 + $0x4] sm:$0xf] %vm1113, %v1566
        %1662 = vst.msk [vmem:[%s1659 + $0x8] sm:$0xf] %vm1113, %v1568
        %1663 = vst.msk [vmem:[%s1659 + $0xc] sm:$0xf] %vm1113, %v1570
        %1664 = vst.msk [vmem:[%s1659 + $0x10] sm:$0xf] %vm1113, %v1572
        %1665 = vst.msk [vmem:[%s1659 + $0x14] sm:$0xf] %vm1113, %v1574
        %1666 = vst.msk [vmem:[%s1659 + $0x18] sm:$0xf] %vm1113, %v1576
        %1667 = vst.msk [vmem:[%s1659 + $0x1c] sm:$0xf] %vm1113, %v1578
        %1668 = vst.msk [vmem:[%s1659 + $0x20] sm:$0xf] %vm1113, %v1580
        %1669 = vst.msk [vmem:[%s1659 + $0x24] sm:$0xf] %vm1113, %v1582
        %1670 = vst.msk [vmem:[%s1659 + $0x28] sm:$0xf] %vm1113, %v1584
        %1671 = vst.msk [vmem:[%s1659 + $0x2c] sm:$0xf] %vm1113, %v1586
        %1672 = vst.msk [vmem:[%s1659 + $0x30] sm:$0xf] %vm1113, %v1588
        %1673 = vst.msk [vmem:[%s1659 + $0x34] sm:$0xf] %vm1113, %v1590
        %1674 = vst.msk [vmem:[%s1659 + $0x38] sm:$0xf] %vm1113, %v1592
        %1675 = vst.msk [vmem:[%s1659 + $0x3c] sm:$0xf] %vm1113, %v1594
        %1676 = vst.msk [vmem:[%s1659 + $0x40] sm:$0xf] %vm1113, %v1596
        %1677 = vst.msk [vmem:[%s1659 + $0x44] sm:$0xf] %vm1113, %v1598
        %1678 = vst.msk [vmem:[%s1659 + $0x48] sm:$0xf] %vm1113, %v1600
        %1679 = vst.msk [vmem:[%s1659 + $0x4c] sm:$0xf] %vm1113, %v1602
        %1680 = vst.msk [vmem:[%s1659 + $0x50] sm:$0xf] %vm1113, %v1604
        %1681 = vst.msk [vmem:[%s1659 + $0x54] sm:$0xf] %vm1113, %v1606
        %1682 = vst.msk [vmem:[%s1659 + $0x58] sm:$0xf] %vm1113, %v1608
        %1683 = vst.msk [vmem:[%s1659 + $0x5c] sm:$0xf] %vm1113, %v1610
        %1684 = vst.msk [vmem:[%s1659 + $0x60] sm:$0xf] %vm1113, %v1612
        %1685 = vst.msk [vmem:[%s1659 + $0x64] sm:$0xf] %vm1113, %v1614
        %1686 = vst.msk [vmem:[%s1659 + $0x68] sm:$0xf] %vm1113, %v1616
        %1687 = vst.msk [vmem:[%s1659 + $0x6c] sm:$0xf] %vm1113, %v1618
        %1688 = vst.msk [vmem:[%s1659 + $0x70] sm:$0xf] %vm1113, %v1620
        %1689 = vst.msk [vmem:[%s1659 + $0x74] sm:$0xf] %vm1113, %v1622
        %1690 = vst.msk [vmem:[%s1659 + $0x78] sm:$0xf] %vm1113, %v1624
        %1691 = vst.msk [vmem:[%s1659 + $0x7c] sm:$0xf] %vm1113, %v1626
        %1692 = vrot.lane.b32.xlu0 %v1338, 96
        %v1693 = vpop.permute.xlu0 %1692
        %1694 = vrot.lane.b32.xlu0 %v1339, 96
        %v1695 = vpop.permute.xlu0 %1694
        %1696 = vrot.lane.b32.xlu0 %v1340, 96
        %v1697 = vpop.permute.xlu0 %1696
        %1698 = vrot.lane.b32.xlu0 %v1341, 96
        %v1699 = vpop.permute.xlu0 %1698
        %1700 = vrot.lane.b32.xlu0 %v1342, 96
        %v1701 = vpop.permute.xlu0 %1700
        %1702 = vrot.lane.b32.xlu0 %v1343, 96
        %v1703 = vpop.permute.xlu0 %1702
        %1704 = vrot.lane.b32.xlu0 %v1344, 96
        %v1705 = vpop.permute.xlu0 %1704
        %1706 = vrot.lane.b32.xlu0 %v1345, 96
        %v1707 = vpop.permute.xlu0 %1706
        %1708 = vrot.lane.b32.xlu0 %v1346, 96
        %v1709 = vpop.permute.xlu0 %1708
        %1710 = vrot.lane.b32.xlu0 %v1347, 96
        %v1711 = vpop.permute.xlu0 %1710
        %1712 = vrot.lane.b32.xlu0 %v1348, 96
        %v1713 = vpop.permute.xlu0 %1712
        %1714 = vrot.lane.b32.xlu0 %v1349, 96
        %v1715 = vpop.permute.xlu0 %1714
        %1716 = vrot.lane.b32.xlu0 %v1350, 96
        %v1717 = vpop.permute.xlu0 %1716
        %1718 = vrot.lane.b32.xlu0 %v1351, 96
        %v1719 = vpop.permute.xlu0 %1718
        %1720 = vrot.lane.b32.xlu0 %v1352, 96
        %v1721 = vpop.permute.xlu0 %1720
        %1722 = vrot.lane.b32.xlu0 %v1353, 96
        %v1723 = vpop.permute.xlu0 %1722
        %1724 = vrot.lane.b32.xlu0 %v1354, 96
        %v1725 = vpop.permute.xlu0 %1724
        %1726 = vrot.lane.b32.xlu0 %v1355, 96
        %v1727 = vpop.permute.xlu0 %1726
        %1728 = vrot.lane.b32.xlu0 %v1356, 96
        %v1729 = vpop.permute.xlu0 %1728
        %1730 = vrot.lane.b32.xlu0 %v1357, 96
        %v1731 = vpop.permute.xlu0 %1730
        %1732 = vrot.lane.b32.xlu0 %v1358, 96
        %v1733 = vpop.permute.xlu0 %1732
        %1734 = vrot.lane.b32.xlu0 %v1359, 96
        %v1735 = vpop.permute.xlu0 %1734
        %1736 = vrot.lane.b32.xlu0 %v1360, 96
        %v1737 = vpop.permute.xlu0 %1736
        %1738 = vrot.lane.b32.xlu0 %v1361, 96
        %v1739 = vpop.permute.xlu0 %1738
        %1740 = vrot.lane.b32.xlu0 %v1362, 96
        %v1741 = vpop.permute.xlu0 %1740
        %1742 = vrot.lane.b32.xlu0 %v1363, 96
        %v1743 = vpop.permute.xlu0 %1742
        %1744 = vrot.lane.b32.xlu0 %v1364, 96
        %v1745 = vpop.permute.xlu0 %1744
        %1746 = vrot.lane.b32.xlu0 %v1365, 96
        %v1747 = vpop.permute.xlu0 %1746
        %1748 = vrot.lane.b32.xlu0 %v1366, 96
        %v1749 = vpop.permute.xlu0 %1748
        %1750 = vrot.lane.b32.xlu0 %v1367, 96
        %v1751 = vpop.permute.xlu0 %1750
        %1752 = vrot.lane.b32.xlu0 %v1368, 96
        %v1753 = vpop.permute.xlu0 %1752
        %1754 = vrot.lane.b32.xlu0 %v1369, 96
        %v1755 = vpop.permute.xlu0 %1754
        %s1788 = scalar_lea.vmem %s288, 128 [#allocation8]
        %1789 = vst.msk [vmem:[%s1788] sm:$0xf] %vm1113, %v1693
        %1790 = vst.msk [vmem:[%s1788 + $0x4] sm:$0xf] %vm1113, %v1695
        %1791 = vst.msk [vmem:[%s1788 + $0x8] sm:$0xf] %vm1113, %v1697
        %1792 = vst.msk [vmem:[%s1788 + $0xc] sm:$0xf] %vm1113, %v1699
        %1793 = vst.msk [vmem:[%s1788 + $0x10] sm:$0xf] %vm1113, %v1701
        %1794 = vst.msk [vmem:[%s1788 + $0x14] sm:$0xf] %vm1113, %v1703
        %1795 = vst.msk [vmem:[%s1788 + $0x18] sm:$0xf] %vm1113, %v1705
        %1796 = vst.msk [vmem:[%s1788 + $0x1c] sm:$0xf] %vm1113, %v1707
        %1797 = vst.msk [vmem:[%s1788 + $0x20] sm:$0xf] %vm1113, %v1709
        %1798 = vst.msk [vmem:[%s1788 + $0x24] sm:$0xf] %vm1113, %v1711
        %1799 = vst.msk [vmem:[%s1788 + $0x28] sm:$0xf] %vm1113, %v1713
        %1800 = vst.msk [vmem:[%s1788 + $0x2c] sm:$0xf] %vm1113, %v1715
        %1801 = vst.msk [vmem:[%s1788 + $0x30] sm:$0xf] %vm1113, %v1717
        %1802 = vst.msk [vmem:[%s1788 + $0x34] sm:$0xf] %vm1113, %v1719
        %1803 = vst.msk [vmem:[%s1788 + $0x38] sm:$0xf] %vm1113, %v1721
        %1804 = vst.msk [vmem:[%s1788 + $0x3c] sm:$0xf] %vm1113, %v1723
        %1805 = vst.msk [vmem:[%s1788 + $0x40] sm:$0xf] %vm1113, %v1725
        %1806 = vst.msk [vmem:[%s1788 + $0x44] sm:$0xf] %vm1113, %v1727
        %1807 = vst.msk [vmem:[%s1788 + $0x48] sm:$0xf] %vm1113, %v1729
        %1808 = vst.msk [vmem:[%s1788 + $0x4c] sm:$0xf] %vm1113, %v1731
        %1809 = vst.msk [vmem:[%s1788 + $0x50] sm:$0xf] %vm1113, %v1733
        %1810 = vst.msk [vmem:[%s1788 + $0x54] sm:$0xf] %vm1113, %v1735
        %1811 = vst.msk [vmem:[%s1788 + $0x58] sm:$0xf] %vm1113, %v1737
        %1812 = vst.msk [vmem:[%s1788 + $0x5c] sm:$0xf] %vm1113, %v1739
        %1813 = vst.msk [vmem:[%s1788 + $0x60] sm:$0xf] %vm1113, %v1741
        %1814 = vst.msk [vmem:[%s1788 + $0x64] sm:$0xf] %vm1113, %v1743
        %1815 = vst.msk [vmem:[%s1788 + $0x68] sm:$0xf] %vm1113, %v1745
        %1816 = vst.msk [vmem:[%s1788 + $0x6c] sm:$0xf] %vm1113, %v1747
        %1817 = vst.msk [vmem:[%s1788 + $0x70] sm:$0xf] %vm1113, %v1749
        %1818 = vst.msk [vmem:[%s1788 + $0x74] sm:$0xf] %vm1113, %v1751
        %1819 = vst.msk [vmem:[%s1788 + $0x78] sm:$0xf] %vm1113, %v1753
        %1820 = vst.msk [vmem:[%s1788 + $0x7c] sm:$0xf] %vm1113, %v1755
        %1821 = vrot.lane.b32.xlu0 %v1049, 64
        %v1822 = vpop.permute.xlu0 %1821
        %1823 = vrot.lane.b32.xlu0 %v1050, 64
        %v1824 = vpop.permute.xlu0 %1823
        %1825 = vrot.lane.b32.xlu0 %v1051, 64
        %v1826 = vpop.permute.xlu0 %1825
        %1827 = vrot.lane.b32.xlu0 %v1052, 64
        %v1828 = vpop.permute.xlu0 %1827
        %1829 = vrot.lane.b32.xlu0 %v1053, 64
        %v1830 = vpop.permute.xlu0 %1829
        %1831 = vrot.lane.b32.xlu0 %v1054, 64
        %v1832 = vpop.permute.xlu0 %1831
        %1833 = vrot.lane.b32.xlu0 %v1055, 64
        %v1834 = vpop.permute.xlu0 %1833
        %1835 = vrot.lane.b32.xlu0 %v1056, 64
        %v1836 = vpop.permute.xlu0 %1835
        %1837 = vrot.lane.b32.xlu0 %v1057, 64
        %v1838 = vpop.permute.xlu0 %1837
        %1839 = vrot.lane.b32.xlu0 %v1058, 64
        %v1840 = vpop.permute.xlu0 %1839
        %1841 = vrot.lane.b32.xlu0 %v1059, 64
        %v1842 = vpop.permute.xlu0 %1841
        %1843 = vrot.lane.b32.xlu0 %v1060, 64
        %v1844 = vpop.permute.xlu0 %1843
        %1845 = vrot.lane.b32.xlu0 %v1061, 64
        %v1846 = vpop.permute.xlu0 %1845
        %1847 = vrot.lane.b32.xlu0 %v1062, 64
        %v1848 = vpop.permute.xlu0 %1847
        %1849 = vrot.lane.b32.xlu0 %v1063, 64
        %v1850 = vpop.permute.xlu0 %1849
        %1851 = vrot.lane.b32.xlu0 %v1064, 64
        %v1852 = vpop.permute.xlu0 %1851
        %1853 = vrot.lane.b32.xlu0 %v1065, 64
        %v1854 = vpop.permute.xlu0 %1853
        %1855 = vrot.lane.b32.xlu0 %v1066, 64
        %v1856 = vpop.permute.xlu0 %1855
        %1857 = vrot.lane.b32.xlu0 %v1067, 64
        %v1858 = vpop.permute.xlu0 %1857
        %1859 = vrot.lane.b32.xlu0 %v1068, 64
        %v1860 = vpop.permute.xlu0 %1859
        %1861 = vrot.lane.b32.xlu0 %v1069, 64
        %v1862 = vpop.permute.xlu0 %1861
        %1863 = vrot.lane.b32.xlu0 %v1070, 64
        %v1864 = vpop.permute.xlu0 %1863
        %1865 = vrot.lane.b32.xlu0 %v1071, 64
        %v1866 = vpop.permute.xlu0 %1865
        %1867 = vrot.lane.b32.xlu0 %v1072, 64
        %v1868 = vpop.permute.xlu0 %1867
        %1869 = vrot.lane.b32.xlu0 %v1073, 64
        %v1870 = vpop.permute.xlu0 %1869
        %1871 = vrot.lane.b32.xlu0 %v1074, 64
        %v1872 = vpop.permute.xlu0 %1871
        %1873 = vrot.lane.b32.xlu0 %v1075, 64
        %v1874 = vpop.permute.xlu0 %1873
        %1875 = vrot.lane.b32.xlu0 %v1076, 64
        %v1876 = vpop.permute.xlu0 %1875
        %1877 = vrot.lane.b32.xlu0 %v1077, 64
        %v1878 = vpop.permute.xlu0 %1877
        %1879 = vrot.lane.b32.xlu0 %v1078, 64
        %v1880 = vpop.permute.xlu0 %1879
        %1881 = vrot.lane.b32.xlu0 %v1079, 64
        %v1882 = vpop.permute.xlu0 %1881
        %1883 = vrot.lane.b32.xlu0 %v1080, 64
        %v1884 = vpop.permute.xlu0 %1883
        %s1917 = scalar_lea.vmem %s276, 256 [#allocation6]
        %1918 = vst.msk [vmem:[%s1917] sm:$0xf] %vm1113, %v1822
        %1919 = vst.msk [vmem:[%s1917 + $0x4] sm:$0xf] %vm1113, %v1824
        %1920 = vst.msk [vmem:[%s1917 + $0x8] sm:$0xf] %vm1113, %v1826
        %1921 = vst.msk [vmem:[%s1917 + $0xc] sm:$0xf] %vm1113, %v1828
        %1922 = vst.msk [vmem:[%s1917 + $0x10] sm:$0xf] %vm1113, %v1830
        %1923 = vst.msk [vmem:[%s1917 + $0x14] sm:$0xf] %vm1113, %v1832
        %1924 = vst.msk [vmem:[%s1917 + $0x18] sm:$0xf] %vm1113, %v1834
        %1925 = vst.msk [vmem:[%s1917 + $0x1c] sm:$0xf] %vm1113, %v1836
        %1926 = vst.msk [vmem:[%s1917 + $0x20] sm:$0xf] %vm1113, %v1838
        %1927 = vst.msk [vmem:[%s1917 + $0x24] sm:$0xf] %vm1113, %v1840
        %1928 = vst.msk [vmem:[%s1917 + $0x28] sm:$0xf] %vm1113, %v1842
        %1929 = vst.msk [vmem:[%s1917 + $0x2c] sm:$0xf] %vm1113, %v1844
        %1930 = vst.msk [vmem:[%s1917 + $0x30] sm:$0xf] %vm1113, %v1846
        %1931 = vst.msk [vmem:[%s1917 + $0x34] sm:$0xf] %vm1113, %v1848
        %1932 = vst.msk [vmem:[%s1917 + $0x38] sm:$0xf] %vm1113, %v1850
        %1933 = vst.msk [vmem:[%s1917 + $0x3c] sm:$0xf] %vm1113, %v1852
        %1934 = vst.msk [vmem:[%s1917 + $0x40] sm:$0xf] %vm1113, %v1854
        %1935 = vst.msk [vmem:[%s1917 + $0x44] sm:$0xf] %vm1113, %v1856
        %1936 = vst.msk [vmem:[%s1917 + $0x48] sm:$0xf] %vm1113, %v1858
        %1937 = vst.msk [vmem:[%s1917 + $0x4c] sm:$0xf] %vm1113, %v1860
        %1938 = vst.msk [vmem:[%s1917 + $0x50] sm:$0xf] %vm1113, %v1862
        %1939 = vst.msk [vmem:[%s1917 + $0x54] sm:$0xf] %vm1113, %v1864
        %1940 = vst.msk [vmem:[%s1917 + $0x58] sm:$0xf] %vm1113, %v1866
        %1941 = vst.msk [vmem:[%s1917 + $0x5c] sm:$0xf] %vm1113, %v1868
        %1942 = vst.msk [vmem:[%s1917 + $0x60] sm:$0xf] %vm1113, %v1870
        %1943 = vst.msk [vmem:[%s1917 + $0x64] sm:$0xf] %vm1113, %v1872
        %1944 = vst.msk [vmem:[%s1917 + $0x68] sm:$0xf] %vm1113, %v1874
        %1945 = vst.msk [vmem:[%s1917 + $0x6c] sm:$0xf] %vm1113, %v1876
        %1946 = vst.msk [vmem:[%s1917 + $0x70] sm:$0xf] %vm1113, %v1878
        %1947 = vst.msk [vmem:[%s1917 + $0x74] sm:$0xf] %vm1113, %v1880
        %1948 = vst.msk [vmem:[%s1917 + $0x78] sm:$0xf] %vm1113, %v1882
        %1949 = vst.msk [vmem:[%s1917 + $0x7c] sm:$0xf] %vm1113, %v1884
        %1950 = vrot.lane.b32.xlu0 %v1194, 64
        %v1951 = vpop.permute.xlu0 %1950
        %1952 = vrot.lane.b32.xlu0 %v1195, 64
        %v1953 = vpop.permute.xlu0 %1952
        %1954 = vrot.lane.b32.xlu0 %v1196, 64
        %v1955 = vpop.permute.xlu0 %1954
        %1956 = vrot.lane.b32.xlu0 %v1197, 64
        %v1957 = vpop.permute.xlu0 %1956
        %1958 = vrot.lane.b32.xlu0 %v1198, 64
        %v1959 = vpop.permute.xlu0 %1958
        %1960 = vrot.lane.b32.xlu0 %v1199, 64
        %v1961 = vpop.permute.xlu0 %1960
        %1962 = vrot.lane.b32.xlu0 %v1200, 64
        %v1963 = vpop.permute.xlu0 %1962
        %1964 = vrot.lane.b32.xlu0 %v1201, 64
        %v1965 = vpop.permute.xlu0 %1964
        %1966 = vrot.lane.b32.xlu0 %v1202, 64
        %v1967 = vpop.permute.xlu0 %1966
        %1968 = vrot.lane.b32.xlu0 %v1203, 64
        %v1969 = vpop.permute.xlu0 %1968
        %1970 = vrot.lane.b32.xlu0 %v1204, 64
        %v1971 = vpop.permute.xlu0 %1970
        %1972 = vrot.lane.b32.xlu0 %v1205, 64
        %v1973 = vpop.permute.xlu0 %1972
        %1974 = vrot.lane.b32.xlu0 %v1206, 64
        %v1975 = vpop.permute.xlu0 %1974
        %1976 = vrot.lane.b32.xlu0 %v1207, 64
        %v1977 = vpop.permute.xlu0 %1976
        %1978 = vrot.lane.b32.xlu0 %v1208, 64
        %v1979 = vpop.permute.xlu0 %1978
        %1980 = vrot.lane.b32.xlu0 %v1209, 64
        %v1981 = vpop.permute.xlu0 %1980
        %1982 = vrot.lane.b32.xlu0 %v1210, 64
        %v1983 = vpop.permute.xlu0 %1982
        %1984 = vrot.lane.b32.xlu0 %v1211, 64
        %v1985 = vpop.permute.xlu0 %1984
        %1986 = vrot.lane.b32.xlu0 %v1212, 64
        %v1987 = vpop.permute.xlu0 %1986
        %1988 = vrot.lane.b32.xlu0 %v1213, 64
        %v1989 = vpop.permute.xlu0 %1988
        %1990 = vrot.lane.b32.xlu0 %v1214, 64
        %v1991 = vpop.permute.xlu0 %1990
        %1992 = vrot.lane.b32.xlu0 %v1215, 64
        %v1993 = vpop.permute.xlu0 %1992
        %1994 = vrot.lane.b32.xlu0 %v1216, 64
        %v1995 = vpop.permute.xlu0 %1994
        %1996 = vrot.lane.b32.xlu0 %v1217, 64
        %v1997 = vpop.permute.xlu0 %1996
        %1998 = vrot.lane.b32.xlu0 %v1218, 64
        %v1999 = vpop.permute.xlu0 %1998
        %2000 = vrot.lane.b32.xlu0 %v1219, 64
        %v2001 = vpop.permute.xlu0 %2000
        %2002 = vrot.lane.b32.xlu0 %v1220, 64
        %v2003 = vpop.permute.xlu0 %2002
        %2004 = vrot.lane.b32.xlu0 %v1221, 64
        %v2005 = vpop.permute.xlu0 %2004
        %2006 = vrot.lane.b32.xlu0 %v1222, 64
        %v2007 = vpop.permute.xlu0 %2006
        %2008 = vrot.lane.b32.xlu0 %v1223, 64
        %v2009 = vpop.permute.xlu0 %2008
        %2010 = vrot.lane.b32.xlu0 %v1224, 64
        %v2011 = vpop.permute.xlu0 %2010
        %2012 = vrot.lane.b32.xlu0 %v1225, 64
        %v2013 = vpop.permute.xlu0 %2012
        %s2046 = scalar_lea.vmem %s282, 256 [#allocation7]
        %2047 = vst.msk [vmem:[%s2046] sm:$0xf] %vm1113, %v1951
        %2048 = vst.msk [vmem:[%s2046 + $0x4] sm:$0xf] %vm1113, %v1953
        %2049 = vst.msk [vmem:[%s2046 + $0x8] sm:$0xf] %vm1113, %v1955
        %2050 = vst.msk [vmem:[%s2046 + $0xc] sm:$0xf] %vm1113, %v1957
        %2051 = vst.msk [vmem:[%s2046 + $0x10] sm:$0xf] %vm1113, %v1959
        %2052 = vst.msk [vmem:[%s2046 + $0x14] sm:$0xf] %vm1113, %v1961
        %2053 = vst.msk [vmem:[%s2046 + $0x18] sm:$0xf] %vm1113, %v1963
        %2054 = vst.msk [vmem:[%s2046 + $0x1c] sm:$0xf] %vm1113, %v1965
        %2055 = vst.msk [vmem:[%s2046 + $0x20] sm:$0xf] %vm1113, %v1967
        %2056 = vst.msk [vmem:[%s2046 + $0x24] sm:$0xf] %vm1113, %v1969
        %2057 = vst.msk [vmem:[%s2046 + $0x28] sm:$0xf] %vm1113, %v1971
        %2058 = vst.msk [vmem:[%s2046 + $0x2c] sm:$0xf] %vm1113, %v1973
        %2059 = vst.msk [vmem:[%s2046 + $0x30] sm:$0xf] %vm1113, %v1975
        %2060 = vst.msk [vmem:[%s2046 + $0x34] sm:$0xf] %vm1113, %v1977
        %2061 = vst.msk [vmem:[%s2046 + $0x38] sm:$0xf] %vm1113, %v1979
        %2062 = vst.msk [vmem:[%s2046 + $0x3c] sm:$0xf] %vm1113, %v1981
        %2063 = vst.msk [vmem:[%s2046 + $0x40] sm:$0xf] %vm1113, %v1983
        %2064 = vst.msk [vmem:[%s2046 + $0x44] sm:$0xf] %vm1113, %v1985
        %2065 = vst.msk [vmem:[%s2046 + $0x48] sm:$0xf] %vm1113, %v1987
        %2066 = vst.msk [vmem:[%s2046 + $0x4c] sm:$0xf] %vm1113, %v1989
        %2067 = vst.msk [vmem:[%s2046 + $0x50] sm:$0xf] %vm1113, %v1991
        %2068 = vst.msk [vmem:[%s2046 + $0x54] sm:$0xf] %vm1113, %v1993
        %2069 = vst.msk [vmem:[%s2046 + $0x58] sm:$0xf] %vm1113, %v1995
        %2070 = vst.msk [vmem:[%s2046 + $0x5c] sm:$0xf] %vm1113, %v1997
        %2071 = vst.msk [vmem:[%s2046 + $0x60] sm:$0xf] %vm1113, %v1999
        %2072 = vst.msk [vmem:[%s2046 + $0x64] sm:$0xf] %vm1113, %v2001
        %2073 = vst.msk [vmem:[%s2046 + $0x68] sm:$0xf] %vm1113, %v2003
        %2074 = vst.msk [vmem:[%s2046 + $0x6c] sm:$0xf] %vm1113, %v2005
        %2075 = vst.msk [vmem:[%s2046 + $0x70] sm:$0xf] %vm1113, %v2007
        %2076 = vst.msk [vmem:[%s2046 + $0x74] sm:$0xf] %vm1113, %v2009
        %2077 = vst.msk [vmem:[%s2046 + $0x78] sm:$0xf] %vm1113, %v2011
        %2078 = vst.msk [vmem:[%s2046 + $0x7c] sm:$0xf] %vm1113, %v2013
        %2079 = vrot.lane.b32.xlu0 %v1338, 64
        %v2080 = vpop.permute.xlu0 %2079
        %2081 = vrot.lane.b32.xlu0 %v1339, 64
        %v2082 = vpop.permute.xlu0 %2081
        %2083 = vrot.lane.b32.xlu0 %v1340, 64
        %v2084 = vpop.permute.xlu0 %2083
        %2085 = vrot.lane.b32.xlu0 %v1341, 64
        %v2086 = vpop.permute.xlu0 %2085
        %2087 = vrot.lane.b32.xlu0 %v1342, 64
        %v2088 = vpop.permute.xlu0 %2087
        %2089 = vrot.lane.b32.xlu0 %v1343, 64
        %v2090 = vpop.permute.xlu0 %2089
        %2091 = vrot.lane.b32.xlu0 %v1344, 64
        %v2092 = vpop.permute.xlu0 %2091
        %2093 = vrot.lane.b32.xlu0 %v1345, 64
        %v2094 = vpop.permute.xlu0 %2093
        %2095 = vrot.lane.b32.xlu0 %v1346, 64
        %v2096 = vpop.permute.xlu0 %2095
        %2097 = vrot.lane.b32.xlu0 %v1347, 64
        %v2098 = vpop.permute.xlu0 %2097
        %2099 = vrot.lane.b32.xlu0 %v1348, 64
        %v2100 = vpop.permute.xlu0 %2099
        %2101 = vrot.lane.b32.xlu0 %v1349, 64
        %v2102 = vpop.permute.xlu0 %2101
        %2103 = vrot.lane.b32.xlu0 %v1350, 64
        %v2104 = vpop.permute.xlu0 %2103
        %2105 = vrot.lane.b32.xlu0 %v1351, 64
        %v2106 = vpop.permute.xlu0 %2105
        %2107 = vrot.lane.b32.xlu0 %v1352, 64
        %v2108 = vpop.permute.xlu0 %2107
        %2109 = vrot.lane.b32.xlu0 %v1353, 64
        %v2110 = vpop.permute.xlu0 %2109
        %2111 = vrot.lane.b32.xlu0 %v1354, 64
        %v2112 = vpop.permute.xlu0 %2111
        %2113 = vrot.lane.b32.xlu0 %v1355, 64
        %v2114 = vpop.permute.xlu0 %2113
        %2115 = vrot.lane.b32.xlu0 %v1356, 64
        %v2116 = vpop.permute.xlu0 %2115
        %2117 = vrot.lane.b32.xlu0 %v1357, 64
        %v2118 = vpop.permute.xlu0 %2117
        %2119 = vrot.lane.b32.xlu0 %v1358, 64
        %v2120 = vpop.permute.xlu0 %2119
        %2121 = vrot.lane.b32.xlu0 %v1359, 64
        %v2122 = vpop.permute.xlu0 %2121
        %2123 = vrot.lane.b32.xlu0 %v1360, 64
        %v2124 = vpop.permute.xlu0 %2123
        %2125 = vrot.lane.b32.xlu0 %v1361, 64
        %v2126 = vpop.permute.xlu0 %2125
        %2127 = vrot.lane.b32.xlu0 %v1362, 64
        %v2128 = vpop.permute.xlu0 %2127
        %2129 = vrot.lane.b32.xlu0 %v1363, 64
        %v2130 = vpop.permute.xlu0 %2129
        %2131 = vrot.lane.b32.xlu0 %v1364, 64
        %v2132 = vpop.permute.xlu0 %2131
        %2133 = vrot.lane.b32.xlu0 %v1365, 64
        %v2134 = vpop.permute.xlu0 %2133
        %2135 = vrot.lane.b32.xlu0 %v1366, 64
        %v2136 = vpop.permute.xlu0 %2135
        %2137 = vrot.lane.b32.xlu0 %v1367, 64
        %v2138 = vpop.permute.xlu0 %2137
        %2139 = vrot.lane.b32.xlu0 %v1368, 64
        %v2140 = vpop.permute.xlu0 %2139
        %2141 = vrot.lane.b32.xlu0 %v1369, 64
        %v2142 = vpop.permute.xlu0 %2141
        %s2175 = scalar_lea.vmem %s288, 256 [#allocation8]
        %2176 = vst.msk [vmem:[%s2175] sm:$0xf] %vm1113, %v2080
        %2177 = vst.msk [vmem:[%s2175 + $0x4] sm:$0xf] %vm1113, %v2082
        %2178 = vst.msk [vmem:[%s2175 + $0x8] sm:$0xf] %vm1113, %v2084
        %2179 = vst.msk [vmem:[%s2175 + $0xc] sm:$0xf] %vm1113, %v2086
        %2180 = vst.msk [vmem:[%s2175 + $0x10] sm:$0xf] %vm1113, %v2088
        %2181 = vst.msk [vmem:[%s2175 + $0x14] sm:$0xf] %vm1113, %v2090
        %2182 = vst.msk [vmem:[%s2175 + $0x18] sm:$0xf] %vm1113, %v2092
        %2183 = vst.msk [vmem:[%s2175 + $0x1c] sm:$0xf] %vm1113, %v2094
        %2184 = vst.msk [vmem:[%s2175 + $0x20] sm:$0xf] %vm1113, %v2096
        %2185 = vst.msk [vmem:[%s2175 + $0x24] sm:$0xf] %vm1113, %v2098
        %2186 = vst.msk [vmem:[%s2175 + $0x28] sm:$0xf] %vm1113, %v2100
        %2187 = vst.msk [vmem:[%s2175 + $0x2c] sm:$0xf] %vm1113, %v2102
        %2188 = vst.msk [vmem:[%s2175 + $0x30] sm:$0xf] %vm1113, %v2104
        %2189 = vst.msk [vmem:[%s2175 + $0x34] sm:$0xf] %vm1113, %v2106
        %2190 = vst.msk [vmem:[%s2175 + $0x38] sm:$0xf] %vm1113, %v2108
        %2191 = vst.msk [vmem:[%s2175 + $0x3c] sm:$0xf] %vm1113, %v2110
        %2192 = vst.msk [vmem:[%s2175 + $0x40] sm:$0xf] %vm1113, %v2112
        %2193 = vst.msk [vmem:[%s2175 + $0x44] sm:$0xf] %vm1113, %v2114
        %2194 = vst.msk [vmem:[%s2175 + $0x48] sm:$0xf] %vm1113, %v2116
        %2195 = vst.msk [vmem:[%s2175 + $0x4c] sm:$0xf] %vm1113, %v2118
        %2196 = vst.msk [vmem:[%s2175 + $0x50] sm:$0xf] %vm1113, %v2120
        %2197 = vst.msk [vmem:[%s2175 + $0x54] sm:$0xf] %vm1113, %v2122
        %2198 = vst.msk [vmem:[%s2175 + $0x58] sm:$0xf] %vm1113, %v2124
        %2199 = vst.msk [vmem:[%s2175 + $0x5c] sm:$0xf] %vm1113, %v2126
        %2200 = vst.msk [vmem:[%s2175 + $0x60] sm:$0xf] %vm1113, %v2128
        %2201 = vst.msk [vmem:[%s2175 + $0x64] sm:$0xf] %vm1113, %v2130
        %2202 = vst.msk [vmem:[%s2175 + $0x68] sm:$0xf] %vm1113, %v2132
        %2203 = vst.msk [vmem:[%s2175 + $0x6c] sm:$0xf] %vm1113, %v2134
        %2204 = vst.msk [vmem:[%s2175 + $0x70] sm:$0xf] %vm1113, %v2136
        %2205 = vst.msk [vmem:[%s2175 + $0x74] sm:$0xf] %vm1113, %v2138
        %2206 = vst.msk [vmem:[%s2175 + $0x78] sm:$0xf] %vm1113, %v2140
        %2207 = vst.msk [vmem:[%s2175 + $0x7c] sm:$0xf] %vm1113, %v2142
        %2208 = vrot.lane.b32.xlu0 %v1049, 32
        %v2209 = vpop.permute.xlu0 %2208
        %2210 = vrot.lane.b32.xlu0 %v1050, 32
        %v2211 = vpop.permute.xlu0 %2210
        %2212 = vrot.lane.b32.xlu0 %v1051, 32
        %v2213 = vpop.permute.xlu0 %2212
        %2214 = vrot.lane.b32.xlu0 %v1052, 32
        %v2215 = vpop.permute.xlu0 %2214
        %2216 = vrot.lane.b32.xlu0 %v1053, 32
        %v2217 = vpop.permute.xlu0 %2216
        %2218 = vrot.lane.b32.xlu0 %v1054, 32
        %v2219 = vpop.permute.xlu0 %2218
        %2220 = vrot.lane.b32.xlu0 %v1055, 32
        %v2221 = vpop.permute.xlu0 %2220
        %2222 = vrot.lane.b32.xlu0 %v1056, 32
        %v2223 = vpop.permute.xlu0 %2222
        %2224 = vrot.lane.b32.xlu0 %v1057, 32
        %v2225 = vpop.permute.xlu0 %2224
        %2226 = vrot.lane.b32.xlu0 %v1058, 32
        %v2227 = vpop.permute.xlu0 %2226
        %2228 = vrot.lane.b32.xlu0 %v1059, 32
        %v2229 = vpop.permute.xlu0 %2228
        %2230 = vrot.lane.b32.xlu0 %v1060, 32
        %v2231 = vpop.permute.xlu0 %2230
        %2232 = vrot.lane.b32.xlu0 %v1061, 32
        %v2233 = vpop.permute.xlu0 %2232
        %2234 = vrot.lane.b32.xlu0 %v1062, 32
        %v2235 = vpop.permute.xlu0 %2234
        %2236 = vrot.lane.b32.xlu0 %v1063, 32
        %v2237 = vpop.permute.xlu0 %2236
        %2238 = vrot.lane.b32.xlu0 %v1064, 32
        %v2239 = vpop.permute.xlu0 %2238
        %2240 = vrot.lane.b32.xlu0 %v1065, 32
        %v2241 = vpop.permute.xlu0 %2240
        %2242 = vrot.lane.b32.xlu0 %v1066, 32
        %v2243 = vpop.permute.xlu0 %2242
        %2244 = vrot.lane.b32.xlu0 %v1067, 32
        %v2245 = vpop.permute.xlu0 %2244
        %2246 = vrot.lane.b32.xlu0 %v1068, 32
        %v2247 = vpop.permute.xlu0 %2246
        %2248 = vrot.lane.b32.xlu0 %v1069, 32
        %v2249 = vpop.permute.xlu0 %2248
        %2250 = vrot.lane.b32.xlu0 %v1070, 32
        %v2251 = vpop.permute.xlu0 %2250
        %2252 = vrot.lane.b32.xlu0 %v1071, 32
        %v2253 = vpop.permute.xlu0 %2252
        %2254 = vrot.lane.b32.xlu0 %v1072, 32
        %v2255 = vpop.permute.xlu0 %2254
        %2256 = vrot.lane.b32.xlu0 %v1073, 32
        %v2257 = vpop.permute.xlu0 %2256
        %2258 = vrot.lane.b32.xlu0 %v1074, 32
        %v2259 = vpop.permute.xlu0 %2258
        %2260 = vrot.lane.b32.xlu0 %v1075, 32
        %v2261 = vpop.permute.xlu0 %2260
        %2262 = vrot.lane.b32.xlu0 %v1076, 32
        %v2263 = vpop.permute.xlu0 %2262
        %2264 = vrot.lane.b32.xlu0 %v1077, 32
        %v2265 = vpop.permute.xlu0 %2264
        %2266 = vrot.lane.b32.xlu0 %v1078, 32
        %v2267 = vpop.permute.xlu0 %2266
        %2268 = vrot.lane.b32.xlu0 %v1079, 32
        %v2269 = vpop.permute.xlu0 %2268
        %2270 = vrot.lane.b32.xlu0 %v1080, 32
        %v2271 = vpop.permute.xlu0 %2270
        %s2304 = scalar_lea.vmem %s276, 384 [#allocation6]
        %2305 = vst.msk [vmem:[%s2304] sm:$0xf] %vm1113, %v2209
        %2306 = vst.msk [vmem:[%s2304 + $0x4] sm:$0xf] %vm1113, %v2211
        %2307 = vst.msk [vmem:[%s2304 + $0x8] sm:$0xf] %vm1113, %v2213
        %2308 = vst.msk [vmem:[%s2304 + $0xc] sm:$0xf] %vm1113, %v2215
        %2309 = vst.msk [vmem:[%s2304 + $0x10] sm:$0xf] %vm1113, %v2217
        %2310 = vst.msk [vmem:[%s2304 + $0x14] sm:$0xf] %vm1113, %v2219
        %2311 = vst.msk [vmem:[%s2304 + $0x18] sm:$0xf] %vm1113, %v2221
        %2312 = vst.msk [vmem:[%s2304 + $0x1c] sm:$0xf] %vm1113, %v2223
        %2313 = vst.msk [vmem:[%s2304 + $0x20] sm:$0xf] %vm1113, %v2225
        %2314 = vst.msk [vmem:[%s2304 + $0x24] sm:$0xf] %vm1113, %v2227
        %2315 = vst.msk [vmem:[%s2304 + $0x28] sm:$0xf] %vm1113, %v2229
        %2316 = vst.msk [vmem:[%s2304 + $0x2c] sm:$0xf] %vm1113, %v2231
        %2317 = vst.msk [vmem:[%s2304 + $0x30] sm:$0xf] %vm1113, %v2233
        %2318 = vst.msk [vmem:[%s2304 + $0x34] sm:$0xf] %vm1113, %v2235
        %2319 = vst.msk [vmem:[%s2304 + $0x38] sm:$0xf] %vm1113, %v2237
        %2320 = vst.msk [vmem:[%s2304 + $0x3c] sm:$0xf] %vm1113, %v2239
        %2321 = vst.msk [vmem:[%s2304 + $0x40] sm:$0xf] %vm1113, %v2241
        %2322 = vst.msk [vmem:[%s2304 + $0x44] sm:$0xf] %vm1113, %v2243
        %2323 = vst.msk [vmem:[%s2304 + $0x48] sm:$0xf] %vm1113, %v2245
        %2324 = vst.msk [vmem:[%s2304 + $0x4c] sm:$0xf] %vm1113, %v2247
        %2325 = vst.msk [vmem:[%s2304 + $0x50] sm:$0xf] %vm1113, %v2249
        %2326 = vst.msk [vmem:[%s2304 + $0x54] sm:$0xf] %vm1113, %v2251
        %2327 = vst.msk [vmem:[%s2304 + $0x58] sm:$0xf] %vm1113, %v2253
        %2328 = vst.msk [vmem:[%s2304 + $0x5c] sm:$0xf] %vm1113, %v2255
        %2329 = vst.msk [vmem:[%s2304 + $0x60] sm:$0xf] %vm1113, %v2257
        %2330 = vst.msk [vmem:[%s2304 + $0x64] sm:$0xf] %vm1113, %v2259
        %2331 = vst.msk [vmem:[%s2304 + $0x68] sm:$0xf] %vm1113, %v2261
        %2332 = vst.msk [vmem:[%s2304 + $0x6c] sm:$0xf] %vm1113, %v2263
        %2333 = vst.msk [vmem:[%s2304 + $0x70] sm:$0xf] %vm1113, %v2265
        %2334 = vst.msk [vmem:[%s2304 + $0x74] sm:$0xf] %vm1113, %v2267
        %2335 = vst.msk [vmem:[%s2304 + $0x78] sm:$0xf] %vm1113, %v2269
        %2336 = vst.msk [vmem:[%s2304 + $0x7c] sm:$0xf] %vm1113, %v2271
        %2337 = vrot.lane.b32.xlu0 %v1194, 32
        %v2338 = vpop.permute.xlu0 %2337
        %2339 = vrot.lane.b32.xlu0 %v1195, 32
        %v2340 = vpop.permute.xlu0 %2339
        %2341 = vrot.lane.b32.xlu0 %v1196, 32
        %v2342 = vpop.permute.xlu0 %2341
        %2343 = vrot.lane.b32.xlu0 %v1197, 32
        %v2344 = vpop.permute.xlu0 %2343
        %2345 = vrot.lane.b32.xlu0 %v1198, 32
        %v2346 = vpop.permute.xlu0 %2345
        %2347 = vrot.lane.b32.xlu0 %v1199, 32
        %v2348 = vpop.permute.xlu0 %2347
        %2349 = vrot.lane.b32.xlu0 %v1200, 32
        %v2350 = vpop.permute.xlu0 %2349
        %2351 = vrot.lane.b32.xlu0 %v1201, 32
        %v2352 = vpop.permute.xlu0 %2351
        %2353 = vrot.lane.b32.xlu0 %v1202, 32
        %v2354 = vpop.permute.xlu0 %2353
        %2355 = vrot.lane.b32.xlu0 %v1203, 32
        %v2356 = vpop.permute.xlu0 %2355
        %2357 = vrot.lane.b32.xlu0 %v1204, 32
        %v2358 = vpop.permute.xlu0 %2357
        %2359 = vrot.lane.b32.xlu0 %v1205, 32
        %v2360 = vpop.permute.xlu0 %2359
        %2361 = vrot.lane.b32.xlu0 %v1206, 32
        %v2362 = vpop.permute.xlu0 %2361
        %2363 = vrot.lane.b32.xlu0 %v1207, 32
        %v2364 = vpop.permute.xlu0 %2363
        %2365 = vrot.lane.b32.xlu0 %v1208, 32
        %v2366 = vpop.permute.xlu0 %2365
        %2367 = vrot.lane.b32.xlu0 %v1209, 32
        %v2368 = vpop.permute.xlu0 %2367
        %2369 = vrot.lane.b32.xlu0 %v1210, 32
        %v2370 = vpop.permute.xlu0 %2369
        %2371 = vrot.lane.b32.xlu0 %v1211, 32
        %v2372 = vpop.permute.xlu0 %2371
        %2373 = vrot.lane.b32.xlu0 %v1212, 32
        %v2374 = vpop.permute.xlu0 %2373
        %2375 = vrot.lane.b32.xlu0 %v1213, 32
        %v2376 = vpop.permute.xlu0 %2375
        %2377 = vrot.lane.b32.xlu0 %v1214, 32
        %v2378 = vpop.permute.xlu0 %2377
        %2379 = vrot.lane.b32.xlu0 %v1215, 32
        %v2380 = vpop.permute.xlu0 %2379
        %2381 = vrot.lane.b32.xlu0 %v1216, 32
        %v2382 = vpop.permute.xlu0 %2381
        %2383 = vrot.lane.b32.xlu0 %v1217, 32
        %v2384 = vpop.permute.xlu0 %2383
        %2385 = vrot.lane.b32.xlu0 %v1218, 32
        %v2386 = vpop.permute.xlu0 %2385
        %2387 = vrot.lane.b32.xlu0 %v1219, 32
        %v2388 = vpop.permute.xlu0 %2387
        %2389 = vrot.lane.b32.xlu0 %v1220, 32
        %v2390 = vpop.permute.xlu0 %2389
        %2391 = vrot.lane.b32.xlu0 %v1221, 32
        %v2392 = vpop.permute.xlu0 %2391
        %2393 = vrot.lane.b32.xlu0 %v1222, 32
        %v2394 = vpop.permute.xlu0 %2393
        %2395 = vrot.lane.b32.xlu0 %v1223, 32
        %v2396 = vpop.permute.xlu0 %2395
        %2397 = vrot.lane.b32.xlu0 %v1224, 32
        %v2398 = vpop.permute.xlu0 %2397
        %2399 = vrot.lane.b32.xlu0 %v1225, 32
        %v2400 = vpop.permute.xlu0 %2399
        %s2433 = scalar_lea.vmem %s282, 384 [#allocation7]
        %2434 = vst.msk [vmem:[%s2433] sm:$0xf] %vm1113, %v2338
        %2435 = vst.msk [vmem:[%s2433 + $0x4] sm:$0xf] %vm1113, %v2340
        %2436 = vst.msk [vmem:[%s2433 + $0x8] sm:$0xf] %vm1113, %v2342
        %2437 = vst.msk [vmem:[%s2433 + $0xc] sm:$0xf] %vm1113, %v2344
        %2438 = vst.msk [vmem:[%s2433 + $0x10] sm:$0xf] %vm1113, %v2346
        %2439 = vst.msk [vmem:[%s2433 + $0x14] sm:$0xf] %vm1113, %v2348
        %2440 = vst.msk [vmem:[%s2433 + $0x18] sm:$0xf] %vm1113, %v2350
        %2441 = vst.msk [vmem:[%s2433 + $0x1c] sm:$0xf] %vm1113, %v2352
        %2442 = vst.msk [vmem:[%s2433 + $0x20] sm:$0xf] %vm1113, %v2354
        %2443 = vst.msk [vmem:[%s2433 + $0x24] sm:$0xf] %vm1113, %v2356
        %2444 = vst.msk [vmem:[%s2433 + $0x28] sm:$0xf] %vm1113, %v2358
        %2445 = vst.msk [vmem:[%s2433 + $0x2c] sm:$0xf] %vm1113, %v2360
        %2446 = vst.msk [vmem:[%s2433 + $0x30] sm:$0xf] %vm1113, %v2362
        %2447 = vst.msk [vmem:[%s2433 + $0x34] sm:$0xf] %vm1113, %v2364
        %2448 = vst.msk [vmem:[%s2433 + $0x38] sm:$0xf] %vm1113, %v2366
        %2449 = vst.msk [vmem:[%s2433 + $0x3c] sm:$0xf] %vm1113, %v2368
        %2450 = vst.msk [vmem:[%s2433 + $0x40] sm:$0xf] %vm1113, %v2370
        %2451 = vst.msk [vmem:[%s2433 + $0x44] sm:$0xf] %vm1113, %v2372
        %2452 = vst.msk [vmem:[%s2433 + $0x48] sm:$0xf] %vm1113, %v2374
        %2453 = vst.msk [vmem:[%s2433 + $0x4c] sm:$0xf] %vm1113, %v2376
        %2454 = vst.msk [vmem:[%s2433 + $0x50] sm:$0xf] %vm1113, %v2378
        %2455 = vst.msk [vmem:[%s2433 + $0x54] sm:$0xf] %vm1113, %v2380
        %2456 = vst.msk [vmem:[%s2433 + $0x58] sm:$0xf] %vm1113, %v2382
        %2457 = vst.msk [vmem:[%s2433 + $0x5c] sm:$0xf] %vm1113, %v2384
        %2458 = vst.msk [vmem:[%s2433 + $0x60] sm:$0xf] %vm1113, %v2386
        %2459 = vst.msk [vmem:[%s2433 + $0x64] sm:$0xf] %vm1113, %v2388
        %2460 = vst.msk [vmem:[%s2433 + $0x68] sm:$0xf] %vm1113, %v2390
        %2461 = vst.msk [vmem:[%s2433 + $0x6c] sm:$0xf] %vm1113, %v2392
        %2462 = vst.msk [vmem:[%s2433 + $0x70] sm:$0xf] %vm1113, %v2394
        %2463 = vst.msk [vmem:[%s2433 + $0x74] sm:$0xf] %vm1113, %v2396
        %2464 = vst.msk [vmem:[%s2433 + $0x78] sm:$0xf] %vm1113, %v2398
        %2465 = vst.msk [vmem:[%s2433 + $0x7c] sm:$0xf] %vm1113, %v2400
        %2466 = vrot.lane.b32.xlu0 %v1338, 32
        %v2467 = vpop.permute.xlu0 %2466
        %2468 = vrot.lane.b32.xlu0 %v1339, 32
        %v2469 = vpop.permute.xlu0 %2468
        %2470 = vrot.lane.b32.xlu0 %v1340, 32
        %v2471 = vpop.permute.xlu0 %2470
        %2472 = vrot.lane.b32.xlu0 %v1341, 32
        %v2473 = vpop.permute.xlu0 %2472
        %2474 = vrot.lane.b32.xlu0 %v1342, 32
        %v2475 = vpop.permute.xlu0 %2474
        %2476 = vrot.lane.b32.xlu0 %v1343, 32
        %v2477 = vpop.permute.xlu0 %2476
        %2478 = vrot.lane.b32.xlu0 %v1344, 32
        %v2479 = vpop.permute.xlu0 %2478
        %2480 = vrot.lane.b32.xlu0 %v1345, 32
        %v2481 = vpop.permute.xlu0 %2480
        %2482 = vrot.lane.b32.xlu0 %v1346, 32
        %v2483 = vpop.permute.xlu0 %2482
        %2484 = vrot.lane.b32.xlu0 %v1347, 32
        %v2485 = vpop.permute.xlu0 %2484
        %2486 = vrot.lane.b32.xlu0 %v1348, 32
        %v2487 = vpop.permute.xlu0 %2486
        %2488 = vrot.lane.b32.xlu0 %v1349, 32
        %v2489 = vpop.permute.xlu0 %2488
        %2490 = vrot.lane.b32.xlu0 %v1350, 32
        %v2491 = vpop.permute.xlu0 %2490
        %2492 = vrot.lane.b32.xlu0 %v1351, 32
        %v2493 = vpop.permute.xlu0 %2492
        %2494 = vrot.lane.b32.xlu0 %v1352, 32
        %v2495 = vpop.permute.xlu0 %2494
        %2496 = vrot.lane.b32.xlu0 %v1353, 32
        %v2497 = vpop.permute.xlu0 %2496
        %2498 = vrot.lane.b32.xlu0 %v1354, 32
        %v2499 = vpop.permute.xlu0 %2498
        %2500 = vrot.lane.b32.xlu0 %v1355, 32
        %v2501 = vpop.permute.xlu0 %2500
        %2502 = vrot.lane.b32.xlu0 %v1356, 32
        %v2503 = vpop.permute.xlu0 %2502
        %2504 = vrot.lane.b32.xlu0 %v1357, 32
        %v2505 = vpop.permute.xlu0 %2504
        %2506 = vrot.lane.b32.xlu0 %v1358, 32
        %v2507 = vpop.permute.xlu0 %2506
        %2508 = vrot.lane.b32.xlu0 %v1359, 32
        %v2509 = vpop.permute.xlu0 %2508
        %2510 = vrot.lane.b32.xlu0 %v1360, 32
        %v2511 = vpop.permute.xlu0 %2510
        %2512 = vrot.lane.b32.xlu0 %v1361, 32
        %v2513 = vpop.permute.xlu0 %2512
        %2514 = vrot.lane.b32.xlu0 %v1362, 32
        %v2515 = vpop.permute.xlu0 %2514
        %2516 = vrot.lane.b32.xlu0 %v1363, 32
        %v2517 = vpop.permute.xlu0 %2516
        %2518 = vrot.lane.b32.xlu0 %v1364, 32
        %v2519 = vpop.permute.xlu0 %2518
        %2520 = vrot.lane.b32.xlu0 %v1365, 32
        %v2521 = vpop.permute.xlu0 %2520
        %2522 = vrot.lane.b32.xlu0 %v1366, 32
        %v2523 = vpop.permute.xlu0 %2522
        %2524 = vrot.lane.b32.xlu0 %v1367, 32
        %v2525 = vpop.permute.xlu0 %2524
        %2526 = vrot.lane.b32.xlu0 %v1368, 32
        %v2527 = vpop.permute.xlu0 %2526
        %2528 = vrot.lane.b32.xlu0 %v1369, 32
        %v2529 = vpop.permute.xlu0 %2528
        %s2562 = scalar_lea.vmem %s288, 384 [#allocation8]
        %2563 = vst.msk [vmem:[%s2562] sm:$0xf] %vm1113, %v2467
        %2564 = vst.msk [vmem:[%s2562 + $0x4] sm:$0xf] %vm1113, %v2469
        %2565 = vst.msk [vmem:[%s2562 + $0x8] sm:$0xf] %vm1113, %v2471
        %2566 = vst.msk [vmem:[%s2562 + $0xc] sm:$0xf] %vm1113, %v2473
        %2567 = vst.msk [vmem:[%s2562 + $0x10] sm:$0xf] %vm1113, %v2475
        %2568 = vst.msk [vmem:[%s2562 + $0x14] sm:$0xf] %vm1113, %v2477
        %2569 = vst.msk [vmem:[%s2562 + $0x18] sm:$0xf] %vm1113, %v2479
        %2570 = vst.msk [vmem:[%s2562 + $0x1c] sm:$0xf] %vm1113, %v2481
        %2571 = vst.msk [vmem:[%s2562 + $0x20] sm:$0xf] %vm1113, %v2483
        %2572 = vst.msk [vmem:[%s2562 + $0x24] sm:$0xf] %vm1113, %v2485
        %2573 = vst.msk [vmem:[%s2562 + $0x28] sm:$0xf] %vm1113, %v2487
        %2574 = vst.msk [vmem:[%s2562 + $0x2c] sm:$0xf] %vm1113, %v2489
        %2575 = vst.msk [vmem:[%s2562 + $0x30] sm:$0xf] %vm1113, %v2491
        %2576 = vst.msk [vmem:[%s2562 + $0x34] sm:$0xf] %vm1113, %v2493
        %2577 = vst.msk [vmem:[%s2562 + $0x38] sm:$0xf] %vm1113, %v2495
        %2578 = vst.msk [vmem:[%s2562 + $0x3c] sm:$0xf] %vm1113, %v2497
        %2579 = vst.msk [vmem:[%s2562 + $0x40] sm:$0xf] %vm1113, %v2499
        %2580 = vst.msk [vmem:[%s2562 + $0x44] sm:$0xf] %vm1113, %v2501
        %2581 = vst.msk [vmem:[%s2562 + $0x48] sm:$0xf] %vm1113, %v2503
        %2582 = vst.msk [vmem:[%s2562 + $0x4c] sm:$0xf] %vm1113, %v2505
        %2583 = vst.msk [vmem:[%s2562 + $0x50] sm:$0xf] %vm1113, %v2507
        %2584 = vst.msk [vmem:[%s2562 + $0x54] sm:$0xf] %vm1113, %v2509
        %2585 = vst.msk [vmem:[%s2562 + $0x58] sm:$0xf] %vm1113, %v2511
        %2586 = vst.msk [vmem:[%s2562 + $0x5c] sm:$0xf] %vm1113, %v2513
        %2587 = vst.msk [vmem:[%s2562 + $0x60] sm:$0xf] %vm1113, %v2515
        %2588 = vst.msk [vmem:[%s2562 + $0x64] sm:$0xf] %vm1113, %v2517
        %2589 = vst.msk [vmem:[%s2562 + $0x68] sm:$0xf] %vm1113, %v2519
        %2590 = vst.msk [vmem:[%s2562 + $0x6c] sm:$0xf] %vm1113, %v2521
        %2591 = vst.msk [vmem:[%s2562 + $0x70] sm:$0xf] %vm1113, %v2523
        %2592 = vst.msk [vmem:[%s2562 + $0x74] sm:$0xf] %vm1113, %v2525
        %2593 = vst.msk [vmem:[%s2562 + $0x78] sm:$0xf] %vm1113, %v2527
        %2594 = vst.msk [vmem:[%s2562 + $0x7c] sm:$0xf] %vm1113, %v2529
        %s2595 = sand.u32 %s113, 1
        %s2596 = sand.u32 %s113, 1
        %s2597 = smul.addr %s2596, 512
        %s2598 = scalar_lea.vmem [#allocation6], %s2597
        %s2599 = sand.u32 %s141, 1
        %s2600 = sand.u32 %s141, 1
        %s2601 = smul.addr %s2600, 512
        %s2602 = scalar_lea.vmem [#allocation7], %s2601
        %s2603 = sand.u32 %s169, 1
        %s2604 = sand.u32 %s169, 1
        %s2605 = smul.addr %s2604, 512
        %s2606 = scalar_lea.vmem [#allocation8], %s2605
        // Predicated region
        $region41: #{tpu_custom_call.1} parent=31 // pred_check
          %p2607 = pneg %p123
        $region42: #{tpu_custom_call.1} parent=31 // pred_check_branch
          %2609 = sbr.rel (%p2607) target = $region44
        $region43: #{tpu_custom_call.1} parent=31 // pred_region
          %s2610 = smul.u32 32, %s26
          %s2611 = smul.addr %s25, 256
          %s2612 = sadd.s32 %s2610, %s2611
          %s2613 = smul.addr %s2612, 4
          %s2614 = scalar_lea.vmem %s3, %s2613
          // Predicated region
          $region45: #{tpu_custom_call.1} parent=43 // pred_check
            _
          $region46: #{tpu_custom_call.1} parent=43 // pred_check_branch
            %2616 = sbr.rel (0) target = $region48
          $region47: #{tpu_custom_call.1} parent=43 // pred_region
            // Predicated region
            $region49: #{tpu_custom_call.1} parent=47 // pred_check
              _
            $region50: #{tpu_custom_call.1} parent=47 // pred_check_branch
              %2618 = sbr.rel target = $region52
            $region51: #{tpu_custom_call.1} parent=47 // pred_region
              // Predicated region
              $region64: #{tpu_custom_call.1} parent=51 // pred_check
                _
              $region65: #{tpu_custom_call.1} parent=51 // pred_check_branch
                %2887 = sbr.rel (0) target = $region67
              $region66: #{tpu_custom_call.1} parent=51 // pred_region
                loop: start=0, step=1, limit=1
                $region68: #{tpu_custom_call.1} parent=66 // loop_pre_header
                  _
                $region69: #{tpu_custom_call.1} parent=66 // loop_header
                  %s2889 = sphi 0, %s2893
                  %p2890 = scmp.ge.s32.totalorder %s2889, 1
                  %s2894 = sphi %s2598, %s2598
                  %s2895 = sphi %s2614, %s2614
                $region70: #{tpu_custom_call.1} parent=66 // loop_header_branch
                  %2892 = sbr.rel (%p2890) target = $region74
                $region71: #{tpu_custom_call.1} parent=66 // loop_body
                  _
                $region72: #{tpu_custom_call.1} parent=66 // loop_footer
                  %s2893 = sadd.s32 1, %s2889
                $region73: #{tpu_custom_call.1} parent=66 // loop_footer_branch
                  %2888 = sbr.rel target = $region69
                $region74: #{tpu_custom_call.1} parent=66 // loop_exit
                  _
                loop: start=0, step=1, limit=1
                $region75: #{tpu_custom_call.1} parent=66 // loop_pre_header
                  _
                $region76: #{tpu_custom_call.1} parent=66 // loop_header
                  %s2898 = sphi 0, %s2902
                  %p2899 = scmp.ge.s32.totalorder %s2898, 1
                  %s2903 = sphi %s2598, %s2598
                  %s2904 = sphi %s2614, %s2614
                $region77: #{tpu_custom_call.1} parent=66 // loop_header_branch
                  %2901 = sbr.rel (%p2899) target = $region81
                $region78: #{tpu_custom_call.1} parent=66 // loop_body
                  %v2905 = vld [vmem:[%s2903] sm:$0xf]
                  %2906 = vst [vmem:[%s2904] sm:$0xf] %v2905
                  %v2907 = vld [vmem:[%s2903 + $0x4] sm:$0xf]
                  %2908 = vst [vmem:[%s2904 + $0x4] sm:$0xf] %v2907
                  %v2909 = vld [vmem:[%s2903 + $0x8] sm:$0xf]
                  %2910 = vst [vmem:[%s2904 + $0x8] sm:$0xf] %v2909
                  %v2911 = vld [vmem:[%s2903 + $0xc] sm:$0xf]
                  %2912 = vst [vmem:[%s2904 + $0xc] sm:$0xf] %v2911
                  %v2913 = vld [vmem:[%s2903 + $0x10] sm:$0xf]
                  %2914 = vst [vmem:[%s2904 + $0x10] sm:$0xf] %v2913
                  %v2915 = vld [vmem:[%s2903 + $0x14] sm:$0xf]
                  %2916 = vst [vmem:[%s2904 + $0x14] sm:$0xf] %v2915
                  %v2917 = vld [vmem:[%s2903 + $0x18] sm:$0xf]
                  %2918 = vst [vmem:[%s2904 + $0x18] sm:$0xf] %v2917
                  %v2919 = vld [vmem:[%s2903 + $0x1c] sm:$0xf]
                  %2920 = vst [vmem:[%s2904 + $0x1c] sm:$0xf] %v2919
                  %v2921 = vld [vmem:[%s2903 + $0x20] sm:$0xf]
                  %2922 = vst [vmem:[%s2904 + $0x20] sm:$0xf] %v2921
                  %v2923 = vld [vmem:[%s2903 + $0x24] sm:$0xf]
                  %2924 = vst [vmem:[%s2904 + $0x24] sm:$0xf] %v2923
                  %v2925 = vld [vmem:[%s2903 + $0x28] sm:$0xf]
                  %2926 = vst [vmem:[%s2904 + $0x28] sm:$0xf] %v2925
                  %v2927 = vld [vmem:[%s2903 + $0x2c] sm:$0xf]
                  %2928 = vst [vmem:[%s2904 + $0x2c] sm:$0xf] %v2927
                  %v2929 = vld [vmem:[%s2903 + $0x30] sm:$0xf]
                  %2930 = vst [vmem:[%s2904 + $0x30] sm:$0xf] %v2929
                  %v2931 = vld [vmem:[%s2903 + $0x34] sm:$0xf]
                  %2932 = vst [vmem:[%s2904 + $0x34] sm:$0xf] %v2931
                  %v2933 = vld [vmem:[%s2903 + $0x38] sm:$0xf]
                  %2934 = vst [vmem:[%s2904 + $0x38] sm:$0xf] %v2933
                  %v2935 = vld [vmem:[%s2903 + $0x3c] sm:$0xf]
                  %2936 = vst [vmem:[%s2904 + $0x3c] sm:$0xf] %v2935
                  %v2937 = vld [vmem:[%s2903 + $0x40] sm:$0xf]
                  %2938 = vst [vmem:[%s2904 + $0x40] sm:$0xf] %v2937
                  %v2939 = vld [vmem:[%s2903 + $0x44] sm:$0xf]
                  %2940 = vst [vmem:[%s2904 + $0x44] sm:$0xf] %v2939
                  %v2941 = vld [vmem:[%s2903 + $0x48] sm:$0xf]
                  %2942 = vst [vmem:[%s2904 + $0x48] sm:$0xf] %v2941
                  %v2943 = vld [vmem:[%s2903 + $0x4c] sm:$0xf]
                  %2944 = vst [vmem:[%s2904 + $0x4c] sm:$0xf] %v2943
                  %v2945 = vld [vmem:[%s2903 + $0x50] sm:$0xf]
                  %2946 = vst [vmem:[%s2904 + $0x50] sm:$0xf] %v2945
                  %v2947 = vld [vmem:[%s2903 + $0x54] sm:$0xf]
                  %2948 = vst [vmem:[%s2904 + $0x54] sm:$0xf] %v2947
                  %v2949 = vld [vmem:[%s2903 + $0x58] sm:$0xf]
                  %2950 = vst [vmem:[%s2904 + $0x58] sm:$0xf] %v2949
                  %v2951 = vld [vmem:[%s2903 + $0x5c] sm:$0xf]
                  %2952 = vst [vmem:[%s2904 + $0x5c] sm:$0xf] %v2951
                  %v2953 = vld [vmem:[%s2903 + $0x60] sm:$0xf]
                  %2954 = vst [vmem:[%s2904 + $0x60] sm:$0xf] %v2953
                  %v2955 = vld [vmem:[%s2903 + $0x64] sm:$0xf]
                  %2956 = vst [vmem:[%s2904 + $0x64] sm:$0xf] %v2955
                  %v2957 = vld [vmem:[%s2903 + $0x68] sm:$0xf]
                  %2958 = vst [vmem:[%s2904 + $0x68] sm:$0xf] %v2957
                  %v2959 = vld [vmem:[%s2903 + $0x6c] sm:$0xf]
                  %2960 = vst [vmem:[%s2904 + $0x6c] sm:$0xf] %v2959
                  %v2961 = vld [vmem:[%s2903 + $0x70] sm:$0xf]
                  %2962 = vst [vmem:[%s2904 + $0x70] sm:$0xf] %v2961
                  %v2963 = vld [vmem:[%s2903 + $0x74] sm:$0xf]
                  %2964 = vst [vmem:[%s2904 + $0x74] sm:$0xf] %v2963
                  %v2965 = vld [vmem:[%s2903 + $0x78] sm:$0xf]
                  %2966 = vst [vmem:[%s2904 + $0x78] sm:$0xf] %v2965
                  %v2967 = vld [vmem:[%s2903 + $0x7c] sm:$0xf]
                  %2968 = vst [vmem:[%s2904 + $0x7c] sm:$0xf] %v2967
                  %v2969 = vld [vmem:[%s2903 + $0x80] sm:$0xf]
                  %2970 = vst [vmem:[%s2904 + $0x100] sm:$0xf] %v2969
                  %v2971 = vld [vmem:[%s2903 + $0x84] sm:$0xf]
                  %2972 = vst [vmem:[%s2904 + $0x104] sm:$0xf] %v2971
                  %v2973 = vld [vmem:[%s2903 + $0x88] sm:$0xf]
                  %2974 = vst [vmem:[%s2904 + $0x108] sm:$0xf] %v2973
                  %v2975 = vld [vmem:[%s2903 + $0x8c] sm:$0xf]
                  %2976 = vst [vmem:[%s2904 + $0x10c] sm:$0xf] %v2975
                  %v2977 = vld [vmem:[%s2903 + $0x90] sm:$0xf]
                  %2978 = vst [vmem:[%s2904 + $0x110] sm:$0xf] %v2977
                  %v2979 = vld [vmem:[%s2903 + $0x94] sm:$0xf]
                  %2980 = vst [vmem:[%s2904 + $0x114] sm:$0xf] %v2979
                  %v2981 = vld [vmem:[%s2903 + $0x98] sm:$0xf]
                  %2982 = vst [vmem:[%s2904 + $0x118] sm:$0xf] %v2981
                  %v2983 = vld [vmem:[%s2903 + $0x9c] sm:$0xf]
                  %2984 = vst [vmem:[%s2904 + $0x11c] sm:$0xf] %v2983
                  %v2985 = vld [vmem:[%s2903 + $0xa0] sm:$0xf]
                  %2986 = vst [vmem:[%s2904 + $0x120] sm:$0xf] %v2985
                  %v2987 = vld [vmem:[%s2903 + $0xa4] sm:$0xf]
                  %2988 = vst [vmem:[%s2904 + $0x124] sm:$0xf] %v2987
                  %v2989 = vld [vmem:[%s2903 + $0xa8] sm:$0xf]
                  %2990 = vst [vmem:[%s2904 + $0x128] sm:$0xf] %v2989
                  %v2991 = vld [vmem:[%s2903 + $0xac] sm:$0xf]
                  %2992 = vst [vmem:[%s2904 + $0x12c] sm:$0xf] %v2991
                  %v2993 = vld [vmem:[%s2903 + $0xb0] sm:$0xf]
                  %2994 = vst [vmem:[%s2904 + $0x130] sm:$0xf] %v2993
                  %v2995 = vld [vmem:[%s2903 + $0xb4] sm:$0xf]
                  %2996 = vst [vmem:[%s2904 + $0x134] sm:$0xf] %v2995
                  %v2997 = vld [vmem:[%s2903 + $0xb8] sm:$0xf]
                  %2998 = vst [vmem:[%s2904 + $0x138] sm:$0xf] %v2997
                  %v2999 = vld [vmem:[%s2903 + $0xbc] sm:$0xf]
                  %3000 = vst [vmem:[%s2904 + $0x13c] sm:$0xf] %v2999
                  %v3001 = vld [vmem:[%s2903 + $0xc0] sm:$0xf]
                  %3002 = vst [vmem:[%s2904 + $0x140] sm:$0xf] %v3001
                  %v3003 = vld [vmem:[%s2903 + $0xc4] sm:$0xf]
                  %3004 = vst [vmem:[%s2904 + $0x144] sm:$0xf] %v3003
                  %v3005 = vld [vmem:[%s2903 + $0xc8] sm:$0xf]
                  %3006 = vst [vmem:[%s2904 + $0x148] sm:$0xf] %v3005
                  %v3007 = vld [vmem:[%s2903 + $0xcc] sm:$0xf]
                  %3008 = vst [vmem:[%s2904 + $0x14c] sm:$0xf] %v3007
                  %v3009 = vld [vmem:[%s2903 + $0xd0] sm:$0xf]
                  %3010 = vst [vmem:[%s2904 + $0x150] sm:$0xf] %v3009
                  %v3011 = vld [vmem:[%s2903 + $0xd4] sm:$0xf]
                  %3012 = vst [vmem:[%s2904 + $0x154] sm:$0xf] %v3011
                  %v3013 = vld [vmem:[%s2903 + $0xd8] sm:$0xf]
                  %3014 = vst [vmem:[%s2904 + $0x158] sm:$0xf] %v3013
                  %v3015 = vld [vmem:[%s2903 + $0xdc] sm:$0xf]
                  %3016 = vst [vmem:[%s2904 + $0x15c] sm:$0xf] %v3015
                  %v3017 = vld [vmem:[%s2903 + $0xe0] sm:$0xf]
                  %3018 = vst [vmem:[%s2904 + $0x160] sm:$0xf] %v3017
                  %v3019 = vld [vmem:[%s2903 + $0xe4] sm:$0xf]
                  %3020 = vst [vmem:[%s2904 + $0x164] sm:$0xf] %v3019
                  %v3021 = vld [vmem:[%s2903 + $0xe8] sm:$0xf]
                  %3022 = vst [vmem:[%s2904 + $0x168] sm:$0xf] %v3021
                  %v3023 = vld [vmem:[%s2903 + $0xec] sm:$0xf]
                  %3024 = vst [vmem:[%s2904 + $0x16c] sm:$0xf] %v3023
                  %v3025 = vld [vmem:[%s2903 + $0xf0] sm:$0xf]
                  %3026 = vst [vmem:[%s2904 + $0x170] sm:$0xf] %v3025
                  %v3027 = vld [vmem:[%s2903 + $0xf4] sm:$0xf]
                  %3028 = vst [vmem:[%s2904 + $0x174] sm:$0xf] %v3027
                  %v3029 = vld [vmem:[%s2903 + $0xf8] sm:$0xf]
                  %3030 = vst [vmem:[%s2904 + $0x178] sm:$0xf] %v3029
                  %v3031 = vld [vmem:[%s2903 + $0xfc] sm:$0xf]
                  %3032 = vst [vmem:[%s2904 + $0x17c] sm:$0xf] %v3031
                  %v3033 = vld [vmem:[%s2903 + $0x100] sm:$0xf]
                  %3034 = vst [vmem:[%s2904 + $0x200] sm:$0xf] %v3033
                  %v3035 = vld [vmem:[%s2903 + $0x104] sm:$0xf]
                  %3036 = vst [vmem:[%s2904 + $0x204] sm:$0xf] %v3035
                  %v3037 = vld [vmem:[%s2903 + $0x108] sm:$0xf]
                  %3038 = vst [vmem:[%s2904 + $0x208] sm:$0xf] %v3037
                  %v3039 = vld [vmem:[%s2903 + $0x10c] sm:$0xf]
                  %3040 = vst [vmem:[%s2904 + $0x20c] sm:$0xf] %v3039
                  %v3041 = vld [vmem:[%s2903 + $0x110] sm:$0xf]
                  %3042 = vst [vmem:[%s2904 + $0x210] sm:$0xf] %v3041
                  %v3043 = vld [vmem:[%s2903 + $0x114] sm:$0xf]
                  %3044 = vst [vmem:[%s2904 + $0x214] sm:$0xf] %v3043
                  %v3045 = vld [vmem:[%s2903 + $0x118] sm:$0xf]
                  %3046 = vst [vmem:[%s2904 + $0x218] sm:$0xf] %v3045
                  %v3047 = vld [vmem:[%s2903 + $0x11c] sm:$0xf]
                  %3048 = vst [vmem:[%s2904 + $0x21c] sm:$0xf] %v3047
                  %v3049 = vld [vmem:[%s2903 + $0x120] sm:$0xf]
                  %3050 = vst [vmem:[%s2904 + $0x220] sm:$0xf] %v3049
                  %v3051 = vld [vmem:[%s2903 + $0x124] sm:$0xf]
                  %3052 = vst [vmem:[%s2904 + $0x224] sm:$0xf] %v3051
                  %v3053 = vld [vmem:[%s2903 + $0x128] sm:$0xf]
                  %3054 = vst [vmem:[%s2904 + $0x228] sm:$0xf] %v3053
                  %v3055 = vld [vmem:[%s2903 + $0x12c] sm:$0xf]
                  %3056 = vst [vmem:[%s2904 + $0x22c] sm:$0xf] %v3055
                  %v3057 = vld [vmem:[%s2903 + $0x130] sm:$0xf]
                  %3058 = vst [vmem:[%s2904 + $0x230] sm:$0xf] %v3057
                  %v3059 = vld [vmem:[%s2903 + $0x134] sm:$0xf]
                  %3060 = vst [vmem:[%s2904 + $0x234] sm:$0xf] %v3059
                  %v3061 = vld [vmem:[%s2903 + $0x138] sm:$0xf]
                  %3062 = vst [vmem:[%s2904 + $0x238] sm:$0xf] %v3061
                  %v3063 = vld [vmem:[%s2903 + $0x13c] sm:$0xf]
                  %3064 = vst [vmem:[%s2904 + $0x23c] sm:$0xf] %v3063
                  %v3065 = vld [vmem:[%s2903 + $0x140] sm:$0xf]
                  %3066 = vst [vmem:[%s2904 + $0x240] sm:$0xf] %v3065
                  %v3067 = vld [vmem:[%s2903 + $0x144] sm:$0xf]
                  %3068 = vst [vmem:[%s2904 + $0x244] sm:$0xf] %v3067
                  %v3069 = vld [vmem:[%s2903 + $0x148] sm:$0xf]
                  %3070 = vst [vmem:[%s2904 + $0x248] sm:$0xf] %v3069
                  %v3071 = vld [vmem:[%s2903 + $0x14c] sm:$0xf]
                  %3072 = vst [vmem:[%s2904 + $0x24c] sm:$0xf] %v3071
                  %v3073 = vld [vmem:[%s2903 + $0x150] sm:$0xf]
                  %3074 = vst [vmem:[%s2904 + $0x250] sm:$0xf] %v3073
                  %v3075 = vld [vmem:[%s2903 + $0x154] sm:$0xf]
                  %3076 = vst [vmem:[%s2904 + $0x254] sm:$0xf] %v3075
                  %v3077 = vld [vmem:[%s2903 + $0x158] sm:$0xf]
                  %3078 = vst [vmem:[%s2904 + $0x258] sm:$0xf] %v3077
                  %v3079 = vld [vmem:[%s2903 + $0x15c] sm:$0xf]
                  %3080 = vst [vmem:[%s2904 + $0x25c] sm:$0xf] %v3079
                  %v3081 = vld [vmem:[%s2903 + $0x160] sm:$0xf]
                  %3082 = vst [vmem:[%s2904 + $0x260] sm:$0xf] %v3081
                  %v3083 = vld [vmem:[%s2903 + $0x164] sm:$0xf]
                  %3084 = vst [vmem:[%s2904 + $0x264] sm:$0xf] %v3083
                  %v3085 = vld [vmem:[%s2903 + $0x168] sm:$0xf]
                  %3086 = vst [vmem:[%s2904 + $0x268] sm:$0xf] %v3085
                  %v3087 = vld [vmem:[%s2903 + $0x16c] sm:$0xf]
                  %3088 = vst [vmem:[%s2904 + $0x26c] sm:$0xf] %v3087
                  %v3089 = vld [vmem:[%s2903 + $0x170] sm:$0xf]
                  %3090 = vst [vmem:[%s2904 + $0x270] sm:$0xf] %v3089
                  %v3091 = vld [vmem:[%s2903 + $0x174] sm:$0xf]
                  %3092 = vst [vmem:[%s2904 + $0x274] sm:$0xf] %v3091
                  %v3093 = vld [vmem:[%s2903 + $0x178] sm:$0xf]
                  %3094 = vst [vmem:[%s2904 + $0x278] sm:$0xf] %v3093
                  %v3095 = vld [vmem:[%s2903 + $0x17c] sm:$0xf]
                  %3096 = vst [vmem:[%s2904 + $0x27c] sm:$0xf] %v3095
                  %v3097 = vld [vmem:[%s2903 + $0x180] sm:$0xf]
                  %3098 = vst [vmem:[%s2904 + $0x300] sm:$0xf] %v3097
                  %v3099 = vld [vmem:[%s2903 + $0x184] sm:$0xf]
                  %3100 = vst [vmem:[%s2904 + $0x304] sm:$0xf] %v3099
                  %v3101 = vld [vmem:[%s2903 + $0x188] sm:$0xf]
                  %3102 = vst [vmem:[%s2904 + $0x308] sm:$0xf] %v3101
                  %v3103 = vld [vmem:[%s2903 + $0x18c] sm:$0xf]
                  %3104 = vst [vmem:[%s2904 + $0x30c] sm:$0xf] %v3103
                  %v3105 = vld [vmem:[%s2903 + $0x190] sm:$0xf]
                  %3106 = vst [vmem:[%s2904 + $0x310] sm:$0xf] %v3105
                  %v3107 = vld [vmem:[%s2903 + $0x194] sm:$0xf]
                  %3108 = vst [vmem:[%s2904 + $0x314] sm:$0xf] %v3107
                  %v3109 = vld [vmem:[%s2903 + $0x198] sm:$0xf]
                  %3110 = vst [vmem:[%s2904 + $0x318] sm:$0xf] %v3109
                  %v3111 = vld [vmem:[%s2903 + $0x19c] sm:$0xf]
                  %3112 = vst [vmem:[%s2904 + $0x31c] sm:$0xf] %v3111
                  %v3113 = vld [vmem:[%s2903 + $0x1a0] sm:$0xf]
                  %3114 = vst [vmem:[%s2904 + $0x320] sm:$0xf] %v3113
                  %v3115 = vld [vmem:[%s2903 + $0x1a4] sm:$0xf]
                  %3116 = vst [vmem:[%s2904 + $0x324] sm:$0xf] %v3115
                  %v3117 = vld [vmem:[%s2903 + $0x1a8] sm:$0xf]
                  %3118 = vst [vmem:[%s2904 + $0x328] sm:$0xf] %v3117
                  %v3119 = vld [vmem:[%s2903 + $0x1ac] sm:$0xf]
                  %3120 = vst [vmem:[%s2904 + $0x32c] sm:$0xf] %v3119
                  %v3121 = vld [vmem:[%s2903 + $0x1b0] sm:$0xf]
                  %3122 = vst [vmem:[%s2904 + $0x330] sm:$0xf] %v3121
                  %v3123 = vld [vmem:[%s2903 + $0x1b4] sm:$0xf]
                  %3124 = vst [vmem:[%s2904 + $0x334] sm:$0xf] %v3123
                  %v3125 = vld [vmem:[%s2903 + $0x1b8] sm:$0xf]
                  %3126 = vst [vmem:[%s2904 + $0x338] sm:$0xf] %v3125
                  %v3127 = vld [vmem:[%s2903 + $0x1bc] sm:$0xf]
                  %3128 = vst [vmem:[%s2904 + $0x33c] sm:$0xf] %v3127
                  %v3129 = vld [vmem:[%s2903 + $0x1c0] sm:$0xf]
                  %3130 = vst [vmem:[%s2904 + $0x340] sm:$0xf] %v3129
                  %v3131 = vld [vmem:[%s2903 + $0x1c4] sm:$0xf]
                  %3132 = vst [vmem:[%s2904 + $0x344] sm:$0xf] %v3131
                  %v3133 = vld [vmem:[%s2903 + $0x1c8] sm:$0xf]
                  %3134 = vst [vmem:[%s2904 + $0x348] sm:$0xf] %v3133
                  %v3135 = vld [vmem:[%s2903 + $0x1cc] sm:$0xf]
                  %3136 = vst [vmem:[%s2904 + $0x34c] sm:$0xf] %v3135
                  %v3137 = vld [vmem:[%s2903 + $0x1d0] sm:$0xf]
                  %3138 = vst [vmem:[%s2904 + $0x350] sm:$0xf] %v3137
                  %v3139 = vld [vmem:[%s2903 + $0x1d4] sm:$0xf]
                  %3140 = vst [vmem:[%s2904 + $0x354] sm:$0xf] %v3139
                  %v3141 = vld [vmem:[%s2903 + $0x1d8] sm:$0xf]
                  %3142 = vst [vmem:[%s2904 + $0x358] sm:$0xf] %v3141
                  %v3143 = vld [vmem:[%s2903 + $0x1dc] sm:$0xf]
                  %3144 = vst [vmem:[%s2904 + $0x35c] sm:$0xf] %v3143
                  %v3145 = vld [vmem:[%s2903 + $0x1e0] sm:$0xf]
                  %3146 = vst [vmem:[%s2904 + $0x360] sm:$0xf] %v3145
                  %v3147 = vld [vmem:[%s2903 + $0x1e4] sm:$0xf]
                  %3148 = vst [vmem:[%s2904 + $0x364] sm:$0xf] %v3147
                  %v3149 = vld [vmem:[%s2903 + $0x1e8] sm:$0xf]
                  %3150 = vst [vmem:[%s2904 + $0x368] sm:$0xf] %v3149
                  %v3151 = vld [vmem:[%s2903 + $0x1ec] sm:$0xf]
                  %3152 = vst [vmem:[%s2904 + $0x36c] sm:$0xf] %v3151
                  %v3153 = vld [vmem:[%s2903 + $0x1f0] sm:$0xf]
                  %3154 = vst [vmem:[%s2904 + $0x370] sm:$0xf] %v3153
                  %v3155 = vld [vmem:[%s2903 + $0x1f4] sm:$0xf]
                  %3156 = vst [vmem:[%s2904 + $0x374] sm:$0xf] %v3155
                  %v3157 = vld [vmem:[%s2903 + $0x1f8] sm:$0xf]
                  %3158 = vst [vmem:[%s2904 + $0x378] sm:$0xf] %v3157
                  %v3159 = vld [vmem:[%s2903 + $0x1fc] sm:$0xf]
                  %3160 = vst [vmem:[%s2904 + $0x37c] sm:$0xf] %v3159
                $region79: #{tpu_custom_call.1} parent=66 // loop_footer
                  %s2902 = sadd.s32 1, %s2898
                $region80: #{tpu_custom_call.1} parent=66 // loop_footer_branch
                  %2897 = sbr.rel target = $region76
                $region81: #{tpu_custom_call.1} parent=66 // loop_exit
                  _
              $region67: #{tpu_custom_call.1} parent=51 // pred_fallthru
                _
            $region52: #{tpu_custom_call.1} parent=47 // pred_fallthru
              _
            // Predicated region
            $region53: #{tpu_custom_call.1} parent=47 // pred_check
              _
            $region54: #{tpu_custom_call.1} parent=47 // pred_check_branch
              %2620 = sbr.rel (0) target = $region56
            $region55: #{tpu_custom_call.1} parent=47 // pred_region
              loop: start=0, step=1, limit=1
              $region57: #{tpu_custom_call.1} parent=55 // loop_pre_header
                _
              $region58: #{tpu_custom_call.1} parent=55 // loop_header
                %s2623 = sphi 0, %s2627
                %p2624 = scmp.ge.s32.totalorder %s2623, 1
                %s2628 = sphi %s2598, %s2598
                %s2629 = sphi %s2614, %s2614
              $region59: #{tpu_custom_call.1} parent=55 // loop_header_branch
                %2626 = sbr.rel (%p2624) target = $region63
              $region60: #{tpu_custom_call.1} parent=55 // loop_body
                %v2630 = vld [vmem:[%s2628] sm:$0xf]
                %2631 = vst [vmem:[%s2629] sm:$0xf] %v2630
                %v2632 = vld [vmem:[%s2628 + $0x4] sm:$0xf]
                %2633 = vst [vmem:[%s2629 + $0x4] sm:$0xf] %v2632
                %v2634 = vld [vmem:[%s2628 + $0x8] sm:$0xf]
                %2635 = vst [vmem:[%s2629 + $0x8] sm:$0xf] %v2634
                %v2636 = vld [vmem:[%s2628 + $0xc] sm:$0xf]
                %2637 = vst [vmem:[%s2629 + $0xc] sm:$0xf] %v2636
                %v2638 = vld [vmem:[%s2628 + $0x10] sm:$0xf]
                %2639 = vst [vmem:[%s2629 + $0x10] sm:$0xf] %v2638
                %v2640 = vld [vmem:[%s2628 + $0x14] sm:$0xf]
                %2641 = vst [vmem:[%s2629 + $0x14] sm:$0xf] %v2640
                %v2642 = vld [vmem:[%s2628 + $0x18] sm:$0xf]
                %2643 = vst [vmem:[%s2629 + $0x18] sm:$0xf] %v2642
                %v2644 = vld [vmem:[%s2628 + $0x1c] sm:$0xf]
                %2645 = vst [vmem:[%s2629 + $0x1c] sm:$0xf] %v2644
                %v2646 = vld [vmem:[%s2628 + $0x20] sm:$0xf]
                %2647 = vst [vmem:[%s2629 + $0x20] sm:$0xf] %v2646
                %v2648 = vld [vmem:[%s2628 + $0x24] sm:$0xf]
                %2649 = vst [vmem:[%s2629 + $0x24] sm:$0xf] %v2648
                %v2650 = vld [vmem:[%s2628 + $0x28] sm:$0xf]
                %2651 = vst [vmem:[%s2629 + $0x28] sm:$0xf] %v2650
                %v2652 = vld [vmem:[%s2628 + $0x2c] sm:$0xf]
                %2653 = vst [vmem:[%s2629 + $0x2c] sm:$0xf] %v2652
                %v2654 = vld [vmem:[%s2628 + $0x30] sm:$0xf]
                %2655 = vst [vmem:[%s2629 + $0x30] sm:$0xf] %v2654
                %v2656 = vld [vmem:[%s2628 + $0x34] sm:$0xf]
                %2657 = vst [vmem:[%s2629 + $0x34] sm:$0xf] %v2656
                %v2658 = vld [vmem:[%s2628 + $0x38] sm:$0xf]
                %2659 = vst [vmem:[%s2629 + $0x38] sm:$0xf] %v2658
                %v2660 = vld [vmem:[%s2628 + $0x3c] sm:$0xf]
                %2661 = vst [vmem:[%s2629 + $0x3c] sm:$0xf] %v2660
                %v2662 = vld [vmem:[%s2628 + $0x40] sm:$0xf]
                %2663 = vst [vmem:[%s2629 + $0x40] sm:$0xf] %v2662
                %v2664 = vld [vmem:[%s2628 + $0x44] sm:$0xf]
                %2665 = vst [vmem:[%s2629 + $0x44] sm:$0xf] %v2664
                %v2666 = vld [vmem:[%s2628 + $0x48] sm:$0xf]
                %2667 = vst [vmem:[%s2629 + $0x48] sm:$0xf] %v2666
                %v2668 = vld [vmem:[%s2628 + $0x4c] sm:$0xf]
                %2669 = vst [vmem:[%s2629 + $0x4c] sm:$0xf] %v2668
                %v2670 = vld [vmem:[%s2628 + $0x50] sm:$0xf]
                %2671 = vst [vmem:[%s2629 + $0x50] sm:$0xf] %v2670
                %v2672 = vld [vmem:[%s2628 + $0x54] sm:$0xf]
                %2673 = vst [vmem:[%s2629 + $0x54] sm:$0xf] %v2672
                %v2674 = vld [vmem:[%s2628 + $0x58] sm:$0xf]
                %2675 = vst [vmem:[%s2629 + $0x58] sm:$0xf] %v2674
                %v2676 = vld [vmem:[%s2628 + $0x5c] sm:$0xf]
                %2677 = vst [vmem:[%s2629 + $0x5c] sm:$0xf] %v2676
                %v2678 = vld [vmem:[%s2628 + $0x60] sm:$0xf]
                %2679 = vst [vmem:[%s2629 + $0x60] sm:$0xf] %v2678
                %v2680 = vld [vmem:[%s2628 + $0x64] sm:$0xf]
                %2681 = vst [vmem:[%s2629 + $0x64] sm:$0xf] %v2680
                %v2682 = vld [vmem:[%s2628 + $0x68] sm:$0xf]
                %2683 = vst [vmem:[%s2629 + $0x68] sm:$0xf] %v2682
                %v2684 = vld [vmem:[%s2628 + $0x6c] sm:$0xf]
                %2685 = vst [vmem:[%s2629 + $0x6c] sm:$0xf] %v2684
                %v2686 = vld [vmem:[%s2628 + $0x70] sm:$0xf]
                %2687 = vst [vmem:[%s2629 + $0x70] sm:$0xf] %v2686
                %v2688 = vld [vmem:[%s2628 + $0x74] sm:$0xf]
                %2689 = vst [vmem:[%s2629 + $0x74] sm:$0xf] %v2688
                %v2690 = vld [vmem:[%s2628 + $0x78] sm:$0xf]
                %2691 = vst [vmem:[%s2629 + $0x78] sm:$0xf] %v2690
                %v2692 = vld [vmem:[%s2628 + $0x7c] sm:$0xf]
                %2693 = vst [vmem:[%s2629 + $0x7c] sm:$0xf] %v2692
                %v2694 = vld [vmem:[%s2628 + $0x80] sm:$0xf]
                %2695 = vst [vmem:[%s2629 + $0x100] sm:$0xf] %v2694
                %v2696 = vld [vmem:[%s2628 + $0x84] sm:$0xf]
                %2697 = vst [vmem:[%s2629 + $0x104] sm:$0xf] %v2696
                %v2698 = vld [vmem:[%s2628 + $0x88] sm:$0xf]
                %2699 = vst [vmem:[%s2629 + $0x108] sm:$0xf] %v2698
                %v2700 = vld [vmem:[%s2628 + $0x8c] sm:$0xf]
                %2701 = vst [vmem:[%s2629 + $0x10c] sm:$0xf] %v2700
                %v2702 = vld [vmem:[%s2628 + $0x90] sm:$0xf]
                %2703 = vst [vmem:[%s2629 + $0x110] sm:$0xf] %v2702
                %v2704 = vld [vmem:[%s2628 + $0x94] sm:$0xf]
                %2705 = vst [vmem:[%s2629 + $0x114] sm:$0xf] %v2704
                %v2706 = vld [vmem:[%s2628 + $0x98] sm:$0xf]
                %2707 = vst [vmem:[%s2629 + $0x118] sm:$0xf] %v2706
                %v2708 = vld [vmem:[%s2628 + $0x9c] sm:$0xf]
                %2709 = vst [vmem:[%s2629 + $0x11c] sm:$0xf] %v2708
                %v2710 = vld [vmem:[%s2628 + $0xa0] sm:$0xf]
                %2711 = vst [vmem:[%s2629 + $0x120] sm:$0xf] %v2710
                %v2712 = vld [vmem:[%s2628 + $0xa4] sm:$0xf]
                %2713 = vst [vmem:[%s2629 + $0x124] sm:$0xf] %v2712
                %v2714 = vld [vmem:[%s2628 + $0xa8] sm:$0xf]
                %2715 = vst [vmem:[%s2629 + $0x128] sm:$0xf] %v2714
                %v2716 = vld [vmem:[%s2628 + $0xac] sm:$0xf]
                %2717 = vst [vmem:[%s2629 + $0x12c] sm:$0xf] %v2716
                %v2718 = vld [vmem:[%s2628 + $0xb0] sm:$0xf]
                %2719 = vst [vmem:[%s2629 + $0x130] sm:$0xf] %v2718
                %v2720 = vld [vmem:[%s2628 + $0xb4] sm:$0xf]
                %2721 = vst [vmem:[%s2629 + $0x134] sm:$0xf] %v2720
                %v2722 = vld [vmem:[%s2628 + $0xb8] sm:$0xf]
                %2723 = vst [vmem:[%s2629 + $0x138] sm:$0xf] %v2722
                %v2724 = vld [vmem:[%s2628 + $0xbc] sm:$0xf]
                %2725 = vst [vmem:[%s2629 + $0x13c] sm:$0xf] %v2724
                %v2726 = vld [vmem:[%s2628 + $0xc0] sm:$0xf]
                %2727 = vst [vmem:[%s2629 + $0x140] sm:$0xf] %v2726
                %v2728 = vld [vmem:[%s2628 + $0xc4] sm:$0xf]
                %2729 = vst [vmem:[%s2629 + $0x144] sm:$0xf] %v2728
                %v2730 = vld [vmem:[%s2628 + $0xc8] sm:$0xf]
                %2731 = vst [vmem:[%s2629 + $0x148] sm:$0xf] %v2730
                %v2732 = vld [vmem:[%s2628 + $0xcc] sm:$0xf]
                %2733 = vst [vmem:[%s2629 + $0x14c] sm:$0xf] %v2732
                %v2734 = vld [vmem:[%s2628 + $0xd0] sm:$0xf]
                %2735 = vst [vmem:[%s2629 + $0x150] sm:$0xf] %v2734
                %v2736 = vld [vmem:[%s2628 + $0xd4] sm:$0xf]
                %2737 = vst [vmem:[%s2629 + $0x154] sm:$0xf] %v2736
                %v2738 = vld [vmem:[%s2628 + $0xd8] sm:$0xf]
                %2739 = vst [vmem:[%s2629 + $0x158] sm:$0xf] %v2738
                %v2740 = vld [vmem:[%s2628 + $0xdc] sm:$0xf]
                %2741 = vst [vmem:[%s2629 + $0x15c] sm:$0xf] %v2740
                %v2742 = vld [vmem:[%s2628 + $0xe0] sm:$0xf]
                %2743 = vst [vmem:[%s2629 + $0x160] sm:$0xf] %v2742
                %v2744 = vld [vmem:[%s2628 + $0xe4] sm:$0xf]
                %2745 = vst [vmem:[%s2629 + $0x164] sm:$0xf] %v2744
                %v2746 = vld [vmem:[%s2628 + $0xe8] sm:$0xf]
                %2747 = vst [vmem:[%s2629 + $0x168] sm:$0xf] %v2746
                %v2748 = vld [vmem:[%s2628 + $0xec] sm:$0xf]
                %2749 = vst [vmem:[%s2629 + $0x16c] sm:$0xf] %v2748
                %v2750 = vld [vmem:[%s2628 + $0xf0] sm:$0xf]
                %2751 = vst [vmem:[%s2629 + $0x170] sm:$0xf] %v2750
                %v2752 = vld [vmem:[%s2628 + $0xf4] sm:$0xf]
                %2753 = vst [vmem:[%s2629 + $0x174] sm:$0xf] %v2752
                %v2754 = vld [vmem:[%s2628 + $0xf8] sm:$0xf]
                %2755 = vst [vmem:[%s2629 + $0x178] sm:$0xf] %v2754
                %v2756 = vld [vmem:[%s2628 + $0xfc] sm:$0xf]
                %2757 = vst [vmem:[%s2629 + $0x17c] sm:$0xf] %v2756
                %v2758 = vld [vmem:[%s2628 + $0x100] sm:$0xf]
                %2759 = vst [vmem:[%s2629 + $0x200] sm:$0xf] %v2758
                %v2760 = vld [vmem:[%s2628 + $0x104] sm:$0xf]
                %2761 = vst [vmem:[%s2629 + $0x204] sm:$0xf] %v2760
                %v2762 = vld [vmem:[%s2628 + $0x108] sm:$0xf]
                %2763 = vst [vmem:[%s2629 + $0x208] sm:$0xf] %v2762
                %v2764 = vld [vmem:[%s2628 + $0x10c] sm:$0xf]
                %2765 = vst [vmem:[%s2629 + $0x20c] sm:$0xf] %v2764
                %v2766 = vld [vmem:[%s2628 + $0x110] sm:$0xf]
                %2767 = vst [vmem:[%s2629 + $0x210] sm:$0xf] %v2766
                %v2768 = vld [vmem:[%s2628 + $0x114] sm:$0xf]
                %2769 = vst [vmem:[%s2629 + $0x214] sm:$0xf] %v2768
                %v2770 = vld [vmem:[%s2628 + $0x118] sm:$0xf]
                %2771 = vst [vmem:[%s2629 + $0x218] sm:$0xf] %v2770
                %v2772 = vld [vmem:[%s2628 + $0x11c] sm:$0xf]
                %2773 = vst [vmem:[%s2629 + $0x21c] sm:$0xf] %v2772
                %v2774 = vld [vmem:[%s2628 + $0x120] sm:$0xf]
                %2775 = vst [vmem:[%s2629 + $0x220] sm:$0xf] %v2774
                %v2776 = vld [vmem:[%s2628 + $0x124] sm:$0xf]
                %2777 = vst [vmem:[%s2629 + $0x224] sm:$0xf] %v2776
                %v2778 = vld [vmem:[%s2628 + $0x128] sm:$0xf]
                %2779 = vst [vmem:[%s2629 + $0x228] sm:$0xf] %v2778
                %v2780 = vld [vmem:[%s2628 + $0x12c] sm:$0xf]
                %2781 = vst [vmem:[%s2629 + $0x22c] sm:$0xf] %v2780
                %v2782 = vld [vmem:[%s2628 + $0x130] sm:$0xf]
                %2783 = vst [vmem:[%s2629 + $0x230] sm:$0xf] %v2782
                %v2784 = vld [vmem:[%s2628 + $0x134] sm:$0xf]
                %2785 = vst [vmem:[%s2629 + $0x234] sm:$0xf] %v2784
                %v2786 = vld [vmem:[%s2628 + $0x138] sm:$0xf]
                %2787 = vst [vmem:[%s2629 + $0x238] sm:$0xf] %v2786
                %v2788 = vld [vmem:[%s2628 + $0x13c] sm:$0xf]
                %2789 = vst [vmem:[%s2629 + $0x23c] sm:$0xf] %v2788
                %v2790 = vld [vmem:[%s2628 + $0x140] sm:$0xf]
                %2791 = vst [vmem:[%s2629 + $0x240] sm:$0xf] %v2790
                %v2792 = vld [vmem:[%s2628 + $0x144] sm:$0xf]
                %2793 = vst [vmem:[%s2629 + $0x244] sm:$0xf] %v2792
                %v2794 = vld [vmem:[%s2628 + $0x148] sm:$0xf]
                %2795 = vst [vmem:[%s2629 + $0x248] sm:$0xf] %v2794
                %v2796 = vld [vmem:[%s2628 + $0x14c] sm:$0xf]
                %2797 = vst [vmem:[%s2629 + $0x24c] sm:$0xf] %v2796
                %v2798 = vld [vmem:[%s2628 + $0x150] sm:$0xf]
                %2799 = vst [vmem:[%s2629 + $0x250] sm:$0xf] %v2798
                %v2800 = vld [vmem:[%s2628 + $0x154] sm:$0xf]
                %2801 = vst [vmem:[%s2629 + $0x254] sm:$0xf] %v2800
                %v2802 = vld [vmem:[%s2628 + $0x158] sm:$0xf]
                %2803 = vst [vmem:[%s2629 + $0x258] sm:$0xf] %v2802
                %v2804 = vld [vmem:[%s2628 + $0x15c] sm:$0xf]
                %2805 = vst [vmem:[%s2629 + $0x25c] sm:$0xf] %v2804
                %v2806 = vld [vmem:[%s2628 + $0x160] sm:$0xf]
                %2807 = vst [vmem:[%s2629 + $0x260] sm:$0xf] %v2806
                %v2808 = vld [vmem:[%s2628 + $0x164] sm:$0xf]
                %2809 = vst [vmem:[%s2629 + $0x264] sm:$0xf] %v2808
                %v2810 = vld [vmem:[%s2628 + $0x168] sm:$0xf]
                %2811 = vst [vmem:[%s2629 + $0x268] sm:$0xf] %v2810
                %v2812 = vld [vmem:[%s2628 + $0x16c] sm:$0xf]
                %2813 = vst [vmem:[%s2629 + $0x26c] sm:$0xf] %v2812
                %v2814 = vld [vmem:[%s2628 + $0x170] sm:$0xf]
                %2815 = vst [vmem:[%s2629 + $0x270] sm:$0xf] %v2814
                %v2816 = vld [vmem:[%s2628 + $0x174] sm:$0xf]
                %2817 = vst [vmem:[%s2629 + $0x274] sm:$0xf] %v2816
                %v2818 = vld [vmem:[%s2628 + $0x178] sm:$0xf]
                %2819 = vst [vmem:[%s2629 + $0x278] sm:$0xf] %v2818
                %v2820 = vld [vmem:[%s2628 + $0x17c] sm:$0xf]
                %2821 = vst [vmem:[%s2629 + $0x27c] sm:$0xf] %v2820
                %v2822 = vld [vmem:[%s2628 + $0x180] sm:$0xf]
                %2823 = vst [vmem:[%s2629 + $0x300] sm:$0xf] %v2822
                %v2824 = vld [vmem:[%s2628 + $0x184] sm:$0xf]
                %2825 = vst [vmem:[%s2629 + $0x304] sm:$0xf] %v2824
                %v2826 = vld [vmem:[%s2628 + $0x188] sm:$0xf]
                %2827 = vst [vmem:[%s2629 + $0x308] sm:$0xf] %v2826
                %v2828 = vld [vmem:[%s2628 + $0x18c] sm:$0xf]
                %2829 = vst [vmem:[%s2629 + $0x30c] sm:$0xf] %v2828
                %v2830 = vld [vmem:[%s2628 + $0x190] sm:$0xf]
                %2831 = vst [vmem:[%s2629 + $0x310] sm:$0xf] %v2830
                %v2832 = vld [vmem:[%s2628 + $0x194] sm:$0xf]
                %2833 = vst [vmem:[%s2629 + $0x314] sm:$0xf] %v2832
                %v2834 = vld [vmem:[%s2628 + $0x198] sm:$0xf]
                %2835 = vst [vmem:[%s2629 + $0x318] sm:$0xf] %v2834
                %v2836 = vld [vmem:[%s2628 + $0x19c] sm:$0xf]
                %2837 = vst [vmem:[%s2629 + $0x31c] sm:$0xf] %v2836
                %v2838 = vld [vmem:[%s2628 + $0x1a0] sm:$0xf]
                %2839 = vst [vmem:[%s2629 + $0x320] sm:$0xf] %v2838
                %v2840 = vld [vmem:[%s2628 + $0x1a4] sm:$0xf]
                %2841 = vst [vmem:[%s2629 + $0x324] sm:$0xf] %v2840
                %v2842 = vld [vmem:[%s2628 + $0x1a8] sm:$0xf]
                %2843 = vst [vmem:[%s2629 + $0x328] sm:$0xf] %v2842
                %v2844 = vld [vmem:[%s2628 + $0x1ac] sm:$0xf]
                %2845 = vst [vmem:[%s2629 + $0x32c] sm:$0xf] %v2844
                %v2846 = vld [vmem:[%s2628 + $0x1b0] sm:$0xf]
                %2847 = vst [vmem:[%s2629 + $0x330] sm:$0xf] %v2846
                %v2848 = vld [vmem:[%s2628 + $0x1b4] sm:$0xf]
                %2849 = vst [vmem:[%s2629 + $0x334] sm:$0xf] %v2848
                %v2850 = vld [vmem:[%s2628 + $0x1b8] sm:$0xf]
                %2851 = vst [vmem:[%s2629 + $0x338] sm:$0xf] %v2850
                %v2852 = vld [vmem:[%s2628 + $0x1bc] sm:$0xf]
                %2853 = vst [vmem:[%s2629 + $0x33c] sm:$0xf] %v2852
                %v2854 = vld [vmem:[%s2628 + $0x1c0] sm:$0xf]
                %2855 = vst [vmem:[%s2629 + $0x340] sm:$0xf] %v2854
                %v2856 = vld [vmem:[%s2628 + $0x1c4] sm:$0xf]
                %2857 = vst [vmem:[%s2629 + $0x344] sm:$0xf] %v2856
                %v2858 = vld [vmem:[%s2628 + $0x1c8] sm:$0xf]
                %2859 = vst [vmem:[%s2629 + $0x348] sm:$0xf] %v2858
                %v2860 = vld [vmem:[%s2628 + $0x1cc] sm:$0xf]
                %2861 = vst [vmem:[%s2629 + $0x34c] sm:$0xf] %v2860
                %v2862 = vld [vmem:[%s2628 + $0x1d0] sm:$0xf]
                %2863 = vst [vmem:[%s2629 + $0x350] sm:$0xf] %v2862
                %v2864 = vld [vmem:[%s2628 + $0x1d4] sm:$0xf]
                %2865 = vst [vmem:[%s2629 + $0x354] sm:$0xf] %v2864
                %v2866 = vld [vmem:[%s2628 + $0x1d8] sm:$0xf]
                %2867 = vst [vmem:[%s2629 + $0x358] sm:$0xf] %v2866
                %v2868 = vld [vmem:[%s2628 + $0x1dc] sm:$0xf]
                %2869 = vst [vmem:[%s2629 + $0x35c] sm:$0xf] %v2868
                %v2870 = vld [vmem:[%s2628 + $0x1e0] sm:$0xf]
                %2871 = vst [vmem:[%s2629 + $0x360] sm:$0xf] %v2870
                %v2872 = vld [vmem:[%s2628 + $0x1e4] sm:$0xf]
                %2873 = vst [vmem:[%s2629 + $0x364] sm:$0xf] %v2872
                %v2874 = vld [vmem:[%s2628 + $0x1e8] sm:$0xf]
                %2875 = vst [vmem:[%s2629 + $0x368] sm:$0xf] %v2874
                %v2876 = vld [vmem:[%s2628 + $0x1ec] sm:$0xf]
                %2877 = vst [vmem:[%s2629 + $0x36c] sm:$0xf] %v2876
                %v2878 = vld [vmem:[%s2628 + $0x1f0] sm:$0xf]
                %2879 = vst [vmem:[%s2629 + $0x370] sm:$0xf] %v2878
                %v2880 = vld [vmem:[%s2628 + $0x1f4] sm:$0xf]
                %2881 = vst [vmem:[%s2629 + $0x374] sm:$0xf] %v2880
                %v2882 = vld [vmem:[%s2628 + $0x1f8] sm:$0xf]
                %2883 = vst [vmem:[%s2629 + $0x378] sm:$0xf] %v2882
                %v2884 = vld [vmem:[%s2628 + $0x1fc] sm:$0xf]
                %2885 = vst [vmem:[%s2629 + $0x37c] sm:$0xf] %v2884
              $region61: #{tpu_custom_call.1} parent=55 // loop_footer
                %s2627 = sadd.s32 1, %s2623
              $region62: #{tpu_custom_call.1} parent=55 // loop_footer_branch
                %2622 = sbr.rel target = $region58
              $region63: #{tpu_custom_call.1} parent=55 // loop_exit
                _
            $region56: #{tpu_custom_call.1} parent=47 // pred_fallthru
              _
          $region48: #{tpu_custom_call.1} parent=43 // pred_fallthru
            _
          %3161 = vnop
        $region44: #{tpu_custom_call.1} parent=31 // pred_fallthru
          _
        // Predicated region
        $region82: #{tpu_custom_call.1} parent=31 // pred_check
          %p3162 = pneg %p151
        $region83: #{tpu_custom_call.1} parent=31 // pred_check_branch
          %3164 = sbr.rel (%p3162) target = $region85
        $region84: #{tpu_custom_call.1} parent=31 // pred_region
          %s3165 = smul.u32 32, %s26
          %s3166 = smul.addr %s25, 256
          %s3167 = sadd.s32 %s3165, %s3166
          %s3168 = smul.addr %s3167, 4
          %s3169 = scalar_lea.vmem %s4, %s3168
          // Predicated region
          $region86: #{tpu_custom_call.1} parent=84 // pred_check
            _
          $region87: #{tpu_custom_call.1} parent=84 // pred_check_branch
            %3171 = sbr.rel (0) target = $region89
          $region88: #{tpu_custom_call.1} parent=84 // pred_region
            // Predicated region
            $region90: #{tpu_custom_call.1} parent=88 // pred_check
              _
            $region91: #{tpu_custom_call.1} parent=88 // pred_check_branch
              %3173 = sbr.rel target = $region93
            $region92: #{tpu_custom_call.1} parent=88 // pred_region
              // Predicated region
              $region105: #{tpu_custom_call.1} parent=92 // pred_check
                _
              $region106: #{tpu_custom_call.1} parent=92 // pred_check_branch
                %3442 = sbr.rel (0) target = $region108
              $region107: #{tpu_custom_call.1} parent=92 // pred_region
                loop: start=0, step=1, limit=1
                $region109: #{tpu_custom_call.1} parent=107 // loop_pre_header
                  _
                $region110: #{tpu_custom_call.1} parent=107 // loop_header
                  %s3444 = sphi 0, %s3448
                  %p3445 = scmp.ge.s32.totalorder %s3444, 1
                  %s3449 = sphi %s2602, %s2602
                  %s3450 = sphi %s3169, %s3169
                $region111: #{tpu_custom_call.1} parent=107 // loop_header_branch
                  %3447 = sbr.rel (%p3445) target = $region115
                $region112: #{tpu_custom_call.1} parent=107 // loop_body
                  _
                $region113: #{tpu_custom_call.1} parent=107 // loop_footer
                  %s3448 = sadd.s32 1, %s3444
                $region114: #{tpu_custom_call.1} parent=107 // loop_footer_branch
                  %3443 = sbr.rel target = $region110
                $region115: #{tpu_custom_call.1} parent=107 // loop_exit
                  _
                loop: start=0, step=1, limit=1
                $region116: #{tpu_custom_call.1} parent=107 // loop_pre_header
                  _
                $region117: #{tpu_custom_call.1} parent=107 // loop_header
                  %s3453 = sphi 0, %s3457
                  %p3454 = scmp.ge.s32.totalorder %s3453, 1
                  %s3458 = sphi %s2602, %s2602
                  %s3459 = sphi %s3169, %s3169
                $region118: #{tpu_custom_call.1} parent=107 // loop_header_branch
                  %3456 = sbr.rel (%p3454) target = $region122
                $region119: #{tpu_custom_call.1} parent=107 // loop_body
                  %v3460 = vld [vmem:[%s3458] sm:$0xf]
                  %3461 = vst [vmem:[%s3459] sm:$0xf] %v3460
                  %v3462 = vld [vmem:[%s3458 + $0x4] sm:$0xf]
                  %3463 = vst [vmem:[%s3459 + $0x4] sm:$0xf] %v3462
                  %v3464 = vld [vmem:[%s3458 + $0x8] sm:$0xf]
                  %3465 = vst [vmem:[%s3459 + $0x8] sm:$0xf] %v3464
                  %v3466 = vld [vmem:[%s3458 + $0xc] sm:$0xf]
                  %3467 = vst [vmem:[%s3459 + $0xc] sm:$0xf] %v3466
                  %v3468 = vld [vmem:[%s3458 + $0x10] sm:$0xf]
                  %3469 = vst [vmem:[%s3459 + $0x10] sm:$0xf] %v3468
                  %v3470 = vld [vmem:[%s3458 + $0x14] sm:$0xf]
                  %3471 = vst [vmem:[%s3459 + $0x14] sm:$0xf] %v3470
                  %v3472 = vld [vmem:[%s3458 + $0x18] sm:$0xf]
                  %3473 = vst [vmem:[%s3459 + $0x18] sm:$0xf] %v3472
                  %v3474 = vld [vmem:[%s3458 + $0x1c] sm:$0xf]
                  %3475 = vst [vmem:[%s3459 + $0x1c] sm:$0xf] %v3474
                  %v3476 = vld [vmem:[%s3458 + $0x20] sm:$0xf]
                  %3477 = vst [vmem:[%s3459 + $0x20] sm:$0xf] %v3476
                  %v3478 = vld [vmem:[%s3458 + $0x24] sm:$0xf]
                  %3479 = vst [vmem:[%s3459 + $0x24] sm:$0xf] %v3478
                  %v3480 = vld [vmem:[%s3458 + $0x28] sm:$0xf]
                  %3481 = vst [vmem:[%s3459 + $0x28] sm:$0xf] %v3480
                  %v3482 = vld [vmem:[%s3458 + $0x2c] sm:$0xf]
                  %3483 = vst [vmem:[%s3459 + $0x2c] sm:$0xf] %v3482
                  %v3484 = vld [vmem:[%s3458 + $0x30] sm:$0xf]
                  %3485 = vst [vmem:[%s3459 + $0x30] sm:$0xf] %v3484
                  %v3486 = vld [vmem:[%s3458 + $0x34] sm:$0xf]
                  %3487 = vst [vmem:[%s3459 + $0x34] sm:$0xf] %v3486
                  %v3488 = vld [vmem:[%s3458 + $0x38] sm:$0xf]
                  %3489 = vst [vmem:[%s3459 + $0x38] sm:$0xf] %v3488
                  %v3490 = vld [vmem:[%s3458 + $0x3c] sm:$0xf]
                  %3491 = vst [vmem:[%s3459 + $0x3c] sm:$0xf] %v3490
                  %v3492 = vld [vmem:[%s3458 + $0x40] sm:$0xf]
                  %3493 = vst [vmem:[%s3459 + $0x40] sm:$0xf] %v3492
                  %v3494 = vld [vmem:[%s3458 + $0x44] sm:$0xf]
                  %3495 = vst [vmem:[%s3459 + $0x44] sm:$0xf] %v3494
                  %v3496 = vld [vmem:[%s3458 + $0x48] sm:$0xf]
                  %3497 = vst [vmem:[%s3459 + $0x48] sm:$0xf] %v3496
                  %v3498 = vld [vmem:[%s3458 + $0x4c] sm:$0xf]
                  %3499 = vst [vmem:[%s3459 + $0x4c] sm:$0xf] %v3498
                  %v3500 = vld [vmem:[%s3458 + $0x50] sm:$0xf]
                  %3501 = vst [vmem:[%s3459 + $0x50] sm:$0xf] %v3500
                  %v3502 = vld [vmem:[%s3458 + $0x54] sm:$0xf]
                  %3503 = vst [vmem:[%s3459 + $0x54] sm:$0xf] %v3502
                  %v3504 = vld [vmem:[%s3458 + $0x58] sm:$0xf]
                  %3505 = vst [vmem:[%s3459 + $0x58] sm:$0xf] %v3504
                  %v3506 = vld [vmem:[%s3458 + $0x5c] sm:$0xf]
                  %3507 = vst [vmem:[%s3459 + $0x5c] sm:$0xf] %v3506
                  %v3508 = vld [vmem:[%s3458 + $0x60] sm:$0xf]
                  %3509 = vst [vmem:[%s3459 + $0x60] sm:$0xf] %v3508
                  %v3510 = vld [vmem:[%s3458 + $0x64] sm:$0xf]
                  %3511 = vst [vmem:[%s3459 + $0x64] sm:$0xf] %v3510
                  %v3512 = vld [vmem:[%s3458 + $0x68] sm:$0xf]
                  %3513 = vst [vmem:[%s3459 + $0x68] sm:$0xf] %v3512
                  %v3514 = vld [vmem:[%s3458 + $0x6c] sm:$0xf]
                  %3515 = vst [vmem:[%s3459 + $0x6c] sm:$0xf] %v3514
                  %v3516 = vld [vmem:[%s3458 + $0x70] sm:$0xf]
                  %3517 = vst [vmem:[%s3459 + $0x70] sm:$0xf] %v3516
                  %v3518 = vld [vmem:[%s3458 + $0x74] sm:$0xf]
                  %3519 = vst [vmem:[%s3459 + $0x74] sm:$0xf] %v3518
                  %v3520 = vld [vmem:[%s3458 + $0x78] sm:$0xf]
                  %3521 = vst [vmem:[%s3459 + $0x78] sm:$0xf] %v3520
                  %v3522 = vld [vmem:[%s3458 + $0x7c] sm:$0xf]
                  %3523 = vst [vmem:[%s3459 + $0x7c] sm:$0xf] %v3522
                  %v3524 = vld [vmem:[%s3458 + $0x80] sm:$0xf]
                  %3525 = vst [vmem:[%s3459 + $0x100] sm:$0xf] %v3524
                  %v3526 = vld [vmem:[%s3458 + $0x84] sm:$0xf]
                  %3527 = vst [vmem:[%s3459 + $0x104] sm:$0xf] %v3526
                  %v3528 = vld [vmem:[%s3458 + $0x88] sm:$0xf]
                  %3529 = vst [vmem:[%s3459 + $0x108] sm:$0xf] %v3528
                  %v3530 = vld [vmem:[%s3458 + $0x8c] sm:$0xf]
                  %3531 = vst [vmem:[%s3459 + $0x10c] sm:$0xf] %v3530
                  %v3532 = vld [vmem:[%s3458 + $0x90] sm:$0xf]
                  %3533 = vst [vmem:[%s3459 + $0x110] sm:$0xf] %v3532
                  %v3534 = vld [vmem:[%s3458 + $0x94] sm:$0xf]
                  %3535 = vst [vmem:[%s3459 + $0x114] sm:$0xf] %v3534
                  %v3536 = vld [vmem:[%s3458 + $0x98] sm:$0xf]
                  %3537 = vst [vmem:[%s3459 + $0x118] sm:$0xf] %v3536
                  %v3538 = vld [vmem:[%s3458 + $0x9c] sm:$0xf]
                  %3539 = vst [vmem:[%s3459 + $0x11c] sm:$0xf] %v3538
                  %v3540 = vld [vmem:[%s3458 + $0xa0] sm:$0xf]
                  %3541 = vst [vmem:[%s3459 + $0x120] sm:$0xf] %v3540
                  %v3542 = vld [vmem:[%s3458 + $0xa4] sm:$0xf]
                  %3543 = vst [vmem:[%s3459 + $0x124] sm:$0xf] %v3542
                  %v3544 = vld [vmem:[%s3458 + $0xa8] sm:$0xf]
                  %3545 = vst [vmem:[%s3459 + $0x128] sm:$0xf] %v3544
                  %v3546 = vld [vmem:[%s3458 + $0xac] sm:$0xf]
                  %3547 = vst [vmem:[%s3459 + $0x12c] sm:$0xf] %v3546
                  %v3548 = vld [vmem:[%s3458 + $0xb0] sm:$0xf]
                  %3549 = vst [vmem:[%s3459 + $0x130] sm:$0xf] %v3548
                  %v3550 = vld [vmem:[%s3458 + $0xb4] sm:$0xf]
                  %3551 = vst [vmem:[%s3459 + $0x134] sm:$0xf] %v3550
                  %v3552 = vld [vmem:[%s3458 + $0xb8] sm:$0xf]
                  %3553 = vst [vmem:[%s3459 + $0x138] sm:$0xf] %v3552
                  %v3554 = vld [vmem:[%s3458 + $0xbc] sm:$0xf]
                  %3555 = vst [vmem:[%s3459 + $0x13c] sm:$0xf] %v3554
                  %v3556 = vld [vmem:[%s3458 + $0xc0] sm:$0xf]
                  %3557 = vst [vmem:[%s3459 + $0x140] sm:$0xf] %v3556
                  %v3558 = vld [vmem:[%s3458 + $0xc4] sm:$0xf]
                  %3559 = vst [vmem:[%s3459 + $0x144] sm:$0xf] %v3558
                  %v3560 = vld [vmem:[%s3458 + $0xc8] sm:$0xf]
                  %3561 = vst [vmem:[%s3459 + $0x148] sm:$0xf] %v3560
                  %v3562 = vld [vmem:[%s3458 + $0xcc] sm:$0xf]
                  %3563 = vst [vmem:[%s3459 + $0x14c] sm:$0xf] %v3562
                  %v3564 = vld [vmem:[%s3458 + $0xd0] sm:$0xf]
                  %3565 = vst [vmem:[%s3459 + $0x150] sm:$0xf] %v3564
                  %v3566 = vld [vmem:[%s3458 + $0xd4] sm:$0xf]
                  %3567 = vst [vmem:[%s3459 + $0x154] sm:$0xf] %v3566
                  %v3568 = vld [vmem:[%s3458 + $0xd8] sm:$0xf]
                  %3569 = vst [vmem:[%s3459 + $0x158] sm:$0xf] %v3568
                  %v3570 = vld [vmem:[%s3458 + $0xdc] sm:$0xf]
                  %3571 = vst [vmem:[%s3459 + $0x15c] sm:$0xf] %v3570
                  %v3572 = vld [vmem:[%s3458 + $0xe0] sm:$0xf]
                  %3573 = vst [vmem:[%s3459 + $0x160] sm:$0xf] %v3572
                  %v3574 = vld [vmem:[%s3458 + $0xe4] sm:$0xf]
                  %3575 = vst [vmem:[%s3459 + $0x164] sm:$0xf] %v3574
                  %v3576 = vld [vmem:[%s3458 + $0xe8] sm:$0xf]
                  %3577 = vst [vmem:[%s3459 + $0x168] sm:$0xf] %v3576
                  %v3578 = vld [vmem:[%s3458 + $0xec] sm:$0xf]
                  %3579 = vst [vmem:[%s3459 + $0x16c] sm:$0xf] %v3578
                  %v3580 = vld [vmem:[%s3458 + $0xf0] sm:$0xf]
                  %3581 = vst [vmem:[%s3459 + $0x170] sm:$0xf] %v3580
                  %v3582 = vld [vmem:[%s3458 + $0xf4] sm:$0xf]
                  %3583 = vst [vmem:[%s3459 + $0x174] sm:$0xf] %v3582
                  %v3584 = vld [vmem:[%s3458 + $0xf8] sm:$0xf]
                  %3585 = vst [vmem:[%s3459 + $0x178] sm:$0xf] %v3584
                  %v3586 = vld [vmem:[%s3458 + $0xfc] sm:$0xf]
                  %3587 = vst [vmem:[%s3459 + $0x17c] sm:$0xf] %v3586
                  %v3588 = vld [vmem:[%s3458 + $0x100] sm:$0xf]
                  %3589 = vst [vmem:[%s3459 + $0x200] sm:$0xf] %v3588
                  %v3590 = vld [vmem:[%s3458 + $0x104] sm:$0xf]
                  %3591 = vst [vmem:[%s3459 + $0x204] sm:$0xf] %v3590
                  %v3592 = vld [vmem:[%s3458 + $0x108] sm:$0xf]
                  %3593 = vst [vmem:[%s3459 + $0x208] sm:$0xf] %v3592
                  %v3594 = vld [vmem:[%s3458 + $0x10c] sm:$0xf]
                  %3595 = vst [vmem:[%s3459 + $0x20c] sm:$0xf] %v3594
                  %v3596 = vld [vmem:[%s3458 + $0x110] sm:$0xf]
                  %3597 = vst [vmem:[%s3459 + $0x210] sm:$0xf] %v3596
                  %v3598 = vld [vmem:[%s3458 + $0x114] sm:$0xf]
                  %3599 = vst [vmem:[%s3459 + $0x214] sm:$0xf] %v3598
                  %v3600 = vld [vmem:[%s3458 + $0x118] sm:$0xf]
                  %3601 = vst [vmem:[%s3459 + $0x218] sm:$0xf] %v3600
                  %v3602 = vld [vmem:[%s3458 + $0x11c] sm:$0xf]
                  %3603 = vst [vmem:[%s3459 + $0x21c] sm:$0xf] %v3602
                  %v3604 = vld [vmem:[%s3458 + $0x120] sm:$0xf]
                  %3605 = vst [vmem:[%s3459 + $0x220] sm:$0xf] %v3604
                  %v3606 = vld [vmem:[%s3458 + $0x124] sm:$0xf]
                  %3607 = vst [vmem:[%s3459 + $0x224] sm:$0xf] %v3606
                  %v3608 = vld [vmem:[%s3458 + $0x128] sm:$0xf]
                  %3609 = vst [vmem:[%s3459 + $0x228] sm:$0xf] %v3608
                  %v3610 = vld [vmem:[%s3458 + $0x12c] sm:$0xf]
                  %3611 = vst [vmem:[%s3459 + $0x22c] sm:$0xf] %v3610
                  %v3612 = vld [vmem:[%s3458 + $0x130] sm:$0xf]
                  %3613 = vst [vmem:[%s3459 + $0x230] sm:$0xf] %v3612
                  %v3614 = vld [vmem:[%s3458 + $0x134] sm:$0xf]
                  %3615 = vst [vmem:[%s3459 + $0x234] sm:$0xf] %v3614
                  %v3616 = vld [vmem:[%s3458 + $0x138] sm:$0xf]
                  %3617 = vst [vmem:[%s3459 + $0x238] sm:$0xf] %v3616
                  %v3618 = vld [vmem:[%s3458 + $0x13c] sm:$0xf]
                  %3619 = vst [vmem:[%s3459 + $0x23c] sm:$0xf] %v3618
                  %v3620 = vld [vmem:[%s3458 + $0x140] sm:$0xf]
                  %3621 = vst [vmem:[%s3459 + $0x240] sm:$0xf] %v3620
                  %v3622 = vld [vmem:[%s3458 + $0x144] sm:$0xf]
                  %3623 = vst [vmem:[%s3459 + $0x244] sm:$0xf] %v3622
                  %v3624 = vld [vmem:[%s3458 + $0x148] sm:$0xf]
                  %3625 = vst [vmem:[%s3459 + $0x248] sm:$0xf] %v3624
                  %v3626 = vld [vmem:[%s3458 + $0x14c] sm:$0xf]
                  %3627 = vst [vmem:[%s3459 + $0x24c] sm:$0xf] %v3626
                  %v3628 = vld [vmem:[%s3458 + $0x150] sm:$0xf]
                  %3629 = vst [vmem:[%s3459 + $0x250] sm:$0xf] %v3628
                  %v3630 = vld [vmem:[%s3458 + $0x154] sm:$0xf]
                  %3631 = vst [vmem:[%s3459 + $0x254] sm:$0xf] %v3630
                  %v3632 = vld [vmem:[%s3458 + $0x158] sm:$0xf]
                  %3633 = vst [vmem:[%s3459 + $0x258] sm:$0xf] %v3632
                  %v3634 = vld [vmem:[%s3458 + $0x15c] sm:$0xf]
                  %3635 = vst [vmem:[%s3459 + $0x25c] sm:$0xf] %v3634
                  %v3636 = vld [vmem:[%s3458 + $0x160] sm:$0xf]
                  %3637 = vst [vmem:[%s3459 + $0x260] sm:$0xf] %v3636
                  %v3638 = vld [vmem:[%s3458 + $0x164] sm:$0xf]
                  %3639 = vst [vmem:[%s3459 + $0x264] sm:$0xf] %v3638
                  %v3640 = vld [vmem:[%s3458 + $0x168] sm:$0xf]
                  %3641 = vst [vmem:[%s3459 + $0x268] sm:$0xf] %v3640
                  %v3642 = vld [vmem:[%s3458 + $0x16c] sm:$0xf]
                  %3643 = vst [vmem:[%s3459 + $0x26c] sm:$0xf] %v3642
                  %v3644 = vld [vmem:[%s3458 + $0x170] sm:$0xf]
                  %3645 = vst [vmem:[%s3459 + $0x270] sm:$0xf] %v3644
                  %v3646 = vld [vmem:[%s3458 + $0x174] sm:$0xf]
                  %3647 = vst [vmem:[%s3459 + $0x274] sm:$0xf] %v3646
                  %v3648 = vld [vmem:[%s3458 + $0x178] sm:$0xf]
                  %3649 = vst [vmem:[%s3459 + $0x278] sm:$0xf] %v3648
                  %v3650 = vld [vmem:[%s3458 + $0x17c] sm:$0xf]
                  %3651 = vst [vmem:[%s3459 + $0x27c] sm:$0xf] %v3650
                  %v3652 = vld [vmem:[%s3458 + $0x180] sm:$0xf]
                  %3653 = vst [vmem:[%s3459 + $0x300] sm:$0xf] %v3652
                  %v3654 = vld [vmem:[%s3458 + $0x184] sm:$0xf]
                  %3655 = vst [vmem:[%s3459 + $0x304] sm:$0xf] %v3654
                  %v3656 = vld [vmem:[%s3458 + $0x188] sm:$0xf]
                  %3657 = vst [vmem:[%s3459 + $0x308] sm:$0xf] %v3656
                  %v3658 = vld [vmem:[%s3458 + $0x18c] sm:$0xf]
                  %3659 = vst [vmem:[%s3459 + $0x30c] sm:$0xf] %v3658
                  %v3660 = vld [vmem:[%s3458 + $0x190] sm:$0xf]
                  %3661 = vst [vmem:[%s3459 + $0x310] sm:$0xf] %v3660
                  %v3662 = vld [vmem:[%s3458 + $0x194] sm:$0xf]
                  %3663 = vst [vmem:[%s3459 + $0x314] sm:$0xf] %v3662
                  %v3664 = vld [vmem:[%s3458 + $0x198] sm:$0xf]
                  %3665 = vst [vmem:[%s3459 + $0x318] sm:$0xf] %v3664
                  %v3666 = vld [vmem:[%s3458 + $0x19c] sm:$0xf]
                  %3667 = vst [vmem:[%s3459 + $0x31c] sm:$0xf] %v3666
                  %v3668 = vld [vmem:[%s3458 + $0x1a0] sm:$0xf]
                  %3669 = vst [vmem:[%s3459 + $0x320] sm:$0xf] %v3668
                  %v3670 = vld [vmem:[%s3458 + $0x1a4] sm:$0xf]
                  %3671 = vst [vmem:[%s3459 + $0x324] sm:$0xf] %v3670
                  %v3672 = vld [vmem:[%s3458 + $0x1a8] sm:$0xf]
                  %3673 = vst [vmem:[%s3459 + $0x328] sm:$0xf] %v3672
                  %v3674 = vld [vmem:[%s3458 + $0x1ac] sm:$0xf]
                  %3675 = vst [vmem:[%s3459 + $0x32c] sm:$0xf] %v3674
                  %v3676 = vld [vmem:[%s3458 + $0x1b0] sm:$0xf]
                  %3677 = vst [vmem:[%s3459 + $0x330] sm:$0xf] %v3676
                  %v3678 = vld [vmem:[%s3458 + $0x1b4] sm:$0xf]
                  %3679 = vst [vmem:[%s3459 + $0x334] sm:$0xf] %v3678
                  %v3680 = vld [vmem:[%s3458 + $0x1b8] sm:$0xf]
                  %3681 = vst [vmem:[%s3459 + $0x338] sm:$0xf] %v3680
                  %v3682 = vld [vmem:[%s3458 + $0x1bc] sm:$0xf]
                  %3683 = vst [vmem:[%s3459 + $0x33c] sm:$0xf] %v3682
                  %v3684 = vld [vmem:[%s3458 + $0x1c0] sm:$0xf]
                  %3685 = vst [vmem:[%s3459 + $0x340] sm:$0xf] %v3684
                  %v3686 = vld [vmem:[%s3458 + $0x1c4] sm:$0xf]
                  %3687 = vst [vmem:[%s3459 + $0x344] sm:$0xf] %v3686
                  %v3688 = vld [vmem:[%s3458 + $0x1c8] sm:$0xf]
                  %3689 = vst [vmem:[%s3459 + $0x348] sm:$0xf] %v3688
                  %v3690 = vld [vmem:[%s3458 + $0x1cc] sm:$0xf]
                  %3691 = vst [vmem:[%s3459 + $0x34c] sm:$0xf] %v3690
                  %v3692 = vld [vmem:[%s3458 + $0x1d0] sm:$0xf]
                  %3693 = vst [vmem:[%s3459 + $0x350] sm:$0xf] %v3692
                  %v3694 = vld [vmem:[%s3458 + $0x1d4] sm:$0xf]
                  %3695 = vst [vmem:[%s3459 + $0x354] sm:$0xf] %v3694
                  %v3696 = vld [vmem:[%s3458 + $0x1d8] sm:$0xf]
                  %3697 = vst [vmem:[%s3459 + $0x358] sm:$0xf] %v3696
                  %v3698 = vld [vmem:[%s3458 + $0x1dc] sm:$0xf]
                  %3699 = vst [vmem:[%s3459 + $0x35c] sm:$0xf] %v3698
                  %v3700 = vld [vmem:[%s3458 + $0x1e0] sm:$0xf]
                  %3701 = vst [vmem:[%s3459 + $0x360] sm:$0xf] %v3700
                  %v3702 = vld [vmem:[%s3458 + $0x1e4] sm:$0xf]
                  %3703 = vst [vmem:[%s3459 + $0x364] sm:$0xf] %v3702
                  %v3704 = vld [vmem:[%s3458 + $0x1e8] sm:$0xf]
                  %3705 = vst [vmem:[%s3459 + $0x368] sm:$0xf] %v3704
                  %v3706 = vld [vmem:[%s3458 + $0x1ec] sm:$0xf]
                  %3707 = vst [vmem:[%s3459 + $0x36c] sm:$0xf] %v3706
                  %v3708 = vld [vmem:[%s3458 + $0x1f0] sm:$0xf]
                  %3709 = vst [vmem:[%s3459 + $0x370] sm:$0xf] %v3708
                  %v3710 = vld [vmem:[%s3458 + $0x1f4] sm:$0xf]
                  %3711 = vst [vmem:[%s3459 + $0x374] sm:$0xf] %v3710
                  %v3712 = vld [vmem:[%s3458 + $0x1f8] sm:$0xf]
                  %3713 = vst [vmem:[%s3459 + $0x378] sm:$0xf] %v3712
                  %v3714 = vld [vmem:[%s3458 + $0x1fc] sm:$0xf]
                  %3715 = vst [vmem:[%s3459 + $0x37c] sm:$0xf] %v3714
                $region120: #{tpu_custom_call.1} parent=107 // loop_footer
                  %s3457 = sadd.s32 1, %s3453
                $region121: #{tpu_custom_call.1} parent=107 // loop_footer_branch
                  %3452 = sbr.rel target = $region117
                $region122: #{tpu_custom_call.1} parent=107 // loop_exit
                  _
              $region108: #{tpu_custom_call.1} parent=92 // pred_fallthru
                _
            $region93: #{tpu_custom_call.1} parent=88 // pred_fallthru
              _
            // Predicated region
            $region94: #{tpu_custom_call.1} parent=88 // pred_check
              _
            $region95: #{tpu_custom_call.1} parent=88 // pred_check_branch
              %3175 = sbr.rel (0) target = $region97
            $region96: #{tpu_custom_call.1} parent=88 // pred_region
              loop: start=0, step=1, limit=1
              $region98: #{tpu_custom_call.1} parent=96 // loop_pre_header
                _
              $region99: #{tpu_custom_call.1} parent=96 // loop_header
                %s3178 = sphi 0, %s3182
                %p3179 = scmp.ge.s32.totalorder %s3178, 1
                %s3183 = sphi %s2602, %s2602
                %s3184 = sphi %s3169, %s3169
              $region100: #{tpu_custom_call.1} parent=96 // loop_header_branch
                %3181 = sbr.rel (%p3179) target = $region104
              $region101: #{tpu_custom_call.1} parent=96 // loop_body
                %v3185 = vld [vmem:[%s3183] sm:$0xf]
                %3186 = vst [vmem:[%s3184] sm:$0xf] %v3185
                %v3187 = vld [vmem:[%s3183 + $0x4] sm:$0xf]
                %3188 = vst [vmem:[%s3184 + $0x4] sm:$0xf] %v3187
                %v3189 = vld [vmem:[%s3183 + $0x8] sm:$0xf]
                %3190 = vst [vmem:[%s3184 + $0x8] sm:$0xf] %v3189
                %v3191 = vld [vmem:[%s3183 + $0xc] sm:$0xf]
                %3192 = vst [vmem:[%s3184 + $0xc] sm:$0xf] %v3191
                %v3193 = vld [vmem:[%s3183 + $0x10] sm:$0xf]
                %3194 = vst [vmem:[%s3184 + $0x10] sm:$0xf] %v3193
                %v3195 = vld [vmem:[%s3183 + $0x14] sm:$0xf]
                %3196 = vst [vmem:[%s3184 + $0x14] sm:$0xf] %v3195
                %v3197 = vld [vmem:[%s3183 + $0x18] sm:$0xf]
                %3198 = vst [vmem:[%s3184 + $0x18] sm:$0xf] %v3197
                %v3199 = vld [vmem:[%s3183 + $0x1c] sm:$0xf]
                %3200 = vst [vmem:[%s3184 + $0x1c] sm:$0xf] %v3199
                %v3201 = vld [vmem:[%s3183 + $0x20] sm:$0xf]
                %3202 = vst [vmem:[%s3184 + $0x20] sm:$0xf] %v3201
                %v3203 = vld [vmem:[%s3183 + $0x24] sm:$0xf]
                %3204 = vst [vmem:[%s3184 + $0x24] sm:$0xf] %v3203
                %v3205 = vld [vmem:[%s3183 + $0x28] sm:$0xf]
                %3206 = vst [vmem:[%s3184 + $0x28] sm:$0xf] %v3205
                %v3207 = vld [vmem:[%s3183 + $0x2c] sm:$0xf]
                %3208 = vst [vmem:[%s3184 + $0x2c] sm:$0xf] %v3207
                %v3209 = vld [vmem:[%s3183 + $0x30] sm:$0xf]
                %3210 = vst [vmem:[%s3184 + $0x30] sm:$0xf] %v3209
                %v3211 = vld [vmem:[%s3183 + $0x34] sm:$0xf]
                %3212 = vst [vmem:[%s3184 + $0x34] sm:$0xf] %v3211
                %v3213 = vld [vmem:[%s3183 + $0x38] sm:$0xf]
                %3214 = vst [vmem:[%s3184 + $0x38] sm:$0xf] %v3213
                %v3215 = vld [vmem:[%s3183 + $0x3c] sm:$0xf]
                %3216 = vst [vmem:[%s3184 + $0x3c] sm:$0xf] %v3215
                %v3217 = vld [vmem:[%s3183 + $0x40] sm:$0xf]
                %3218 = vst [vmem:[%s3184 + $0x40] sm:$0xf] %v3217
                %v3219 = vld [vmem:[%s3183 + $0x44] sm:$0xf]
                %3220 = vst [vmem:[%s3184 + $0x44] sm:$0xf] %v3219
                %v3221 = vld [vmem:[%s3183 + $0x48] sm:$0xf]
                %3222 = vst [vmem:[%s3184 + $0x48] sm:$0xf] %v3221
                %v3223 = vld [vmem:[%s3183 + $0x4c] sm:$0xf]
                %3224 = vst [vmem:[%s3184 + $0x4c] sm:$0xf] %v3223
                %v3225 = vld [vmem:[%s3183 + $0x50] sm:$0xf]
                %3226 = vst [vmem:[%s3184 + $0x50] sm:$0xf] %v3225
                %v3227 = vld [vmem:[%s3183 + $0x54] sm:$0xf]
                %3228 = vst [vmem:[%s3184 + $0x54] sm:$0xf] %v3227
                %v3229 = vld [vmem:[%s3183 + $0x58] sm:$0xf]
                %3230 = vst [vmem:[%s3184 + $0x58] sm:$0xf] %v3229
                %v3231 = vld [vmem:[%s3183 + $0x5c] sm:$0xf]
                %3232 = vst [vmem:[%s3184 + $0x5c] sm:$0xf] %v3231
                %v3233 = vld [vmem:[%s3183 + $0x60] sm:$0xf]
                %3234 = vst [vmem:[%s3184 + $0x60] sm:$0xf] %v3233
                %v3235 = vld [vmem:[%s3183 + $0x64] sm:$0xf]
                %3236 = vst [vmem:[%s3184 + $0x64] sm:$0xf] %v3235
                %v3237 = vld [vmem:[%s3183 + $0x68] sm:$0xf]
                %3238 = vst [vmem:[%s3184 + $0x68] sm:$0xf] %v3237
                %v3239 = vld [vmem:[%s3183 + $0x6c] sm:$0xf]
                %3240 = vst [vmem:[%s3184 + $0x6c] sm:$0xf] %v3239
                %v3241 = vld [vmem:[%s3183 + $0x70] sm:$0xf]
                %3242 = vst [vmem:[%s3184 + $0x70] sm:$0xf] %v3241
                %v3243 = vld [vmem:[%s3183 + $0x74] sm:$0xf]
                %3244 = vst [vmem:[%s3184 + $0x74] sm:$0xf] %v3243
                %v3245 = vld [vmem:[%s3183 + $0x78] sm:$0xf]
                %3246 = vst [vmem:[%s3184 + $0x78] sm:$0xf] %v3245
                %v3247 = vld [vmem:[%s3183 + $0x7c] sm:$0xf]
                %3248 = vst [vmem:[%s3184 + $0x7c] sm:$0xf] %v3247
                %v3249 = vld [vmem:[%s3183 + $0x80] sm:$0xf]
                %3250 = vst [vmem:[%s3184 + $0x100] sm:$0xf] %v3249
                %v3251 = vld [vmem:[%s3183 + $0x84] sm:$0xf]
                %3252 = vst [vmem:[%s3184 + $0x104] sm:$0xf] %v3251
                %v3253 = vld [vmem:[%s3183 + $0x88] sm:$0xf]
                %3254 = vst [vmem:[%s3184 + $0x108] sm:$0xf] %v3253
                %v3255 = vld [vmem:[%s3183 + $0x8c] sm:$0xf]
                %3256 = vst [vmem:[%s3184 + $0x10c] sm:$0xf] %v3255
                %v3257 = vld [vmem:[%s3183 + $0x90] sm:$0xf]
                %3258 = vst [vmem:[%s3184 + $0x110] sm:$0xf] %v3257
                %v3259 = vld [vmem:[%s3183 + $0x94] sm:$0xf]
                %3260 = vst [vmem:[%s3184 + $0x114] sm:$0xf] %v3259
                %v3261 = vld [vmem:[%s3183 + $0x98] sm:$0xf]
                %3262 = vst [vmem:[%s3184 + $0x118] sm:$0xf] %v3261
                %v3263 = vld [vmem:[%s3183 + $0x9c] sm:$0xf]
                %3264 = vst [vmem:[%s3184 + $0x11c] sm:$0xf] %v3263
                %v3265 = vld [vmem:[%s3183 + $0xa0] sm:$0xf]
                %3266 = vst [vmem:[%s3184 + $0x120] sm:$0xf] %v3265
                %v3267 = vld [vmem:[%s3183 + $0xa4] sm:$0xf]
                %3268 = vst [vmem:[%s3184 + $0x124] sm:$0xf] %v3267
                %v3269 = vld [vmem:[%s3183 + $0xa8] sm:$0xf]
                %3270 = vst [vmem:[%s3184 + $0x128] sm:$0xf] %v3269
                %v3271 = vld [vmem:[%s3183 + $0xac] sm:$0xf]
                %3272 = vst [vmem:[%s3184 + $0x12c] sm:$0xf] %v3271
                %v3273 = vld [vmem:[%s3183 + $0xb0] sm:$0xf]
                %3274 = vst [vmem:[%s3184 + $0x130] sm:$0xf] %v3273
                %v3275 = vld [vmem:[%s3183 + $0xb4] sm:$0xf]
                %3276 = vst [vmem:[%s3184 + $0x134] sm:$0xf] %v3275
                %v3277 = vld [vmem:[%s3183 + $0xb8] sm:$0xf]
                %3278 = vst [vmem:[%s3184 + $0x138] sm:$0xf] %v3277
                %v3279 = vld [vmem:[%s3183 + $0xbc] sm:$0xf]
                %3280 = vst [vmem:[%s3184 + $0x13c] sm:$0xf] %v3279
                %v3281 = vld [vmem:[%s3183 + $0xc0] sm:$0xf]
                %3282 = vst [vmem:[%s3184 + $0x140] sm:$0xf] %v3281
                %v3283 = vld [vmem:[%s3183 + $0xc4] sm:$0xf]
                %3284 = vst [vmem:[%s3184 + $0x144] sm:$0xf] %v3283
                %v3285 = vld [vmem:[%s3183 + $0xc8] sm:$0xf]
                %3286 = vst [vmem:[%s3184 + $0x148] sm:$0xf] %v3285
                %v3287 = vld [vmem:[%s3183 + $0xcc] sm:$0xf]
                %3288 = vst [vmem:[%s3184 + $0x14c] sm:$0xf] %v3287
                %v3289 = vld [vmem:[%s3183 + $0xd0] sm:$0xf]
                %3290 = vst [vmem:[%s3184 + $0x150] sm:$0xf] %v3289
                %v3291 = vld [vmem:[%s3183 + $0xd4] sm:$0xf]
                %3292 = vst [vmem:[%s3184 + $0x154] sm:$0xf] %v3291
                %v3293 = vld [vmem:[%s3183 + $0xd8] sm:$0xf]
                %3294 = vst [vmem:[%s3184 + $0x158] sm:$0xf] %v3293
                %v3295 = vld [vmem:[%s3183 + $0xdc] sm:$0xf]
                %3296 = vst [vmem:[%s3184 + $0x15c] sm:$0xf] %v3295
                %v3297 = vld [vmem:[%s3183 + $0xe0] sm:$0xf]
                %3298 = vst [vmem:[%s3184 + $0x160] sm:$0xf] %v3297
                %v3299 = vld [vmem:[%s3183 + $0xe4] sm:$0xf]
                %3300 = vst [vmem:[%s3184 + $0x164] sm:$0xf] %v3299
                %v3301 = vld [vmem:[%s3183 + $0xe8] sm:$0xf]
                %3302 = vst [vmem:[%s3184 + $0x168] sm:$0xf] %v3301
                %v3303 = vld [vmem:[%s3183 + $0xec] sm:$0xf]
                %3304 = vst [vmem:[%s3184 + $0x16c] sm:$0xf] %v3303
                %v3305 = vld [vmem:[%s3183 + $0xf0] sm:$0xf]
                %3306 = vst [vmem:[%s3184 + $0x170] sm:$0xf] %v3305
                %v3307 = vld [vmem:[%s3183 + $0xf4] sm:$0xf]
                %3308 = vst [vmem:[%s3184 + $0x174] sm:$0xf] %v3307
                %v3309 = vld [vmem:[%s3183 + $0xf8] sm:$0xf]
                %3310 = vst [vmem:[%s3184 + $0x178] sm:$0xf] %v3309
                %v3311 = vld [vmem:[%s3183 + $0xfc] sm:$0xf]
                %3312 = vst [vmem:[%s3184 + $0x17c] sm:$0xf] %v3311
                %v3313 = vld [vmem:[%s3183 + $0x100] sm:$0xf]
                %3314 = vst [vmem:[%s3184 + $0x200] sm:$0xf] %v3313
                %v3315 = vld [vmem:[%s3183 + $0x104] sm:$0xf]
                %3316 = vst [vmem:[%s3184 + $0x204] sm:$0xf] %v3315
                %v3317 = vld [vmem:[%s3183 + $0x108] sm:$0xf]
                %3318 = vst [vmem:[%s3184 + $0x208] sm:$0xf] %v3317
                %v3319 = vld [vmem:[%s3183 + $0x10c] sm:$0xf]
                %3320 = vst [vmem:[%s3184 + $0x20c] sm:$0xf] %v3319
                %v3321 = vld [vmem:[%s3183 + $0x110] sm:$0xf]
                %3322 = vst [vmem:[%s3184 + $0x210] sm:$0xf] %v3321
                %v3323 = vld [vmem:[%s3183 + $0x114] sm:$0xf]
                %3324 = vst [vmem:[%s3184 + $0x214] sm:$0xf] %v3323
                %v3325 = vld [vmem:[%s3183 + $0x118] sm:$0xf]
                %3326 = vst [vmem:[%s3184 + $0x218] sm:$0xf] %v3325
                %v3327 = vld [vmem:[%s3183 + $0x11c] sm:$0xf]
                %3328 = vst [vmem:[%s3184 + $0x21c] sm:$0xf] %v3327
                %v3329 = vld [vmem:[%s3183 + $0x120] sm:$0xf]
                %3330 = vst [vmem:[%s3184 + $0x220] sm:$0xf] %v3329
                %v3331 = vld [vmem:[%s3183 + $0x124] sm:$0xf]
                %3332 = vst [vmem:[%s3184 + $0x224] sm:$0xf] %v3331
                %v3333 = vld [vmem:[%s3183 + $0x128] sm:$0xf]
                %3334 = vst [vmem:[%s3184 + $0x228] sm:$0xf] %v3333
                %v3335 = vld [vmem:[%s3183 + $0x12c] sm:$0xf]
                %3336 = vst [vmem:[%s3184 + $0x22c] sm:$0xf] %v3335
                %v3337 = vld [vmem:[%s3183 + $0x130] sm:$0xf]
                %3338 = vst [vmem:[%s3184 + $0x230] sm:$0xf] %v3337
                %v3339 = vld [vmem:[%s3183 + $0x134] sm:$0xf]
                %3340 = vst [vmem:[%s3184 + $0x234] sm:$0xf] %v3339
                %v3341 = vld [vmem:[%s3183 + $0x138] sm:$0xf]
                %3342 = vst [vmem:[%s3184 + $0x238] sm:$0xf] %v3341
                %v3343 = vld [vmem:[%s3183 + $0x13c] sm:$0xf]
                %3344 = vst [vmem:[%s3184 + $0x23c] sm:$0xf] %v3343
                %v3345 = vld [vmem:[%s3183 + $0x140] sm:$0xf]
                %3346 = vst [vmem:[%s3184 + $0x240] sm:$0xf] %v3345
                %v3347 = vld [vmem:[%s3183 + $0x144] sm:$0xf]
                %3348 = vst [vmem:[%s3184 + $0x244] sm:$0xf] %v3347
                %v3349 = vld [vmem:[%s3183 + $0x148] sm:$0xf]
                %3350 = vst [vmem:[%s3184 + $0x248] sm:$0xf] %v3349
                %v3351 = vld [vmem:[%s3183 + $0x14c] sm:$0xf]
                %3352 = vst [vmem:[%s3184 + $0x24c] sm:$0xf] %v3351
                %v3353 = vld [vmem:[%s3183 + $0x150] sm:$0xf]
                %3354 = vst [vmem:[%s3184 + $0x250] sm:$0xf] %v3353
                %v3355 = vld [vmem:[%s3183 + $0x154] sm:$0xf]
                %3356 = vst [vmem:[%s3184 + $0x254] sm:$0xf] %v3355
                %v3357 = vld [vmem:[%s3183 + $0x158] sm:$0xf]
                %3358 = vst [vmem:[%s3184 + $0x258] sm:$0xf] %v3357
                %v3359 = vld [vmem:[%s3183 + $0x15c] sm:$0xf]
                %3360 = vst [vmem:[%s3184 + $0x25c] sm:$0xf] %v3359
                %v3361 = vld [vmem:[%s3183 + $0x160] sm:$0xf]
                %3362 = vst [vmem:[%s3184 + $0x260] sm:$0xf] %v3361
                %v3363 = vld [vmem:[%s3183 + $0x164] sm:$0xf]
                %3364 = vst [vmem:[%s3184 + $0x264] sm:$0xf] %v3363
                %v3365 = vld [vmem:[%s3183 + $0x168] sm:$0xf]
                %3366 = vst [vmem:[%s3184 + $0x268] sm:$0xf] %v3365
                %v3367 = vld [vmem:[%s3183 + $0x16c] sm:$0xf]
                %3368 = vst [vmem:[%s3184 + $0x26c] sm:$0xf] %v3367
                %v3369 = vld [vmem:[%s3183 + $0x170] sm:$0xf]
                %3370 = vst [vmem:[%s3184 + $0x270] sm:$0xf] %v3369
                %v3371 = vld [vmem:[%s3183 + $0x174] sm:$0xf]
                %3372 = vst [vmem:[%s3184 + $0x274] sm:$0xf] %v3371
                %v3373 = vld [vmem:[%s3183 + $0x178] sm:$0xf]
                %3374 = vst [vmem:[%s3184 + $0x278] sm:$0xf] %v3373
                %v3375 = vld [vmem:[%s3183 + $0x17c] sm:$0xf]
                %3376 = vst [vmem:[%s3184 + $0x27c] sm:$0xf] %v3375
                %v3377 = vld [vmem:[%s3183 + $0x180] sm:$0xf]
                %3378 = vst [vmem:[%s3184 + $0x300] sm:$0xf] %v3377
                %v3379 = vld [vmem:[%s3183 + $0x184] sm:$0xf]
                %3380 = vst [vmem:[%s3184 + $0x304] sm:$0xf] %v3379
                %v3381 = vld [vmem:[%s3183 + $0x188] sm:$0xf]
                %3382 = vst [vmem:[%s3184 + $0x308] sm:$0xf] %v3381
                %v3383 = vld [vmem:[%s3183 + $0x18c] sm:$0xf]
                %3384 = vst [vmem:[%s3184 + $0x30c] sm:$0xf] %v3383
                %v3385 = vld [vmem:[%s3183 + $0x190] sm:$0xf]
                %3386 = vst [vmem:[%s3184 + $0x310] sm:$0xf] %v3385
                %v3387 = vld [vmem:[%s3183 + $0x194] sm:$0xf]
                %3388 = vst [vmem:[%s3184 + $0x314] sm:$0xf] %v3387
                %v3389 = vld [vmem:[%s3183 + $0x198] sm:$0xf]
                %3390 = vst [vmem:[%s3184 + $0x318] sm:$0xf] %v3389
                %v3391 = vld [vmem:[%s3183 + $0x19c] sm:$0xf]
                %3392 = vst [vmem:[%s3184 + $0x31c] sm:$0xf] %v3391
                %v3393 = vld [vmem:[%s3183 + $0x1a0] sm:$0xf]
                %3394 = vst [vmem:[%s3184 + $0x320] sm:$0xf] %v3393
                %v3395 = vld [vmem:[%s3183 + $0x1a4] sm:$0xf]
                %3396 = vst [vmem:[%s3184 + $0x324] sm:$0xf] %v3395
                %v3397 = vld [vmem:[%s3183 + $0x1a8] sm:$0xf]
                %3398 = vst [vmem:[%s3184 + $0x328] sm:$0xf] %v3397
                %v3399 = vld [vmem:[%s3183 + $0x1ac] sm:$0xf]
                %3400 = vst [vmem:[%s3184 + $0x32c] sm:$0xf] %v3399
                %v3401 = vld [vmem:[%s3183 + $0x1b0] sm:$0xf]
                %3402 = vst [vmem:[%s3184 + $0x330] sm:$0xf] %v3401
                %v3403 = vld [vmem:[%s3183 + $0x1b4] sm:$0xf]
                %3404 = vst [vmem:[%s3184 + $0x334] sm:$0xf] %v3403
                %v3405 = vld [vmem:[%s3183 + $0x1b8] sm:$0xf]
                %3406 = vst [vmem:[%s3184 + $0x338] sm:$0xf] %v3405
                %v3407 = vld [vmem:[%s3183 + $0x1bc] sm:$0xf]
                %3408 = vst [vmem:[%s3184 + $0x33c] sm:$0xf] %v3407
                %v3409 = vld [vmem:[%s3183 + $0x1c0] sm:$0xf]
                %3410 = vst [vmem:[%s3184 + $0x340] sm:$0xf] %v3409
                %v3411 = vld [vmem:[%s3183 + $0x1c4] sm:$0xf]
                %3412 = vst [vmem:[%s3184 + $0x344] sm:$0xf] %v3411
                %v3413 = vld [vmem:[%s3183 + $0x1c8] sm:$0xf]
                %3414 = vst [vmem:[%s3184 + $0x348] sm:$0xf] %v3413
                %v3415 = vld [vmem:[%s3183 + $0x1cc] sm:$0xf]
                %3416 = vst [vmem:[%s3184 + $0x34c] sm:$0xf] %v3415
                %v3417 = vld [vmem:[%s3183 + $0x1d0] sm:$0xf]
                %3418 = vst [vmem:[%s3184 + $0x350] sm:$0xf] %v3417
                %v3419 = vld [vmem:[%s3183 + $0x1d4] sm:$0xf]
                %3420 = vst [vmem:[%s3184 + $0x354] sm:$0xf] %v3419
                %v3421 = vld [vmem:[%s3183 + $0x1d8] sm:$0xf]
                %3422 = vst [vmem:[%s3184 + $0x358] sm:$0xf] %v3421
                %v3423 = vld [vmem:[%s3183 + $0x1dc] sm:$0xf]
                %3424 = vst [vmem:[%s3184 + $0x35c] sm:$0xf] %v3423
                %v3425 = vld [vmem:[%s3183 + $0x1e0] sm:$0xf]
                %3426 = vst [vmem:[%s3184 + $0x360] sm:$0xf] %v3425
                %v3427 = vld [vmem:[%s3183 + $0x1e4] sm:$0xf]
                %3428 = vst [vmem:[%s3184 + $0x364] sm:$0xf] %v3427
                %v3429 = vld [vmem:[%s3183 + $0x1e8] sm:$0xf]
                %3430 = vst [vmem:[%s3184 + $0x368] sm:$0xf] %v3429
                %v3431 = vld [vmem:[%s3183 + $0x1ec] sm:$0xf]
                %3432 = vst [vmem:[%s3184 + $0x36c] sm:$0xf] %v3431
                %v3433 = vld [vmem:[%s3183 + $0x1f0] sm:$0xf]
                %3434 = vst [vmem:[%s3184 + $0x370] sm:$0xf] %v3433
                %v3435 = vld [vmem:[%s3183 + $0x1f4] sm:$0xf]
                %3436 = vst [vmem:[%s3184 + $0x374] sm:$0xf] %v3435
                %v3437 = vld [vmem:[%s3183 + $0x1f8] sm:$0xf]
                %3438 = vst [vmem:[%s3184 + $0x378] sm:$0xf] %v3437
                %v3439 = vld [vmem:[%s3183 + $0x1fc] sm:$0xf]
                %3440 = vst [vmem:[%s3184 + $0x37c] sm:$0xf] %v3439
              $region102: #{tpu_custom_call.1} parent=96 // loop_footer
                %s3182 = sadd.s32 1, %s3178
              $region103: #{tpu_custom_call.1} parent=96 // loop_footer_branch
                %3177 = sbr.rel target = $region99
              $region104: #{tpu_custom_call.1} parent=96 // loop_exit
                _
            $region97: #{tpu_custom_call.1} parent=88 // pred_fallthru
              _
          $region89: #{tpu_custom_call.1} parent=84 // pred_fallthru
            _
          %3716 = vnop
        $region85: #{tpu_custom_call.1} parent=31 // pred_fallthru
          _
        // Predicated region
        $region123: #{tpu_custom_call.1} parent=31 // pred_check
          %p3717 = pneg %p179
        $region124: #{tpu_custom_call.1} parent=31 // pred_check_branch
          %3719 = sbr.rel (%p3717) target = $region126
        $region125: #{tpu_custom_call.1} parent=31 // pred_region
          %s3720 = smul.u32 32, %s26
          %s3721 = smul.addr %s25, 256
          %s3722 = sadd.s32 %s3720, %s3721
          %s3723 = smul.addr %s3722, 4
          %s3724 = scalar_lea.vmem %s5, %s3723
          // Predicated region
          $region127: #{tpu_custom_call.1} parent=125 // pred_check
            _
          $region128: #{tpu_custom_call.1} parent=125 // pred_check_branch
            %3726 = sbr.rel (0) target = $region130
          $region129: #{tpu_custom_call.1} parent=125 // pred_region
            // Predicated region
            $region131: #{tpu_custom_call.1} parent=129 // pred_check
              _
            $region132: #{tpu_custom_call.1} parent=129 // pred_check_branch
              %3728 = sbr.rel target = $region134
            $region133: #{tpu_custom_call.1} parent=129 // pred_region
              // Predicated region
              $region146: #{tpu_custom_call.1} parent=133 // pred_check
                _
              $region147: #{tpu_custom_call.1} parent=133 // pred_check_branch
                %3997 = sbr.rel (0) target = $region149
              $region148: #{tpu_custom_call.1} parent=133 // pred_region
                loop: start=0, step=1, limit=1
                $region150: #{tpu_custom_call.1} parent=148 // loop_pre_header
                  _
                $region151: #{tpu_custom_call.1} parent=148 // loop_header
                  %s3999 = sphi 0, %s4003
                  %p4000 = scmp.ge.s32.totalorder %s3999, 1
                  %s4004 = sphi %s2606, %s2606
                  %s4005 = sphi %s3724, %s3724
                $region152: #{tpu_custom_call.1} parent=148 // loop_header_branch
                  %4002 = sbr.rel (%p4000) target = $region156
                $region153: #{tpu_custom_call.1} parent=148 // loop_body
                  _
                $region154: #{tpu_custom_call.1} parent=148 // loop_footer
                  %s4003 = sadd.s32 1, %s3999
                $region155: #{tpu_custom_call.1} parent=148 // loop_footer_branch
                  %3998 = sbr.rel target = $region151
                $region156: #{tpu_custom_call.1} parent=148 // loop_exit
                  _
                loop: start=0, step=1, limit=1
                $region157: #{tpu_custom_call.1} parent=148 // loop_pre_header
                  _
                $region158: #{tpu_custom_call.1} parent=148 // loop_header
                  %s4008 = sphi 0, %s4012
                  %p4009 = scmp.ge.s32.totalorder %s4008, 1
                  %s4013 = sphi %s2606, %s2606
                  %s4014 = sphi %s3724, %s3724
                $region159: #{tpu_custom_call.1} parent=148 // loop_header_branch
                  %4011 = sbr.rel (%p4009) target = $region163
                $region160: #{tpu_custom_call.1} parent=148 // loop_body
                  %v4015 = vld [vmem:[%s4013] sm:$0xf]
                  %4016 = vst [vmem:[%s4014] sm:$0xf] %v4015
                  %v4017 = vld [vmem:[%s4013 + $0x4] sm:$0xf]
                  %4018 = vst [vmem:[%s4014 + $0x4] sm:$0xf] %v4017
                  %v4019 = vld [vmem:[%s4013 + $0x8] sm:$0xf]
                  %4020 = vst [vmem:[%s4014 + $0x8] sm:$0xf] %v4019
                  %v4021 = vld [vmem:[%s4013 + $0xc] sm:$0xf]
                  %4022 = vst [vmem:[%s4014 + $0xc] sm:$0xf] %v4021
                  %v4023 = vld [vmem:[%s4013 + $0x10] sm:$0xf]
                  %4024 = vst [vmem:[%s4014 + $0x10] sm:$0xf] %v4023
                  %v4025 = vld [vmem:[%s4013 + $0x14] sm:$0xf]
                  %4026 = vst [vmem:[%s4014 + $0x14] sm:$0xf] %v4025
                  %v4027 = vld [vmem:[%s4013 + $0x18] sm:$0xf]
                  %4028 = vst [vmem:[%s4014 + $0x18] sm:$0xf] %v4027
                  %v4029 = vld [vmem:[%s4013 + $0x1c] sm:$0xf]
                  %4030 = vst [vmem:[%s4014 + $0x1c] sm:$0xf] %v4029
                  %v4031 = vld [vmem:[%s4013 + $0x20] sm:$0xf]
                  %4032 = vst [vmem:[%s4014 + $0x20] sm:$0xf] %v4031
                  %v4033 = vld [vmem:[%s4013 + $0x24] sm:$0xf]
                  %4034 = vst [vmem:[%s4014 + $0x24] sm:$0xf] %v4033
                  %v4035 = vld [vmem:[%s4013 + $0x28] sm:$0xf]
                  %4036 = vst [vmem:[%s4014 + $0x28] sm:$0xf] %v4035
                  %v4037 = vld [vmem:[%s4013 + $0x2c] sm:$0xf]
                  %4038 = vst [vmem:[%s4014 + $0x2c] sm:$0xf] %v4037
                  %v4039 = vld [vmem:[%s4013 + $0x30] sm:$0xf]
                  %4040 = vst [vmem:[%s4014 + $0x30] sm:$0xf] %v4039
                  %v4041 = vld [vmem:[%s4013 + $0x34] sm:$0xf]
                  %4042 = vst [vmem:[%s4014 + $0x34] sm:$0xf] %v4041
                  %v4043 = vld [vmem:[%s4013 + $0x38] sm:$0xf]
                  %4044 = vst [vmem:[%s4014 + $0x38] sm:$0xf] %v4043
                  %v4045 = vld [vmem:[%s4013 + $0x3c] sm:$0xf]
                  %4046 = vst [vmem:[%s4014 + $0x3c] sm:$0xf] %v4045
                  %v4047 = vld [vmem:[%s4013 + $0x40] sm:$0xf]
                  %4048 = vst [vmem:[%s4014 + $0x40] sm:$0xf] %v4047
                  %v4049 = vld [vmem:[%s4013 + $0x44] sm:$0xf]
                  %4050 = vst [vmem:[%s4014 + $0x44] sm:$0xf] %v4049
                  %v4051 = vld [vmem:[%s4013 + $0x48] sm:$0xf]
                  %4052 = vst [vmem:[%s4014 + $0x48] sm:$0xf] %v4051
                  %v4053 = vld [vmem:[%s4013 + $0x4c] sm:$0xf]
                  %4054 = vst [vmem:[%s4014 + $0x4c] sm:$0xf] %v4053
                  %v4055 = vld [vmem:[%s4013 + $0x50] sm:$0xf]
                  %4056 = vst [vmem:[%s4014 + $0x50] sm:$0xf] %v4055
                  %v4057 = vld [vmem:[%s4013 + $0x54] sm:$0xf]
                  %4058 = vst [vmem:[%s4014 + $0x54] sm:$0xf] %v4057
                  %v4059 = vld [vmem:[%s4013 + $0x58] sm:$0xf]
                  %4060 = vst [vmem:[%s4014 + $0x58] sm:$0xf] %v4059
                  %v4061 = vld [vmem:[%s4013 + $0x5c] sm:$0xf]
                  %4062 = vst [vmem:[%s4014 + $0x5c] sm:$0xf] %v4061
                  %v4063 = vld [vmem:[%s4013 + $0x60] sm:$0xf]
                  %4064 = vst [vmem:[%s4014 + $0x60] sm:$0xf] %v4063
                  %v4065 = vld [vmem:[%s4013 + $0x64] sm:$0xf]
                  %4066 = vst [vmem:[%s4014 + $0x64] sm:$0xf] %v4065
                  %v4067 = vld [vmem:[%s4013 + $0x68] sm:$0xf]
                  %4068 = vst [vmem:[%s4014 + $0x68] sm:$0xf] %v4067
                  %v4069 = vld [vmem:[%s4013 + $0x6c] sm:$0xf]
                  %4070 = vst [vmem:[%s4014 + $0x6c] sm:$0xf] %v4069
                  %v4071 = vld [vmem:[%s4013 + $0x70] sm:$0xf]
                  %4072 = vst [vmem:[%s4014 + $0x70] sm:$0xf] %v4071
                  %v4073 = vld [vmem:[%s4013 + $0x74] sm:$0xf]
                  %4074 = vst [vmem:[%s4014 + $0x74] sm:$0xf] %v4073
                  %v4075 = vld [vmem:[%s4013 + $0x78] sm:$0xf]
                  %4076 = vst [vmem:[%s4014 + $0x78] sm:$0xf] %v4075
                  %v4077 = vld [vmem:[%s4013 + $0x7c] sm:$0xf]
                  %4078 = vst [vmem:[%s4014 + $0x7c] sm:$0xf] %v4077
                  %v4079 = vld [vmem:[%s4013 + $0x80] sm:$0xf]
                  %4080 = vst [vmem:[%s4014 + $0x100] sm:$0xf] %v4079
                  %v4081 = vld [vmem:[%s4013 + $0x84] sm:$0xf]
                  %4082 = vst [vmem:[%s4014 + $0x104] sm:$0xf] %v4081
                  %v4083 = vld [vmem:[%s4013 + $0x88] sm:$0xf]
                  %4084 = vst [vmem:[%s4014 + $0x108] sm:$0xf] %v4083
                  %v4085 = vld [vmem:[%s4013 + $0x8c] sm:$0xf]
                  %4086 = vst [vmem:[%s4014 + $0x10c] sm:$0xf] %v4085
                  %v4087 = vld [vmem:[%s4013 + $0x90] sm:$0xf]
                  %4088 = vst [vmem:[%s4014 + $0x110] sm:$0xf] %v4087
                  %v4089 = vld [vmem:[%s4013 + $0x94] sm:$0xf]
                  %4090 = vst [vmem:[%s4014 + $0x114] sm:$0xf] %v4089
                  %v4091 = vld [vmem:[%s4013 + $0x98] sm:$0xf]
                  %4092 = vst [vmem:[%s4014 + $0x118] sm:$0xf] %v4091
                  %v4093 = vld [vmem:[%s4013 + $0x9c] sm:$0xf]
                  %4094 = vst [vmem:[%s4014 + $0x11c] sm:$0xf] %v4093
                  %v4095 = vld [vmem:[%s4013 + $0xa0] sm:$0xf]
                  %4096 = vst [vmem:[%s4014 + $0x120] sm:$0xf] %v4095
                  %v4097 = vld [vmem:[%s4013 + $0xa4] sm:$0xf]
                  %4098 = vst [vmem:[%s4014 + $0x124] sm:$0xf] %v4097
                  %v4099 = vld [vmem:[%s4013 + $0xa8] sm:$0xf]
                  %4100 = vst [vmem:[%s4014 + $0x128] sm:$0xf] %v4099
                  %v4101 = vld [vmem:[%s4013 + $0xac] sm:$0xf]
                  %4102 = vst [vmem:[%s4014 + $0x12c] sm:$0xf] %v4101
                  %v4103 = vld [vmem:[%s4013 + $0xb0] sm:$0xf]
                  %4104 = vst [vmem:[%s4014 + $0x130] sm:$0xf] %v4103
                  %v4105 = vld [vmem:[%s4013 + $0xb4] sm:$0xf]
                  %4106 = vst [vmem:[%s4014 + $0x134] sm:$0xf] %v4105
                  %v4107 = vld [vmem:[%s4013 + $0xb8] sm:$0xf]
                  %4108 = vst [vmem:[%s4014 + $0x138] sm:$0xf] %v4107
                  %v4109 = vld [vmem:[%s4013 + $0xbc] sm:$0xf]
                  %4110 = vst [vmem:[%s4014 + $0x13c] sm:$0xf] %v4109
                  %v4111 = vld [vmem:[%s4013 + $0xc0] sm:$0xf]
                  %4112 = vst [vmem:[%s4014 + $0x140] sm:$0xf] %v4111
                  %v4113 = vld [vmem:[%s4013 + $0xc4] sm:$0xf]
                  %4114 = vst [vmem:[%s4014 + $0x144] sm:$0xf] %v4113
                  %v4115 = vld [vmem:[%s4013 + $0xc8] sm:$0xf]
                  %4116 = vst [vmem:[%s4014 + $0x148] sm:$0xf] %v4115
                  %v4117 = vld [vmem:[%s4013 + $0xcc] sm:$0xf]
                  %4118 = vst [vmem:[%s4014 + $0x14c] sm:$0xf] %v4117
                  %v4119 = vld [vmem:[%s4013 + $0xd0] sm:$0xf]
                  %4120 = vst [vmem:[%s4014 + $0x150] sm:$0xf] %v4119
                  %v4121 = vld [vmem:[%s4013 + $0xd4] sm:$0xf]
                  %4122 = vst [vmem:[%s4014 + $0x154] sm:$0xf] %v4121
                  %v4123 = vld [vmem:[%s4013 + $0xd8] sm:$0xf]
                  %4124 = vst [vmem:[%s4014 + $0x158] sm:$0xf] %v4123
                  %v4125 = vld [vmem:[%s4013 + $0xdc] sm:$0xf]
                  %4126 = vst [vmem:[%s4014 + $0x15c] sm:$0xf] %v4125
                  %v4127 = vld [vmem:[%s4013 + $0xe0] sm:$0xf]
                  %4128 = vst [vmem:[%s4014 + $0x160] sm:$0xf] %v4127
                  %v4129 = vld [vmem:[%s4013 + $0xe4] sm:$0xf]
                  %4130 = vst [vmem:[%s4014 + $0x164] sm:$0xf] %v4129
                  %v4131 = vld [vmem:[%s4013 + $0xe8] sm:$0xf]
                  %4132 = vst [vmem:[%s4014 + $0x168] sm:$0xf] %v4131
                  %v4133 = vld [vmem:[%s4013 + $0xec] sm:$0xf]
                  %4134 = vst [vmem:[%s4014 + $0x16c] sm:$0xf] %v4133
                  %v4135 = vld [vmem:[%s4013 + $0xf0] sm:$0xf]
                  %4136 = vst [vmem:[%s4014 + $0x170] sm:$0xf] %v4135
                  %v4137 = vld [vmem:[%s4013 + $0xf4] sm:$0xf]
                  %4138 = vst [vmem:[%s4014 + $0x174] sm:$0xf] %v4137
                  %v4139 = vld [vmem:[%s4013 + $0xf8] sm:$0xf]
                  %4140 = vst [vmem:[%s4014 + $0x178] sm:$0xf] %v4139
                  %v4141 = vld [vmem:[%s4013 + $0xfc] sm:$0xf]
                  %4142 = vst [vmem:[%s4014 + $0x17c] sm:$0xf] %v4141
                  %v4143 = vld [vmem:[%s4013 + $0x100] sm:$0xf]
                  %4144 = vst [vmem:[%s4014 + $0x200] sm:$0xf] %v4143
                  %v4145 = vld [vmem:[%s4013 + $0x104] sm:$0xf]
                  %4146 = vst [vmem:[%s4014 + $0x204] sm:$0xf] %v4145
                  %v4147 = vld [vmem:[%s4013 + $0x108] sm:$0xf]
                  %4148 = vst [vmem:[%s4014 + $0x208] sm:$0xf] %v4147
                  %v4149 = vld [vmem:[%s4013 + $0x10c] sm:$0xf]
                  %4150 = vst [vmem:[%s4014 + $0x20c] sm:$0xf] %v4149
                  %v4151 = vld [vmem:[%s4013 + $0x110] sm:$0xf]
                  %4152 = vst [vmem:[%s4014 + $0x210] sm:$0xf] %v4151
                  %v4153 = vld [vmem:[%s4013 + $0x114] sm:$0xf]
                  %4154 = vst [vmem:[%s4014 + $0x214] sm:$0xf] %v4153
                  %v4155 = vld [vmem:[%s4013 + $0x118] sm:$0xf]
                  %4156 = vst [vmem:[%s4014 + $0x218] sm:$0xf] %v4155
                  %v4157 = vld [vmem:[%s4013 + $0x11c] sm:$0xf]
                  %4158 = vst [vmem:[%s4014 + $0x21c] sm:$0xf] %v4157
                  %v4159 = vld [vmem:[%s4013 + $0x120] sm:$0xf]
                  %4160 = vst [vmem:[%s4014 + $0x220] sm:$0xf] %v4159
                  %v4161 = vld [vmem:[%s4013 + $0x124] sm:$0xf]
                  %4162 = vst [vmem:[%s4014 + $0x224] sm:$0xf] %v4161
                  %v4163 = vld [vmem:[%s4013 + $0x128] sm:$0xf]
                  %4164 = vst [vmem:[%s4014 + $0x228] sm:$0xf] %v4163
                  %v4165 = vld [vmem:[%s4013 + $0x12c] sm:$0xf]
                  %4166 = vst [vmem:[%s4014 + $0x22c] sm:$0xf] %v4165
                  %v4167 = vld [vmem:[%s4013 + $0x130] sm:$0xf]
                  %4168 = vst [vmem:[%s4014 + $0x230] sm:$0xf] %v4167
                  %v4169 = vld [vmem:[%s4013 + $0x134] sm:$0xf]
                  %4170 = vst [vmem:[%s4014 + $0x234] sm:$0xf] %v4169
                  %v4171 = vld [vmem:[%s4013 + $0x138] sm:$0xf]
                  %4172 = vst [vmem:[%s4014 + $0x238] sm:$0xf] %v4171
                  %v4173 = vld [vmem:[%s4013 + $0x13c] sm:$0xf]
                  %4174 = vst [vmem:[%s4014 + $0x23c] sm:$0xf] %v4173
                  %v4175 = vld [vmem:[%s4013 + $0x140] sm:$0xf]
                  %4176 = vst [vmem:[%s4014 + $0x240] sm:$0xf] %v4175
                  %v4177 = vld [vmem:[%s4013 + $0x144] sm:$0xf]
                  %4178 = vst [vmem:[%s4014 + $0x244] sm:$0xf] %v4177
                  %v4179 = vld [vmem:[%s4013 + $0x148] sm:$0xf]
                  %4180 = vst [vmem:[%s4014 + $0x248] sm:$0xf] %v4179
                  %v4181 = vld [vmem:[%s4013 + $0x14c] sm:$0xf]
                  %4182 = vst [vmem:[%s4014 + $0x24c] sm:$0xf] %v4181
                  %v4183 = vld [vmem:[%s4013 + $0x150] sm:$0xf]
                  %4184 = vst [vmem:[%s4014 + $0x250] sm:$0xf] %v4183
                  %v4185 = vld [vmem:[%s4013 + $0x154] sm:$0xf]
                  %4186 = vst [vmem:[%s4014 + $0x254] sm:$0xf] %v4185
                  %v4187 = vld [vmem:[%s4013 + $0x158] sm:$0xf]
                  %4188 = vst [vmem:[%s4014 + $0x258] sm:$0xf] %v4187
                  %v4189 = vld [vmem:[%s4013 + $0x15c] sm:$0xf]
                  %4190 = vst [vmem:[%s4014 + $0x25c] sm:$0xf] %v4189
                  %v4191 = vld [vmem:[%s4013 + $0x160] sm:$0xf]
                  %4192 = vst [vmem:[%s4014 + $0x260] sm:$0xf] %v4191
                  %v4193 = vld [vmem:[%s4013 + $0x164] sm:$0xf]
                  %4194 = vst [vmem:[%s4014 + $0x264] sm:$0xf] %v4193
                  %v4195 = vld [vmem:[%s4013 + $0x168] sm:$0xf]
                  %4196 = vst [vmem:[%s4014 + $0x268] sm:$0xf] %v4195
                  %v4197 = vld [vmem:[%s4013 + $0x16c] sm:$0xf]
                  %4198 = vst [vmem:[%s4014 + $0x26c] sm:$0xf] %v4197
                  %v4199 = vld [vmem:[%s4013 + $0x170] sm:$0xf]
                  %4200 = vst [vmem:[%s4014 + $0x270] sm:$0xf] %v4199
                  %v4201 = vld [vmem:[%s4013 + $0x174] sm:$0xf]
                  %4202 = vst [vmem:[%s4014 + $0x274] sm:$0xf] %v4201
                  %v4203 = vld [vmem:[%s4013 + $0x178] sm:$0xf]
                  %4204 = vst [vmem:[%s4014 + $0x278] sm:$0xf] %v4203
                  %v4205 = vld [vmem:[%s4013 + $0x17c] sm:$0xf]
                  %4206 = vst [vmem:[%s4014 + $0x27c] sm:$0xf] %v4205
                  %v4207 = vld [vmem:[%s4013 + $0x180] sm:$0xf]
                  %4208 = vst [vmem:[%s4014 + $0x300] sm:$0xf] %v4207
                  %v4209 = vld [vmem:[%s4013 + $0x184] sm:$0xf]
                  %4210 = vst [vmem:[%s4014 + $0x304] sm:$0xf] %v4209
                  %v4211 = vld [vmem:[%s4013 + $0x188] sm:$0xf]
                  %4212 = vst [vmem:[%s4014 + $0x308] sm:$0xf] %v4211
                  %v4213 = vld [vmem:[%s4013 + $0x18c] sm:$0xf]
                  %4214 = vst [vmem:[%s4014 + $0x30c] sm:$0xf] %v4213
                  %v4215 = vld [vmem:[%s4013 + $0x190] sm:$0xf]
                  %4216 = vst [vmem:[%s4014 + $0x310] sm:$0xf] %v4215
                  %v4217 = vld [vmem:[%s4013 + $0x194] sm:$0xf]
                  %4218 = vst [vmem:[%s4014 + $0x314] sm:$0xf] %v4217
                  %v4219 = vld [vmem:[%s4013 + $0x198] sm:$0xf]
                  %4220 = vst [vmem:[%s4014 + $0x318] sm:$0xf] %v4219
                  %v4221 = vld [vmem:[%s4013 + $0x19c] sm:$0xf]
                  %4222 = vst [vmem:[%s4014 + $0x31c] sm:$0xf] %v4221
                  %v4223 = vld [vmem:[%s4013 + $0x1a0] sm:$0xf]
                  %4224 = vst [vmem:[%s4014 + $0x320] sm:$0xf] %v4223
                  %v4225 = vld [vmem:[%s4013 + $0x1a4] sm:$0xf]
                  %4226 = vst [vmem:[%s4014 + $0x324] sm:$0xf] %v4225
                  %v4227 = vld [vmem:[%s4013 + $0x1a8] sm:$0xf]
                  %4228 = vst [vmem:[%s4014 + $0x328] sm:$0xf] %v4227
                  %v4229 = vld [vmem:[%s4013 + $0x1ac] sm:$0xf]
                  %4230 = vst [vmem:[%s4014 + $0x32c] sm:$0xf] %v4229
                  %v4231 = vld [vmem:[%s4013 + $0x1b0] sm:$0xf]
                  %4232 = vst [vmem:[%s4014 + $0x330] sm:$0xf] %v4231
                  %v4233 = vld [vmem:[%s4013 + $0x1b4] sm:$0xf]
                  %4234 = vst [vmem:[%s4014 + $0x334] sm:$0xf] %v4233
                  %v4235 = vld [vmem:[%s4013 + $0x1b8] sm:$0xf]
                  %4236 = vst [vmem:[%s4014 + $0x338] sm:$0xf] %v4235
                  %v4237 = vld [vmem:[%s4013 + $0x1bc] sm:$0xf]
                  %4238 = vst [vmem:[%s4014 + $0x33c] sm:$0xf] %v4237
                  %v4239 = vld [vmem:[%s4013 + $0x1c0] sm:$0xf]
                  %4240 = vst [vmem:[%s4014 + $0x340] sm:$0xf] %v4239
                  %v4241 = vld [vmem:[%s4013 + $0x1c4] sm:$0xf]
                  %4242 = vst [vmem:[%s4014 + $0x344] sm:$0xf] %v4241
                  %v4243 = vld [vmem:[%s4013 + $0x1c8] sm:$0xf]
                  %4244 = vst [vmem:[%s4014 + $0x348] sm:$0xf] %v4243
                  %v4245 = vld [vmem:[%s4013 + $0x1cc] sm:$0xf]
                  %4246 = vst [vmem:[%s4014 + $0x34c] sm:$0xf] %v4245
                  %v4247 = vld [vmem:[%s4013 + $0x1d0] sm:$0xf]
                  %4248 = vst [vmem:[%s4014 + $0x350] sm:$0xf] %v4247
                  %v4249 = vld [vmem:[%s4013 + $0x1d4] sm:$0xf]
                  %4250 = vst [vmem:[%s4014 + $0x354] sm:$0xf] %v4249
                  %v4251 = vld [vmem:[%s4013 + $0x1d8] sm:$0xf]
                  %4252 = vst [vmem:[%s4014 + $0x358] sm:$0xf] %v4251
                  %v4253 = vld [vmem:[%s4013 + $0x1dc] sm:$0xf]
                  %4254 = vst [vmem:[%s4014 + $0x35c] sm:$0xf] %v4253
                  %v4255 = vld [vmem:[%s4013 + $0x1e0] sm:$0xf]
                  %4256 = vst [vmem:[%s4014 + $0x360] sm:$0xf] %v4255
                  %v4257 = vld [vmem:[%s4013 + $0x1e4] sm:$0xf]
                  %4258 = vst [vmem:[%s4014 + $0x364] sm:$0xf] %v4257
                  %v4259 = vld [vmem:[%s4013 + $0x1e8] sm:$0xf]
                  %4260 = vst [vmem:[%s4014 + $0x368] sm:$0xf] %v4259
                  %v4261 = vld [vmem:[%s4013 + $0x1ec] sm:$0xf]
                  %4262 = vst [vmem:[%s4014 + $0x36c] sm:$0xf] %v4261
                  %v4263 = vld [vmem:[%s4013 + $0x1f0] sm:$0xf]
                  %4264 = vst [vmem:[%s4014 + $0x370] sm:$0xf] %v4263
                  %v4265 = vld [vmem:[%s4013 + $0x1f4] sm:$0xf]
                  %4266 = vst [vmem:[%s4014 + $0x374] sm:$0xf] %v4265
                  %v4267 = vld [vmem:[%s4013 + $0x1f8] sm:$0xf]
                  %4268 = vst [vmem:[%s4014 + $0x378] sm:$0xf] %v4267
                  %v4269 = vld [vmem:[%s4013 + $0x1fc] sm:$0xf]
                  %4270 = vst [vmem:[%s4014 + $0x37c] sm:$0xf] %v4269
                $region161: #{tpu_custom_call.1} parent=148 // loop_footer
                  %s4012 = sadd.s32 1, %s4008
                $region162: #{tpu_custom_call.1} parent=148 // loop_footer_branch
                  %4007 = sbr.rel target = $region158
                $region163: #{tpu_custom_call.1} parent=148 // loop_exit
                  _
              $region149: #{tpu_custom_call.1} parent=133 // pred_fallthru
                _
            $region134: #{tpu_custom_call.1} parent=129 // pred_fallthru
              _
            // Predicated region
            $region135: #{tpu_custom_call.1} parent=129 // pred_check
              _
            $region136: #{tpu_custom_call.1} parent=129 // pred_check_branch
              %3730 = sbr.rel (0) target = $region138
            $region137: #{tpu_custom_call.1} parent=129 // pred_region
              loop: start=0, step=1, limit=1
              $region139: #{tpu_custom_call.1} parent=137 // loop_pre_header
                _
              $region140: #{tpu_custom_call.1} parent=137 // loop_header
                %s3733 = sphi 0, %s3737
                %p3734 = scmp.ge.s32.totalorder %s3733, 1
                %s3738 = sphi %s2606, %s2606
                %s3739 = sphi %s3724, %s3724
              $region141: #{tpu_custom_call.1} parent=137 // loop_header_branch
                %3736 = sbr.rel (%p3734) target = $region145
              $region142: #{tpu_custom_call.1} parent=137 // loop_body
                %v3740 = vld [vmem:[%s3738] sm:$0xf]
                %3741 = vst [vmem:[%s3739] sm:$0xf] %v3740
                %v3742 = vld [vmem:[%s3738 + $0x4] sm:$0xf]
                %3743 = vst [vmem:[%s3739 + $0x4] sm:$0xf] %v3742
                %v3744 = vld [vmem:[%s3738 + $0x8] sm:$0xf]
                %3745 = vst [vmem:[%s3739 + $0x8] sm:$0xf] %v3744
                %v3746 = vld [vmem:[%s3738 + $0xc] sm:$0xf]
                %3747 = vst [vmem:[%s3739 + $0xc] sm:$0xf] %v3746
                %v3748 = vld [vmem:[%s3738 + $0x10] sm:$0xf]
                %3749 = vst [vmem:[%s3739 + $0x10] sm:$0xf] %v3748
                %v3750 = vld [vmem:[%s3738 + $0x14] sm:$0xf]
                %3751 = vst [vmem:[%s3739 + $0x14] sm:$0xf] %v3750
                %v3752 = vld [vmem:[%s3738 + $0x18] sm:$0xf]
                %3753 = vst [vmem:[%s3739 + $0x18] sm:$0xf] %v3752
                %v3754 = vld [vmem:[%s3738 + $0x1c] sm:$0xf]
                %3755 = vst [vmem:[%s3739 + $0x1c] sm:$0xf] %v3754
                %v3756 = vld [vmem:[%s3738 + $0x20] sm:$0xf]
                %3757 = vst [vmem:[%s3739 + $0x20] sm:$0xf] %v3756
                %v3758 = vld [vmem:[%s3738 + $0x24] sm:$0xf]
                %3759 = vst [vmem:[%s3739 + $0x24] sm:$0xf] %v3758
                %v3760 = vld [vmem:[%s3738 + $0x28] sm:$0xf]
                %3761 = vst [vmem:[%s3739 + $0x28] sm:$0xf] %v3760
                %v3762 = vld [vmem:[%s3738 + $0x2c] sm:$0xf]
                %3763 = vst [vmem:[%s3739 + $0x2c] sm:$0xf] %v3762
                %v3764 = vld [vmem:[%s3738 + $0x30] sm:$0xf]
                %3765 = vst [vmem:[%s3739 + $0x30] sm:$0xf] %v3764
                %v3766 = vld [vmem:[%s3738 + $0x34] sm:$0xf]
                %3767 = vst [vmem:[%s3739 + $0x34] sm:$0xf] %v3766
                %v3768 = vld [vmem:[%s3738 + $0x38] sm:$0xf]
                %3769 = vst [vmem:[%s3739 + $0x38] sm:$0xf] %v3768
                %v3770 = vld [vmem:[%s3738 + $0x3c] sm:$0xf]
                %3771 = vst [vmem:[%s3739 + $0x3c] sm:$0xf] %v3770
                %v3772 = vld [vmem:[%s3738 + $0x40] sm:$0xf]
                %3773 = vst [vmem:[%s3739 + $0x40] sm:$0xf] %v3772
                %v3774 = vld [vmem:[%s3738 + $0x44] sm:$0xf]
                %3775 = vst [vmem:[%s3739 + $0x44] sm:$0xf] %v3774
                %v3776 = vld [vmem:[%s3738 + $0x48] sm:$0xf]
                %3777 = vst [vmem:[%s3739 + $0x48] sm:$0xf] %v3776
                %v3778 = vld [vmem:[%s3738 + $0x4c] sm:$0xf]
                %3779 = vst [vmem:[%s3739 + $0x4c] sm:$0xf] %v3778
                %v3780 = vld [vmem:[%s3738 + $0x50] sm:$0xf]
                %3781 = vst [vmem:[%s3739 + $0x50] sm:$0xf] %v3780
                %v3782 = vld [vmem:[%s3738 + $0x54] sm:$0xf]
                %3783 = vst [vmem:[%s3739 + $0x54] sm:$0xf] %v3782
                %v3784 = vld [vmem:[%s3738 + $0x58] sm:$0xf]
                %3785 = vst [vmem:[%s3739 + $0x58] sm:$0xf] %v3784
                %v3786 = vld [vmem:[%s3738 + $0x5c] sm:$0xf]
                %3787 = vst [vmem:[%s3739 + $0x5c] sm:$0xf] %v3786
                %v3788 = vld [vmem:[%s3738 + $0x60] sm:$0xf]
                %3789 = vst [vmem:[%s3739 + $0x60] sm:$0xf] %v3788
                %v3790 = vld [vmem:[%s3738 + $0x64] sm:$0xf]
                %3791 = vst [vmem:[%s3739 + $0x64] sm:$0xf] %v3790
                %v3792 = vld [vmem:[%s3738 + $0x68] sm:$0xf]
                %3793 = vst [vmem:[%s3739 + $0x68] sm:$0xf] %v3792
                %v3794 = vld [vmem:[%s3738 + $0x6c] sm:$0xf]
                %3795 = vst [vmem:[%s3739 + $0x6c] sm:$0xf] %v3794
                %v3796 = vld [vmem:[%s3738 + $0x70] sm:$0xf]
                %3797 = vst [vmem:[%s3739 + $0x70] sm:$0xf] %v3796
                %v3798 = vld [vmem:[%s3738 + $0x74] sm:$0xf]
                %3799 = vst [vmem:[%s3739 + $0x74] sm:$0xf] %v3798
                %v3800 = vld [vmem:[%s3738 + $0x78] sm:$0xf]
                %3801 = vst [vmem:[%s3739 + $0x78] sm:$0xf] %v3800
                %v3802 = vld [vmem:[%s3738 + $0x7c] sm:$0xf]
                %3803 = vst [vmem:[%s3739 + $0x7c] sm:$0xf] %v3802
                %v3804 = vld [vmem:[%s3738 + $0x80] sm:$0xf]
                %3805 = vst [vmem:[%s3739 + $0x100] sm:$0xf] %v3804
                %v3806 = vld [vmem:[%s3738 + $0x84] sm:$0xf]
                %3807 = vst [vmem:[%s3739 + $0x104] sm:$0xf] %v3806
                %v3808 = vld [vmem:[%s3738 + $0x88] sm:$0xf]
                %3809 = vst [vmem:[%s3739 + $0x108] sm:$0xf] %v3808
                %v3810 = vld [vmem:[%s3738 + $0x8c] sm:$0xf]
                %3811 = vst [vmem:[%s3739 + $0x10c] sm:$0xf] %v3810
                %v3812 = vld [vmem:[%s3738 + $0x90] sm:$0xf]
                %3813 = vst [vmem:[%s3739 + $0x110] sm:$0xf] %v3812
                %v3814 = vld [vmem:[%s3738 + $0x94] sm:$0xf]
                %3815 = vst [vmem:[%s3739 + $0x114] sm:$0xf] %v3814
                %v3816 = vld [vmem:[%s3738 + $0x98] sm:$0xf]
                %3817 = vst [vmem:[%s3739 + $0x118] sm:$0xf] %v3816
                %v3818 = vld [vmem:[%s3738 + $0x9c] sm:$0xf]
                %3819 = vst [vmem:[%s3739 + $0x11c] sm:$0xf] %v3818
                %v3820 = vld [vmem:[%s3738 + $0xa0] sm:$0xf]
                %3821 = vst [vmem:[%s3739 + $0x120] sm:$0xf] %v3820
                %v3822 = vld [vmem:[%s3738 + $0xa4] sm:$0xf]
                %3823 = vst [vmem:[%s3739 + $0x124] sm:$0xf] %v3822
                %v3824 = vld [vmem:[%s3738 + $0xa8] sm:$0xf]
                %3825 = vst [vmem:[%s3739 + $0x128] sm:$0xf] %v3824
                %v3826 = vld [vmem:[%s3738 + $0xac] sm:$0xf]
                %3827 = vst [vmem:[%s3739 + $0x12c] sm:$0xf] %v3826
                %v3828 = vld [vmem:[%s3738 + $0xb0] sm:$0xf]
                %3829 = vst [vmem:[%s3739 + $0x130] sm:$0xf] %v3828
                %v3830 = vld [vmem:[%s3738 + $0xb4] sm:$0xf]
                %3831 = vst [vmem:[%s3739 + $0x134] sm:$0xf] %v3830
                %v3832 = vld [vmem:[%s3738 + $0xb8] sm:$0xf]
                %3833 = vst [vmem:[%s3739 + $0x138] sm:$0xf] %v3832
                %v3834 = vld [vmem:[%s3738 + $0xbc] sm:$0xf]
                %3835 = vst [vmem:[%s3739 + $0x13c] sm:$0xf] %v3834
                %v3836 = vld [vmem:[%s3738 + $0xc0] sm:$0xf]
                %3837 = vst [vmem:[%s3739 + $0x140] sm:$0xf] %v3836
                %v3838 = vld [vmem:[%s3738 + $0xc4] sm:$0xf]
                %3839 = vst [vmem:[%s3739 + $0x144] sm:$0xf] %v3838
                %v3840 = vld [vmem:[%s3738 + $0xc8] sm:$0xf]
                %3841 = vst [vmem:[%s3739 + $0x148] sm:$0xf] %v3840
                %v3842 = vld [vmem:[%s3738 + $0xcc] sm:$0xf]
                %3843 = vst [vmem:[%s3739 + $0x14c] sm:$0xf] %v3842
                %v3844 = vld [vmem:[%s3738 + $0xd0] sm:$0xf]
                %3845 = vst [vmem:[%s3739 + $0x150] sm:$0xf] %v3844
                %v3846 = vld [vmem:[%s3738 + $0xd4] sm:$0xf]
                %3847 = vst [vmem:[%s3739 + $0x154] sm:$0xf] %v3846
                %v3848 = vld [vmem:[%s3738 + $0xd8] sm:$0xf]
                %3849 = vst [vmem:[%s3739 + $0x158] sm:$0xf] %v3848
                %v3850 = vld [vmem:[%s3738 + $0xdc] sm:$0xf]
                %3851 = vst [vmem:[%s3739 + $0x15c] sm:$0xf] %v3850
                %v3852 = vld [vmem:[%s3738 + $0xe0] sm:$0xf]
                %3853 = vst [vmem:[%s3739 + $0x160] sm:$0xf] %v3852
                %v3854 = vld [vmem:[%s3738 + $0xe4] sm:$0xf]
                %3855 = vst [vmem:[%s3739 + $0x164] sm:$0xf] %v3854
                %v3856 = vld [vmem:[%s3738 + $0xe8] sm:$0xf]
                %3857 = vst [vmem:[%s3739 + $0x168] sm:$0xf] %v3856
                %v3858 = vld [vmem:[%s3738 + $0xec] sm:$0xf]
                %3859 = vst [vmem:[%s3739 + $0x16c] sm:$0xf] %v3858
                %v3860 = vld [vmem:[%s3738 + $0xf0] sm:$0xf]
                %3861 = vst [vmem:[%s3739 + $0x170] sm:$0xf] %v3860
                %v3862 = vld [vmem:[%s3738 + $0xf4] sm:$0xf]
                %3863 = vst [vmem:[%s3739 + $0x174] sm:$0xf] %v3862
                %v3864 = vld [vmem:[%s3738 + $0xf8] sm:$0xf]
                %3865 = vst [vmem:[%s3739 + $0x178] sm:$0xf] %v3864
                %v3866 = vld [vmem:[%s3738 + $0xfc] sm:$0xf]
                %3867 = vst [vmem:[%s3739 + $0x17c] sm:$0xf] %v3866
                %v3868 = vld [vmem:[%s3738 + $0x100] sm:$0xf]
                %3869 = vst [vmem:[%s3739 + $0x200] sm:$0xf] %v3868
                %v3870 = vld [vmem:[%s3738 + $0x104] sm:$0xf]
                %3871 = vst [vmem:[%s3739 + $0x204] sm:$0xf] %v3870
                %v3872 = vld [vmem:[%s3738 + $0x108] sm:$0xf]
                %3873 = vst [vmem:[%s3739 + $0x208] sm:$0xf] %v3872
                %v3874 = vld [vmem:[%s3738 + $0x10c] sm:$0xf]
                %3875 = vst [vmem:[%s3739 + $0x20c] sm:$0xf] %v3874
                %v3876 = vld [vmem:[%s3738 + $0x110] sm:$0xf]
                %3877 = vst [vmem:[%s3739 + $0x210] sm:$0xf] %v3876
                %v3878 = vld [vmem:[%s3738 + $0x114] sm:$0xf]
                %3879 = vst [vmem:[%s3739 + $0x214] sm:$0xf] %v3878
                %v3880 = vld [vmem:[%s3738 + $0x118] sm:$0xf]
                %3881 = vst [vmem:[%s3739 + $0x218] sm:$0xf] %v3880
                %v3882 = vld [vmem:[%s3738 + $0x11c] sm:$0xf]
                %3883 = vst [vmem:[%s3739 + $0x21c] sm:$0xf] %v3882
                %v3884 = vld [vmem:[%s3738 + $0x120] sm:$0xf]
                %3885 = vst [vmem:[%s3739 + $0x220] sm:$0xf] %v3884
                %v3886 = vld [vmem:[%s3738 + $0x124] sm:$0xf]
                %3887 = vst [vmem:[%s3739 + $0x224] sm:$0xf] %v3886
                %v3888 = vld [vmem:[%s3738 + $0x128] sm:$0xf]
                %3889 = vst [vmem:[%s3739 + $0x228] sm:$0xf] %v3888
                %v3890 = vld [vmem:[%s3738 + $0x12c] sm:$0xf]
                %3891 = vst [vmem:[%s3739 + $0x22c] sm:$0xf] %v3890
                %v3892 = vld [vmem:[%s3738 + $0x130] sm:$0xf]
                %3893 = vst [vmem:[%s3739 + $0x230] sm:$0xf] %v3892
                %v3894 = vld [vmem:[%s3738 + $0x134] sm:$0xf]
                %3895 = vst [vmem:[%s3739 + $0x234] sm:$0xf] %v3894
                %v3896 = vld [vmem:[%s3738 + $0x138] sm:$0xf]
                %3897 = vst [vmem:[%s3739 + $0x238] sm:$0xf] %v3896
                %v3898 = vld [vmem:[%s3738 + $0x13c] sm:$0xf]
                %3899 = vst [vmem:[%s3739 + $0x23c] sm:$0xf] %v3898
                %v3900 = vld [vmem:[%s3738 + $0x140] sm:$0xf]
                %3901 = vst [vmem:[%s3739 + $0x240] sm:$0xf] %v3900
                %v3902 = vld [vmem:[%s3738 + $0x144] sm:$0xf]
                %3903 = vst [vmem:[%s3739 + $0x244] sm:$0xf] %v3902
                %v3904 = vld [vmem:[%s3738 + $0x148] sm:$0xf]
                %3905 = vst [vmem:[%s3739 + $0x248] sm:$0xf] %v3904
                %v3906 = vld [vmem:[%s3738 + $0x14c] sm:$0xf]
                %3907 = vst [vmem:[%s3739 + $0x24c] sm:$0xf] %v3906
                %v3908 = vld [vmem:[%s3738 + $0x150] sm:$0xf]
                %3909 = vst [vmem:[%s3739 + $0x250] sm:$0xf] %v3908
                %v3910 = vld [vmem:[%s3738 + $0x154] sm:$0xf]
                %3911 = vst [vmem:[%s3739 + $0x254] sm:$0xf] %v3910
                %v3912 = vld [vmem:[%s3738 + $0x158] sm:$0xf]
                %3913 = vst [vmem:[%s3739 + $0x258] sm:$0xf] %v3912
                %v3914 = vld [vmem:[%s3738 + $0x15c] sm:$0xf]
                %3915 = vst [vmem:[%s3739 + $0x25c] sm:$0xf] %v3914
                %v3916 = vld [vmem:[%s3738 + $0x160] sm:$0xf]
                %3917 = vst [vmem:[%s3739 + $0x260] sm:$0xf] %v3916
                %v3918 = vld [vmem:[%s3738 + $0x164] sm:$0xf]
                %3919 = vst [vmem:[%s3739 + $0x264] sm:$0xf] %v3918
                %v3920 = vld [vmem:[%s3738 + $0x168] sm:$0xf]
                %3921 = vst [vmem:[%s3739 + $0x268] sm:$0xf] %v3920
                %v3922 = vld [vmem:[%s3738 + $0x16c] sm:$0xf]
                %3923 = vst [vmem:[%s3739 + $0x26c] sm:$0xf] %v3922
                %v3924 = vld [vmem:[%s3738 + $0x170] sm:$0xf]
                %3925 = vst [vmem:[%s3739 + $0x270] sm:$0xf] %v3924
                %v3926 = vld [vmem:[%s3738 + $0x174] sm:$0xf]
                %3927 = vst [vmem:[%s3739 + $0x274] sm:$0xf] %v3926
                %v3928 = vld [vmem:[%s3738 + $0x178] sm:$0xf]
                %3929 = vst [vmem:[%s3739 + $0x278] sm:$0xf] %v3928
                %v3930 = vld [vmem:[%s3738 + $0x17c] sm:$0xf]
                %3931 = vst [vmem:[%s3739 + $0x27c] sm:$0xf] %v3930
                %v3932 = vld [vmem:[%s3738 + $0x180] sm:$0xf]
                %3933 = vst [vmem:[%s3739 + $0x300] sm:$0xf] %v3932
                %v3934 = vld [vmem:[%s3738 + $0x184] sm:$0xf]
                %3935 = vst [vmem:[%s3739 + $0x304] sm:$0xf] %v3934
                %v3936 = vld [vmem:[%s3738 + $0x188] sm:$0xf]
                %3937 = vst [vmem:[%s3739 + $0x308] sm:$0xf] %v3936
                %v3938 = vld [vmem:[%s3738 + $0x18c] sm:$0xf]
                %3939 = vst [vmem:[%s3739 + $0x30c] sm:$0xf] %v3938
                %v3940 = vld [vmem:[%s3738 + $0x190] sm:$0xf]
                %3941 = vst [vmem:[%s3739 + $0x310] sm:$0xf] %v3940
                %v3942 = vld [vmem:[%s3738 + $0x194] sm:$0xf]
                %3943 = vst [vmem:[%s3739 + $0x314] sm:$0xf] %v3942
                %v3944 = vld [vmem:[%s3738 + $0x198] sm:$0xf]
                %3945 = vst [vmem:[%s3739 + $0x318] sm:$0xf] %v3944
                %v3946 = vld [vmem:[%s3738 + $0x19c] sm:$0xf]
                %3947 = vst [vmem:[%s3739 + $0x31c] sm:$0xf] %v3946
                %v3948 = vld [vmem:[%s3738 + $0x1a0] sm:$0xf]
                %3949 = vst [vmem:[%s3739 + $0x320] sm:$0xf] %v3948
                %v3950 = vld [vmem:[%s3738 + $0x1a4] sm:$0xf]
                %3951 = vst [vmem:[%s3739 + $0x324] sm:$0xf] %v3950
                %v3952 = vld [vmem:[%s3738 + $0x1a8] sm:$0xf]
                %3953 = vst [vmem:[%s3739 + $0x328] sm:$0xf] %v3952
                %v3954 = vld [vmem:[%s3738 + $0x1ac] sm:$0xf]
                %3955 = vst [vmem:[%s3739 + $0x32c] sm:$0xf] %v3954
                %v3956 = vld [vmem:[%s3738 + $0x1b0] sm:$0xf]
                %3957 = vst [vmem:[%s3739 + $0x330] sm:$0xf] %v3956
                %v3958 = vld [vmem:[%s3738 + $0x1b4] sm:$0xf]
                %3959 = vst [vmem:[%s3739 + $0x334] sm:$0xf] %v3958
                %v3960 = vld [vmem:[%s3738 + $0x1b8] sm:$0xf]
                %3961 = vst [vmem:[%s3739 + $0x338] sm:$0xf] %v3960
                %v3962 = vld [vmem:[%s3738 + $0x1bc] sm:$0xf]
                %3963 = vst [vmem:[%s3739 + $0x33c] sm:$0xf] %v3962
                %v3964 = vld [vmem:[%s3738 + $0x1c0] sm:$0xf]
                %3965 = vst [vmem:[%s3739 + $0x340] sm:$0xf] %v3964
                %v3966 = vld [vmem:[%s3738 + $0x1c4] sm:$0xf]
                %3967 = vst [vmem:[%s3739 + $0x344] sm:$0xf] %v3966
                %v3968 = vld [vmem:[%s3738 + $0x1c8] sm:$0xf]
                %3969 = vst [vmem:[%s3739 + $0x348] sm:$0xf] %v3968
                %v3970 = vld [vmem:[%s3738 + $0x1cc] sm:$0xf]
                %3971 = vst [vmem:[%s3739 + $0x34c] sm:$0xf] %v3970
                %v3972 = vld [vmem:[%s3738 + $0x1d0] sm:$0xf]
                %3973 = vst [vmem:[%s3739 + $0x350] sm:$0xf] %v3972
                %v3974 = vld [vmem:[%s3738 + $0x1d4] sm:$0xf]
                %3975 = vst [vmem:[%s3739 + $0x354] sm:$0xf] %v3974
                %v3976 = vld [vmem:[%s3738 + $0x1d8] sm:$0xf]
                %3977 = vst [vmem:[%s3739 + $0x358] sm:$0xf] %v3976
                %v3978 = vld [vmem:[%s3738 + $0x1dc] sm:$0xf]
                %3979 = vst [vmem:[%s3739 + $0x35c] sm:$0xf] %v3978
                %v3980 = vld [vmem:[%s3738 + $0x1e0] sm:$0xf]
                %3981 = vst [vmem:[%s3739 + $0x360] sm:$0xf] %v3980
                %v3982 = vld [vmem:[%s3738 + $0x1e4] sm:$0xf]
                %3983 = vst [vmem:[%s3739 + $0x364] sm:$0xf] %v3982
                %v3984 = vld [vmem:[%s3738 + $0x1e8] sm:$0xf]
                %3985 = vst [vmem:[%s3739 + $0x368] sm:$0xf] %v3984
                %v3986 = vld [vmem:[%s3738 + $0x1ec] sm:$0xf]
                %3987 = vst [vmem:[%s3739 + $0x36c] sm:$0xf] %v3986
                %v3988 = vld [vmem:[%s3738 + $0x1f0] sm:$0xf]
                %3989 = vst [vmem:[%s3739 + $0x370] sm:$0xf] %v3988
                %v3990 = vld [vmem:[%s3738 + $0x1f4] sm:$0xf]
                %3991 = vst [vmem:[%s3739 + $0x374] sm:$0xf] %v3990
                %v3992 = vld [vmem:[%s3738 + $0x1f8] sm:$0xf]
                %3993 = vst [vmem:[%s3739 + $0x378] sm:$0xf] %v3992
                %v3994 = vld [vmem:[%s3738 + $0x1fc] sm:$0xf]
                %3995 = vst [vmem:[%s3739 + $0x37c] sm:$0xf] %v3994
              $region143: #{tpu_custom_call.1} parent=137 // loop_footer
                %s3737 = sadd.s32 1, %s3733
              $region144: #{tpu_custom_call.1} parent=137 // loop_footer_branch
                %3732 = sbr.rel target = $region140
              $region145: #{tpu_custom_call.1} parent=137 // loop_exit
                _
            $region138: #{tpu_custom_call.1} parent=129 // pred_fallthru
              _
          $region130: #{tpu_custom_call.1} parent=125 // pred_fallthru
            _
          %4271 = vnop
        $region126: #{tpu_custom_call.1} parent=31 // pred_fallthru
          _
      $region32: #{tpu_custom_call.1} parent=5 // pred_fallthru
        _
      %p4272 = scmp.le.s32.totalorder 2, %s16
      // Predicated region
      $region164: #{tpu_custom_call.1} parent=5 // pred_check
        %p4273 = pneg %p4272
      $region165: #{tpu_custom_call.1} parent=5 // pred_check_branch
        %4275 = sbr.rel (%p4273) target = $region167
      $region166: #{tpu_custom_call.1} parent=5 // pred_region
        %s4276 = ssub.s32 %s16, 2
        // Predicated region
        $region168: #{tpu_custom_call.1} parent=166 // pred_check
          %p4277 = pneg %p129
        $region169: #{tpu_custom_call.1} parent=166 // pred_check_branch
          %4279 = sbr.rel (%p4277) target = $region171
        $region170: #{tpu_custom_call.1} parent=166 // pred_region
          %s4280 = sand.u32 %s114, 1
          %s4281 = sand.u32 %s114, 1
          %s4282 = smul.addr %s4281, 512
          %s4283 = scalar_lea.vmem [#allocation6], %s4282
        $region171: #{tpu_custom_call.1} parent=166 // pred_fallthru
          _
        // Predicated region
        $region172: #{tpu_custom_call.1} parent=166 // pred_check
          %p4284 = pneg %p157
        $region173: #{tpu_custom_call.1} parent=166 // pred_check_branch
          %4286 = sbr.rel (%p4284) target = $region175
        $region174: #{tpu_custom_call.1} parent=166 // pred_region
          %s4287 = sand.u32 %s142, 1
          %s4288 = sand.u32 %s142, 1
          %s4289 = smul.addr %s4288, 512
          %s4290 = scalar_lea.vmem [#allocation7], %s4289
        $region175: #{tpu_custom_call.1} parent=166 // pred_fallthru
          _
        // Predicated region
        $region176: #{tpu_custom_call.1} parent=166 // pred_check
          %p4291 = pneg %p185
        $region177: #{tpu_custom_call.1} parent=166 // pred_check_branch
          %4293 = sbr.rel (%p4291) target = $region179
        $region178: #{tpu_custom_call.1} parent=166 // pred_region
          %s4294 = sand.u32 %s170, 1
          %s4295 = sand.u32 %s170, 1
          %s4296 = smul.addr %s4295, 512
          %s4297 = scalar_lea.vmem [#allocation8], %s4296
        $region179: #{tpu_custom_call.1} parent=166 // pred_fallthru
          _
      $region167: #{tpu_custom_call.1} parent=5 // pred_fallthru
        _
    $region6: #{tpu_custom_call.1} parent=1 // loop_footer
      %s20 = sadd.s32 1, %s16
    $region7: #{tpu_custom_call.1} parent=1 // loop_footer_branch
      %15 = sbr.rel target = $region3
    $region8: #{tpu_custom_call.1} parent=1 // loop_exit
      _
    %4298 = vsyncpa [#allocation3], 1
    %s4299 = scalar_lea.sflag [#allocation3], 1
    %4300 = vsyncpa %s4299, 1
    %4301 = vsyncpa [#allocation5], 1

</llo_original>
